<compile_context>
chip_gen: v7x
topology: tpu7x:2x2x1
jax: 0.10.0
libtpu: 0.0.40
codegen_flags: <defaults>
</compile_context>

<pallas_src>
import jax
import jax.numpy as jnp
import numpy as np
from jax.experimental import pallas as pl
from jax.experimental.pallas import tpu as pltpu

N_PTS = 128  # number of points; model is agnostic to N as long as N % 128 == 0

# rows of the packed (16, 1024) bias array
_B_SC1, _B_SC2, _B_SC3, _B_SF1, _B_SF2, _B_SF3 = 0, 1, 2, 3, 4, 5
_B_FT1, _B_FT2, _B_FT3, _B_H1, _B_H2, _B_H3, _B_H4 = 6, 7, 8, 9, 10, 11, 12

# weights auto-pipelined into VMEM by BlockSpec (needed early / small)
_VMEM_WEIGHTS = ('sc1w', 'ft1w', 'w128', 'w1024', 'sf3w',
                 'h1wp', 'h2w', 'h3w', 'h4w', 'bias')
# big, late-used weights: kept in HBM (pl.ANY) and manually prefetched in-kernel
_ANY_WEIGHTS = ('sf1w', 'sf2w', 'h1wg')


def fused_kernel(x_ref,
                 sc1w_ref, ft1w_ref, w128_ref, w1024_ref, sf3w_ref,
                 h1wp_ref, h2w_ref, h3w_ref, h4w_ref, bias_ref,
                 sf1w_hbm, sf2w_hbm, h1wg_hbm,
                 o1_ref, o2_ref, o3_ref,
                 sf1_buf, sf2_buf, h1g_buf, dma_sem):
    Bb = x_ref.shape[0]
    N = x_ref.shape[2]
    f32, bf16 = jnp.float32, jnp.bfloat16

    # --- kick off DMAs for the late-used weights; they overlap the STN chain ---
    cp_sf1 = pltpu.make_async_copy(sf1w_hbm, sf1_buf, dma_sem.at[0])
    cp_sf2 = pltpu.make_async_copy(sf2w_hbm, sf2_buf, dma_sem.at[1])
    cp_h1g = pltpu.make_async_copy(h1wg_hbm, h1g_buf, dma_sem.at[2])
    cp_sf1.start()
    cp_sf2.start()
    cp_h1g.start()

    def brow(r, c):                      # (1, c) f32 bias row from the packed bias array
        return bias_ref[r:r + 1, 0:c]

    def mm(a, w, b=None, relu=True):
        y = jnp.dot(a, w, preferred_element_type=f32)
        if b is not None:
            y = y + b
        if relu:
            y = jnp.maximum(y, 0.0)
        return y

    def pool_max(v):                     # (Bb*N, C) -> per-batch max over points (Bb, C)
        return jnp.max(v.reshape(Bb, N, v.shape[-1]), axis=1)

    sc2w = w128_ref[0:64, :]                             # (64, 128)   bf16
    ft2w = w128_ref[64:128, :]                           # (64, 128)   bf16
    sc3w = w1024_ref[0:128, :]                           # (128, 1024) bf16
    ft3w = w1024_ref[128:256, :]                         # (128, 1024) bf16

    # (Bb, 3, N) -> (Bb*N, 3): tiny in-kernel transpose (points on sublanes)
    xf = jnp.transpose(x_ref[...], (0, 2, 1)).reshape(Bb * N, 3)

    # ---------------- STN3d (input transform net) ----------------
    h = mm(xf, sc1w_ref[...], brow(_B_SC1, 64))                           # (BbN, 64)
    h = mm(h.astype(bf16), sc2w, brow(_B_SC2, 128))                       # (BbN, 128)
    h = mm(h.astype(bf16), sc3w, brow(_B_SC3, 1024))                      # (BbN, 1024)
    g = pool_max(h)                                                       # (Bb, 1024)

    cp_sf1.wait()
    f = mm(g.astype(bf16), sf1_buf[...], brow(_B_SF1, 512))               # (Bb, 512)
    cp_sf2.wait()
    f = mm(f.astype(bf16), sf2_buf[...], brow(_B_SF2, 256))               # (Bb, 256)
    t = mm(f, sf3w_ref[...], brow(_B_SF3, 9), relu=False)                 # (Bb, 9)

    # x' = x @ t.reshape(3, 3), batched, without an in-kernel 3x3 reshape
    xf3 = xf.reshape(Bb, N, 3)
    t3 = t.reshape(Bb, 1, 9)
    x2 = (xf3[:, :, 0:1] * t3[:, :, 0:3] +
          xf3[:, :, 1:2] * t3[:, :, 3:6] +
          xf3[:, :, 2:3] * t3[:, :, 6:9]).reshape(Bb * N, 3)

    # ---------------- PointNetfeat trunk (global_feat=False) ----------------
    p1 = mm(x2, ft1w_ref[...], brow(_B_FT1, 64))                          # (BbN, 64) pointfeat
    p2 = mm(p1.astype(bf16), ft2w, brow(_B_FT2, 128))                     # (BbN, 128)
    p3 = mm(p2.astype(bf16), ft3w, brow(_B_FT3, 1024), relu=False)        # (BbN, 1024)
    g2 = pool_max(p3)                                                     # (Bb, 1024) global

    # ---------------- dense fusion head (lane-padded to 128 columns) ----------------
    # concat([global(1024), point(64)]) @ W1 == global @ W1[:1024] + point @ W1[1024:]
    cp_h1g.wait()
    gc = mm(g2.astype(bf16), h1g_buf[...], brow(_B_H1, 128), relu=False)  # (Bb, 128)
    pc = jnp.dot(p1.astype(bf16), h1wp_ref[...],
                 preferred_element_type=f32)                              # (BbN, 128)
    a1 = jnp.maximum(pc.reshape(Bb, N, 128) + gc.reshape(Bb, 1, 128),
                     0.0).reshape(Bb * N, 128)                            # (BbN, 128)

    cv2 = mm(a1.astype(bf16), h2w_ref[...], brow(_B_H2, 128))             # (BbN, 128)
    cv3 = mm(cv2.astype(bf16), h3w_ref[...], brow(_B_H3, 128))            # (BbN, 128)
    out = mm(cv3.astype(bf16), h4w_ref[...], brow(_B_H4, 128), relu=False)

    # exact-shape, channels-first outputs: full 128-wide tile transposes (XLU), then
    # sublane slices; wrapper only needs free reshapes.
    o1_ref[...] = jnp.transpose(out.reshape(Bb, N, 128), (0, 2, 1))[:, 0:6, :]
    o2_ref[...] = jnp.transpose(cv2.reshape(Bb, N, 128), (0, 2, 1))[:, 0:10, :]
    o3_ref[...] = jnp.transpose(cv3.reshape(Bb, N, 128), (0, 2, 1))[:, 0:8, :]


def init_params(key):
    state = [key]

    def nxt():
        state[0], sub = jax.random.split(state[0])
        return sub

    def conv(cin, cout):
        w = jax.random.normal(nxt(), (cin, cout), jnp.float32) / jnp.sqrt(jnp.float32(cin))
        b = 0.02 * jax.random.normal(nxt(), (1, cout), jnp.float32)
        return w, b

    def with_bn(cin, cout, eps=1e-5):
        # Conv/Linear followed by eval-mode BatchNorm1d folded into weight/bias.
        w, b = conv(cin, cout)
        gamma = 1.0 + 0.1 * jax.random.normal(nxt(), (1, cout), jnp.float32)
        beta = 0.05 * jax.random.normal(nxt(), (1, cout), jnp.float32)
        scale = gamma / jnp.sqrt(1.0 + eps)
        return w * scale, b * scale + beta

    # STN3d
    sc1w, sc1b = with_bn(3, 64)
    sc2w, sc2b = with_bn(64, 128)
    sc3w, sc3b = with_bn(128, 1024)
    sf1w, sf1b = with_bn(1024, 512)
    sf2w, sf2b = with_bn(512, 256)
    sf3w, sf3b = conv(256, 9)
    sf3b = sf3b + jnp.eye(3, dtype=jnp.float32).reshape(1, 9)  # + identity transform

    # PointNetfeat trunk
    ft1w, ft1b = with_bn(3, 64)
    ft2w, ft2b = with_bn(64, 128)
    ft3w, ft3b = with_bn(128, 1024)

    # Dense fusion head (no BN)
    h1w, h1b = conv(1088, 12)
    h1wg, h1wp = h1w[:1024], h1w[1024:]
    h2w, h2b = conv(12, 10)
    h3w, h3b = conv(10, 8)
    h4w, h4b = conv(8, 6)

    def pad2(w, r, c):
        return jnp.zeros((r, c), jnp.float32).at[:w.shape[0], :w.shape[1]].set(w)

    # pack all 13 biases into one lane-padded f32 array (one DMA, free zero-padding)
    bias = jnp.zeros((16, 1024), jnp.float32)
    for r, v in enumerate([sc1b, sc2b, sc3b, sf1b, sf2b, sf3b,
                           ft1b, ft2b, ft3b, h1b, h2b, h3b, h4b]):
        bias = bias.at[r, :v.shape[1]].set(v[0])

    bf16 = jnp.bfloat16
    return dict(
        sc1w=sc1w,                                                   # (3, 64)     f32
        ft1w=ft1w,                                                   # (3, 64)     f32
        w128=jnp.concatenate([sc2w, ft2w], axis=0).astype(bf16),     # (128, 128)  bf16
        w1024=jnp.concatenate([sc3w, ft3w], axis=0).astype(bf16),    # (256, 1024) bf16
        sf1w=sf1w.astype(bf16),                                      # (1024, 512) bf16
        sf2w=sf2w.astype(bf16),                                      # (512, 256)  bf16
        sf3w=sf3w,                                                   # (256, 9)    f32
        h1wg=pad2(h1wg, 1024, 128).astype(bf16),                     # (1024, 128) bf16
        h1wp=pad2(h1wp, 64, 128).astype(bf16),                       # (64, 128)   bf16
        h2w=pad2(h2w, 128, 128).astype(bf16),                        # (128, 128)  bf16
        h3w=pad2(h3w, 128, 128).astype(bf16),                        # (128, 128)  bf16
        h4w=pad2(h4w, 128, 128).astype(bf16),                        # (128, 128)  bf16
        bias=bias)                                                   # (16, 1024)  f32


def _tensorcores_per_chip():
    try:
        kind = jax.devices()[0].device_kind.lower()
    except Exception:
        return 1
    return 2 if ('v7' in kind or 'tpu7' in kind) else 1


def pointnet_densefusion_forward(x_bcn, params):
    B, C, N = x_bcn.shape
    assert C == 3 and N % 128 == 0

    # Generation-aware batch block: single grid step on 1-TC chips (v5e/v6e),
    # two parallel steps on v7x (2 TensorCores).  Cap so intermediates stay small.
    num_tc = _tensorcores_per_chip()
    Bb = B // 2 if (num_tc >= 2 and B % 2 == 0) else B
    while Bb > 1 and Bb * N > 2048:                    # keep (Bb*N, 1024) f32 modest
        Bb = max(d for d in range(1, Bb) if B % d == 0)
    assert B % Bb == 0
    grid = (B // Bb,)

    vmem_w = [params[k] for k in _VMEM_WEIGHTS]
    any_w = [params[k] for k in _ANY_WEIGHTS]

    in_specs = [pl.BlockSpec((Bb, 3, N), lambda i: (i, 0, 0))]
    in_specs += [pl.BlockSpec(w.shape, lambda i: (0, 0)) for w in vmem_w]
    in_specs += [pl.BlockSpec(memory_space=pl.ANY) for _ in any_w]

    out_specs = [pl.BlockSpec((Bb, 6, N), lambda i: (i, 0, 0)),
                 pl.BlockSpec((Bb, 10, N), lambda i: (i, 0, 0)),
                 pl.BlockSpec((Bb, 8, N), lambda i: (i, 0, 0))]
    out_shape = (jax.ShapeDtypeStruct((B, 6, N), jnp.float32),
                 jax.ShapeDtypeStruct((B, 10, N), jnp.float32),
                 jax.ShapeDtypeStruct((B, 8, N), jnp.float32))

    scratch_shapes = [pltpu.VMEM(params['sf1w'].shape, params['sf1w'].dtype),
                      pltpu.VMEM(params['sf2w'].shape, params['sf2w'].dtype),
                      pltpu.VMEM(params['h1wg'].shape, params['h1wg'].dtype),
                      pltpu.SemaphoreType.DMA((3,))]

    o1, o2, o3 = pl.pallas_call(
        fused_kernel,
        out_shape=out_shape,
        grid_spec=pltpu.PrefetchScalarGridSpec(
            num_scalar_prefetch=0,
            grid=grid,
            in_specs=in_specs,
            out_specs=out_specs,
            scratch_shapes=scratch_shapes),
        compiler_params=pltpu.CompilerParams(
            dimension_semantics=("parallel",),
            vmem_limit_bytes=32 * 1024 * 1024),
    )(x_bcn, *vmem_w, *any_w)

    # outputs are already channels-first => .reshape matches torch .view(B, -1)
    return o1.reshape(B, -1), (o2.reshape(B, -1), o3.reshape(B, -1))


def reference_forward(x_bcn, p):
    """Plain-JAX reference with the same mixed precision (bf16 weights + bf16
    activation casts, f32 accumulation) the kernel uses."""
    B, _, N = x_bcn.shape
    f32, bf16 = jnp.float32, jnp.bfloat16
    x = jnp.transpose(x_bcn, (0, 2, 1))                       # (B, N, 3)
    bias = p['bias']

    def brow(r, c):
        return bias[r, :c]

    def dot(a, w):
        return jnp.dot(a, w, preferred_element_type=f32)

    relu = lambda v: jnp.maximum(v, 0.0)
    sc2w, ft2w = p['w128'][:64], p['w128'][64:]
    sc3w, ft3w = p['w1024'][:128], p['w1024'][128:]

    # STN3d
    h = relu(dot(x, p['sc1w']) + brow(_B_SC1, 64))
    h = relu(dot(h.astype(bf16), sc2w) + brow(_B_SC2, 128))
    h = relu(dot(h.astype(bf16), sc3w) + brow(_B_SC3, 1024))
    g = jnp.max(h, axis=1)                                    # (B, 1024)
    f = relu(dot(g.astype(bf16), p['sf1w']) + brow(_B_SF1, 512))
    f = relu(dot(f.astype(bf16), p['sf2w']) + brow(_B_SF2, 256))
    t = dot(f, p['sf3w']) + brow(_B_SF3, 9)                   # (B, 9)
    trans = t.reshape(B, 3, 3)
    x2 = jnp.einsum('bni,bij->bnj', x, trans)

    # trunk
    p1 = relu(dot(x2, p['ft1w']) + brow(_B_FT1, 64))
    p2 = relu(dot(p1.astype(bf16), ft2w) + brow(_B_FT2, 128))
    p3 = dot(p2.astype(bf16), ft3w) + brow(_B_FT3, 1024)
    g2 = jnp.max(p3, axis=1)                                  # (B, 1024)

    # dense fusion head (valid sub-blocks of the lane-padded weights)
    gc = dot(g2.astype(bf16), p['h1wg'][:, :12]) + brow(_B_H1, 12)        # (B, 12)
    pc = dot(p1.astype(bf16), p['h1wp'][:, :12])                          # (B, N, 12)
    a1 = relu(pc + gc[:, None, :])
    cv2 = relu(dot(a1.astype(bf16), p['h2w'][:12, :10]) + brow(_B_H2, 10))
    cv3 = relu(dot(cv2.astype(bf16), p['h3w'][:10, :8]) + brow(_B_H3, 8))
    out = dot(cv3.astype(bf16), p['h4w'][:8, :6]) + brow(_B_H4, 6)

    flat = lambda v: jnp.transpose(v, (0, 2, 1)).reshape(B, -1)
    return flat(out), (flat(cv2), flat(cv3))


if __name__ == "__main__":
    key = jax.random.PRNGKey(0)
    kx, kp = jax.random.split(key)
    B, N = 2, N_PTS
    x = jax.random.normal(kx, (B, 3, N), jnp.float32)   # torch NCW: (batch, 3, n_pts)
    params = init_params(kp)

    fwd = jax.jit(pointnet_densefusion_forward)
    out = jax.block_until_ready(fwd(x, params))
    ref = reference_forward(x, params)

    np.testing.assert_allclose(np.asarray(out[0]), np.asarray(ref[0]), rtol=5e-3, atol=5e-3)
    np.testing.assert_allclose(np.asarray(out[1][0]), np.asarray(ref[1][0]), rtol=5e-3, atol=5e-3)
    np.testing.assert_allclose(np.asarray(out[1][1]), np.asarray(ref[1][1]), rtol=5e-3, atol=5e-3)
    assert out[0].shape == (B, 6 * N) and out[1][0].shape == (B, 10 * N) and out[1][1].shape == (B, 8 * N)
    print("KERNEL_OK")
</pallas_src>

<mosaic_0001>
module attributes {stable_mosaic.version = 11 : i64} {
  func.func @fused_kernel(%arg0: i32, %arg1: memref<2x3x128xf32, #tpu.memory_space<vmem>>, %arg2: memref<3x64xf32, #tpu.memory_space<vmem>>, %arg3: memref<3x64xf32, #tpu.memory_space<vmem>>, %arg4: memref<128x128xbf16, #tpu.memory_space<vmem>>, %arg5: memref<256x1024xbf16, #tpu.memory_space<vmem>>, %arg6: memref<256x9xf32, #tpu.memory_space<vmem>>, %arg7: memref<64x128xbf16, #tpu.memory_space<vmem>>, %arg8: memref<128x128xbf16, #tpu.memory_space<vmem>>, %arg9: memref<128x128xbf16, #tpu.memory_space<vmem>>, %arg10: memref<128x128xbf16, #tpu.memory_space<vmem>>, %arg11: memref<16x1024xf32, #tpu.memory_space<vmem>>, %arg12: memref<1024x512xbf16, #tpu.memory_space<any>>, %arg13: memref<512x256xbf16, #tpu.memory_space<any>>, %arg14: memref<1024x128xbf16, #tpu.memory_space<any>>, %arg15: memref<2x6x128xf32, #tpu.memory_space<vmem>>, %arg16: memref<2x10x128xf32, #tpu.memory_space<vmem>>, %arg17: memref<2x8x128xf32, #tpu.memory_space<vmem>>, %arg18: memref<1024x512xbf16, #tpu.memory_space<vmem>>, %arg19: memref<512x256xbf16, #tpu.memory_space<vmem>>, %arg20: memref<1024x128xbf16, #tpu.memory_space<vmem>>, %arg21: memref<3x!tpu.dma_semaphore, #tpu.memory_space<semaphore_mem>>) attributes {dimension_semantics = [#tpu.dimension_semantics<parallel>], iteration_bounds = array<i64: 1>, scalar_prefetch = 0 : i64, scratch_operands = 4 : i64, tpu.core_type = #tpu.core_type<tc>, window_params = [{transform_indices = @transform_0, window_bounds = array<i64: 2, 3, 128>}, {pipeline_mode = #tpu.pipeline_mode<synchronous>, transform_indices = @transform_1, window_bounds = array<i64: 3, 64>}, {pipeline_mode = #tpu.pipeline_mode<synchronous>, transform_indices = @transform_2, window_bounds = array<i64: 3, 64>}, {pipeline_mode = #tpu.pipeline_mode<synchronous>, transform_indices = @transform_3, window_bounds = array<i64: 128, 128>}, {pipeline_mode = #tpu.pipeline_mode<synchronous>, transform_indices = @transform_4, window_bounds = array<i64: 256, 1024>}, {pipeline_mode = #tpu.pipeline_mode<synchronous>, transform_indices = @transform_5, window_bounds = array<i64: 256, 9>}, {pipeline_mode = #tpu.pipeline_mode<synchronous>, transform_indices = @transform_6, window_bounds = array<i64: 64, 128>}, {pipeline_mode = #tpu.pipeline_mode<synchronous>, transform_indices = @transform_7, window_bounds = array<i64: 128, 128>}, {pipeline_mode = #tpu.pipeline_mode<synchronous>, transform_indices = @transform_8, window_bounds = array<i64: 128, 128>}, {pipeline_mode = #tpu.pipeline_mode<synchronous>, transform_indices = @transform_9, window_bounds = array<i64: 128, 128>}, {pipeline_mode = #tpu.pipeline_mode<synchronous>, transform_indices = @transform_10, window_bounds = array<i64: 16, 1024>}, {}, {}, {}, {transform_indices = @transform_14, window_bounds = array<i64: 2, 6, 128>}, {transform_indices = @transform_15, window_bounds = array<i64: 2, 10, 128>}, {transform_indices = @transform_16, window_bounds = array<i64: 2, 8, 128>}]} {
    %c0_i32 = arith.constant 0 : i32
    %0 = tpu.memref_slice %arg21[%c0_i32] : memref<3x!tpu.dma_semaphore, #tpu.memory_space<semaphore_mem>> -> memref<1x!tpu.dma_semaphore, #tpu.memory_space<semaphore_mem>>
    %1 = tpu.memref_squeeze %0 : memref<1x!tpu.dma_semaphore, #tpu.memory_space<semaphore_mem>> -> memref<!tpu.dma_semaphore, #tpu.memory_space<semaphore_mem>>
    tpu.enqueue_dma source(%arg12 : memref<1024x512xbf16, #tpu.memory_space<any>>) target(%arg18 : memref<1024x512xbf16, #tpu.memory_space<vmem>>) target_semaphore(%1 : memref<!tpu.dma_semaphore, #tpu.memory_space<semaphore_mem>>)
    %c1_i32 = arith.constant 1 : i32
    %2 = tpu.memref_slice %arg21[%c1_i32] : memref<3x!tpu.dma_semaphore, #tpu.memory_space<semaphore_mem>> -> memref<1x!tpu.dma_semaphore, #tpu.memory_space<semaphore_mem>>
    %3 = tpu.memref_squeeze %2 : memref<1x!tpu.dma_semaphore, #tpu.memory_space<semaphore_mem>> -> memref<!tpu.dma_semaphore, #tpu.memory_space<semaphore_mem>>
    tpu.enqueue_dma source(%arg13 : memref<512x256xbf16, #tpu.memory_space<any>>) target(%arg19 : memref<512x256xbf16, #tpu.memory_space<vmem>>) target_semaphore(%3 : memref<!tpu.dma_semaphore, #tpu.memory_space<semaphore_mem>>)
    %c2_i32 = arith.constant 2 : i32
    %4 = tpu.memref_slice %arg21[%c2_i32] : memref<3x!tpu.dma_semaphore, #tpu.memory_space<semaphore_mem>> -> memref<1x!tpu.dma_semaphore, #tpu.memory_space<semaphore_mem>>
    %5 = tpu.memref_squeeze %4 : memref<1x!tpu.dma_semaphore, #tpu.memory_space<semaphore_mem>> -> memref<!tpu.dma_semaphore, #tpu.memory_space<semaphore_mem>>
    tpu.enqueue_dma source(%arg14 : memref<1024x128xbf16, #tpu.memory_space<any>>) target(%arg20 : memref<1024x128xbf16, #tpu.memory_space<vmem>>) target_semaphore(%5 : memref<!tpu.dma_semaphore, #tpu.memory_space<semaphore_mem>>)
    %c0 = arith.constant 0 : index
    %c0_0 = arith.constant 0 : index
    %6 = vector.load %arg4[%c0, %c0_0] : memref<128x128xbf16, #tpu.memory_space<vmem>>, vector<64x128xbf16>
    %c64 = arith.constant 64 : index
    %c0_1 = arith.constant 0 : index
    %7 = vector.load %arg4[%c64, %c0_1] : memref<128x128xbf16, #tpu.memory_space<vmem>>, vector<64x128xbf16>
    %c0_2 = arith.constant 0 : index
    %c0_3 = arith.constant 0 : index
    %8 = vector.load %arg5[%c0_2, %c0_3] : memref<256x1024xbf16, #tpu.memory_space<vmem>>, vector<128x1024xbf16>
    %c128 = arith.constant 128 : index
    %c0_4 = arith.constant 0 : index
    %9 = vector.load %arg5[%c128, %c0_4] : memref<256x1024xbf16, #tpu.memory_space<vmem>>, vector<128x1024xbf16>
    %c0_5 = arith.constant 0 : index
    %c0_6 = arith.constant 0 : index
    %c0_7 = arith.constant 0 : index
    %10 = vector.load %arg1[%c0_5, %c0_6, %c0_7] : memref<2x3x128xf32, #tpu.memory_space<vmem>>, vector<2x3x128xf32>
    %11 = tpu.transpose %10, [0, 2, 1] : vector<2x3x128xf32> -> vector<2x128x3xf32>
    %12 = vector.shape_cast %11 : vector<2x128x3xf32> to vector<256x3xf32>
    %c0_8 = arith.constant 0 : index
    %c0_9 = arith.constant 0 : index
    %13 = vector.load %arg2[%c0_8, %c0_9] : memref<3x64xf32, #tpu.memory_space<vmem>>, vector<3x64xf32>
    %c0_10 = arith.constant 0 : index
    %c0_11 = arith.constant 0 : index
    %14 = vector.load %arg11[%c0_10, %c0_11] : memref<16x1024xf32, #tpu.memory_space<vmem>>, vector<1x64xf32>
    %cst = arith.constant dense<0.000000e+00> : vector<256x64xf32>
    %15 = tpu.matmul %12, %13, %cst {dimension_numbers = #tpu.dot_dimension_numbers<[1], [0], [0], [1], [0, 0, 1, 1], [], []>} : vector<256x3xf32>, vector<3x64xf32>, vector<256x64xf32> -> vector<256x64xf32>
    %16 = vector.broadcast %14 : vector<1x64xf32> to vector<256x64xf32>
    %17 = arith.addf %15, %16 : vector<256x64xf32>
    %cst_12 = arith.constant 0.000000e+00 : f32
    %18 = vector.broadcast %cst_12 : f32 to vector<256x64xf32>
    %19 = arith.maximumf %17, %18 : vector<256x64xf32>
    %20 = arith.truncf %19 : vector<256x64xf32> to vector<256x64xbf16>
    %c1 = arith.constant 1 : index
    %c0_13 = arith.constant 0 : index
    %21 = vector.load %arg11[%c1, %c0_13] : memref<16x1024xf32, #tpu.memory_space<vmem>>, vector<1x128xf32>
    %cst_14 = arith.constant dense<0.000000e+00> : vector<256x128xf32>
    %22 = tpu.matmul %20, %6, %cst_14 {dimension_numbers = #tpu.dot_dimension_numbers<[1], [0], [0], [1], [0, 0, 1, 1], [], []>} : vector<256x64xbf16>, vector<64x128xbf16>, vector<256x128xf32> -> vector<256x128xf32>
    %23 = vector.broadcast %21 : vector<1x128xf32> to vector<256x128xf32>
    %24 = arith.addf %22, %23 : vector<256x128xf32>
    %cst_15 = arith.constant 0.000000e+00 : f32
    %25 = vector.broadcast %cst_15 : f32 to vector<256x128xf32>
    %26 = arith.maximumf %24, %25 : vector<256x128xf32>
    %27 = arith.truncf %26 : vector<256x128xf32> to vector<256x128xbf16>
    %c2 = arith.constant 2 : index
    %c0_16 = arith.constant 0 : index
    %28 = vector.load %arg11[%c2, %c0_16] : memref<16x1024xf32, #tpu.memory_space<vmem>>, vector<1x1024xf32>
    %cst_17 = arith.constant dense<0.000000e+00> : vector<256x1024xf32>
    %29 = tpu.matmul %27, %8, %cst_17 {dimension_numbers = #tpu.dot_dimension_numbers<[1], [0], [0], [1], [0, 0, 1, 1], [], []>} : vector<256x128xbf16>, vector<128x1024xbf16>, vector<256x1024xf32> -> vector<256x1024xf32>
    %30 = vector.broadcast %28 : vector<1x1024xf32> to vector<256x1024xf32>
    %31 = arith.addf %29, %30 : vector<256x1024xf32>
    %cst_18 = arith.constant 0.000000e+00 : f32
    %32 = vector.broadcast %cst_18 : f32 to vector<256x1024xf32>
    %33 = arith.maximumf %31, %32 : vector<256x1024xf32>
    %34 = vector.shape_cast %33 : vector<256x1024xf32> to vector<2x128x1024xf32>
    %cst_19 = arith.constant dense<0xFF800000> : vector<2x1024xf32>
    %35 = vector.multi_reduction <maximumf>, %34, %cst_19 [1] : vector<2x128x1024xf32> to vector<2x1024xf32>
    %c0_i32_20 = arith.constant 0 : i32
    %36 = tpu.memref_slice %arg21[%c0_i32_20] : memref<3x!tpu.dma_semaphore, #tpu.memory_space<semaphore_mem>> -> memref<1x!tpu.dma_semaphore, #tpu.memory_space<semaphore_mem>>
    %37 = tpu.memref_squeeze %36 : memref<1x!tpu.dma_semaphore, #tpu.memory_space<semaphore_mem>> -> memref<!tpu.dma_semaphore, #tpu.memory_space<semaphore_mem>>
    tpu.wait_dma2 semaphore(%37 : memref<!tpu.dma_semaphore, #tpu.memory_space<semaphore_mem>>) src(%arg12 : memref<1024x512xbf16, #tpu.memory_space<any>>) dst(%arg18 : memref<1024x512xbf16, #tpu.memory_space<vmem>>)
    %38 = arith.truncf %35 : vector<2x1024xf32> to vector<2x1024xbf16>
    %c0_21 = arith.constant 0 : index
    %c0_22 = arith.constant 0 : index
    %39 = vector.load %arg18[%c0_21, %c0_22] : memref<1024x512xbf16, #tpu.memory_space<vmem>>, vector<1024x512xbf16>
    %c3 = arith.constant 3 : index
    %c0_23 = arith.constant 0 : index
    %40 = vector.load %arg11[%c3, %c0_23] : memref<16x1024xf32, #tpu.memory_space<vmem>>, vector<1x512xf32>
    %cst_24 = arith.constant dense<0.000000e+00> : vector<2x512xf32>
    %41 = tpu.matmul %38, %39, %cst_24 {dimension_numbers = #tpu.dot_dimension_numbers<[1], [0], [0], [1], [0, 0, 1, 1], [], []>} : vector<2x1024xbf16>, vector<1024x512xbf16>, vector<2x512xf32> -> vector<2x512xf32>
    %42 = vector.broadcast %40 : vector<1x512xf32> to vector<2x512xf32>
    %43 = arith.addf %41, %42 : vector<2x512xf32>
    %cst_25 = arith.constant 0.000000e+00 : f32
    %44 = vector.broadcast %cst_25 : f32 to vector<2x512xf32>
    %45 = arith.maximumf %43, %44 : vector<2x512xf32>
    %c1_i32_26 = arith.constant 1 : i32
    %46 = tpu.memref_slice %arg21[%c1_i32_26] : memref<3x!tpu.dma_semaphore, #tpu.memory_space<semaphore_mem>> -> memref<1x!tpu.dma_semaphore, #tpu.memory_space<semaphore_mem>>
    %47 = tpu.memref_squeeze %46 : memref<1x!tpu.dma_semaphore, #tpu.memory_space<semaphore_mem>> -> memref<!tpu.dma_semaphore, #tpu.memory_space<semaphore_mem>>
    tpu.wait_dma2 semaphore(%47 : memref<!tpu.dma_semaphore, #tpu.memory_space<semaphore_mem>>) src(%arg13 : memref<512x256xbf16, #tpu.memory_space<any>>) dst(%arg19 : memref<512x256xbf16, #tpu.memory_space<vmem>>)
    %48 = arith.truncf %45 : vector<2x512xf32> to vector<2x512xbf16>
    %c0_27 = arith.constant 0 : index
    %c0_28 = arith.constant 0 : index
    %49 = vector.load %arg19[%c0_27, %c0_28] : memref<512x256xbf16, #tpu.memory_space<vmem>>, vector<512x256xbf16>
    %c4 = arith.constant 4 : index
    %c0_29 = arith.constant 0 : index
    %50 = vector.load %arg11[%c4, %c0_29] : memref<16x1024xf32, #tpu.memory_space<vmem>>, vector<1x256xf32>
    %cst_30 = arith.constant dense<0.000000e+00> : vector<2x256xf32>
    %51 = tpu.matmul %48, %49, %cst_30 {dimension_numbers = #tpu.dot_dimension_numbers<[1], [0], [0], [1], [0, 0, 1, 1], [], []>} : vector<2x512xbf16>, vector<512x256xbf16>, vector<2x256xf32> -> vector<2x256xf32>
    %52 = vector.broadcast %50 : vector<1x256xf32> to vector<2x256xf32>
    %53 = arith.addf %51, %52 : vector<2x256xf32>
    %cst_31 = arith.constant 0.000000e+00 : f32
    %54 = vector.broadcast %cst_31 : f32 to vector<2x256xf32>
    %55 = arith.maximumf %53, %54 : vector<2x256xf32>
    %c0_32 = arith.constant 0 : index
    %c0_33 = arith.constant 0 : index
    %56 = vector.load %arg6[%c0_32, %c0_33] : memref<256x9xf32, #tpu.memory_space<vmem>>, vector<256x9xf32>
    %c5 = arith.constant 5 : index
    %c0_34 = arith.constant 0 : index
    %57 = vector.load %arg11[%c5, %c0_34] : memref<16x1024xf32, #tpu.memory_space<vmem>>, vector<1x9xf32>
    %cst_35 = arith.constant dense<0.000000e+00> : vector<2x9xf32>
    %58 = tpu.matmul %55, %56, %cst_35 {dimension_numbers = #tpu.dot_dimension_numbers<[1], [0], [0], [1], [0, 0, 1, 1], [], []>} : vector<2x256xf32>, vector<256x9xf32>, vector<2x9xf32> -> vector<2x9xf32>
    %59 = vector.broadcast %57 : vector<1x9xf32> to vector<2x9xf32>
    %60 = arith.addf %58, %59 : vector<2x9xf32>
    %61 = vector.shape_cast %12 : vector<256x3xf32> to vector<2x128x3xf32>
    %62 = vector.shape_cast %60 : vector<2x9xf32> to vector<2x1x9xf32>
    %63 = vector.extract_strided_slice %61 {offsets = [0, 0, 0], sizes = [2, 128, 1], strides = [1, 1, 1]} : vector<2x128x3xf32> to vector<2x128x1xf32>
    %64 = vector.extract_strided_slice %62 {offsets = [0, 0, 0], sizes = [2, 1, 3], strides = [1, 1, 1]} : vector<2x1x9xf32> to vector<2x1x3xf32>
    %65 = vector.broadcast %63 : vector<2x128x1xf32> to vector<2x128x3xf32>
    %66 = vector.broadcast %64 : vector<2x1x3xf32> to vector<2x128x3xf32>
    %67 = arith.mulf %65, %66 : vector<2x128x3xf32>
    %68 = vector.extract_strided_slice %61 {offsets = [0, 0, 1], sizes = [2, 128, 1], strides = [1, 1, 1]} : vector<2x128x3xf32> to vector<2x128x1xf32>
    %69 = vector.extract_strided_slice %62 {offsets = [0, 0, 3], sizes = [2, 1, 3], strides = [1, 1, 1]} : vector<2x1x9xf32> to vector<2x1x3xf32>
    %70 = vector.broadcast %68 : vector<2x128x1xf32> to vector<2x128x3xf32>
    %71 = vector.broadcast %69 : vector<2x1x3xf32> to vector<2x128x3xf32>
    %72 = arith.mulf %70, %71 : vector<2x128x3xf32>
    %73 = arith.addf %67, %72 : vector<2x128x3xf32>
    %74 = vector.extract_strided_slice %61 {offsets = [0, 0, 2], sizes = [2, 128, 1], strides = [1, 1, 1]} : vector<2x128x3xf32> to vector<2x128x1xf32>
    %75 = vector.extract_strided_slice %62 {offsets = [0, 0, 6], sizes = [2, 1, 3], strides = [1, 1, 1]} : vector<2x1x9xf32> to vector<2x1x3xf32>
    %76 = vector.broadcast %74 : vector<2x128x1xf32> to vector<2x128x3xf32>
    %77 = vector.broadcast %75 : vector<2x1x3xf32> to vector<2x128x3xf32>
    %78 = arith.mulf %76, %77 : vector<2x128x3xf32>
    %79 = arith.addf %73, %78 : vector<2x128x3xf32>
    %80 = vector.shape_cast %79 : vector<2x128x3xf32> to vector<256x3xf32>
    %c0_36 = arith.constant 0 : index
    %c0_37 = arith.constant 0 : index
    %81 = vector.load %arg3[%c0_36, %c0_37] : memref<3x64xf32, #tpu.memory_space<vmem>>, vector<3x64xf32>
    %c6 = arith.constant 6 : index
    %c0_38 = arith.constant 0 : index
    %82 = vector.load %arg11[%c6, %c0_38] : memref<16x1024xf32, #tpu.memory_space<vmem>>, vector<1x64xf32>
    %cst_39 = arith.constant dense<0.000000e+00> : vector<256x64xf32>
    %83 = tpu.matmul %80, %81, %cst_39 {dimension_numbers = #tpu.dot_dimension_numbers<[1], [0], [0], [1], [0, 0, 1, 1], [], []>} : vector<256x3xf32>, vector<3x64xf32>, vector<256x64xf32> -> vector<256x64xf32>
    %84 = vector.broadcast %82 : vector<1x64xf32> to vector<256x64xf32>
    %85 = arith.addf %83, %84 : vector<256x64xf32>
    %cst_40 = arith.constant 0.000000e+00 : f32
    %86 = vector.broadcast %cst_40 : f32 to vector<256x64xf32>
    %87 = arith.maximumf %85, %86 : vector<256x64xf32>
    %88 = arith.truncf %87 : vector<256x64xf32> to vector<256x64xbf16>
    %c7 = arith.constant 7 : index
    %c0_41 = arith.constant 0 : index
    %89 = vector.load %arg11[%c7, %c0_41] : memref<16x1024xf32, #tpu.memory_space<vmem>>, vector<1x128xf32>
    %cst_42 = arith.constant dense<0.000000e+00> : vector<256x128xf32>
    %90 = tpu.matmul %88, %7, %cst_42 {dimension_numbers = #tpu.dot_dimension_numbers<[1], [0], [0], [1], [0, 0, 1, 1], [], []>} : vector<256x64xbf16>, vector<64x128xbf16>, vector<256x128xf32> -> vector<256x128xf32>
    %91 = vector.broadcast %89 : vector<1x128xf32> to vector<256x128xf32>
    %92 = arith.addf %90, %91 : vector<256x128xf32>
    %cst_43 = arith.constant 0.000000e+00 : f32
    %93 = vector.broadcast %cst_43 : f32 to vector<256x128xf32>
    %94 = arith.maximumf %92, %93 : vector<256x128xf32>
    %95 = arith.truncf %94 : vector<256x128xf32> to vector<256x128xbf16>
    %c8 = arith.constant 8 : index
    %c0_44 = arith.constant 0 : index
    %96 = vector.load %arg11[%c8, %c0_44] : memref<16x1024xf32, #tpu.memory_space<vmem>>, vector<1x1024xf32>
    %cst_45 = arith.constant dense<0.000000e+00> : vector<256x1024xf32>
    %97 = tpu.matmul %95, %9, %cst_45 {dimension_numbers = #tpu.dot_dimension_numbers<[1], [0], [0], [1], [0, 0, 1, 1], [], []>} : vector<256x128xbf16>, vector<128x1024xbf16>, vector<256x1024xf32> -> vector<256x1024xf32>
    %98 = vector.broadcast %96 : vector<1x1024xf32> to vector<256x1024xf32>
    %99 = arith.addf %97, %98 : vector<256x1024xf32>
    %100 = vector.shape_cast %99 : vector<256x1024xf32> to vector<2x128x1024xf32>
    %cst_46 = arith.constant dense<0xFF800000> : vector<2x1024xf32>
    %101 = vector.multi_reduction <maximumf>, %100, %cst_46 [1] : vector<2x128x1024xf32> to vector<2x1024xf32>
    %c2_i32_47 = arith.constant 2 : i32
    %102 = tpu.memref_slice %arg21[%c2_i32_47] : memref<3x!tpu.dma_semaphore, #tpu.memory_space<semaphore_mem>> -> memref<1x!tpu.dma_semaphore, #tpu.memory_space<semaphore_mem>>
    %103 = tpu.memref_squeeze %102 : memref<1x!tpu.dma_semaphore, #tpu.memory_space<semaphore_mem>> -> memref<!tpu.dma_semaphore, #tpu.memory_space<semaphore_mem>>
    tpu.wait_dma2 semaphore(%103 : memref<!tpu.dma_semaphore, #tpu.memory_space<semaphore_mem>>) src(%arg14 : memref<1024x128xbf16, #tpu.memory_space<any>>) dst(%arg20 : memref<1024x128xbf16, #tpu.memory_space<vmem>>)
    %104 = arith.truncf %101 : vector<2x1024xf32> to vector<2x1024xbf16>
    %c0_48 = arith.constant 0 : index
    %c0_49 = arith.constant 0 : index
    %105 = vector.load %arg20[%c0_48, %c0_49] : memref<1024x128xbf16, #tpu.memory_space<vmem>>, vector<1024x128xbf16>
    %c9 = arith.constant 9 : index
    %c0_50 = arith.constant 0 : index
    %106 = vector.load %arg11[%c9, %c0_50] : memref<16x1024xf32, #tpu.memory_space<vmem>>, vector<1x128xf32>
    %cst_51 = arith.constant dense<0.000000e+00> : vector<2x128xf32>
    %107 = tpu.matmul %104, %105, %cst_51 {dimension_numbers = #tpu.dot_dimension_numbers<[1], [0], [0], [1], [0, 0, 1, 1], [], []>} : vector<2x1024xbf16>, vector<1024x128xbf16>, vector<2x128xf32> -> vector<2x128xf32>
    %108 = vector.broadcast %106 : vector<1x128xf32> to vector<2x128xf32>
    %109 = arith.addf %107, %108 : vector<2x128xf32>
    %110 = arith.truncf %87 : vector<256x64xf32> to vector<256x64xbf16>
    %c0_52 = arith.constant 0 : index
    %c0_53 = arith.constant 0 : index
    %111 = vector.load %arg7[%c0_52, %c0_53] : memref<64x128xbf16, #tpu.memory_space<vmem>>, vector<64x128xbf16>
    %cst_54 = arith.constant dense<0.000000e+00> : vector<256x128xf32>
    %112 = tpu.matmul %110, %111, %cst_54 {dimension_numbers = #tpu.dot_dimension_numbers<[1], [0], [0], [1], [0, 0, 1, 1], [], []>} : vector<256x64xbf16>, vector<64x128xbf16>, vector<256x128xf32> -> vector<256x128xf32>
    %113 = vector.shape_cast %112 : vector<256x128xf32> to vector<2x128x128xf32>
    %114 = vector.shape_cast %109 : vector<2x128xf32> to vector<2x1x128xf32>
    %115 = vector.broadcast %114 : vector<2x1x128xf32> to vector<2x128x128xf32>
    %116 = arith.addf %113, %115 : vector<2x128x128xf32>
    %cst_55 = arith.constant 0.000000e+00 : f32
    %117 = vector.broadcast %cst_55 : f32 to vector<2x128x128xf32>
    %118 = arith.maximumf %116, %117 : vector<2x128x128xf32>
    %119 = vector.shape_cast %118 : vector<2x128x128xf32> to vector<256x128xf32>
    %120 = arith.truncf %119 : vector<256x128xf32> to vector<256x128xbf16>
    %c0_56 = arith.constant 0 : index
    %c0_57 = arith.constant 0 : index
    %121 = vector.load %arg8[%c0_56, %c0_57] : memref<128x128xbf16, #tpu.memory_space<vmem>>, vector<128x128xbf16>
    %c10 = arith.constant 10 : index
    %c0_58 = arith.constant 0 : index
    %122 = vector.load %arg11[%c10, %c0_58] : memref<16x1024xf32, #tpu.memory_space<vmem>>, vector<1x128xf32>
    %cst_59 = arith.constant dense<0.000000e+00> : vector<256x128xf32>
    %123 = tpu.matmul %120, %121, %cst_59 {dimension_numbers = #tpu.dot_dimension_numbers<[1], [0], [0], [1], [0, 0, 1, 1], [], []>} : vector<256x128xbf16>, vector<128x128xbf16>, vector<256x128xf32> -> vector<256x128xf32>
    %124 = vector.broadcast %122 : vector<1x128xf32> to vector<256x128xf32>
    %125 = arith.addf %123, %124 : vector<256x128xf32>
    %cst_60 = arith.constant 0.000000e+00 : f32
    %126 = vector.broadcast %cst_60 : f32 to vector<256x128xf32>
    %127 = arith.maximumf %125, %126 : vector<256x128xf32>
    %128 = arith.truncf %127 : vector<256x128xf32> to vector<256x128xbf16>
    %c0_61 = arith.constant 0 : index
    %c0_62 = arith.constant 0 : index
    %129 = vector.load %arg9[%c0_61, %c0_62] : memref<128x128xbf16, #tpu.memory_space<vmem>>, vector<128x128xbf16>
    %c11 = arith.constant 11 : index
    %c0_63 = arith.constant 0 : index
    %130 = vector.load %arg11[%c11, %c0_63] : memref<16x1024xf32, #tpu.memory_space<vmem>>, vector<1x128xf32>
    %cst_64 = arith.constant dense<0.000000e+00> : vector<256x128xf32>
    %131 = tpu.matmul %128, %129, %cst_64 {dimension_numbers = #tpu.dot_dimension_numbers<[1], [0], [0], [1], [0, 0, 1, 1], [], []>} : vector<256x128xbf16>, vector<128x128xbf16>, vector<256x128xf32> -> vector<256x128xf32>
    %132 = vector.broadcast %130 : vector<1x128xf32> to vector<256x128xf32>
    %133 = arith.addf %131, %132 : vector<256x128xf32>
    %cst_65 = arith.constant 0.000000e+00 : f32
    %134 = vector.broadcast %cst_65 : f32 to vector<256x128xf32>
    %135 = arith.maximumf %133, %134 : vector<256x128xf32>
    %136 = arith.truncf %135 : vector<256x128xf32> to vector<256x128xbf16>
    %c0_66 = arith.constant 0 : index
    %c0_67 = arith.constant 0 : index
    %137 = vector.load %arg10[%c0_66, %c0_67] : memref<128x128xbf16, #tpu.memory_space<vmem>>, vector<128x128xbf16>
    %c12 = arith.constant 12 : index
    %c0_68 = arith.constant 0 : index
    %138 = vector.load %arg11[%c12, %c0_68] : memref<16x1024xf32, #tpu.memory_space<vmem>>, vector<1x128xf32>
    %cst_69 = arith.constant dense<0.000000e+00> : vector<256x128xf32>
    %139 = tpu.matmul %136, %137, %cst_69 {dimension_numbers = #tpu.dot_dimension_numbers<[1], [0], [0], [1], [0, 0, 1, 1], [], []>} : vector<256x128xbf16>, vector<128x128xbf16>, vector<256x128xf32> -> vector<256x128xf32>
    %140 = vector.broadcast %138 : vector<1x128xf32> to vector<256x128xf32>
    %141 = arith.addf %139, %140 : vector<256x128xf32>
    %142 = vector.shape_cast %141 : vector<256x128xf32> to vector<2x128x128xf32>
    %143 = tpu.transpose %142, [0, 2, 1] : vector<2x128x128xf32> -> vector<2x128x128xf32>
    %144 = vector.extract_strided_slice %143 {offsets = [0, 0, 0], sizes = [2, 6, 128], strides = [1, 1, 1]} : vector<2x128x128xf32> to vector<2x6x128xf32>
    %c0_70 = arith.constant 0 : index
    %c0_71 = arith.constant 0 : index
    %c0_72 = arith.constant 0 : index
    %145 = vector.load %arg15[%c0_70, %c0_71, %c0_72] : memref<2x6x128xf32, #tpu.memory_space<vmem>>, vector<2x6x128xf32>
    tpu.vector_store %arg15[%c0_70, %c0_71, %c0_72], %144 {strides = array<i32>} : memref<2x6x128xf32, #tpu.memory_space<vmem>>, vector<2x6x128xf32>,
    %146 = vector.shape_cast %127 : vector<256x128xf32> to vector<2x128x128xf32>
    %147 = tpu.transpose %146, [0, 2, 1] : vector<2x128x128xf32> -> vector<2x128x128xf32>
    %148 = vector.extract_strided_slice %147 {offsets = [0, 0, 0], sizes = [2, 10, 128], strides = [1, 1, 1]} : vector<2x128x128xf32> to vector<2x10x128xf32>
    %c0_73 = arith.constant 0 : index
    %c0_74 = arith.constant 0 : index
    %c0_75 = arith.constant 0 : index
    %149 = vector.load %arg16[%c0_73, %c0_74, %c0_75] : memref<2x10x128xf32, #tpu.memory_space<vmem>>, vector<2x10x128xf32>
    tpu.vector_store %arg16[%c0_73, %c0_74, %c0_75], %148 {strides = array<i32>} : memref<2x10x128xf32, #tpu.memory_space<vmem>>, vector<2x10x128xf32>,
    %150 = vector.shape_cast %135 : vector<256x128xf32> to vector<2x128x128xf32>
    %151 = tpu.transpose %150, [0, 2, 1] : vector<2x128x128xf32> -> vector<2x128x128xf32>
    %152 = vector.extract_strided_slice %151 {offsets = [0, 0, 0], sizes = [2, 8, 128], strides = [1, 1, 1]} : vector<2x128x128xf32> to vector<2x8x128xf32>
    %c0_76 = arith.constant 0 : index
    %c0_77 = arith.constant 0 : index
    %c0_78 = arith.constant 0 : index
    %153 = vector.load %arg17[%c0_76, %c0_77, %c0_78] : memref<2x8x128xf32, #tpu.memory_space<vmem>>, vector<2x8x128xf32>
    tpu.vector_store %arg17[%c0_76, %c0_77, %c0_78], %152 {strides = array<i32>} : memref<2x8x128xf32, #tpu.memory_space<vmem>>, vector<2x8x128xf32>,
    return
  }
  func.func @transform_0(%arg0: i32) -> (i32, i32, i32) {
    %c0_i32 = arith.constant 0 : i32
    %c0_i32_0 = arith.constant 0 : i32
    %c0_i32_1 = arith.constant 0 : i32
    return %arg0, %c0_i32, %c0_i32_0 : i32, i32, i32
  }
  func.func @transform_1(%arg0: i32) -> (i32, i32) {
    %c0_i32 = arith.constant 0 : i32
    %c0_i32_0 = arith.constant 0 : i32
    %c0_i32_1 = arith.constant 0 : i32
    return %c0_i32, %c0_i32_0 : i32, i32
  }
  func.func @transform_2(%arg0: i32) -> (i32, i32) {
    %c0_i32 = arith.constant 0 : i32
    %c0_i32_0 = arith.constant 0 : i32
    %c0_i32_1 = arith.constant 0 : i32
    return %c0_i32, %c0_i32_0 : i32, i32
  }
  func.func @transform_3(%arg0: i32) -> (i32, i32) {
    %c0_i32 = arith.constant 0 : i32
    %c0_i32_0 = arith.constant 0 : i32
    %c0_i32_1 = arith.constant 0 : i32
    return %c0_i32, %c0_i32_0 : i32, i32
  }
  func.func @transform_4(%arg0: i32) -> (i32, i32) {
    %c0_i32 = arith.constant 0 : i32
    %c0_i32_0 = arith.constant 0 : i32
    %c0_i32_1 = arith.constant 0 : i32
    return %c0_i32, %c0_i32_0 : i32, i32
  }
  func.func @transform_5(%arg0: i32) -> (i32, i32) {
    %c0_i32 = arith.constant 0 : i32
    %c0_i32_0 = arith.constant 0 : i32
    %c0_i32_1 = arith.constant 0 : i32
    return %c0_i32, %c0_i32_0 : i32, i32
  }
  func.func @transform_6(%arg0: i32) -> (i32, i32) {
    %c0_i32 = arith.constant 0 : i32
    %c0_i32_0 = arith.constant 0 : i32
    %c0_i32_1 = arith.constant 0 : i32
    return %c0_i32, %c0_i32_0 : i32, i32
  }
  func.func @transform_7(%arg0: i32) -> (i32, i32) {
    %c0_i32 = arith.constant 0 : i32
    %c0_i32_0 = arith.constant 0 : i32
    %c0_i32_1 = arith.constant 0 : i32
    return %c0_i32, %c0_i32_0 : i32, i32
  }
  func.func @transform_8(%arg0: i32) -> (i32, i32) {
    %c0_i32 = arith.constant 0 : i32
    %c0_i32_0 = arith.constant 0 : i32
    %c0_i32_1 = arith.constant 0 : i32
    return %c0_i32, %c0_i32_0 : i32, i32
  }
  func.func @transform_9(%arg0: i32) -> (i32, i32) {
    %c0_i32 = arith.constant 0 : i32
    %c0_i32_0 = arith.constant 0 : i32
    %c0_i32_1 = arith.constant 0 : i32
    return %c0_i32, %c0_i32_0 : i32, i32
  }
  func.func @transform_10(%arg0: i32) -> (i32, i32) {
    %c0_i32 = arith.constant 0 : i32
    %c0_i32_0 = arith.constant 0 : i32
    %c0_i32_1 = arith.constant 0 : i32
    return %c0_i32, %c0_i32_0 : i32, i32
  }
  func.func @transform_14(%arg0: i32) -> (i32, i32, i32) {
    %c0_i32 = arith.constant 0 : i32
    %c0_i32_0 = arith.constant 0 : i32
    %c0_i32_1 = arith.constant 0 : i32
    return %arg0, %c0_i32, %c0_i32_0 : i32, i32, i32
  }
  func.func @transform_15(%arg0: i32) -> (i32, i32, i32) {
    %c0_i32 = arith.constant 0 : i32
    %c0_i32_0 = arith.constant 0 : i32
    %c0_i32_1 = arith.constant 0 : i32
    return %arg0, %c0_i32, %c0_i32_0 : i32, i32, i32
  }
  func.func @transform_16(%arg0: i32) -> (i32, i32, i32) {
    %c0_i32 = arith.constant 0 : i32
    %c0_i32_0 = arith.constant 0 : i32
    %c0_i32_1 = arith.constant 0 : i32
    return %arg0, %c0_i32, %c0_i32_0 : i32, i32, i32
  }
}

</mosaic_0001>

<llo_original>
// kernel: pointnet_densefusion_forward.1
$region0: #{pointnet_densefusion_forward.1}
  #allocation0 [shape = 'u32[]', space=smem, size = 0x4, offset = 0x4, fixed_abs, tag = 'smem constant byte address 0x4 - core index']
  #allocation1 [shape = 'u32[144,128]{1,0:T(1,128)}', space=vmem, size = 0x12000, scoped, tag = 'internal scratch']
  #allocation2 [shape = 'bf16[1024,512]{1,0:T(16,128)(2,1)}', space=vmem, size = 0x100000, scoped, tag = 'scratch operand']
  #allocation3 [shape = 'bf16[512,256]{1,0:T(16,128)(2,1)}', space=vmem, size = 0x40000, scoped, tag = 'scratch operand']
  #allocation4 [shape = 'bf16[1024,128]{1,0:T(16,128)(2,1)}', space=vmem, size = 0x40000, scoped, tag = 'scratch operand']
  #allocation5 [shape = 's32[3]{0}', space=sflag, size = 0xc, scoped, tag = 'scratch operand']
  #allocation13 [shape = 's32[]', space=sflag, size = 0x4, offset = 0, fixed_abs, tag = 'sflag constant byte address 0x0 - dummy sync flag']
  #allocation15 [shape = 's32[]', space=sflag, size = 0x4, offset = 0, fixed_abs, tag = 'sflag constant byte address 0x0 - dummy sync flag']
  #allocation17 [shape = 's32[]', space=sflag, size = 0x4, offset = 0, fixed_abs, tag = 'sflag constant byte address 0x0 - dummy sync flag']
  #allocation18 [shape = 's32[]', space=sflag, size = 0x4, offset = 0, fixed_abs, tag = 'sflag constant byte address 0x0 - dummy sync flag']
  #allocation19 [shape = 'u32[]', space=smem, size = 0x4, offset = 0x44, fixed_abs, tag = 'smem constant byte address 0x44 - assertion arg 0']
  #allocation20 [shape = 'u32[]', space=smem, size = 0x4, offset = 0x48, fixed_abs, tag = 'smem constant byte address 0x48 - assertion arg 1']
  %s0 = inlined_call_operand.vmem [shape: f32[2,3,128], index: 0, kind: input, shape index: {}]
  %s1 = inlined_call_operand.vmem [shape: f32[3,64], index: 1, kind: input, shape index: {}]
  %s2 = inlined_call_operand.hbm [shape: f32[3,64], index: 2, kind: input, shape index: {}]
  %s3 = inlined_call_operand.vmem [shape: bf16[128,128], index: 3, kind: input, shape index: {}]
  %s4 = inlined_call_operand.hbm [shape: bf16[256,1024], index: 4, kind: input, shape index: {}]
  %s5 = inlined_call_operand.vmem [shape: f32[256,9], index: 5, kind: input, shape index: {}]
  %s6 = inlined_call_operand.hbm [shape: bf16[64,128], index: 6, kind: input, shape index: {}]
  %s7 = inlined_call_operand.vmem [shape: bf16[128,128], index: 7, kind: input, shape index: {}]
  %s8 = inlined_call_operand.vmem [shape: bf16[128,128], index: 8, kind: input, shape index: {}]
  %s9 = inlined_call_operand.hbm [shape: bf16[128,128], index: 9, kind: input, shape index: {}]
  %s10 = inlined_call_operand.vmem [shape: f32[16,1024], index: 10, kind: input, shape index: {}]
  %s11 = inlined_call_operand.hbm [shape: bf16[1024,512], index: 11, kind: input, shape index: {}]
  %s12 = inlined_call_operand.hbm [shape: bf16[512,256], index: 12, kind: input, shape index: {}]
  %s13 = inlined_call_operand.hbm [shape: bf16[1024,128], index: 13, kind: input, shape index: {}]
  %s14 = inlined_call_operand.vmem [shape: f32[2,6,128], index: 14, kind: output, shape index: {0}]
  %s15 = inlined_call_operand.vmem [shape: f32[2,10,128], index: 15, kind: output, shape index: {1}]
  %s16 = inlined_call_operand.vmem [shape: f32[2,8,128], index: 16, kind: output, shape index: {2}]
  %17 = xla_tuple %s14, %s15, %s16
  %s18 = sld [smem:[#allocation0]]
  $region90: #{pointnet_densefusion_forward.1} parent=0
    _
  %s20 = ssub.s32 1, %s18
  %s21 = scalar_select 0, %s20, %s18
  $region1: #{pointnet_densefusion_forward.1} parent=0
    #allocation6 [shape = 'u8[2048]{0}', space=vmem, size = 0x800, scoped, tag = 'input window, operand 2, single buffered']
    #allocation7 [shape = 's32[1]{0}', space=sflag, size = 0x4, scoped, tag = 'scoped memory for pointnet_densefusion_forward.1']
    #allocation8 [shape = 'u8[524288]{0}', space=vmem, size = 0x80000, scoped, tag = 'input window, operand 4, single buffered']
    #allocation9 [shape = 's32[1]{0}', space=sflag, size = 0x4, scoped, tag = 'scoped memory for pointnet_densefusion_forward.1']
    #allocation10 [shape = 'u8[16384]{0}', space=vmem, size = 0x4000, scoped, tag = 'input window, operand 6, single buffered']
    #allocation11 [shape = 'u8[32768]{0}', space=vmem, size = 0x8000, scoped, tag = 'input window, operand 9, single buffered']
    #allocation12 [shape = 's32[1]{0}', space=sflag, size = 0x4, scoped, tag = 'scoped memory for pointnet_densefusion_forward.1']
    #allocation14 [shape = 'u32[9]{0}', space=smem, size = 0x24, scoped, tag = 'DMA stride descriptor']
    #allocation16 [shape = 'u32[9]{0}', space=smem, size = 0x24, scoped, tag = 'DMA stride descriptor']
    %22 = vsyncpa [#allocation7], 0
    %23 = vsyncpa [#allocation9], 0
    %24 = vsyncpa [#allocation12], 0
    // Predicated region
    $region2: #{pointnet_densefusion_forward.1} parent=1 // pred_check
      _
    $region3: #{pointnet_densefusion_forward.1} parent=1 // pred_check_branch
      %26 = sbr.rel (0) target = $region5
    $region4: #{pointnet_densefusion_forward.1} parent=1 // pred_region
      _
    $region5: #{pointnet_densefusion_forward.1} parent=1 // pred_fallthru
      _
    // Predicated region
    $region6: #{pointnet_densefusion_forward.1} parent=1 // pred_check
      _
    $region7: #{pointnet_densefusion_forward.1} parent=1 // pred_check_branch
      %28 = sbr.rel (0) target = $region9
    $region8: #{pointnet_densefusion_forward.1} parent=1 // pred_region
      _
    $region9: #{pointnet_densefusion_forward.1} parent=1 // pred_fallthru
      _
    // Predicated region
    $region10: #{pointnet_densefusion_forward.1} parent=1 // pred_check
      _
    $region11: #{pointnet_densefusion_forward.1} parent=1 // pred_check_branch
      %30 = sbr.rel (0) target = $region13
    $region12: #{pointnet_densefusion_forward.1} parent=1 // pred_region
      %s32 = ssub.s32 64, 64
      %33 = vsyncadd [#allocation7], %s32
      %s35 = sshll.u32 [#allocation6], 4
      %s36 = int_to_ptr.vmem [resolvable:$true] %s35
      %38 = dma.hbm_to_vmem [thread:$0]  %s2, 64, %s36, [#allocation7]
    $region13: #{pointnet_densefusion_forward.1} parent=1 // pred_fallthru
      _
    // Predicated region
    $region14: #{pointnet_densefusion_forward.1} parent=1 // pred_check
      _
    $region15: #{pointnet_densefusion_forward.1} parent=1 // pred_check_branch
      %40 = sbr.rel (0) target = $region17
    $region16: #{pointnet_densefusion_forward.1} parent=1 // pred_region
      _
    $region17: #{pointnet_densefusion_forward.1} parent=1 // pred_fallthru
      _
    // Predicated region
    $region18: #{pointnet_densefusion_forward.1} parent=1 // pred_check
      _
    $region19: #{pointnet_densefusion_forward.1} parent=1 // pred_check_branch
      %42 = sbr.rel (0) target = $region21
    $region20: #{pointnet_densefusion_forward.1} parent=1 // pred_region
      %s44 = ssub.s32 16384, 16384
      %45 = vsyncadd [#allocation9], %s44
      %s46 = sshll.u32 [#allocation8], 4
      %s47 = int_to_ptr.vmem [resolvable:$true] %s46
      %52 = dma.hbm_to_vmem [thread:$0]  %s4, 16384, %s47, [#allocation9], 512, 512, 32
    $region21: #{pointnet_densefusion_forward.1} parent=1 // pred_fallthru
      _
    // Predicated region
    $region22: #{pointnet_densefusion_forward.1} parent=1 // pred_check
      _
    $region23: #{pointnet_densefusion_forward.1} parent=1 // pred_check_branch
      %54 = sbr.rel (0) target = $region25
    $region24: #{pointnet_densefusion_forward.1} parent=1 // pred_region
      _
    $region25: #{pointnet_densefusion_forward.1} parent=1 // pred_fallthru
      _
    // Predicated region
    $region26: #{pointnet_densefusion_forward.1} parent=1 // pred_check
      _
    $region27: #{pointnet_densefusion_forward.1} parent=1 // pred_check_branch
      %56 = sbr.rel (0) target = $region29
    $region28: #{pointnet_densefusion_forward.1} parent=1 // pred_region
      %s58 = ssub.s32 512, 512
      %59 = vsyncadd [#allocation9], %s58
      %s60 = sshll.u32 [#allocation10], 4
      %s61 = int_to_ptr.vmem [resolvable:$true] %s60
      %66 = dma.hbm_to_vmem [thread:$0]  %s6, 512, %s61, [#allocation9], 64, 64, 4
    $region29: #{pointnet_densefusion_forward.1} parent=1 // pred_fallthru
      _
    // Predicated region
    $region30: #{pointnet_densefusion_forward.1} parent=1 // pred_check
      _
    $region31: #{pointnet_densefusion_forward.1} parent=1 // pred_check_branch
      %68 = sbr.rel (0) target = $region33
    $region32: #{pointnet_densefusion_forward.1} parent=1 // pred_region
      _
    $region33: #{pointnet_densefusion_forward.1} parent=1 // pred_fallthru
      _
    // Predicated region
    $region34: #{pointnet_densefusion_forward.1} parent=1 // pred_check
      _
    $region35: #{pointnet_densefusion_forward.1} parent=1 // pred_check_branch
      %70 = sbr.rel (0) target = $region37
    $region36: #{pointnet_densefusion_forward.1} parent=1 // pred_region
      _
    $region37: #{pointnet_densefusion_forward.1} parent=1 // pred_fallthru
      _
    // Predicated region
    $region38: #{pointnet_densefusion_forward.1} parent=1 // pred_check
      _
    $region39: #{pointnet_densefusion_forward.1} parent=1 // pred_check_branch
      %72 = sbr.rel (0) target = $region41
    $region40: #{pointnet_densefusion_forward.1} parent=1 // pred_region
      %s74 = ssub.s32 1024, 1024
      %75 = vsyncadd [#allocation12], %s74
      %s76 = sshll.u32 [#allocation11], 4
      %s77 = int_to_ptr.vmem [resolvable:$true] %s76
      %82 = dma.hbm_to_vmem [thread:$0]  %s9, 1024, %s77, [#allocation12], 64, 64, 4
    $region41: #{pointnet_densefusion_forward.1} parent=1 // pred_fallthru
      _
    // Predicated region
    $region42: #{pointnet_densefusion_forward.1} parent=1 // pred_check
      _
    $region43: #{pointnet_densefusion_forward.1} parent=1 // pred_check_branch
      %84 = sbr.rel (0) target = $region45
    $region44: #{pointnet_densefusion_forward.1} parent=1 // pred_region
      _
    $region45: #{pointnet_densefusion_forward.1} parent=1 // pred_fallthru
      _
    // Predicated region
    $region46: #{pointnet_densefusion_forward.1} parent=1 // pred_check
      _
    $region47: #{pointnet_densefusion_forward.1} parent=1 // pred_check_branch
      %86 = sbr.rel (0) target = $region49
    $region48: #{pointnet_densefusion_forward.1} parent=1 // pred_region
      %87 = dma.done [#allocation7], 64
    $region49: #{pointnet_densefusion_forward.1} parent=1 // pred_fallthru
      _
    // Predicated region
    $region50: #{pointnet_densefusion_forward.1} parent=1 // pred_check
      _
    $region51: #{pointnet_densefusion_forward.1} parent=1 // pred_check_branch
      %89 = sbr.rel (0) target = $region53
    $region52: #{pointnet_densefusion_forward.1} parent=1 // pred_region
      %90 = dma.done [#allocation9], 16384
    $region53: #{pointnet_densefusion_forward.1} parent=1 // pred_fallthru
      _
    // Predicated region
    $region54: #{pointnet_densefusion_forward.1} parent=1 // pred_check
      _
    $region55: #{pointnet_densefusion_forward.1} parent=1 // pred_check_branch
      %92 = sbr.rel (0) target = $region57
    $region56: #{pointnet_densefusion_forward.1} parent=1 // pred_region
      %93 = dma.done [#allocation9], 512
    $region57: #{pointnet_densefusion_forward.1} parent=1 // pred_fallthru
      _
    // Predicated region
    $region58: #{pointnet_densefusion_forward.1} parent=1 // pred_check
      _
    $region59: #{pointnet_densefusion_forward.1} parent=1 // pred_check_branch
      %95 = sbr.rel (0) target = $region61
    $region60: #{pointnet_densefusion_forward.1} parent=1 // pred_region
      %96 = dma.done [#allocation12], 1024
    $region61: #{pointnet_densefusion_forward.1} parent=1 // pred_fallthru
      _
    %s99 = sshll.u32 1, 14
    %s100 = sxor.u32 4294967295, %s99
    %s102 = sld [smem:[#allocation0]]
    %s103 = sadd.s32 2, %s102
    %s105 = sshll.u32 7, 26
    %s106 = sxor.u32 4294967295, %s105
    %s107 = sand.u32 0, %s106
    %s108 = sshll.u32 %s103, 26
    %s109 = sor.u32 %s107, %s108
    %s110 = sshll.u32 [#allocation2], 4
    %s111 = int_to_ptr.vmem [resolvable:$true] %s110
    %114 = sst [smem:[#allocation14]] 512
    %s115 = scalar_lea.smem [#allocation14], 1
    %116 = sst [smem:[%s115]] 512
    %s117 = scalar_lea.smem [#allocation14], 2
    %118 = sst [smem:[%s117]] 4
    %s119 = scalar_lea.smem [#allocation14], 3
    %120 = sst [smem:[%s119]] 64
    %s121 = scalar_lea.smem [#allocation14], 4
    %122 = sst [smem:[%s121]] 128
    %s123 = scalar_lea.smem [#allocation14], 5
    %124 = sst [smem:[%s123]] 2
    %s125 = scalar_lea.smem [#allocation14], 6
    %126 = sst [smem:[%s125]] 256
    %s127 = scalar_lea.smem [#allocation14], 7
    %128 = sst [smem:[%s127]] 64
    %s129 = scalar_lea.smem [#allocation14], 8
    %130 = sst [smem:[%s129]] 4
    %132 = dma.general %s11, 32768, %s111, [#allocation5], [#allocation13], [#allocation14], %s109, 0
    %s133 = scalar_lea.sflag [#allocation5], 1
    %s135 = sshll.u32 1, 14
    %s136 = sxor.u32 4294967295, %s135
    %s138 = sadd.s32 2, %s102
    %s140 = sshll.u32 7, 26
    %s141 = sxor.u32 4294967295, %s140
    %s142 = sand.u32 0, %s141
    %s143 = sshll.u32 %s138, 26
    %s144 = sor.u32 %s142, %s143
    %s145 = sshll.u32 [#allocation3], 4
    %s146 = int_to_ptr.vmem [resolvable:$true] %s145
    %149 = sst [smem:[#allocation16]] 256
    %s150 = scalar_lea.smem [#allocation16], 1
    %151 = sst [smem:[%s150]] 256
    %s152 = scalar_lea.smem [#allocation16], 2
    %153 = sst [smem:[%s152]] 2
    %s154 = scalar_lea.smem [#allocation16], 3
    %155 = sst [smem:[%s154]] 64
    %s156 = scalar_lea.smem [#allocation16], 4
    %157 = sst [smem:[%s156]] 128
    %s158 = scalar_lea.smem [#allocation16], 5
    %159 = sst [smem:[%s158]] 2
    %s160 = scalar_lea.smem [#allocation16], 6
    %161 = sst [smem:[%s160]] 128
    %s162 = scalar_lea.smem [#allocation16], 7
    %163 = sst [smem:[%s162]] 64
    %s164 = scalar_lea.smem [#allocation16], 8
    %165 = sst [smem:[%s164]] 4
    %167 = dma.general %s12, 8192, %s146, %s133, [#allocation15], [#allocation16], %s144, 0
    %s168 = scalar_lea.sflag [#allocation5], 2
    // Predicated region
    $region62: #{pointnet_densefusion_forward.1} parent=1 // pred_check
      _
    $region63: #{pointnet_densefusion_forward.1} parent=1 // pred_check_branch
      %170 = sbr.rel target = $region65
    $region64: #{pointnet_densefusion_forward.1} parent=1 // pred_region
      %171 = sst [smem:[#allocation19]] [#allocation18]
      %172 = sst [smem:[#allocation20]] [#allocation17]
    $region65: #{pointnet_densefusion_forward.1} parent=1 // pred_fallthru
      _
    %174 = shalt.err (0)
    %s176 = sshll.u32 [#allocation4], 4
    %s177 = int_to_ptr.vmem [resolvable:$true] %s176
    %179 = dma.hbm_to_vmem [thread:$0]  %s13, 8192, %s177, %s168
    %v180 = vld [vmem:[%s3] sm:$0xf]
    %v181 = vld [vmem:[%s3 + $0x4] sm:$0xf]
    %v182 = vld [vmem:[%s3 + $0x8] sm:$0xf]
    %v183 = vld [vmem:[%s3 + $0xc] sm:$0xf]
    %v184 = vld [vmem:[%s3 + $0x10] sm:$0xf]
    %v185 = vld [vmem:[%s3 + $0x14] sm:$0xf]
    %v186 = vld [vmem:[%s3 + $0x18] sm:$0xf]
    %v187 = vld [vmem:[%s3 + $0x1c] sm:$0xf]
    %v188 = vld [vmem:[%s3 + $0x20] sm:$0xf]
    %v189 = vld [vmem:[%s3 + $0x24] sm:$0xf]
    %v190 = vld [vmem:[%s3 + $0x28] sm:$0xf]
    %v191 = vld [vmem:[%s3 + $0x2c] sm:$0xf]
    %v192 = vld [vmem:[%s3 + $0x30] sm:$0xf]
    %v193 = vld [vmem:[%s3 + $0x34] sm:$0xf]
    %v194 = vld [vmem:[%s3 + $0x38] sm:$0xf]
    %v195 = vld [vmem:[%s3 + $0x3c] sm:$0xf]
    %v196 = vld [vmem:[#allocation8] sm:$0xff]
    %v197 = vld [vmem:[#allocation8 + $0x8] sm:$0xff]
    %v198 = vld [vmem:[#allocation8 + $0x10] sm:$0xff]
    %v199 = vld [vmem:[#allocation8 + $0x18] sm:$0xff]
    %v200 = vld [vmem:[#allocation8 + $0x20] sm:$0xff]
    %v201 = vld [vmem:[#allocation8 + $0x28] sm:$0xff]
    %v202 = vld [vmem:[#allocation8 + $0x30] sm:$0xff]
    %v203 = vld [vmem:[#allocation8 + $0x38] sm:$0xff]
    %v204 = vld [vmem:[#allocation8 + $0x40] sm:$0xff]
    %v205 = vld [vmem:[#allocation8 + $0x48] sm:$0xff]
    %v206 = vld [vmem:[#allocation8 + $0x50] sm:$0xff]
    %v207 = vld [vmem:[#allocation8 + $0x58] sm:$0xff]
    %v208 = vld [vmem:[#allocation8 + $0x60] sm:$0xff]
    %v209 = vld [vmem:[#allocation8 + $0x68] sm:$0xff]
    %v210 = vld [vmem:[#allocation8 + $0x70] sm:$0xff]
    %v211 = vld [vmem:[#allocation8 + $0x78] sm:$0xff]
    %v212 = vld [vmem:[#allocation8 + $0x80] sm:$0xff]
    %v213 = vld [vmem:[#allocation8 + $0x88] sm:$0xff]
    %v214 = vld [vmem:[#allocation8 + $0x90] sm:$0xff]
    %v215 = vld [vmem:[#allocation8 + $0x98] sm:$0xff]
    %v216 = vld [vmem:[#allocation8 + $0xa0] sm:$0xff]
    %v217 = vld [vmem:[#allocation8 + $0xa8] sm:$0xff]
    %v218 = vld [vmem:[#allocation8 + $0xb0] sm:$0xff]
    %v219 = vld [vmem:[#allocation8 + $0xb8] sm:$0xff]
    %v220 = vld [vmem:[#allocation8 + $0xc0] sm:$0xff]
    %v221 = vld [vmem:[#allocation8 + $0xc8] sm:$0xff]
    %v222 = vld [vmem:[#allocation8 + $0xd0] sm:$0xff]
    %v223 = vld [vmem:[#allocation8 + $0xd8] sm:$0xff]
    %v224 = vld [vmem:[#allocation8 + $0xe0] sm:$0xff]
    %v225 = vld [vmem:[#allocation8 + $0xe8] sm:$0xff]
    %v226 = vld [vmem:[#allocation8 + $0xf0] sm:$0xff]
    %v227 = vld [vmem:[#allocation8 + $0xf8] sm:$0xff]
    %v228 = vld [vmem:[#allocation8 + $0x100] sm:$0xff]
    %v229 = vld [vmem:[#allocation8 + $0x108] sm:$0xff]
    %v230 = vld [vmem:[#allocation8 + $0x110] sm:$0xff]
    %v231 = vld [vmem:[#allocation8 + $0x118] sm:$0xff]
    %v232 = vld [vmem:[#allocation8 + $0x120] sm:$0xff]
    %v233 = vld [vmem:[#allocation8 + $0x128] sm:$0xff]
    %v234 = vld [vmem:[#allocation8 + $0x130] sm:$0xff]
    %v235 = vld [vmem:[#allocation8 + $0x138] sm:$0xff]
    %v236 = vld [vmem:[#allocation8 + $0x140] sm:$0xff]
    %v237 = vld [vmem:[#allocation8 + $0x148] sm:$0xff]
    %v238 = vld [vmem:[#allocation8 + $0x150] sm:$0xff]
    %v239 = vld [vmem:[#allocation8 + $0x158] sm:$0xff]
    %v240 = vld [vmem:[#allocation8 + $0x160] sm:$0xff]
    %v241 = vld [vmem:[#allocation8 + $0x168] sm:$0xff]
    %v242 = vld [vmem:[#allocation8 + $0x170] sm:$0xff]
    %v243 = vld [vmem:[#allocation8 + $0x178] sm:$0xff]
    %v244 = vld [vmem:[#allocation8 + $0x180] sm:$0xff]
    %v245 = vld [vmem:[#allocation8 + $0x188] sm:$0xff]
    %v246 = vld [vmem:[#allocation8 + $0x190] sm:$0xff]
    %v247 = vld [vmem:[#allocation8 + $0x198] sm:$0xff]
    %v248 = vld [vmem:[#allocation8 + $0x1a0] sm:$0xff]
    %v249 = vld [vmem:[#allocation8 + $0x1a8] sm:$0xff]
    %v250 = vld [vmem:[#allocation8 + $0x1b0] sm:$0xff]
    %v251 = vld [vmem:[#allocation8 + $0x1b8] sm:$0xff]
    %v252 = vld [vmem:[#allocation8 + $0x1c0] sm:$0xff]
    %v253 = vld [vmem:[#allocation8 + $0x1c8] sm:$0xff]
    %v254 = vld [vmem:[#allocation8 + $0x1d0] sm:$0xff]
    %v255 = vld [vmem:[#allocation8 + $0x1d8] sm:$0xff]
    %v256 = vld [vmem:[#allocation8 + $0x1e0] sm:$0xff]
    %v257 = vld [vmem:[#allocation8 + $0x1e8] sm:$0xff]
    %v258 = vld [vmem:[#allocation8 + $0x1f0] sm:$0xff]
    %v259 = vld [vmem:[#allocation8 + $0x1f8] sm:$0xff]
    %v260 = vld [vmem:[#allocation8 + $0x200] sm:$0xff]
    %v261 = vld [vmem:[#allocation8 + $0x208] sm:$0xff]
    %v262 = vld [vmem:[#allocation8 + $0x210] sm:$0xff]
    %v263 = vld [vmem:[#allocation8 + $0x218] sm:$0xff]
    %v264 = vld [vmem:[#allocation8 + $0x220] sm:$0xff]
    %v265 = vld [vmem:[#allocation8 + $0x228] sm:$0xff]
    %v266 = vld [vmem:[#allocation8 + $0x230] sm:$0xff]
    %v267 = vld [vmem:[#allocation8 + $0x238] sm:$0xff]
    %v268 = vld [vmem:[#allocation8 + $0x240] sm:$0xff]
    %v269 = vld [vmem:[#allocation8 + $0x248] sm:$0xff]
    %v270 = vld [vmem:[#allocation8 + $0x250] sm:$0xff]
    %v271 = vld [vmem:[#allocation8 + $0x258] sm:$0xff]
    %v272 = vld [vmem:[#allocation8 + $0x260] sm:$0xff]
    %v273 = vld [vmem:[#allocation8 + $0x268] sm:$0xff]
    %v274 = vld [vmem:[#allocation8 + $0x270] sm:$0xff]
    %v275 = vld [vmem:[#allocation8 + $0x278] sm:$0xff]
    %v276 = vld [vmem:[#allocation8 + $0x280] sm:$0xff]
    %v277 = vld [vmem:[#allocation8 + $0x288] sm:$0xff]
    %v278 = vld [vmem:[#allocation8 + $0x290] sm:$0xff]
    %v279 = vld [vmem:[#allocation8 + $0x298] sm:$0xff]
    %v280 = vld [vmem:[#allocation8 + $0x2a0] sm:$0xff]
    %v281 = vld [vmem:[#allocation8 + $0x2a8] sm:$0xff]
    %v282 = vld [vmem:[#allocation8 + $0x2b0] sm:$0xff]
    %v283 = vld [vmem:[#allocation8 + $0x2b8] sm:$0xff]
    %v284 = vld [vmem:[#allocation8 + $0x2c0] sm:$0xff]
    %v285 = vld [vmem:[#allocation8 + $0x2c8] sm:$0xff]
    %v286 = vld [vmem:[#allocation8 + $0x2d0] sm:$0xff]
    %v287 = vld [vmem:[#allocation8 + $0x2d8] sm:$0xff]
    %v288 = vld [vmem:[#allocation8 + $0x2e0] sm:$0xff]
    %v289 = vld [vmem:[#allocation8 + $0x2e8] sm:$0xff]
    %v290 = vld [vmem:[#allocation8 + $0x2f0] sm:$0xff]
    %v291 = vld [vmem:[#allocation8 + $0x2f8] sm:$0xff]
    %v292 = vld [vmem:[#allocation8 + $0x300] sm:$0xff]
    %v293 = vld [vmem:[#allocation8 + $0x308] sm:$0xff]
    %v294 = vld [vmem:[#allocation8 + $0x310] sm:$0xff]
    %v295 = vld [vmem:[#allocation8 + $0x318] sm:$0xff]
    %v296 = vld [vmem:[#allocation8 + $0x320] sm:$0xff]
    %v297 = vld [vmem:[#allocation8 + $0x328] sm:$0xff]
    %v298 = vld [vmem:[#allocation8 + $0x330] sm:$0xff]
    %v299 = vld [vmem:[#allocation8 + $0x338] sm:$0xff]
    %v300 = vld [vmem:[#allocation8 + $0x340] sm:$0xff]
    %v301 = vld [vmem:[#allocation8 + $0x348] sm:$0xff]
    %v302 = vld [vmem:[#allocation8 + $0x350] sm:$0xff]
    %v303 = vld [vmem:[#allocation8 + $0x358] sm:$0xff]
    %v304 = vld [vmem:[#allocation8 + $0x360] sm:$0xff]
    %v305 = vld [vmem:[#allocation8 + $0x368] sm:$0xff]
    %v306 = vld [vmem:[#allocation8 + $0x370] sm:$0xff]
    %v307 = vld [vmem:[#allocation8 + $0x378] sm:$0xff]
    %v308 = vld [vmem:[#allocation8 + $0x380] sm:$0xff]
    %v309 = vld [vmem:[#allocation8 + $0x388] sm:$0xff]
    %v310 = vld [vmem:[#allocation8 + $0x390] sm:$0xff]
    %v311 = vld [vmem:[#allocation8 + $0x398] sm:$0xff]
    %v312 = vld [vmem:[#allocation8 + $0x3a0] sm:$0xff]
    %v313 = vld [vmem:[#allocation8 + $0x3a8] sm:$0xff]
    %v314 = vld [vmem:[#allocation8 + $0x3b0] sm:$0xff]
    %v315 = vld [vmem:[#allocation8 + $0x3b8] sm:$0xff]
    %v316 = vld [vmem:[#allocation8 + $0x3c0] sm:$0xff]
    %v317 = vld [vmem:[#allocation8 + $0x3c8] sm:$0xff]
    %v318 = vld [vmem:[#allocation8 + $0x3d0] sm:$0xff]
    %v319 = vld [vmem:[#allocation8 + $0x3d8] sm:$0xff]
    %v320 = vld [vmem:[#allocation8 + $0x3e0] sm:$0xff]
    %v321 = vld [vmem:[#allocation8 + $0x3e8] sm:$0xff]
    %v322 = vld [vmem:[#allocation8 + $0x3f0] sm:$0xff]
    %v323 = vld [vmem:[#allocation8 + $0x3f8] sm:$0xff]
    %v324 = vld [vmem:[%s0] sm:$0x7]
    %v325 = vld [vmem:[%s0 + $0x4] sm:$0x7]
    %326 = vxpose.xlu0.b32.start [1/16] %v324, 128
    %327 = vxpose.xlu0.b32.cont [2/16] 0.0, 128
    %328 = vxpose.xlu0.b32.cont [3/16] 0.0, 128
    %329 = vxpose.xlu0.b32.cont [4/16] 0.0, 128
    %330 = vxpose.xlu0.b32.cont [5/16] 0.0, 128
    %331 = vxpose.xlu0.b32.cont [6/16] 0.0, 128
    %332 = vxpose.xlu0.b32.cont [7/16] 0.0, 128
    %333 = vxpose.xlu0.b32.cont [8/16] 0.0, 128
    %334 = vxpose.xlu0.b32.cont [9/16] 0.0, 128
    %335 = vxpose.xlu0.b32.cont [10/16] 0.0, 128
    %336 = vxpose.xlu0.b32.cont [11/16] 0.0, 128
    %337 = vxpose.xlu0.b32.cont [12/16] 0.0, 128
    %338 = vxpose.xlu0.b32.cont [13/16] 0.0, 128
    %339 = vxpose.xlu0.b32.cont [14/16] 0.0, 128
    %340 = vxpose.xlu0.b32.cont [15/16] 0.0, 128
    %341 = vxpose.xlu0.b32.end [16/16] 0.0, 128
    %v342 = vpop.trf.xlu0
    %v343 = vpop.trf.xlu0
    %v344 = vpop.trf.xlu0
    %v345 = vpop.trf.xlu0
    %v346 = vpop.trf.xlu0
    %v347 = vpop.trf.xlu0
    %v348 = vpop.trf.xlu0
    %v349 = vpop.trf.xlu0
    %v350 = vpop.trf.xlu0
    %v351 = vpop.trf.xlu0
    %v352 = vpop.trf.xlu0
    %v353 = vpop.trf.xlu0
    %v354 = vpop.trf.xlu0
    %v355 = vpop.trf.xlu0
    %v356 = vpop.trf.xlu0
    %v357 = vpop.trf.xlu0
    %358 = vxpose.xlu0.b32.start [1/16] %v325, 128
    %359 = vxpose.xlu0.b32.cont [2/16] 0.0, 128
    %360 = vxpose.xlu0.b32.cont [3/16] 0.0, 128
    %361 = vxpose.xlu0.b32.cont [4/16] 0.0, 128
    %362 = vxpose.xlu0.b32.cont [5/16] 0.0, 128
    %363 = vxpose.xlu0.b32.cont [6/16] 0.0, 128
    %364 = vxpose.xlu0.b32.cont [7/16] 0.0, 128
    %365 = vxpose.xlu0.b32.cont [8/16] 0.0, 128
    %366 = vxpose.xlu0.b32.cont [9/16] 0.0, 128
    %367 = vxpose.xlu0.b32.cont [10/16] 0.0, 128
    %368 = vxpose.xlu0.b32.cont [11/16] 0.0, 128
    %369 = vxpose.xlu0.b32.cont [12/16] 0.0, 128
    %370 = vxpose.xlu0.b32.cont [13/16] 0.0, 128
    %371 = vxpose.xlu0.b32.cont [14/16] 0.0, 128
    %372 = vxpose.xlu0.b32.cont [15/16] 0.0, 128
    %373 = vxpose.xlu0.b32.end [16/16] 0.0, 128
    %v374 = vpop.trf.xlu0
    %v375 = vpop.trf.xlu0
    %v376 = vpop.trf.xlu0
    %v377 = vpop.trf.xlu0
    %v378 = vpop.trf.xlu0
    %v379 = vpop.trf.xlu0
    %v380 = vpop.trf.xlu0
    %v381 = vpop.trf.xlu0
    %v382 = vpop.trf.xlu0
    %v383 = vpop.trf.xlu0
    %v384 = vpop.trf.xlu0
    %v385 = vpop.trf.xlu0
    %v386 = vpop.trf.xlu0
    %v387 = vpop.trf.xlu0
    %v388 = vpop.trf.xlu0
    %v389 = vpop.trf.xlu0
    %v390 = vld [vmem:[%s1] sm:$0x7]
    %v391 = vld [vmem:[%s10] ss:$0 sm:$0xff]
    %vm392 = vcmask 23552
    %v394 = vsel %vm392, %v342, 0
    %v397 = vsel %vm392, %v343, 0
    %v400 = vsel %vm392, %v344, 0
    %v403 = vsel %vm392, %v345, 0
    %v406 = vsel %vm392, %v346, 0
    %v409 = vsel %vm392, %v347, 0
    %v412 = vsel %vm392, %v348, 0
    %v415 = vsel %vm392, %v349, 0
    %v418 = vsel %vm392, %v350, 0
    %v421 = vsel %vm392, %v351, 0
    %v424 = vsel %vm392, %v352, 0
    %v427 = vsel %vm392, %v353, 0
    %v430 = vsel %vm392, %v354, 0
    %v433 = vsel %vm392, %v355, 0
    %v436 = vsel %vm392, %v356, 0
    %v439 = vsel %vm392, %v357, 0
    %v442 = vsel %vm392, %v374, 0
    %v445 = vsel %vm392, %v375, 0
    %v448 = vsel %vm392, %v376, 0
    %v451 = vsel %vm392, %v377, 0
    %v454 = vsel %vm392, %v378, 0
    %v457 = vsel %vm392, %v379, 0
    %v460 = vsel %vm392, %v380, 0
    %v463 = vsel %vm392, %v381, 0
    %v466 = vsel %vm392, %v382, 0
    %v469 = vsel %vm392, %v383, 0
    %v472 = vsel %vm392, %v384, 0
    %v475 = vsel %vm392, %v385, 0
    %v478 = vsel %vm392, %v386, 0
    %v481 = vsel %vm392, %v387, 0
    %v484 = vsel %vm392, %v388, 0
    %v487 = vsel %vm392, %v389, 0
    %vm489 = vcmask 1042432
    %v491 = vsel %vm489, %v390, 0
    %493 = vmatprep.subr.mxu0 0.0
    %494 = vmatpush1.msra.mxu0 %v491
    %495 = vmatprep.subr.mxu0 0.0
    %496 = vmatpush1.msra.mxu0 0.0
    %497 = vmatprep.subr.mxu0 0.0
    %498 = vmatpush1.msra.mxu0 0.0
    %499 = vmatprep.subr.mxu0 0.0
    %500 = vmatpush1.msra.mxu0 0.0
    %501 = vmatprep.subr.mxu0 0.0
    %502 = vmatpush1.msra.mxu0 0.0
    %503 = vmatprep.subr.mxu0 0.0
    %504 = vmatpush1.msra.mxu0 0.0
    %505 = vmatprep.subr.mxu0 0.0
    %506 = vmatpush1.msra.mxu0 0.0
    %507 = vmatprep.subr.mxu0 0.0
    %508 = vmatpush1.msra.mxu0 0.0
    %509 = vmatprep.subr.mxu0 0.0
    %510 = vmatpush1.msra.mxu0 0.0
    %511 = vmatprep.subr.mxu0 0.0
    %512 = vmatpush1.msra.mxu0 0.0
    %513 = vmatprep.subr.mxu0 0.0
    %514 = vmatpush1.msra.mxu0 0.0
    %515 = vmatprep.subr.mxu0 0.0
    %516 = vmatpush1.msra.mxu0 0.0
    %517 = vmatprep.subr.mxu0 0.0
    %518 = vmatpush1.msra.mxu0 0.0
    %519 = vmatprep.subr.mxu0 0.0
    %520 = vmatpush1.msra.mxu0 0.0
    %521 = vmatprep.subr.mxu0 0.0
    %522 = vmatpush1.msra.mxu0 0.0
    %523 = vmatprep.subr.mxu0 0.0
    %524 = vmatpush1.msra.mxu0 0.0
    %525 = vmatprep.subr.mxu0 0.0
    %526 = vmatpush1.msra.mxu0 0.0
    %527 = vmatprep.subr.mxu0 0.0
    %528 = vmatpush1.msra.mxu0 0.0
    %529 = vmatprep.subr.mxu0 0.0
    %530 = vmatpush1.msra.mxu0 0.0
    %531 = vmatprep.subr.mxu0 0.0
    %532 = vmatpush1.msra.mxu0 0.0
    %533 = vmatprep.subr.mxu0 0.0
    %534 = vmatpush1.msra.mxu0 0.0
    %535 = vmatprep.subr.mxu0 0.0
    %536 = vmatpush1.msra.mxu0 0.0
    %537 = vmatprep.subr.mxu0 0.0
    %538 = vmatpush1.msra.mxu0 0.0
    %539 = vmatprep.subr.mxu0 0.0
    %540 = vmatpush1.msra.mxu0 0.0
    %541 = vmatprep.subr.mxu0 0.0
    %542 = vmatpush1.msra.mxu0 0.0
    %543 = vmatprep.subr.mxu0 0.0
    %544 = vmatpush1.msra.mxu0 0.0
    %545 = vmatprep.subr.mxu0 0.0
    %546 = vmatpush1.msra.mxu0 0.0
    %547 = vmatprep.subr.mxu0 0.0
    %548 = vmatpush1.msra.mxu0 0.0
    %549 = vmatprep.subr.mxu0 0.0
    %550 = vmatpush1.msra.mxu0 0.0
    %551 = vmatprep.subr.mxu0 0.0
    %552 = vmatpush1.msra.mxu0 0.0
    %553 = vmatprep.subr.mxu0 0.0
    %554 = vmatpush1.msra.mxu0 0.0
    %555 = vmatprep.subr.mxu0 0.0
    %556 = vmatpush1.msra.mxu0 0.0
    %557 = vmatprep.mubr.f32.mxu0 0.0
    %558 = vmatmul.mubr.f32.gmra.mrb[0].mxu0 %v394
    %v559 = vpop.f32.mrb[0].mxu0
    %v560 = vadd.f32 %v391, %v559
    %v561 = vpop.f32.mrb[0].mxu0
    %562 = vmatprep.mubr.f32.mxu0 0.0
    %563 = vmatmul.mubr.f32.gmra.mrb[0].mxu0 %v397
    %v564 = vpop.f32.mrb[0].mxu0
    %v565 = vadd.f32 %v391, %v564
    %v566 = vpop.f32.mrb[0].mxu0
    %567 = vmatprep.mubr.f32.mxu0 0.0
    %568 = vmatmul.mubr.f32.gmra.mrb[0].mxu0 %v400
    %v569 = vpop.f32.mrb[0].mxu0
    %v570 = vadd.f32 %v391, %v569
    %v571 = vpop.f32.mrb[0].mxu0
    %572 = vmatprep.mubr.f32.mxu0 0.0
    %573 = vmatmul.mubr.f32.gmra.mrb[0].mxu0 %v403
    %v574 = vpop.f32.mrb[0].mxu0
    %v575 = vadd.f32 %v391, %v574
    %v576 = vpop.f32.mrb[0].mxu0
    %577 = vmatprep.mubr.f32.mxu0 0.0
    %578 = vmatmul.mubr.f32.gmra.mrb[0].mxu0 %v406
    %v579 = vpop.f32.mrb[0].mxu0
    %v580 = vadd.f32 %v391, %v579
    %v581 = vpop.f32.mrb[0].mxu0
    %582 = vmatprep.mubr.f32.mxu0 0.0
    %583 = vmatmul.mubr.f32.gmra.mrb[0].mxu0 %v409
    %v584 = vpop.f32.mrb[0].mxu0
    %v585 = vadd.f32 %v391, %v584
    %v586 = vpop.f32.mrb[0].mxu0
    %587 = vmatprep.mubr.f32.mxu0 0.0
    %588 = vmatmul.mubr.f32.gmra.mrb[0].mxu0 %v412
    %v589 = vpop.f32.mrb[0].mxu0
    %v590 = vadd.f32 %v391, %v589
    %v591 = vpop.f32.mrb[0].mxu0
    %592 = vmatprep.mubr.f32.mxu0 0.0
    %593 = vmatmul.mubr.f32.gmra.mrb[0].mxu0 %v415
    %v594 = vpop.f32.mrb[0].mxu0
    %v595 = vadd.f32 %v391, %v594
    %v596 = vpop.f32.mrb[0].mxu0
    %597 = vmatprep.mubr.f32.mxu0 0.0
    %598 = vmatmul.mubr.f32.gmra.mrb[0].mxu0 %v418
    %v599 = vpop.f32.mrb[0].mxu0
    %v600 = vadd.f32 %v391, %v599
    %v601 = vpop.f32.mrb[0].mxu0
    %602 = vmatprep.mubr.f32.mxu0 0.0
    %603 = vmatmul.mubr.f32.gmra.mrb[0].mxu0 %v421
    %v604 = vpop.f32.mrb[0].mxu0
    %v605 = vadd.f32 %v391, %v604
    %v606 = vpop.f32.mrb[0].mxu0
    %607 = vmatprep.mubr.f32.mxu0 0.0
    %608 = vmatmul.mubr.f32.gmra.mrb[0].mxu0 %v424
    %v609 = vpop.f32.mrb[0].mxu0
    %v610 = vadd.f32 %v391, %v609
    %v611 = vpop.f32.mrb[0].mxu0
    %612 = vmatprep.mubr.f32.mxu0 0.0
    %613 = vmatmul.mubr.f32.gmra.mrb[0].mxu0 %v427
    %v614 = vpop.f32.mrb[0].mxu0
    %v615 = vadd.f32 %v391, %v614
    %v616 = vpop.f32.mrb[0].mxu0
    %617 = vmatprep.mubr.f32.mxu0 0.0
    %618 = vmatmul.mubr.f32.gmra.mrb[0].mxu0 %v430
    %v619 = vpop.f32.mrb[0].mxu0
    %v620 = vadd.f32 %v391, %v619
    %v621 = vpop.f32.mrb[0].mxu0
    %622 = vmatprep.mubr.f32.mxu0 0.0
    %623 = vmatmul.mubr.f32.gmra.mrb[0].mxu0 %v433
    %v624 = vpop.f32.mrb[0].mxu0
    %v625 = vadd.f32 %v391, %v624
    %v626 = vpop.f32.mrb[0].mxu0
    %627 = vmatprep.mubr.f32.mxu0 0.0
    %628 = vmatmul.mubr.f32.gmra.mrb[0].mxu0 %v436
    %v629 = vpop.f32.mrb[0].mxu0
    %v630 = vadd.f32 %v391, %v629
    %v631 = vpop.f32.mrb[0].mxu0
    %632 = vmatprep.mubr.f32.mxu0 0.0
    %633 = vmatmul.mubr.f32.gmra.mrb[0].mxu0 %v439
    %v634 = vpop.f32.mrb[0].mxu0
    %v635 = vadd.f32 %v391, %v634
    %v636 = vpop.f32.mrb[0].mxu0
    %637 = vmatprep.mubr.f32.mxu0 0.0
    %638 = vmatmul.mubr.f32.gmra.mrb[0].mxu0 %v442
    %v639 = vpop.f32.mrb[0].mxu0
    %v640 = vadd.f32 %v391, %v639
    %v641 = vpop.f32.mrb[0].mxu0
    %642 = vmatprep.mubr.f32.mxu0 0.0
    %643 = vmatmul.mubr.f32.gmra.mrb[0].mxu0 %v445
    %v644 = vpop.f32.mrb[0].mxu0
    %v645 = vadd.f32 %v391, %v644
    %v646 = vpop.f32.mrb[0].mxu0
    %647 = vmatprep.mubr.f32.mxu0 0.0
    %648 = vmatmul.mubr.f32.gmra.mrb[0].mxu0 %v448
    %v649 = vpop.f32.mrb[0].mxu0
    %v650 = vadd.f32 %v391, %v649
    %v651 = vpop.f32.mrb[0].mxu0
    %652 = vmatprep.mubr.f32.mxu0 0.0
    %653 = vmatmul.mubr.f32.gmra.mrb[0].mxu0 %v451
    %v654 = vpop.f32.mrb[0].mxu0
    %v655 = vadd.f32 %v391, %v654
    %v656 = vpop.f32.mrb[0].mxu0
    %657 = vmatprep.mubr.f32.mxu0 0.0
    %658 = vmatmul.mubr.f32.gmra.mrb[0].mxu0 %v454
    %v659 = vpop.f32.mrb[0].mxu0
    %v660 = vadd.f32 %v391, %v659
    %v661 = vpop.f32.mrb[0].mxu0
    %662 = vmatprep.mubr.f32.mxu0 0.0
    %663 = vmatmul.mubr.f32.gmra.mrb[0].mxu0 %v457
    %v664 = vpop.f32.mrb[0].mxu0
    %v665 = vadd.f32 %v391, %v664
    %v666 = vpop.f32.mrb[0].mxu0
    %667 = vmatprep.mubr.f32.mxu0 0.0
    %668 = vmatmul.mubr.f32.gmra.mrb[0].mxu0 %v460
    %v669 = vpop.f32.mrb[0].mxu0
    %v670 = vadd.f32 %v391, %v669
    %v671 = vpop.f32.mrb[0].mxu0
    %672 = vmatprep.mubr.f32.mxu0 0.0
    %673 = vmatmul.mubr.f32.gmra.mrb[0].mxu0 %v463
    %v674 = vpop.f32.mrb[0].mxu0
    %v675 = vadd.f32 %v391, %v674
    %v676 = vpop.f32.mrb[0].mxu0
    %677 = vmatprep.mubr.f32.mxu0 0.0
    %678 = vmatmul.mubr.f32.gmra.mrb[0].mxu0 %v466
    %v679 = vpop.f32.mrb[0].mxu0
    %v680 = vadd.f32 %v391, %v679
    %v681 = vpop.f32.mrb[0].mxu0
    %682 = vmatprep.mubr.f32.mxu0 0.0
    %683 = vmatmul.mubr.f32.gmra.mrb[0].mxu0 %v469
    %v684 = vpop.f32.mrb[0].mxu0
    %v685 = vadd.f32 %v391, %v684
    %v686 = vpop.f32.mrb[0].mxu0
    %687 = vmatprep.mubr.f32.mxu0 0.0
    %688 = vmatmul.mubr.f32.gmra.mrb[0].mxu0 %v472
    %v689 = vpop.f32.mrb[0].mxu0
    %v690 = vadd.f32 %v391, %v689
    %v691 = vpop.f32.mrb[0].mxu0
    %692 = vmatprep.mubr.f32.mxu0 0.0
    %693 = vmatmul.mubr.f32.gmra.mrb[0].mxu0 %v475
    %v694 = vpop.f32.mrb[0].mxu0
    %v695 = vadd.f32 %v391, %v694
    %v696 = vpop.f32.mrb[0].mxu0
    %697 = vmatprep.mubr.f32.mxu0 0.0
    %698 = vmatmul.mubr.f32.gmra.mrb[0].mxu0 %v478
    %v699 = vpop.f32.mrb[0].mxu0
    %v700 = vadd.f32 %v391, %v699
    %v701 = vpop.f32.mrb[0].mxu0
    %702 = vmatprep.mubr.f32.mxu0 0.0
    %703 = vmatmul.mubr.f32.gmra.mrb[0].mxu0 %v481
    %v704 = vpop.f32.mrb[0].mxu0
    %v705 = vadd.f32 %v391, %v704
    %v706 = vpop.f32.mrb[0].mxu0
    %707 = vmatprep.mubr.f32.mxu0 0.0
    %708 = vmatmul.mubr.f32.gmra.mrb[0].mxu0 %v484
    %v709 = vpop.f32.mrb[0].mxu0
    %v710 = vadd.f32 %v391, %v709
    %v711 = vpop.f32.mrb[0].mxu0
    %712 = vmatprep.mubr.f32.mxu0 0.0
    %713 = vmatmul.mubr.f32.gmra.mrb[0].mxu0 %v487
    %v714 = vpop.f32.mrb[0].mxu0
    %v715 = vadd.f32 %v391, %v714
    %v716 = vpop.f32.mrb[0].mxu0
    %717 = vdwg.mxu0
    %v718 = vmax.f32 %v560, 0.0
    %v719 = vmax.f32 %v565, 0.0
    %v720 = vmax.f32 %v570, 0.0
    %v721 = vmax.f32 %v575, 0.0
    %v722 = vmax.f32 %v580, 0.0
    %v723 = vmax.f32 %v585, 0.0
    %v724 = vmax.f32 %v590, 0.0
    %v725 = vmax.f32 %v595, 0.0
    %v726 = vmax.f32 %v600, 0.0
    %v727 = vmax.f32 %v605, 0.0
    %v728 = vmax.f32 %v610, 0.0
    %v729 = vmax.f32 %v615, 0.0
    %v730 = vmax.f32 %v620, 0.0
    %v731 = vmax.f32 %v625, 0.0
    %v732 = vmax.f32 %v630, 0.0
    %v733 = vmax.f32 %v635, 0.0
    %v734 = vmax.f32 %v640, 0.0
    %v735 = vmax.f32 %v645, 0.0
    %v736 = vmax.f32 %v650, 0.0
    %v737 = vmax.f32 %v655, 0.0
    %v738 = vmax.f32 %v660, 0.0
    %v739 = vmax.f32 %v665, 0.0
    %v740 = vmax.f32 %v670, 0.0
    %v741 = vmax.f32 %v675, 0.0
    %v742 = vmax.f32 %v680, 0.0
    %v743 = vmax.f32 %v685, 0.0
    %v744 = vmax.f32 %v690, 0.0
    %v745 = vmax.f32 %v695, 0.0
    %v746 = vmax.f32 %v700, 0.0
    %v747 = vmax.f32 %v705, 0.0
    %v748 = vmax.f32 %v710, 0.0
    %v749 = vmax.f32 %v715, 0.0
    %v750 = vpack.c.bf16 %v719, %v718
    %v751 = vpack.c.bf16 %v721, %v720
    %v752 = vpack.c.bf16 %v723, %v722
    %v753 = vpack.c.bf16 %v725, %v724
    %v754 = vpack.c.bf16 %v727, %v726
    %v755 = vpack.c.bf16 %v729, %v728
    %v756 = vpack.c.bf16 %v731, %v730
    %v757 = vpack.c.bf16 %v733, %v732
    %v758 = vpack.c.bf16 %v735, %v734
    %v759 = vpack.c.bf16 %v737, %v736
    %v760 = vpack.c.bf16 %v739, %v738
    %v761 = vpack.c.bf16 %v741, %v740
    %v762 = vpack.c.bf16 %v743, %v742
    %v763 = vpack.c.bf16 %v745, %v744
    %v764 = vpack.c.bf16 %v747, %v746
    %v765 = vpack.c.bf16 %v749, %v748
    %v766 = vld [vmem:[%s10 + $0x1] ss:$0 sm:$0xff]
    %v775 = vunpack.c.l.b16 %v180
    %v776 = vunpack.c.l.b16 %v181
    %v777 = vunpack.c.l.b16 %v182
    %v778 = vunpack.c.l.b16 %v183
    %v779 = vunpack.c.l.b16 %v184
    %v780 = vunpack.c.l.b16 %v185
    %v781 = vunpack.c.l.b16 %v186
    %v782 = vunpack.c.l.b16 %v187
    %v783 = vpack.c.b16 %v776, %v775
    %v784 = vpack.c.b16 %v778, %v777
    %v785 = vpack.c.b16 %v780, %v779
    %v786 = vpack.c.b16 %v782, %v781
    %vm791 = vcmask 523264
    %v793 = vsel %vm791, %v750, 0
    %v796 = vsel %vm791, %v751, 0
    %v799 = vsel %vm791, %v752, 0
    %v802 = vsel %vm791, %v753, 0
    %v805 = vsel %vm791, %v754, 0
    %v808 = vsel %vm791, %v755, 0
    %v811 = vsel %vm791, %v756, 0
    %v814 = vsel %vm791, %v757, 0
    %v817 = vsel %vm791, %v758, 0
    %v820 = vsel %vm791, %v759, 0
    %v823 = vsel %vm791, %v760, 0
    %v826 = vsel %vm791, %v761, 0
    %v829 = vsel %vm791, %v762, 0
    %v832 = vsel %vm791, %v763, 0
    %v835 = vsel %vm791, %v764, 0
    %v838 = vsel %vm791, %v765, 0
    %840 = vmatprep.subr.bf16.mxu0 0
    %841 = vmatpush1.bf16.msra.mxu0 %v783
    %842 = vmatprep.subr.bf16.mxu0 0
    %843 = vmatpush1.bf16.msra.mxu0 %v784
    %844 = vmatprep.subr.bf16.mxu0 0
    %845 = vmatpush1.bf16.msra.mxu0 %v785
    %846 = vmatprep.subr.bf16.mxu0 0
    %847 = vmatpush1.bf16.msra.mxu0 %v786
    %848 = vmatprep.subr.bf16.mxu0 0
    %849 = vmatpush1.bf16.msra.mxu0 0
    %850 = vmatprep.subr.bf16.mxu0 0
    %851 = vmatpush1.bf16.msra.mxu0 0
    %852 = vmatprep.subr.bf16.mxu0 0
    %853 = vmatpush1.bf16.msra.mxu0 0
    %854 = vmatprep.subr.bf16.mxu0 0
    %855 = vmatpush1.bf16.msra.mxu0 0
    %856 = vmatprep.subr.bf16.mxu0 0
    %857 = vmatpush1.bf16.msra.mxu0 0
    %858 = vmatprep.subr.bf16.mxu0 0
    %859 = vmatpush1.bf16.msra.mxu0 0
    %860 = vmatprep.subr.bf16.mxu0 0
    %861 = vmatpush1.bf16.msra.mxu0 0
    %862 = vmatprep.subr.bf16.mxu0 0
    %863 = vmatpush1.bf16.msra.mxu0 0
    %864 = vmatprep.subr.bf16.mxu0 0
    %865 = vmatpush1.bf16.msra.mxu0 0
    %866 = vmatprep.subr.bf16.mxu0 0
    %867 = vmatpush1.bf16.msra.mxu0 0
    %868 = vmatprep.subr.bf16.mxu0 0
    %869 = vmatpush1.bf16.msra.mxu0 0
    %870 = vmatprep.subr.bf16.mxu0 0
    %871 = vmatpush1.bf16.msra.mxu0 0
    %872 = vmatprep.mubr.bf16.mxu0 0
    %873 = vmatmul.mubr.bf16.gmra.mrb[0].mxu0 %v793
    %v874 = vpop.f32.mrb[0].mxu0
    %v875 = vadd.f32 %v766, %v874
    %v876 = vpop.f32.mrb[0].mxu0
    %v877 = vpop.f32.mrb[0].mxu0
    %v878 = vadd.f32 %v766, %v877
    %v879 = vpop.f32.mrb[0].mxu0
    %880 = vmatprep.mubr.bf16.mxu0 0
    %881 = vmatmul.mubr.bf16.gmra.mrb[0].mxu0 %v796
    %v882 = vpop.f32.mrb[0].mxu0
    %v883 = vadd.f32 %v766, %v882
    %v884 = vpop.f32.mrb[0].mxu0
    %v885 = vpop.f32.mrb[0].mxu0
    %v886 = vadd.f32 %v766, %v885
    %v887 = vpop.f32.mrb[0].mxu0
    %888 = vmatprep.mubr.bf16.mxu0 0
    %889 = vmatmul.mubr.bf16.gmra.mrb[0].mxu0 %v799
    %v890 = vpop.f32.mrb[0].mxu0
    %v891 = vadd.f32 %v766, %v890
    %v892 = vpop.f32.mrb[0].mxu0
    %v893 = vpop.f32.mrb[0].mxu0
    %v894 = vadd.f32 %v766, %v893
    %v895 = vpop.f32.mrb[0].mxu0
    %896 = vmatprep.mubr.bf16.mxu0 0
    %897 = vmatmul.mubr.bf16.gmra.mrb[0].mxu0 %v802
    %v898 = vpop.f32.mrb[0].mxu0
    %v899 = vadd.f32 %v766, %v898
    %v900 = vpop.f32.mrb[0].mxu0
    %v901 = vpop.f32.mrb[0].mxu0
    %v902 = vadd.f32 %v766, %v901
    %v903 = vpop.f32.mrb[0].mxu0
    %904 = vmatprep.mubr.bf16.mxu0 0
    %905 = vmatmul.mubr.bf16.gmra.mrb[0].mxu0 %v805
    %v906 = vpop.f32.mrb[0].mxu0
    %v907 = vadd.f32 %v766, %v906
    %v908 = vpop.f32.mrb[0].mxu0
    %v909 = vpop.f32.mrb[0].mxu0
    %v910 = vadd.f32 %v766, %v909
    %v911 = vpop.f32.mrb[0].mxu0
    %912 = vmatprep.mubr.bf16.mxu0 0
    %913 = vmatmul.mubr.bf16.gmra.mrb[0].mxu0 %v808
    %v914 = vpop.f32.mrb[0].mxu0
    %v915 = vadd.f32 %v766, %v914
    %v916 = vpop.f32.mrb[0].mxu0
    %v917 = vpop.f32.mrb[0].mxu0
    %v918 = vadd.f32 %v766, %v917
    %v919 = vpop.f32.mrb[0].mxu0
    %920 = vmatprep.mubr.bf16.mxu0 0
    %921 = vmatmul.mubr.bf16.gmra.mrb[0].mxu0 %v811
    %v922 = vpop.f32.mrb[0].mxu0
    %v923 = vadd.f32 %v766, %v922
    %v924 = vpop.f32.mrb[0].mxu0
    %v925 = vpop.f32.mrb[0].mxu0
    %v926 = vadd.f32 %v766, %v925
    %v927 = vpop.f32.mrb[0].mxu0
    %928 = vmatprep.mubr.bf16.mxu0 0
    %929 = vmatmul.mubr.bf16.gmra.mrb[0].mxu0 %v814
    %v930 = vpop.f32.mrb[0].mxu0
    %v931 = vadd.f32 %v766, %v930
    %v932 = vpop.f32.mrb[0].mxu0
    %v933 = vpop.f32.mrb[0].mxu0
    %v934 = vadd.f32 %v766, %v933
    %v935 = vpop.f32.mrb[0].mxu0
    %936 = vmatprep.mubr.bf16.mxu0 0
    %937 = vmatmul.mubr.bf16.gmra.mrb[0].mxu0 %v817
    %v938 = vpop.f32.mrb[0].mxu0
    %v939 = vadd.f32 %v766, %v938
    %v940 = vpop.f32.mrb[0].mxu0
    %v941 = vpop.f32.mrb[0].mxu0
    %v942 = vadd.f32 %v766, %v941
    %v943 = vpop.f32.mrb[0].mxu0
    %944 = vmatprep.mubr.bf16.mxu0 0
    %945 = vmatmul.mubr.bf16.gmra.mrb[0].mxu0 %v820
    %v946 = vpop.f32.mrb[0].mxu0
    %v947 = vadd.f32 %v766, %v946
    %v948 = vpop.f32.mrb[0].mxu0
    %v949 = vpop.f32.mrb[0].mxu0
    %v950 = vadd.f32 %v766, %v949
    %v951 = vpop.f32.mrb[0].mxu0
    %952 = vmatprep.mubr.bf16.mxu0 0
    %953 = vmatmul.mubr.bf16.gmra.mrb[0].mxu0 %v823
    %v954 = vpop.f32.mrb[0].mxu0
    %v955 = vadd.f32 %v766, %v954
    %v956 = vpop.f32.mrb[0].mxu0
    %v957 = vpop.f32.mrb[0].mxu0
    %v958 = vadd.f32 %v766, %v957
    %v959 = vpop.f32.mrb[0].mxu0
    %960 = vmatprep.mubr.bf16.mxu0 0
    %961 = vmatmul.mubr.bf16.gmra.mrb[0].mxu0 %v826
    %v962 = vpop.f32.mrb[0].mxu0
    %v963 = vadd.f32 %v766, %v962
    %v964 = vpop.f32.mrb[0].mxu0
    %v965 = vpop.f32.mrb[0].mxu0
    %v966 = vadd.f32 %v766, %v965
    %v967 = vpop.f32.mrb[0].mxu0
    %968 = vmatprep.mubr.bf16.mxu0 0
    %969 = vmatmul.mubr.bf16.gmra.mrb[0].mxu0 %v829
    %v970 = vpop.f32.mrb[0].mxu0
    %v971 = vadd.f32 %v766, %v970
    %v972 = vpop.f32.mrb[0].mxu0
    %v973 = vpop.f32.mrb[0].mxu0
    %v974 = vadd.f32 %v766, %v973
    %v975 = vpop.f32.mrb[0].mxu0
    %976 = vmatprep.mubr.bf16.mxu0 0
    %977 = vmatmul.mubr.bf16.gmra.mrb[0].mxu0 %v832
    %v978 = vpop.f32.mrb[0].mxu0
    %v979 = vadd.f32 %v766, %v978
    %v980 = vpop.f32.mrb[0].mxu0
    %v981 = vpop.f32.mrb[0].mxu0
    %v982 = vadd.f32 %v766, %v981
    %v983 = vpop.f32.mrb[0].mxu0
    %984 = vmatprep.mubr.bf16.mxu0 0
    %985 = vmatmul.mubr.bf16.gmra.mrb[0].mxu0 %v835
    %v986 = vpop.f32.mrb[0].mxu0
    %v987 = vadd.f32 %v766, %v986
    %v988 = vpop.f32.mrb[0].mxu0
    %v989 = vpop.f32.mrb[0].mxu0
    %v990 = vadd.f32 %v766, %v989
    %v991 = vpop.f32.mrb[0].mxu0
    %992 = vmatprep.mubr.bf16.mxu0 0
    %993 = vmatmul.mubr.bf16.gmra.mrb[0].mxu0 %v838
    %v994 = vpop.f32.mrb[0].mxu0
    %v995 = vadd.f32 %v766, %v994
    %v996 = vpop.f32.mrb[0].mxu0
    %v997 = vpop.f32.mrb[0].mxu0
    %v998 = vadd.f32 %v766, %v997
    %v999 = vpop.f32.mrb[0].mxu0
    %1000 = vdwg.mxu0
    %v1001 = vmax.f32 %v875, 0.0
    %v1002 = vmax.f32 %v878, 0.0
    %v1003 = vmax.f32 %v883, 0.0
    %v1004 = vmax.f32 %v886, 0.0
    %v1005 = vmax.f32 %v891, 0.0
    %v1006 = vmax.f32 %v894, 0.0
    %v1007 = vmax.f32 %v899, 0.0
    %v1008 = vmax.f32 %v902, 0.0
    %v1009 = vmax.f32 %v907, 0.0
    %v1010 = vmax.f32 %v910, 0.0
    %v1011 = vmax.f32 %v915, 0.0
    %v1012 = vmax.f32 %v918, 0.0
    %v1013 = vmax.f32 %v923, 0.0
    %v1014 = vmax.f32 %v926, 0.0
    %v1015 = vmax.f32 %v931, 0.0
    %v1016 = vmax.f32 %v934, 0.0
    %v1017 = vmax.f32 %v939, 0.0
    %v1018 = vmax.f32 %v942, 0.0
    %v1019 = vmax.f32 %v947, 0.0
    %v1020 = vmax.f32 %v950, 0.0
    %v1021 = vmax.f32 %v955, 0.0
    %v1022 = vmax.f32 %v958, 0.0
    %v1023 = vmax.f32 %v963, 0.0
    %v1024 = vmax.f32 %v966, 0.0
    %v1025 = vmax.f32 %v971, 0.0
    %v1026 = vmax.f32 %v974, 0.0
    %v1027 = vmax.f32 %v979, 0.0
    %v1028 = vmax.f32 %v982, 0.0
    %v1029 = vmax.f32 %v987, 0.0
    %v1030 = vmax.f32 %v990, 0.0
    %v1031 = vmax.f32 %v995, 0.0
    %v1032 = vmax.f32 %v998, 0.0
    %v1033 = vpack.c.bf16 %v1002, %v1001
    %v1034 = vpack.c.bf16 %v1004, %v1003
    %v1035 = vpack.c.bf16 %v1006, %v1005
    %v1036 = vpack.c.bf16 %v1008, %v1007
    %v1037 = vpack.c.bf16 %v1010, %v1009
    %v1038 = vpack.c.bf16 %v1012, %v1011
    %v1039 = vpack.c.bf16 %v1014, %v1013
    %v1040 = vpack.c.bf16 %v1016, %v1015
    %v1041 = vpack.c.bf16 %v1018, %v1017
    %v1042 = vpack.c.bf16 %v1020, %v1019
    %v1043 = vpack.c.bf16 %v1022, %v1021
    %v1044 = vpack.c.bf16 %v1024, %v1023
    %v1045 = vpack.c.bf16 %v1026, %v1025
    %v1046 = vpack.c.bf16 %v1028, %v1027
    %v1047 = vpack.c.bf16 %v1030, %v1029
    %v1048 = vpack.c.bf16 %v1032, %v1031
    %s1049 = scalar_lea.vmem %s10, 2
    %v1050 = vld [vmem:[%s1049] ss:$8 sm:$0xf]
    %v1051 = vld [vmem:[%s1049] ss:$8 sm:$0xf0]
    %v1052 = vor.u32 %v1050, %v1051
    %v1054 = vlaneseq
    %v1055 = vshrl.u32 %v1054, 7
    %v1056 = vsub.s32 0, %v1055
    %v1057 = vrot.slane %v1052, %v1056
    %v1058 = vlaneseq
    %v1059 = vshrl.u32 %v1058, 7
    %v1060 = vsub.s32 1, %v1059
    %v1061 = vrot.slane %v1052, %v1060
    %v1062 = vlaneseq
    %v1063 = vshrl.u32 %v1062, 7
    %v1064 = vsub.s32 2, %v1063
    %v1065 = vrot.slane %v1052, %v1064
    %v1066 = vlaneseq
    %v1067 = vshrl.u32 %v1066, 7
    %v1068 = vsub.s32 3, %v1067
    %v1069 = vrot.slane %v1052, %v1068
    %v1070 = vlaneseq
    %v1071 = vshrl.u32 %v1070, 7
    %v1072 = vsub.s32 4, %v1071
    %v1073 = vrot.slane %v1052, %v1072
    %v1074 = vlaneseq
    %v1075 = vshrl.u32 %v1074, 7
    %v1076 = vsub.s32 5, %v1075
    %v1077 = vrot.slane %v1052, %v1076
    %v1078 = vlaneseq
    %v1079 = vshrl.u32 %v1078, 7
    %v1080 = vsub.s32 6, %v1079
    %v1081 = vrot.slane %v1052, %v1080
    %v1082 = vlaneseq
    %v1083 = vshrl.u32 %v1082, 7
    %v1084 = vsub.s32 7, %v1083
    %v1085 = vrot.slane %v1052, %v1084
    %v1158 = vunpack.c.l.b16 %v196
    %v1159 = vunpack.c.h.b16 %v196
    %v1160 = vunpack.c.l.b16 %v197
    %v1161 = vunpack.c.h.b16 %v197
    %v1162 = vunpack.c.l.b16 %v198
    %v1163 = vunpack.c.h.b16 %v198
    %v1164 = vunpack.c.l.b16 %v199
    %v1165 = vunpack.c.h.b16 %v199
    %v1166 = vunpack.c.l.b16 %v200
    %v1167 = vunpack.c.h.b16 %v200
    %v1168 = vunpack.c.l.b16 %v201
    %v1169 = vunpack.c.h.b16 %v201
    %v1170 = vunpack.c.l.b16 %v202
    %v1171 = vunpack.c.h.b16 %v202
    %v1172 = vunpack.c.l.b16 %v203
    %v1173 = vunpack.c.h.b16 %v203
    %v1174 = vunpack.c.l.b16 %v204
    %v1175 = vunpack.c.h.b16 %v204
    %v1176 = vunpack.c.l.b16 %v205
    %v1177 = vunpack.c.h.b16 %v205
    %v1178 = vunpack.c.l.b16 %v206
    %v1179 = vunpack.c.h.b16 %v206
    %v1180 = vunpack.c.l.b16 %v207
    %v1181 = vunpack.c.h.b16 %v207
    %v1182 = vunpack.c.l.b16 %v208
    %v1183 = vunpack.c.h.b16 %v208
    %v1184 = vunpack.c.l.b16 %v209
    %v1185 = vunpack.c.h.b16 %v209
    %v1186 = vunpack.c.l.b16 %v210
    %v1187 = vunpack.c.h.b16 %v210
    %v1188 = vunpack.c.l.b16 %v211
    %v1189 = vunpack.c.h.b16 %v211
    %v1190 = vunpack.c.l.b16 %v212
    %v1191 = vunpack.c.h.b16 %v212
    %v1192 = vunpack.c.l.b16 %v213
    %v1193 = vunpack.c.h.b16 %v213
    %v1194 = vunpack.c.l.b16 %v214
    %v1195 = vunpack.c.h.b16 %v214
    %v1196 = vunpack.c.l.b16 %v215
    %v1197 = vunpack.c.h.b16 %v215
    %v1198 = vunpack.c.l.b16 %v216
    %v1199 = vunpack.c.h.b16 %v216
    %v1200 = vunpack.c.l.b16 %v217
    %v1201 = vunpack.c.h.b16 %v217
    %v1202 = vunpack.c.l.b16 %v218
    %v1203 = vunpack.c.h.b16 %v218
    %v1204 = vunpack.c.l.b16 %v219
    %v1205 = vunpack.c.h.b16 %v219
    %v1206 = vunpack.c.l.b16 %v220
    %v1207 = vunpack.c.h.b16 %v220
    %v1208 = vunpack.c.l.b16 %v221
    %v1209 = vunpack.c.h.b16 %v221
    %v1210 = vunpack.c.l.b16 %v222
    %v1211 = vunpack.c.h.b16 %v222
    %v1212 = vunpack.c.l.b16 %v223
    %v1213 = vunpack.c.h.b16 %v223
    %v1214 = vunpack.c.l.b16 %v224
    %v1215 = vunpack.c.h.b16 %v224
    %v1216 = vunpack.c.l.b16 %v225
    %v1217 = vunpack.c.h.b16 %v225
    %v1218 = vunpack.c.l.b16 %v226
    %v1219 = vunpack.c.h.b16 %v226
    %v1220 = vunpack.c.l.b16 %v227
    %v1221 = vunpack.c.h.b16 %v227
    %v1222 = vunpack.c.l.b16 %v228
    %v1223 = vunpack.c.h.b16 %v228
    %v1224 = vunpack.c.l.b16 %v229
    %v1225 = vunpack.c.h.b16 %v229
    %v1226 = vunpack.c.l.b16 %v230
    %v1227 = vunpack.c.h.b16 %v230
    %v1228 = vunpack.c.l.b16 %v231
    %v1229 = vunpack.c.h.b16 %v231
    %v1230 = vunpack.c.l.b16 %v232
    %v1231 = vunpack.c.h.b16 %v232
    %v1232 = vunpack.c.l.b16 %v233
    %v1233 = vunpack.c.h.b16 %v233
    %v1234 = vunpack.c.l.b16 %v234
    %v1235 = vunpack.c.h.b16 %v234
    %v1236 = vunpack.c.l.b16 %v235
    %v1237 = vunpack.c.h.b16 %v235
    %v1238 = vunpack.c.l.b16 %v236
    %v1239 = vunpack.c.h.b16 %v236
    %v1240 = vunpack.c.l.b16 %v237
    %v1241 = vunpack.c.h.b16 %v237
    %v1242 = vunpack.c.l.b16 %v238
    %v1243 = vunpack.c.h.b16 %v238
    %v1244 = vunpack.c.l.b16 %v239
    %v1245 = vunpack.c.h.b16 %v239
    %v1246 = vunpack.c.l.b16 %v240
    %v1247 = vunpack.c.h.b16 %v240
    %v1248 = vunpack.c.l.b16 %v241
    %v1249 = vunpack.c.h.b16 %v241
    %v1250 = vunpack.c.l.b16 %v242
    %v1251 = vunpack.c.h.b16 %v242
    %v1252 = vunpack.c.l.b16 %v243
    %v1253 = vunpack.c.h.b16 %v243
    %v1254 = vunpack.c.l.b16 %v244
    %v1255 = vunpack.c.h.b16 %v244
    %v1256 = vunpack.c.l.b16 %v245
    %v1257 = vunpack.c.h.b16 %v245
    %v1258 = vunpack.c.l.b16 %v246
    %v1259 = vunpack.c.h.b16 %v246
    %v1260 = vunpack.c.l.b16 %v247
    %v1261 = vunpack.c.h.b16 %v247
    %v1262 = vunpack.c.l.b16 %v248
    %v1263 = vunpack.c.h.b16 %v248
    %v1264 = vunpack.c.l.b16 %v249
    %v1265 = vunpack.c.h.b16 %v249
    %v1266 = vunpack.c.l.b16 %v250
    %v1267 = vunpack.c.h.b16 %v250
    %v1268 = vunpack.c.l.b16 %v251
    %v1269 = vunpack.c.h.b16 %v251
    %v1270 = vunpack.c.l.b16 %v252
    %v1271 = vunpack.c.h.b16 %v252
    %v1272 = vunpack.c.l.b16 %v253
    %v1273 = vunpack.c.h.b16 %v253
    %v1274 = vunpack.c.l.b16 %v254
    %v1275 = vunpack.c.h.b16 %v254
    %v1276 = vunpack.c.l.b16 %v255
    %v1277 = vunpack.c.h.b16 %v255
    %v1278 = vunpack.c.l.b16 %v256
    %v1279 = vunpack.c.h.b16 %v256
    %v1280 = vunpack.c.l.b16 %v257
    %v1281 = vunpack.c.h.b16 %v257
    %v1282 = vunpack.c.l.b16 %v258
    %v1283 = vunpack.c.h.b16 %v258
    %v1284 = vunpack.c.l.b16 %v259
    %v1285 = vunpack.c.h.b16 %v259
    %v1286 = vpack.c.b16 %v1166, %v1158
    %v1287 = vpack.c.b16 %v1167, %v1159
    %v1288 = vpack.c.b16 %v1168, %v1160
    %v1289 = vpack.c.b16 %v1169, %v1161
    %v1290 = vpack.c.b16 %v1170, %v1162
    %v1291 = vpack.c.b16 %v1171, %v1163
    %v1292 = vpack.c.b16 %v1172, %v1164
    %v1293 = vpack.c.b16 %v1173, %v1165
    %v1294 = vpack.c.b16 %v1182, %v1174
    %v1295 = vpack.c.b16 %v1183, %v1175
    %v1296 = vpack.c.b16 %v1184, %v1176
    %v1297 = vpack.c.b16 %v1185, %v1177
    %v1298 = vpack.c.b16 %v1186, %v1178
    %v1299 = vpack.c.b16 %v1187, %v1179
    %v1300 = vpack.c.b16 %v1188, %v1180
    %v1301 = vpack.c.b16 %v1189, %v1181
    %v1302 = vpack.c.b16 %v1198, %v1190
    %v1303 = vpack.c.b16 %v1199, %v1191
    %v1304 = vpack.c.b16 %v1200, %v1192
    %v1305 = vpack.c.b16 %v1201, %v1193
    %v1306 = vpack.c.b16 %v1202, %v1194
    %v1307 = vpack.c.b16 %v1203, %v1195
    %v1308 = vpack.c.b16 %v1204, %v1196
    %v1309 = vpack.c.b16 %v1205, %v1197
    %v1310 = vpack.c.b16 %v1214, %v1206
    %v1311 = vpack.c.b16 %v1215, %v1207
    %v1312 = vpack.c.b16 %v1216, %v1208
    %v1313 = vpack.c.b16 %v1217, %v1209
    %v1314 = vpack.c.b16 %v1218, %v1210
    %v1315 = vpack.c.b16 %v1219, %v1211
    %v1316 = vpack.c.b16 %v1220, %v1212
    %v1317 = vpack.c.b16 %v1221, %v1213
    %v1318 = vpack.c.b16 %v1230, %v1222
    %v1319 = vpack.c.b16 %v1231, %v1223
    %v1320 = vpack.c.b16 %v1232, %v1224
    %v1321 = vpack.c.b16 %v1233, %v1225
    %v1322 = vpack.c.b16 %v1234, %v1226
    %v1323 = vpack.c.b16 %v1235, %v1227
    %v1324 = vpack.c.b16 %v1236, %v1228
    %v1325 = vpack.c.b16 %v1237, %v1229
    %v1326 = vpack.c.b16 %v1246, %v1238
    %v1327 = vpack.c.b16 %v1247, %v1239
    %v1328 = vpack.c.b16 %v1248, %v1240
    %v1329 = vpack.c.b16 %v1249, %v1241
    %v1330 = vpack.c.b16 %v1250, %v1242
    %v1331 = vpack.c.b16 %v1251, %v1243
    %v1332 = vpack.c.b16 %v1252, %v1244
    %v1333 = vpack.c.b16 %v1253, %v1245
    %v1334 = vpack.c.b16 %v1262, %v1254
    %v1335 = vpack.c.b16 %v1263, %v1255
    %v1336 = vpack.c.b16 %v1264, %v1256
    %v1337 = vpack.c.b16 %v1265, %v1257
    %v1338 = vpack.c.b16 %v1266, %v1258
    %v1339 = vpack.c.b16 %v1267, %v1259
    %v1340 = vpack.c.b16 %v1268, %v1260
    %v1341 = vpack.c.b16 %v1269, %v1261
    %v1342 = vpack.c.b16 %v1278, %v1270
    %v1343 = vpack.c.b16 %v1279, %v1271
    %v1344 = vpack.c.b16 %v1280, %v1272
    %v1345 = vpack.c.b16 %v1281, %v1273
    %v1346 = vpack.c.b16 %v1282, %v1274
    %v1347 = vpack.c.b16 %v1283, %v1275
    %v1348 = vpack.c.b16 %v1284, %v1276
    %v1349 = vpack.c.b16 %v1285, %v1277
    %1414 = vmatprep.subr.bf16.mxu0 %v1287
    %1415 = vmatpush1.bf16.msra.mxu0 %v1286
    %1416 = vmatprep.subr.bf16.mxu0 %v1295
    %1417 = vmatpush1.bf16.msra.mxu0 %v1294
    %1418 = vmatprep.subr.bf16.mxu0 %v1303
    %1419 = vmatpush1.bf16.msra.mxu0 %v1302
    %1420 = vmatprep.subr.bf16.mxu0 %v1311
    %1421 = vmatpush1.bf16.msra.mxu0 %v1310
    %1422 = vmatprep.subr.bf16.mxu0 %v1319
    %1423 = vmatpush1.bf16.msra.mxu0 %v1318
    %1424 = vmatprep.subr.bf16.mxu0 %v1327
    %1425 = vmatpush1.bf16.msra.mxu0 %v1326
    %1426 = vmatprep.subr.bf16.mxu0 %v1335
    %1427 = vmatpush1.bf16.msra.mxu0 %v1334
    %1428 = vmatprep.subr.bf16.mxu0 %v1343
    %1429 = vmatpush1.bf16.msra.mxu0 %v1342
    %1430 = vmatprep.subr.bf16.mxu0 0
    %1431 = vmatpush1.bf16.msra.mxu0 0
    %1432 = vmatprep.subr.bf16.mxu0 0
    %1433 = vmatpush1.bf16.msra.mxu0 0
    %1434 = vmatprep.subr.bf16.mxu0 0
    %1435 = vmatpush1.bf16.msra.mxu0 0
    %1436 = vmatprep.subr.bf16.mxu0 0
    %1437 = vmatpush1.bf16.msra.mxu0 0
    %1438 = vmatprep.subr.bf16.mxu0 0
    %1439 = vmatpush1.bf16.msra.mxu0 0
    %1440 = vmatprep.subr.bf16.mxu0 0
    %1441 = vmatpush1.bf16.msra.mxu0 0
    %1442 = vmatprep.subr.bf16.mxu0 0
    %1443 = vmatpush1.bf16.msra.mxu0 0
    %1444 = vmatprep.subr.bf16.mxu0 0
    %1445 = vmatpush1.bf16.msra.mxu0 0
    %1446 = vmatprep.mubr.bf16.mxu0 0
    %1447 = vmatmul.mubr.bf16.gmra.mrb[0].mxu0 %v1033
    %v1448 = vpop.f32.mrb[0].mxu0
    %v1449 = vadd.f32 %v1057, %v1448
    %v1450 = vpop.f32.mrb[0].mxu0
    %v1451 = vadd.f32 %v1061, %v1450
    %v1452 = vpop.f32.mrb[0].mxu0
    %v1453 = vadd.f32 %v1057, %v1452
    %v1454 = vpop.f32.mrb[0].mxu0
    %v1455 = vadd.f32 %v1061, %v1454
    %1456 = vmatprep.mubr.bf16.mxu0 0
    %1457 = vmatmul.mubr.bf16.gmra.mrb[0].mxu0 %v1034
    %v1458 = vpop.f32.mrb[0].mxu0
    %v1459 = vadd.f32 %v1057, %v1458
    %v1460 = vpop.f32.mrb[0].mxu0
    %v1461 = vadd.f32 %v1061, %v1460
    %v1462 = vpop.f32.mrb[0].mxu0
    %v1463 = vadd.f32 %v1057, %v1462
    %v1464 = vpop.f32.mrb[0].mxu0
    %v1465 = vadd.f32 %v1061, %v1464
    %1466 = vmatprep.mubr.bf16.mxu0 0
    %1467 = vmatmul.mubr.bf16.gmra.mrb[0].mxu0 %v1035
    %v1468 = vpop.f32.mrb[0].mxu0
    %v1469 = vadd.f32 %v1057, %v1468
    %v1470 = vpop.f32.mrb[0].mxu0
    %v1471 = vadd.f32 %v1061, %v1470
    %v1472 = vpop.f32.mrb[0].mxu0
    %v1473 = vadd.f32 %v1057, %v1472
    %v1474 = vpop.f32.mrb[0].mxu0
    %v1475 = vadd.f32 %v1061, %v1474
    %1476 = vmatprep.mubr.bf16.mxu0 0
    %1477 = vmatmul.mubr.bf16.gmra.mrb[0].mxu0 %v1036
    %v1478 = vpop.f32.mrb[0].mxu0
    %v1479 = vadd.f32 %v1057, %v1478
    %v1480 = vpop.f32.mrb[0].mxu0
    %v1481 = vadd.f32 %v1061, %v1480
    %v1482 = vpop.f32.mrb[0].mxu0
    %v1483 = vadd.f32 %v1057, %v1482
    %v1484 = vpop.f32.mrb[0].mxu0
    %v1485 = vadd.f32 %v1061, %v1484
    %1486 = vmatprep.mubr.bf16.mxu0 0
    %1487 = vmatmul.mubr.bf16.gmra.mrb[0].mxu0 %v1037
    %v1488 = vpop.f32.mrb[0].mxu0
    %v1489 = vadd.f32 %v1057, %v1488
    %v1490 = vpop.f32.mrb[0].mxu0
    %v1491 = vadd.f32 %v1061, %v1490
    %v1492 = vpop.f32.mrb[0].mxu0
    %v1493 = vadd.f32 %v1057, %v1492
    %v1494 = vpop.f32.mrb[0].mxu0
    %v1495 = vadd.f32 %v1061, %v1494
    %1496 = vmatprep.mubr.bf16.mxu0 0
    %1497 = vmatmul.mubr.bf16.gmra.mrb[0].mxu0 %v1038
    %v1498 = vpop.f32.mrb[0].mxu0
    %v1499 = vadd.f32 %v1057, %v1498
    %v1500 = vpop.f32.mrb[0].mxu0
    %v1501 = vadd.f32 %v1061, %v1500
    %v1502 = vpop.f32.mrb[0].mxu0
    %v1503 = vadd.f32 %v1057, %v1502
    %v1504 = vpop.f32.mrb[0].mxu0
    %v1505 = vadd.f32 %v1061, %v1504
    %1506 = vmatprep.mubr.bf16.mxu0 0
    %1507 = vmatmul.mubr.bf16.gmra.mrb[0].mxu0 %v1039
    %v1508 = vpop.f32.mrb[0].mxu0
    %v1509 = vadd.f32 %v1057, %v1508
    %v1510 = vpop.f32.mrb[0].mxu0
    %v1511 = vadd.f32 %v1061, %v1510
    %v1512 = vpop.f32.mrb[0].mxu0
    %v1513 = vadd.f32 %v1057, %v1512
    %v1514 = vpop.f32.mrb[0].mxu0
    %v1515 = vadd.f32 %v1061, %v1514
    %1516 = vmatprep.mubr.bf16.mxu0 0
    %1517 = vmatmul.mubr.bf16.gmra.mrb[0].mxu0 %v1040
    %v1518 = vpop.f32.mrb[0].mxu0
    %v1519 = vadd.f32 %v1057, %v1518
    %v1520 = vpop.f32.mrb[0].mxu0
    %v1521 = vadd.f32 %v1061, %v1520
    %v1522 = vpop.f32.mrb[0].mxu0
    %v1523 = vadd.f32 %v1057, %v1522
    %v1524 = vpop.f32.mrb[0].mxu0
    %v1525 = vadd.f32 %v1061, %v1524
    %1526 = vmatprep.mubr.bf16.mxu0 0
    %1527 = vmatmul.mubr.bf16.gmra.mrb[0].mxu0 %v1041
    %v1528 = vpop.f32.mrb[0].mxu0
    %v1529 = vadd.f32 %v1057, %v1528
    %v1530 = vpop.f32.mrb[0].mxu0
    %v1531 = vadd.f32 %v1061, %v1530
    %v1532 = vpop.f32.mrb[0].mxu0
    %v1533 = vadd.f32 %v1057, %v1532
    %v1534 = vpop.f32.mrb[0].mxu0
    %v1535 = vadd.f32 %v1061, %v1534
    %1536 = vmatprep.mubr.bf16.mxu0 0
    %1537 = vmatmul.mubr.bf16.gmra.mrb[0].mxu0 %v1042
    %v1538 = vpop.f32.mrb[0].mxu0
    %v1539 = vadd.f32 %v1057, %v1538
    %v1540 = vpop.f32.mrb[0].mxu0
    %v1541 = vadd.f32 %v1061, %v1540
    %v1542 = vpop.f32.mrb[0].mxu0
    %v1543 = vadd.f32 %v1057, %v1542
    %v1544 = vpop.f32.mrb[0].mxu0
    %v1545 = vadd.f32 %v1061, %v1544
    %1546 = vmatprep.mubr.bf16.mxu0 0
    %1547 = vmatmul.mubr.bf16.gmra.mrb[0].mxu0 %v1043
    %v1548 = vpop.f32.mrb[0].mxu0
    %v1549 = vadd.f32 %v1057, %v1548
    %v1550 = vpop.f32.mrb[0].mxu0
    %v1551 = vadd.f32 %v1061, %v1550
    %v1552 = vpop.f32.mrb[0].mxu0
    %v1553 = vadd.f32 %v1057, %v1552
    %v1554 = vpop.f32.mrb[0].mxu0
    %v1555 = vadd.f32 %v1061, %v1554
    %1556 = vmatprep.mubr.bf16.mxu0 0
    %1557 = vmatmul.mubr.bf16.gmra.mrb[0].mxu0 %v1044
    %v1558 = vpop.f32.mrb[0].mxu0
    %v1559 = vadd.f32 %v1057, %v1558
    %v1560 = vpop.f32.mrb[0].mxu0
    %v1561 = vadd.f32 %v1061, %v1560
    %v1562 = vpop.f32.mrb[0].mxu0
    %v1563 = vadd.f32 %v1057, %v1562
    %v1564 = vpop.f32.mrb[0].mxu0
    %v1565 = vadd.f32 %v1061, %v1564
    %1566 = vmatprep.mubr.bf16.mxu0 0
    %1567 = vmatmul.mubr.bf16.gmra.mrb[0].mxu0 %v1045
    %v1568 = vpop.f32.mrb[0].mxu0
    %v1569 = vadd.f32 %v1057, %v1568
    %v1570 = vpop.f32.mrb[0].mxu0
    %v1571 = vadd.f32 %v1061, %v1570
    %v1572 = vpop.f32.mrb[0].mxu0
    %v1573 = vadd.f32 %v1057, %v1572
    %v1574 = vpop.f32.mrb[0].mxu0
    %v1575 = vadd.f32 %v1061, %v1574
    %1576 = vmatprep.mubr.bf16.mxu0 0
    %1577 = vmatmul.mubr.bf16.gmra.mrb[0].mxu0 %v1046
    %v1578 = vpop.f32.mrb[0].mxu0
    %v1579 = vadd.f32 %v1057, %v1578
    %v1580 = vpop.f32.mrb[0].mxu0
    %v1581 = vadd.f32 %v1061, %v1580
    %v1582 = vpop.f32.mrb[0].mxu0
    %v1583 = vadd.f32 %v1057, %v1582
    %v1584 = vpop.f32.mrb[0].mxu0
    %v1585 = vadd.f32 %v1061, %v1584
    %1586 = vmatprep.mubr.bf16.mxu0 0
    %1587 = vmatmul.mubr.bf16.gmra.mrb[0].mxu0 %v1047
    %v1588 = vpop.f32.mrb[0].mxu0
    %v1589 = vadd.f32 %v1057, %v1588
    %v1590 = vpop.f32.mrb[0].mxu0
    %v1591 = vadd.f32 %v1061, %v1590
    %v1592 = vpop.f32.mrb[0].mxu0
    %v1593 = vadd.f32 %v1057, %v1592
    %v1594 = vpop.f32.mrb[0].mxu0
    %v1595 = vadd.f32 %v1061, %v1594
    %1596 = vmatprep.mubr.bf16.mxu0 0
    %1597 = vmatmul.mubr.bf16.gmra.mrb[0].mxu0 %v1048
    %v1598 = vpop.f32.mrb[0].mxu0
    %v1599 = vadd.f32 %v1057, %v1598
    %v1600 = vpop.f32.mrb[0].mxu0
    %v1601 = vadd.f32 %v1061, %v1600
    %v1602 = vpop.f32.mrb[0].mxu0
    %v1603 = vadd.f32 %v1057, %v1602
    %v1604 = vpop.f32.mrb[0].mxu0
    %v1605 = vadd.f32 %v1061, %v1604
    %1606 = vdwg.mxu0
    %1607 = vmatprep.subr.bf16.mxu0 %v1289
    %1608 = vmatpush1.bf16.msra.mxu0 %v1288
    %1609 = vmatprep.subr.bf16.mxu0 %v1297
    %1610 = vmatpush1.bf16.msra.mxu0 %v1296
    %1611 = vmatprep.subr.bf16.mxu0 %v1305
    %1612 = vmatpush1.bf16.msra.mxu0 %v1304
    %1613 = vmatprep.subr.bf16.mxu0 %v1313
    %1614 = vmatpush1.bf16.msra.mxu0 %v1312
    %1615 = vmatprep.subr.bf16.mxu0 %v1321
    %1616 = vmatpush1.bf16.msra.mxu0 %v1320
    %1617 = vmatprep.subr.bf16.mxu0 %v1329
    %1618 = vmatpush1.bf16.msra.mxu0 %v1328
    %1619 = vmatprep.subr.bf16.mxu0 %v1337
    %1620 = vmatpush1.bf16.msra.mxu0 %v1336
    %1621 = vmatprep.subr.bf16.mxu0 %v1345
    %1622 = vmatpush1.bf16.msra.mxu0 %v1344
    %1623 = vmatprep.subr.bf16.mxu0 0
    %1624 = vmatpush1.bf16.msra.mxu0 0
    %1625 = vmatprep.subr.bf16.mxu0 0
    %1626 = vmatpush1.bf16.msra.mxu0 0
    %1627 = vmatprep.subr.bf16.mxu0 0
    %1628 = vmatpush1.bf16.msra.mxu0 0
    %1629 = vmatprep.subr.bf16.mxu0 0
    %1630 = vmatpush1.bf16.msra.mxu0 0
    %1631 = vmatprep.subr.bf16.mxu0 0
    %1632 = vmatpush1.bf16.msra.mxu0 0
    %1633 = vmatprep.subr.bf16.mxu0 0
    %1634 = vmatpush1.bf16.msra.mxu0 0
    %1635 = vmatprep.subr.bf16.mxu0 0
    %1636 = vmatpush1.bf16.msra.mxu0 0
    %1637 = vmatprep.subr.bf16.mxu0 0
    %1638 = vmatpush1.bf16.msra.mxu0 0
    %1639 = vmatprep.mubr.bf16.mxu0 0
    %1640 = vmatmul.mubr.bf16.gmra.mrb[0].mxu0 %v1033
    %v1641 = vpop.f32.mrb[0].mxu0
    %v1642 = vadd.f32 %v1065, %v1641
    %v1643 = vpop.f32.mrb[0].mxu0
    %v1644 = vadd.f32 %v1069, %v1643
    %v1645 = vpop.f32.mrb[0].mxu0
    %v1646 = vadd.f32 %v1065, %v1645
    %v1647 = vpop.f32.mrb[0].mxu0
    %v1648 = vadd.f32 %v1069, %v1647
    %1649 = vmatprep.mubr.bf16.mxu0 0
    %1650 = vmatmul.mubr.bf16.gmra.mrb[0].mxu0 %v1034
    %v1651 = vpop.f32.mrb[0].mxu0
    %v1652 = vadd.f32 %v1065, %v1651
    %v1653 = vpop.f32.mrb[0].mxu0
    %v1654 = vadd.f32 %v1069, %v1653
    %v1655 = vpop.f32.mrb[0].mxu0
    %v1656 = vadd.f32 %v1065, %v1655
    %v1657 = vpop.f32.mrb[0].mxu0
    %v1658 = vadd.f32 %v1069, %v1657
    %1659 = vmatprep.mubr.bf16.mxu0 0
    %1660 = vmatmul.mubr.bf16.gmra.mrb[0].mxu0 %v1035
    %v1661 = vpop.f32.mrb[0].mxu0
    %v1662 = vadd.f32 %v1065, %v1661
    %v1663 = vpop.f32.mrb[0].mxu0
    %v1664 = vadd.f32 %v1069, %v1663
    %v1665 = vpop.f32.mrb[0].mxu0
    %v1666 = vadd.f32 %v1065, %v1665
    %v1667 = vpop.f32.mrb[0].mxu0
    %v1668 = vadd.f32 %v1069, %v1667
    %1669 = vmatprep.mubr.bf16.mxu0 0
    %1670 = vmatmul.mubr.bf16.gmra.mrb[0].mxu0 %v1036
    %v1671 = vpop.f32.mrb[0].mxu0
    %v1672 = vadd.f32 %v1065, %v1671
    %v1673 = vpop.f32.mrb[0].mxu0
    %v1674 = vadd.f32 %v1069, %v1673
    %v1675 = vpop.f32.mrb[0].mxu0
    %v1676 = vadd.f32 %v1065, %v1675
    %v1677 = vpop.f32.mrb[0].mxu0
    %v1678 = vadd.f32 %v1069, %v1677
    %1679 = vmatprep.mubr.bf16.mxu0 0
    %1680 = vmatmul.mubr.bf16.gmra.mrb[0].mxu0 %v1037
    %v1681 = vpop.f32.mrb[0].mxu0
    %v1682 = vadd.f32 %v1065, %v1681
    %v1683 = vpop.f32.mrb[0].mxu0
    %v1684 = vadd.f32 %v1069, %v1683
    %v1685 = vpop.f32.mrb[0].mxu0
    %v1686 = vadd.f32 %v1065, %v1685
    %v1687 = vpop.f32.mrb[0].mxu0
    %v1688 = vadd.f32 %v1069, %v1687
    %1689 = vmatprep.mubr.bf16.mxu0 0
    %1690 = vmatmul.mubr.bf16.gmra.mrb[0].mxu0 %v1038
    %v1691 = vpop.f32.mrb[0].mxu0
    %v1692 = vadd.f32 %v1065, %v1691
    %v1693 = vpop.f32.mrb[0].mxu0
    %v1694 = vadd.f32 %v1069, %v1693
    %v1695 = vpop.f32.mrb[0].mxu0
    %v1696 = vadd.f32 %v1065, %v1695
    %v1697 = vpop.f32.mrb[0].mxu0
    %v1698 = vadd.f32 %v1069, %v1697
    %1699 = vmatprep.mubr.bf16.mxu0 0
    %1700 = vmatmul.mubr.bf16.gmra.mrb[0].mxu0 %v1039
    %v1701 = vpop.f32.mrb[0].mxu0
    %v1702 = vadd.f32 %v1065, %v1701
    %v1703 = vpop.f32.mrb[0].mxu0
    %v1704 = vadd.f32 %v1069, %v1703
    %v1705 = vpop.f32.mrb[0].mxu0
    %v1706 = vadd.f32 %v1065, %v1705
    %v1707 = vpop.f32.mrb[0].mxu0
    %v1708 = vadd.f32 %v1069, %v1707
    %1709 = vmatprep.mubr.bf16.mxu0 0
    %1710 = vmatmul.mubr.bf16.gmra.mrb[0].mxu0 %v1040
    %v1711 = vpop.f32.mrb[0].mxu0
    %v1712 = vadd.f32 %v1065, %v1711
    %v1713 = vpop.f32.mrb[0].mxu0
    %v1714 = vadd.f32 %v1069, %v1713
    %v1715 = vpop.f32.mrb[0].mxu0
    %v1716 = vadd.f32 %v1065, %v1715
    %v1717 = vpop.f32.mrb[0].mxu0
    %v1718 = vadd.f32 %v1069, %v1717
    %1719 = vmatprep.mubr.bf16.mxu0 0
    %1720 = vmatmul.mubr.bf16.gmra.mrb[0].mxu0 %v1041
    %v1721 = vpop.f32.mrb[0].mxu0
    %v1722 = vadd.f32 %v1065, %v1721
    %v1723 = vpop.f32.mrb[0].mxu0
    %v1724 = vadd.f32 %v1069, %v1723
    %v1725 = vpop.f32.mrb[0].mxu0
    %v1726 = vadd.f32 %v1065, %v1725
    %v1727 = vpop.f32.mrb[0].mxu0
    %v1728 = vadd.f32 %v1069, %v1727
    %1729 = vmatprep.mubr.bf16.mxu0 0
    %1730 = vmatmul.mubr.bf16.gmra.mrb[0].mxu0 %v1042
    %v1731 = vpop.f32.mrb[0].mxu0
    %v1732 = vadd.f32 %v1065, %v1731
    %v1733 = vpop.f32.mrb[0].mxu0
    %v1734 = vadd.f32 %v1069, %v1733
    %v1735 = vpop.f32.mrb[0].mxu0
    %v1736 = vadd.f32 %v1065, %v1735
    %v1737 = vpop.f32.mrb[0].mxu0
    %v1738 = vadd.f32 %v1069, %v1737
    %1739 = vmatprep.mubr.bf16.mxu0 0
    %1740 = vmatmul.mubr.bf16.gmra.mrb[0].mxu0 %v1043
    %v1741 = vpop.f32.mrb[0].mxu0
    %v1742 = vadd.f32 %v1065, %v1741
    %v1743 = vpop.f32.mrb[0].mxu0
    %v1744 = vadd.f32 %v1069, %v1743
    %v1745 = vpop.f32.mrb[0].mxu0
    %v1746 = vadd.f32 %v1065, %v1745
    %v1747 = vpop.f32.mrb[0].mxu0
    %v1748 = vadd.f32 %v1069, %v1747
    %1749 = vmatprep.mubr.bf16.mxu0 0
    %1750 = vmatmul.mubr.bf16.gmra.mrb[0].mxu0 %v1044
    %v1751 = vpop.f32.mrb[0].mxu0
    %v1752 = vadd.f32 %v1065, %v1751
    %v1753 = vpop.f32.mrb[0].mxu0
    %v1754 = vadd.f32 %v1069, %v1753
    %v1755 = vpop.f32.mrb[0].mxu0
    %v1756 = vadd.f32 %v1065, %v1755
    %v1757 = vpop.f32.mrb[0].mxu0
    %v1758 = vadd.f32 %v1069, %v1757
    %1759 = vmatprep.mubr.bf16.mxu0 0
    %1760 = vmatmul.mubr.bf16.gmra.mrb[0].mxu0 %v1045
    %v1761 = vpop.f32.mrb[0].mxu0
    %v1762 = vadd.f32 %v1065, %v1761
    %v1763 = vpop.f32.mrb[0].mxu0
    %v1764 = vadd.f32 %v1069, %v1763
    %v1765 = vpop.f32.mrb[0].mxu0
    %v1766 = vadd.f32 %v1065, %v1765
    %v1767 = vpop.f32.mrb[0].mxu0
    %v1768 = vadd.f32 %v1069, %v1767
    %1769 = vmatprep.mubr.bf16.mxu0 0
    %1770 = vmatmul.mubr.bf16.gmra.mrb[0].mxu0 %v1046
    %v1771 = vpop.f32.mrb[0].mxu0
    %v1772 = vadd.f32 %v1065, %v1771
    %v1773 = vpop.f32.mrb[0].mxu0
    %v1774 = vadd.f32 %v1069, %v1773
    %v1775 = vpop.f32.mrb[0].mxu0
    %v1776 = vadd.f32 %v1065, %v1775
    %v1777 = vpop.f32.mrb[0].mxu0
    %v1778 = vadd.f32 %v1069, %v1777
    %1779 = vmatprep.mubr.bf16.mxu0 0
    %1780 = vmatmul.mubr.bf16.gmra.mrb[0].mxu0 %v1047
    %v1781 = vpop.f32.mrb[0].mxu0
    %v1782 = vadd.f32 %v1065, %v1781
    %v1783 = vpop.f32.mrb[0].mxu0
    %v1784 = vadd.f32 %v1069, %v1783
    %v1785 = vpop.f32.mrb[0].mxu0
    %v1786 = vadd.f32 %v1065, %v1785
    %v1787 = vpop.f32.mrb[0].mxu0
    %v1788 = vadd.f32 %v1069, %v1787
    %1789 = vmatprep.mubr.bf16.mxu0 0
    %1790 = vmatmul.mubr.bf16.gmra.mrb[0].mxu0 %v1048
    %v1791 = vpop.f32.mrb[0].mxu0
    %v1792 = vadd.f32 %v1065, %v1791
    %v1793 = vpop.f32.mrb[0].mxu0
    %v1794 = vadd.f32 %v1069, %v1793
    %v1795 = vpop.f32.mrb[0].mxu0
    %v1796 = vadd.f32 %v1065, %v1795
    %v1797 = vpop.f32.mrb[0].mxu0
    %v1798 = vadd.f32 %v1069, %v1797
    %1799 = vdwg.mxu0
    %1800 = vmatprep.subr.bf16.mxu0 %v1291
    %1801 = vmatpush1.bf16.msra.mxu0 %v1290
    %1802 = vmatprep.subr.bf16.mxu0 %v1299
    %1803 = vmatpush1.bf16.msra.mxu0 %v1298
    %1804 = vmatprep.subr.bf16.mxu0 %v1307
    %1805 = vmatpush1.bf16.msra.mxu0 %v1306
    %1806 = vmatprep.subr.bf16.mxu0 %v1315
    %1807 = vmatpush1.bf16.msra.mxu0 %v1314
    %1808 = vmatprep.subr.bf16.mxu0 %v1323
    %1809 = vmatpush1.bf16.msra.mxu0 %v1322
    %1810 = vmatprep.subr.bf16.mxu0 %v1331
    %1811 = vmatpush1.bf16.msra.mxu0 %v1330
    %1812 = vmatprep.subr.bf16.mxu0 %v1339
    %1813 = vmatpush1.bf16.msra.mxu0 %v1338
    %1814 = vmatprep.subr.bf16.mxu0 %v1347
    %1815 = vmatpush1.bf16.msra.mxu0 %v1346
    %1816 = vmatprep.subr.bf16.mxu0 0
    %1817 = vmatpush1.bf16.msra.mxu0 0
    %1818 = vmatprep.subr.bf16.mxu0 0
    %1819 = vmatpush1.bf16.msra.mxu0 0
    %1820 = vmatprep.subr.bf16.mxu0 0
    %1821 = vmatpush1.bf16.msra.mxu0 0
    %1822 = vmatprep.subr.bf16.mxu0 0
    %1823 = vmatpush1.bf16.msra.mxu0 0
    %1824 = vmatprep.subr.bf16.mxu0 0
    %1825 = vmatpush1.bf16.msra.mxu0 0
    %1826 = vmatprep.subr.bf16.mxu0 0
    %1827 = vmatpush1.bf16.msra.mxu0 0
    %1828 = vmatprep.subr.bf16.mxu0 0
    %1829 = vmatpush1.bf16.msra.mxu0 0
    %1830 = vmatprep.subr.bf16.mxu0 0
    %1831 = vmatpush1.bf16.msra.mxu0 0
    %1832 = vmatprep.mubr.bf16.mxu0 0
    %1833 = vmatmul.mubr.bf16.gmra.mrb[0].mxu0 %v1033
    %v1834 = vpop.f32.mrb[0].mxu0
    %v1835 = vadd.f32 %v1073, %v1834
    %v1836 = vpop.f32.mrb[0].mxu0
    %v1837 = vadd.f32 %v1077, %v1836
    %v1838 = vpop.f32.mrb[0].mxu0
    %v1839 = vadd.f32 %v1073, %v1838
    %v1840 = vpop.f32.mrb[0].mxu0
    %v1841 = vadd.f32 %v1077, %v1840
    %1842 = vmatprep.mubr.bf16.mxu0 0
    %1843 = vmatmul.mubr.bf16.gmra.mrb[0].mxu0 %v1034
    %v1844 = vpop.f32.mrb[0].mxu0
    %v1845 = vadd.f32 %v1073, %v1844
    %v1846 = vpop.f32.mrb[0].mxu0
    %v1847 = vadd.f32 %v1077, %v1846
    %v1848 = vpop.f32.mrb[0].mxu0
    %v1849 = vadd.f32 %v1073, %v1848
    %v1850 = vpop.f32.mrb[0].mxu0
    %v1851 = vadd.f32 %v1077, %v1850
    %1852 = vmatprep.mubr.bf16.mxu0 0
    %1853 = vmatmul.mubr.bf16.gmra.mrb[0].mxu0 %v1035
    %v1854 = vpop.f32.mrb[0].mxu0
    %v1855 = vadd.f32 %v1073, %v1854
    %v1856 = vpop.f32.mrb[0].mxu0
    %v1857 = vadd.f32 %v1077, %v1856
    %v1858 = vpop.f32.mrb[0].mxu0
    %v1859 = vadd.f32 %v1073, %v1858
    %v1860 = vpop.f32.mrb[0].mxu0
    %v1861 = vadd.f32 %v1077, %v1860
    %1862 = vmatprep.mubr.bf16.mxu0 0
    %1863 = vmatmul.mubr.bf16.gmra.mrb[0].mxu0 %v1036
    %v1864 = vpop.f32.mrb[0].mxu0
    %v1865 = vadd.f32 %v1073, %v1864
    %v1866 = vpop.f32.mrb[0].mxu0
    %v1867 = vadd.f32 %v1077, %v1866
    %v1868 = vpop.f32.mrb[0].mxu0
    %v1869 = vadd.f32 %v1073, %v1868
    %v1870 = vpop.f32.mrb[0].mxu0
    %v1871 = vadd.f32 %v1077, %v1870
    %1872 = vmatprep.mubr.bf16.mxu0 0
    %1873 = vmatmul.mubr.bf16.gmra.mrb[0].mxu0 %v1037
    %v1874 = vpop.f32.mrb[0].mxu0
    %v1875 = vadd.f32 %v1073, %v1874
    %v1876 = vpop.f32.mrb[0].mxu0
    %v1877 = vadd.f32 %v1077, %v1876
    %v1878 = vpop.f32.mrb[0].mxu0
    %v1879 = vadd.f32 %v1073, %v1878
    %v1880 = vpop.f32.mrb[0].mxu0
    %v1881 = vadd.f32 %v1077, %v1880
    %1882 = vmatprep.mubr.bf16.mxu0 0
    %1883 = vmatmul.mubr.bf16.gmra.mrb[0].mxu0 %v1038
    %v1884 = vpop.f32.mrb[0].mxu0
    %v1885 = vadd.f32 %v1073, %v1884
    %v1886 = vpop.f32.mrb[0].mxu0
    %v1887 = vadd.f32 %v1077, %v1886
    %v1888 = vpop.f32.mrb[0].mxu0
    %v1889 = vadd.f32 %v1073, %v1888
    %v1890 = vpop.f32.mrb[0].mxu0
    %v1891 = vadd.f32 %v1077, %v1890
    %1892 = vmatprep.mubr.bf16.mxu0 0
    %1893 = vmatmul.mubr.bf16.gmra.mrb[0].mxu0 %v1039
    %v1894 = vpop.f32.mrb[0].mxu0
    %v1895 = vadd.f32 %v1073, %v1894
    %v1896 = vpop.f32.mrb[0].mxu0
    %v1897 = vadd.f32 %v1077, %v1896
    %v1898 = vpop.f32.mrb[0].mxu0
    %v1899 = vadd.f32 %v1073, %v1898
    %v1900 = vpop.f32.mrb[0].mxu0
    %v1901 = vadd.f32 %v1077, %v1900
    %1902 = vmatprep.mubr.bf16.mxu0 0
    %1903 = vmatmul.mubr.bf16.gmra.mrb[0].mxu0 %v1040
    %v1904 = vpop.f32.mrb[0].mxu0
    %v1905 = vadd.f32 %v1073, %v1904
    %v1906 = vpop.f32.mrb[0].mxu0
    %v1907 = vadd.f32 %v1077, %v1906
    %v1908 = vpop.f32.mrb[0].mxu0
    %v1909 = vadd.f32 %v1073, %v1908
    %v1910 = vpop.f32.mrb[0].mxu0
    %v1911 = vadd.f32 %v1077, %v1910
    %1912 = vmatprep.mubr.bf16.mxu0 0
    %1913 = vmatmul.mubr.bf16.gmra.mrb[0].mxu0 %v1041
    %v1914 = vpop.f32.mrb[0].mxu0
    %v1915 = vadd.f32 %v1073, %v1914
    %v1916 = vpop.f32.mrb[0].mxu0
    %v1917 = vadd.f32 %v1077, %v1916
    %v1918 = vpop.f32.mrb[0].mxu0
    %v1919 = vadd.f32 %v1073, %v1918
    %v1920 = vpop.f32.mrb[0].mxu0
    %v1921 = vadd.f32 %v1077, %v1920
    %1922 = vmatprep.mubr.bf16.mxu0 0
    %1923 = vmatmul.mubr.bf16.gmra.mrb[0].mxu0 %v1042
    %v1924 = vpop.f32.mrb[0].mxu0
    %v1925 = vadd.f32 %v1073, %v1924
    %v1926 = vpop.f32.mrb[0].mxu0
    %v1927 = vadd.f32 %v1077, %v1926
    %v1928 = vpop.f32.mrb[0].mxu0
    %v1929 = vadd.f32 %v1073, %v1928
    %v1930 = vpop.f32.mrb[0].mxu0
    %v1931 = vadd.f32 %v1077, %v1930
    %1932 = vmatprep.mubr.bf16.mxu0 0
    %1933 = vmatmul.mubr.bf16.gmra.mrb[0].mxu0 %v1043
    %v1934 = vpop.f32.mrb[0].mxu0
    %v1935 = vadd.f32 %v1073, %v1934
    %v1936 = vpop.f32.mrb[0].mxu0
    %v1937 = vadd.f32 %v1077, %v1936
    %v1938 = vpop.f32.mrb[0].mxu0
    %v1939 = vadd.f32 %v1073, %v1938
    %v1940 = vpop.f32.mrb[0].mxu0
    %v1941 = vadd.f32 %v1077, %v1940
    %1942 = vmatprep.mubr.bf16.mxu0 0
    %1943 = vmatmul.mubr.bf16.gmra.mrb[0].mxu0 %v1044
    %v1944 = vpop.f32.mrb[0].mxu0
    %v1945 = vadd.f32 %v1073, %v1944
    %v1946 = vpop.f32.mrb[0].mxu0
    %v1947 = vadd.f32 %v1077, %v1946
    %v1948 = vpop.f32.mrb[0].mxu0
    %v1949 = vadd.f32 %v1073, %v1948
    %v1950 = vpop.f32.mrb[0].mxu0
    %v1951 = vadd.f32 %v1077, %v1950
    %1952 = vmatprep.mubr.bf16.mxu0 0
    %1953 = vmatmul.mubr.bf16.gmra.mrb[0].mxu0 %v1045
    %v1954 = vpop.f32.mrb[0].mxu0
    %v1955 = vadd.f32 %v1073, %v1954
    %v1956 = vpop.f32.mrb[0].mxu0
    %v1957 = vadd.f32 %v1077, %v1956
    %v1958 = vpop.f32.mrb[0].mxu0
    %v1959 = vadd.f32 %v1073, %v1958
    %v1960 = vpop.f32.mrb[0].mxu0
    %v1961 = vadd.f32 %v1077, %v1960
    %1962 = vmatprep.mubr.bf16.mxu0 0
    %1963 = vmatmul.mubr.bf16.gmra.mrb[0].mxu0 %v1046
    %v1964 = vpop.f32.mrb[0].mxu0
    %v1965 = vadd.f32 %v1073, %v1964
    %v1966 = vpop.f32.mrb[0].mxu0
    %v1967 = vadd.f32 %v1077, %v1966
    %v1968 = vpop.f32.mrb[0].mxu0
    %v1969 = vadd.f32 %v1073, %v1968
    %v1970 = vpop.f32.mrb[0].mxu0
    %v1971 = vadd.f32 %v1077, %v1970
    %1972 = vmatprep.mubr.bf16.mxu0 0
    %1973 = vmatmul.mubr.bf16.gmra.mrb[0].mxu0 %v1047
    %v1974 = vpop.f32.mrb[0].mxu0
    %v1975 = vadd.f32 %v1073, %v1974
    %v1976 = vpop.f32.mrb[0].mxu0
    %v1977 = vadd.f32 %v1077, %v1976
    %v1978 = vpop.f32.mrb[0].mxu0
    %v1979 = vadd.f32 %v1073, %v1978
    %v1980 = vpop.f32.mrb[0].mxu0
    %v1981 = vadd.f32 %v1077, %v1980
    %1982 = vmatprep.mubr.bf16.mxu0 0
    %1983 = vmatmul.mubr.bf16.gmra.mrb[0].mxu0 %v1048
    %v1984 = vpop.f32.mrb[0].mxu0
    %v1985 = vadd.f32 %v1073, %v1984
    %v1986 = vpop.f32.mrb[0].mxu0
    %v1987 = vadd.f32 %v1077, %v1986
    %v1988 = vpop.f32.mrb[0].mxu0
    %v1989 = vadd.f32 %v1073, %v1988
    %v1990 = vpop.f32.mrb[0].mxu0
    %v1991 = vadd.f32 %v1077, %v1990
    %1992 = vdwg.mxu0
    %1993 = vmatprep.subr.bf16.mxu0 %v1293
    %1994 = vmatpush1.bf16.msra.mxu0 %v1292
    %1995 = vmatprep.subr.bf16.mxu0 %v1301
    %1996 = vmatpush1.bf16.msra.mxu0 %v1300
    %1997 = vmatprep.subr.bf16.mxu0 %v1309
    %1998 = vmatpush1.bf16.msra.mxu0 %v1308
    %1999 = vmatprep.subr.bf16.mxu0 %v1317
    %2000 = vmatpush1.bf16.msra.mxu0 %v1316
    %2001 = vmatprep.subr.bf16.mxu0 %v1325
    %2002 = vmatpush1.bf16.msra.mxu0 %v1324
    %2003 = vmatprep.subr.bf16.mxu0 %v1333
    %2004 = vmatpush1.bf16.msra.mxu0 %v1332
    %2005 = vmatprep.subr.bf16.mxu0 %v1341
    %2006 = vmatpush1.bf16.msra.mxu0 %v1340
    %2007 = vmatprep.subr.bf16.mxu0 %v1349
    %2008 = vmatpush1.bf16.msra.mxu0 %v1348
    %2009 = vmatprep.subr.bf16.mxu0 0
    %2010 = vmatpush1.bf16.msra.mxu0 0
    %2011 = vmatprep.subr.bf16.mxu0 0
    %2012 = vmatpush1.bf16.msra.mxu0 0
    %2013 = vmatprep.subr.bf16.mxu0 0
    %2014 = vmatpush1.bf16.msra.mxu0 0
    %2015 = vmatprep.subr.bf16.mxu0 0
    %2016 = vmatpush1.bf16.msra.mxu0 0
    %2017 = vmatprep.subr.bf16.mxu0 0
    %2018 = vmatpush1.bf16.msra.mxu0 0
    %2019 = vmatprep.subr.bf16.mxu0 0
    %2020 = vmatpush1.bf16.msra.mxu0 0
    %2021 = vmatprep.subr.bf16.mxu0 0
    %2022 = vmatpush1.bf16.msra.mxu0 0
    %2023 = vmatprep.subr.bf16.mxu0 0
    %2024 = vmatpush1.bf16.msra.mxu0 0
    %2025 = vmatprep.mubr.bf16.mxu0 0
    %2026 = vmatmul.mubr.bf16.gmra.mrb[0].mxu0 %v1033
    %v2027 = vpop.f32.mrb[0].mxu0
    %v2028 = vadd.f32 %v1081, %v2027
    %v2029 = vpop.f32.mrb[0].mxu0
    %v2030 = vadd.f32 %v1085, %v2029
    %v2031 = vpop.f32.mrb[0].mxu0
    %v2032 = vadd.f32 %v1081, %v2031
    %v2033 = vpop.f32.mrb[0].mxu0
    %v2034 = vadd.f32 %v1085, %v2033
    %2035 = vmatprep.mubr.bf16.mxu0 0
    %2036 = vmatmul.mubr.bf16.gmra.mrb[0].mxu0 %v1034
    %v2037 = vpop.f32.mrb[0].mxu0
    %v2038 = vadd.f32 %v1081, %v2037
    %v2039 = vpop.f32.mrb[0].mxu0
    %v2040 = vadd.f32 %v1085, %v2039
    %v2041 = vpop.f32.mrb[0].mxu0
    %v2042 = vadd.f32 %v1081, %v2041
    %v2043 = vpop.f32.mrb[0].mxu0
    %v2044 = vadd.f32 %v1085, %v2043
    %2045 = vmatprep.mubr.bf16.mxu0 0
    %2046 = vmatmul.mubr.bf16.gmra.mrb[0].mxu0 %v1035
    %v2047 = vpop.f32.mrb[0].mxu0
    %v2048 = vadd.f32 %v1081, %v2047
    %v2049 = vpop.f32.mrb[0].mxu0
    %v2050 = vadd.f32 %v1085, %v2049
    %v2051 = vpop.f32.mrb[0].mxu0
    %v2052 = vadd.f32 %v1081, %v2051
    %v2053 = vpop.f32.mrb[0].mxu0
    %v2054 = vadd.f32 %v1085, %v2053
    %2055 = vmatprep.mubr.bf16.mxu0 0
    %2056 = vmatmul.mubr.bf16.gmra.mrb[0].mxu0 %v1036
    %v2057 = vpop.f32.mrb[0].mxu0
    %v2058 = vadd.f32 %v1081, %v2057
    %v2059 = vpop.f32.mrb[0].mxu0
    %v2060 = vadd.f32 %v1085, %v2059
    %v2061 = vpop.f32.mrb[0].mxu0
    %v2062 = vadd.f32 %v1081, %v2061
    %v2063 = vpop.f32.mrb[0].mxu0
    %v2064 = vadd.f32 %v1085, %v2063
    %2065 = vmatprep.mubr.bf16.mxu0 0
    %2066 = vmatmul.mubr.bf16.gmra.mrb[0].mxu0 %v1037
    %v2067 = vpop.f32.mrb[0].mxu0
    %v2068 = vadd.f32 %v1081, %v2067
    %v2069 = vpop.f32.mrb[0].mxu0
    %v2070 = vadd.f32 %v1085, %v2069
    %v2071 = vpop.f32.mrb[0].mxu0
    %v2072 = vadd.f32 %v1081, %v2071
    %v2073 = vpop.f32.mrb[0].mxu0
    %v2074 = vadd.f32 %v1085, %v2073
    %2075 = vmatprep.mubr.bf16.mxu0 0
    %2076 = vmatmul.mubr.bf16.gmra.mrb[0].mxu0 %v1038
    %v2077 = vpop.f32.mrb[0].mxu0
    %v2078 = vadd.f32 %v1081, %v2077
    %v2079 = vpop.f32.mrb[0].mxu0
    %v2080 = vadd.f32 %v1085, %v2079
    %v2081 = vpop.f32.mrb[0].mxu0
    %v2082 = vadd.f32 %v1081, %v2081
    %v2083 = vpop.f32.mrb[0].mxu0
    %v2084 = vadd.f32 %v1085, %v2083
    %2085 = vmatprep.mubr.bf16.mxu0 0
    %2086 = vmatmul.mubr.bf16.gmra.mrb[0].mxu0 %v1039
    %v2087 = vpop.f32.mrb[0].mxu0
    %v2088 = vadd.f32 %v1081, %v2087
    %v2089 = vpop.f32.mrb[0].mxu0
    %v2090 = vadd.f32 %v1085, %v2089
    %v2091 = vpop.f32.mrb[0].mxu0
    %v2092 = vadd.f32 %v1081, %v2091
    %v2093 = vpop.f32.mrb[0].mxu0
    %v2094 = vadd.f32 %v1085, %v2093
    %2095 = vmatprep.mubr.bf16.mxu0 0
    %2096 = vmatmul.mubr.bf16.gmra.mrb[0].mxu0 %v1040
    %v2097 = vpop.f32.mrb[0].mxu0
    %v2098 = vadd.f32 %v1081, %v2097
    %v2099 = vpop.f32.mrb[0].mxu0
    %v2100 = vadd.f32 %v1085, %v2099
    %v2101 = vpop.f32.mrb[0].mxu0
    %v2102 = vadd.f32 %v1081, %v2101
    %v2103 = vpop.f32.mrb[0].mxu0
    %v2104 = vadd.f32 %v1085, %v2103
    %2105 = vmatprep.mubr.bf16.mxu0 0
    %2106 = vmatmul.mubr.bf16.gmra.mrb[0].mxu0 %v1041
    %v2107 = vpop.f32.mrb[0].mxu0
    %v2108 = vadd.f32 %v1081, %v2107
    %v2109 = vpop.f32.mrb[0].mxu0
    %v2110 = vadd.f32 %v1085, %v2109
    %v2111 = vpop.f32.mrb[0].mxu0
    %v2112 = vadd.f32 %v1081, %v2111
    %v2113 = vpop.f32.mrb[0].mxu0
    %v2114 = vadd.f32 %v1085, %v2113
    %2115 = vmatprep.mubr.bf16.mxu0 0
    %2116 = vmatmul.mubr.bf16.gmra.mrb[0].mxu0 %v1042
    %v2117 = vpop.f32.mrb[0].mxu0
    %v2118 = vadd.f32 %v1081, %v2117
    %v2119 = vpop.f32.mrb[0].mxu0
    %v2120 = vadd.f32 %v1085, %v2119
    %v2121 = vpop.f32.mrb[0].mxu0
    %v2122 = vadd.f32 %v1081, %v2121
    %v2123 = vpop.f32.mrb[0].mxu0
    %v2124 = vadd.f32 %v1085, %v2123
    %2125 = vmatprep.mubr.bf16.mxu0 0
    %2126 = vmatmul.mubr.bf16.gmra.mrb[0].mxu0 %v1043
    %v2127 = vpop.f32.mrb[0].mxu0
    %v2128 = vadd.f32 %v1081, %v2127
    %v2129 = vpop.f32.mrb[0].mxu0
    %v2130 = vadd.f32 %v1085, %v2129
    %v2131 = vpop.f32.mrb[0].mxu0
    %v2132 = vadd.f32 %v1081, %v2131
    %v2133 = vpop.f32.mrb[0].mxu0
    %v2134 = vadd.f32 %v1085, %v2133
    %2135 = vmatprep.mubr.bf16.mxu0 0
    %2136 = vmatmul.mubr.bf16.gmra.mrb[0].mxu0 %v1044
    %v2137 = vpop.f32.mrb[0].mxu0
    %v2138 = vadd.f32 %v1081, %v2137
    %v2139 = vpop.f32.mrb[0].mxu0
    %v2140 = vadd.f32 %v1085, %v2139
    %v2141 = vpop.f32.mrb[0].mxu0
    %v2142 = vadd.f32 %v1081, %v2141
    %v2143 = vpop.f32.mrb[0].mxu0
    %v2144 = vadd.f32 %v1085, %v2143
    %2145 = vmatprep.mubr.bf16.mxu0 0
    %2146 = vmatmul.mubr.bf16.gmra.mrb[0].mxu0 %v1045
    %v2147 = vpop.f32.mrb[0].mxu0
    %v2148 = vadd.f32 %v1081, %v2147
    %v2149 = vpop.f32.mrb[0].mxu0
    %v2150 = vadd.f32 %v1085, %v2149
    %v2151 = vpop.f32.mrb[0].mxu0
    %v2152 = vadd.f32 %v1081, %v2151
    %v2153 = vpop.f32.mrb[0].mxu0
    %v2154 = vadd.f32 %v1085, %v2153
    %2155 = vmatprep.mubr.bf16.mxu0 0
    %2156 = vmatmul.mubr.bf16.gmra.mrb[0].mxu0 %v1046
    %v2157 = vpop.f32.mrb[0].mxu0
    %v2158 = vadd.f32 %v1081, %v2157
    %v2159 = vpop.f32.mrb[0].mxu0
    %v2160 = vadd.f32 %v1085, %v2159
    %v2161 = vpop.f32.mrb[0].mxu0
    %v2162 = vadd.f32 %v1081, %v2161
    %v2163 = vpop.f32.mrb[0].mxu0
    %v2164 = vadd.f32 %v1085, %v2163
    %2165 = vmatprep.mubr.bf16.mxu0 0
    %2166 = vmatmul.mubr.bf16.gmra.mrb[0].mxu0 %v1047
    %v2167 = vpop.f32.mrb[0].mxu0
    %v2168 = vadd.f32 %v1081, %v2167
    %v2169 = vpop.f32.mrb[0].mxu0
    %v2170 = vadd.f32 %v1085, %v2169
    %v2171 = vpop.f32.mrb[0].mxu0
    %v2172 = vadd.f32 %v1081, %v2171
    %v2173 = vpop.f32.mrb[0].mxu0
    %v2174 = vadd.f32 %v1085, %v2173
    %2175 = vmatprep.mubr.bf16.mxu0 0
    %2176 = vmatmul.mubr.bf16.gmra.mrb[0].mxu0 %v1048
    %v2177 = vpop.f32.mrb[0].mxu0
    %v2178 = vadd.f32 %v1081, %v2177
    %v2179 = vpop.f32.mrb[0].mxu0
    %v2180 = vadd.f32 %v1085, %v2179
    %v2181 = vpop.f32.mrb[0].mxu0
    %v2182 = vadd.f32 %v1081, %v2181
    %v2183 = vpop.f32.mrb[0].mxu0
    %v2184 = vadd.f32 %v1085, %v2183
    %2185 = vdwg.mxu0
    %v2186 = vmax.f32 %v1449, 0.0
    %v2187 = vmax.f32 %v1451, 0.0
    %v2188 = vmax.f32 %v1642, 0.0
    %v2189 = vmax.f32 %v1644, 0.0
    %v2190 = vmax.f32 %v1835, 0.0
    %v2191 = vmax.f32 %v1837, 0.0
    %v2192 = vmax.f32 %v2028, 0.0
    %v2193 = vmax.f32 %v2030, 0.0
    %v2194 = vmax.f32 %v1453, 0.0
    %v2195 = vmax.f32 %v1455, 0.0
    %v2196 = vmax.f32 %v1646, 0.0
    %v2197 = vmax.f32 %v1648, 0.0
    %v2198 = vmax.f32 %v1839, 0.0
    %v2199 = vmax.f32 %v1841, 0.0
    %v2200 = vmax.f32 %v2032, 0.0
    %v2201 = vmax.f32 %v2034, 0.0
    %v2202 = vmax.f32 %v1459, 0.0
    %v2203 = vmax.f32 %v1461, 0.0
    %v2204 = vmax.f32 %v1652, 0.0
    %v2205 = vmax.f32 %v1654, 0.0
    %v2206 = vmax.f32 %v1845, 0.0
    %v2207 = vmax.f32 %v1847, 0.0
    %v2208 = vmax.f32 %v2038, 0.0
    %v2209 = vmax.f32 %v2040, 0.0
    %v2210 = vmax.f32 %v1463, 0.0
    %v2211 = vmax.f32 %v1465, 0.0
    %v2212 = vmax.f32 %v1656, 0.0
    %v2213 = vmax.f32 %v1658, 0.0
    %v2214 = vmax.f32 %v1849, 0.0
    %v2215 = vmax.f32 %v1851, 0.0
    %v2216 = vmax.f32 %v2042, 0.0
    %v2217 = vmax.f32 %v2044, 0.0
    %v2218 = vmax.f32 %v1469, 0.0
    %v2219 = vmax.f32 %v1471, 0.0
    %v2220 = vmax.f32 %v1662, 0.0
    %v2221 = vmax.f32 %v1664, 0.0
    %v2222 = vmax.f32 %v1855, 0.0
    %v2223 = vmax.f32 %v1857, 0.0
    %v2224 = vmax.f32 %v2048, 0.0
    %v2225 = vmax.f32 %v2050, 0.0
    %v2226 = vmax.f32 %v1473, 0.0
    %v2227 = vmax.f32 %v1475, 0.0
    %v2228 = vmax.f32 %v1666, 0.0
    %v2229 = vmax.f32 %v1668, 0.0
    %v2230 = vmax.f32 %v1859, 0.0
    %v2231 = vmax.f32 %v1861, 0.0
    %v2232 = vmax.f32 %v2052, 0.0
    %v2233 = vmax.f32 %v2054, 0.0
    %v2234 = vmax.f32 %v1479, 0.0
    %v2235 = vmax.f32 %v1481, 0.0
    %v2236 = vmax.f32 %v1672, 0.0
    %v2237 = vmax.f32 %v1674, 0.0
    %v2238 = vmax.f32 %v1865, 0.0
    %v2239 = vmax.f32 %v1867, 0.0
    %v2240 = vmax.f32 %v2058, 0.0
    %v2241 = vmax.f32 %v2060, 0.0
    %v2242 = vmax.f32 %v1483, 0.0
    %v2243 = vmax.f32 %v1485, 0.0
    %v2244 = vmax.f32 %v1676, 0.0
    %v2245 = vmax.f32 %v1678, 0.0
    %v2246 = vmax.f32 %v1869, 0.0
    %v2247 = vmax.f32 %v1871, 0.0
    %v2248 = vmax.f32 %v2062, 0.0
    %v2249 = vmax.f32 %v2064, 0.0
    %v2250 = vmax.f32 %v1489, 0.0
    %v2251 = vmax.f32 %v1491, 0.0
    %v2252 = vmax.f32 %v1682, 0.0
    %v2253 = vmax.f32 %v1684, 0.0
    %v2254 = vmax.f32 %v1875, 0.0
    %v2255 = vmax.f32 %v1877, 0.0
    %v2256 = vmax.f32 %v2068, 0.0
    %v2257 = vmax.f32 %v2070, 0.0
    %v2258 = vmax.f32 %v1493, 0.0
    %v2259 = vmax.f32 %v1495, 0.0
    %v2260 = vmax.f32 %v1686, 0.0
    %v2261 = vmax.f32 %v1688, 0.0
    %v2262 = vmax.f32 %v1879, 0.0
    %v2263 = vmax.f32 %v1881, 0.0
    %v2264 = vmax.f32 %v2072, 0.0
    %v2265 = vmax.f32 %v2074, 0.0
    %v2266 = vmax.f32 %v1499, 0.0
    %v2267 = vmax.f32 %v1501, 0.0
    %v2268 = vmax.f32 %v1692, 0.0
    %v2269 = vmax.f32 %v1694, 0.0
    %v2270 = vmax.f32 %v1885, 0.0
    %v2271 = vmax.f32 %v1887, 0.0
    %v2272 = vmax.f32 %v2078, 0.0
    %v2273 = vmax.f32 %v2080, 0.0
    %v2274 = vmax.f32 %v1503, 0.0
    %v2275 = vmax.f32 %v1505, 0.0
    %v2276 = vmax.f32 %v1696, 0.0
    %v2277 = vmax.f32 %v1698, 0.0
    %v2278 = vmax.f32 %v1889, 0.0
    %v2279 = vmax.f32 %v1891, 0.0
    %v2280 = vmax.f32 %v2082, 0.0
    %v2281 = vmax.f32 %v2084, 0.0
    %v2282 = vmax.f32 %v1509, 0.0
    %v2283 = vmax.f32 %v1511, 0.0
    %v2284 = vmax.f32 %v1702, 0.0
    %v2285 = vmax.f32 %v1704, 0.0
    %v2286 = vmax.f32 %v1895, 0.0
    %v2287 = vmax.f32 %v1897, 0.0
    %v2288 = vmax.f32 %v2088, 0.0
    %v2289 = vmax.f32 %v2090, 0.0
    %v2290 = vmax.f32 %v1513, 0.0
    %v2291 = vmax.f32 %v1515, 0.0
    %v2292 = vmax.f32 %v1706, 0.0
    %v2293 = vmax.f32 %v1708, 0.0
    %v2294 = vmax.f32 %v1899, 0.0
    %v2295 = vmax.f32 %v1901, 0.0
    %v2296 = vmax.f32 %v2092, 0.0
    %v2297 = vmax.f32 %v2094, 0.0
    %v2298 = vmax.f32 %v1519, 0.0
    %v2299 = vmax.f32 %v1521, 0.0
    %v2300 = vmax.f32 %v1712, 0.0
    %v2301 = vmax.f32 %v1714, 0.0
    %v2302 = vmax.f32 %v1905, 0.0
    %v2303 = vmax.f32 %v1907, 0.0
    %v2304 = vmax.f32 %v2098, 0.0
    %v2305 = vmax.f32 %v2100, 0.0
    %v2306 = vmax.f32 %v1523, 0.0
    %v2307 = vmax.f32 %v1525, 0.0
    %v2308 = vmax.f32 %v1716, 0.0
    %v2309 = vmax.f32 %v1718, 0.0
    %v2310 = vmax.f32 %v1909, 0.0
    %v2311 = vmax.f32 %v1911, 0.0
    %v2312 = vmax.f32 %v2102, 0.0
    %v2313 = vmax.f32 %v2104, 0.0
    %v2314 = vmax.f32 %v1529, 0.0
    %v2315 = vmax.f32 %v1531, 0.0
    %v2316 = vmax.f32 %v1722, 0.0
    %v2317 = vmax.f32 %v1724, 0.0
    %v2318 = vmax.f32 %v1915, 0.0
    %v2319 = vmax.f32 %v1917, 0.0
    %v2320 = vmax.f32 %v2108, 0.0
    %v2321 = vmax.f32 %v2110, 0.0
    %v2322 = vmax.f32 %v1533, 0.0
    %v2323 = vmax.f32 %v1535, 0.0
    %v2324 = vmax.f32 %v1726, 0.0
    %v2325 = vmax.f32 %v1728, 0.0
    %v2326 = vmax.f32 %v1919, 0.0
    %v2327 = vmax.f32 %v1921, 0.0
    %v2328 = vmax.f32 %v2112, 0.0
    %v2329 = vmax.f32 %v2114, 0.0
    %v2330 = vmax.f32 %v1539, 0.0
    %v2331 = vmax.f32 %v1541, 0.0
    %v2332 = vmax.f32 %v1732, 0.0
    %v2333 = vmax.f32 %v1734, 0.0
    %v2334 = vmax.f32 %v1925, 0.0
    %v2335 = vmax.f32 %v1927, 0.0
    %v2336 = vmax.f32 %v2118, 0.0
    %v2337 = vmax.f32 %v2120, 0.0
    %v2338 = vmax.f32 %v1543, 0.0
    %v2339 = vmax.f32 %v1545, 0.0
    %v2340 = vmax.f32 %v1736, 0.0
    %v2341 = vmax.f32 %v1738, 0.0
    %v2342 = vmax.f32 %v1929, 0.0
    %v2343 = vmax.f32 %v1931, 0.0
    %v2344 = vmax.f32 %v2122, 0.0
    %v2345 = vmax.f32 %v2124, 0.0
    %v2346 = vmax.f32 %v1549, 0.0
    %v2347 = vmax.f32 %v1551, 0.0
    %v2348 = vmax.f32 %v1742, 0.0
    %v2349 = vmax.f32 %v1744, 0.0
    %v2350 = vmax.f32 %v1935, 0.0
    %v2351 = vmax.f32 %v1937, 0.0
    %v2352 = vmax.f32 %v2128, 0.0
    %v2353 = vmax.f32 %v2130, 0.0
    %v2354 = vmax.f32 %v1553, 0.0
    %v2355 = vmax.f32 %v1555, 0.0
    %v2356 = vmax.f32 %v1746, 0.0
    %v2357 = vmax.f32 %v1748, 0.0
    %v2358 = vmax.f32 %v1939, 0.0
    %v2359 = vmax.f32 %v1941, 0.0
    %v2360 = vmax.f32 %v2132, 0.0
    %v2361 = vmax.f32 %v2134, 0.0
    %v2362 = vmax.f32 %v1559, 0.0
    %v2363 = vmax.f32 %v1561, 0.0
    %v2364 = vmax.f32 %v1752, 0.0
    %v2365 = vmax.f32 %v1754, 0.0
    %v2366 = vmax.f32 %v1945, 0.0
    %v2367 = vmax.f32 %v1947, 0.0
    %v2368 = vmax.f32 %v2138, 0.0
    %v2369 = vmax.f32 %v2140, 0.0
    %v2370 = vmax.f32 %v1563, 0.0
    %v2371 = vmax.f32 %v1565, 0.0
    %v2372 = vmax.f32 %v1756, 0.0
    %v2373 = vmax.f32 %v1758, 0.0
    %v2374 = vmax.f32 %v1949, 0.0
    %v2375 = vmax.f32 %v1951, 0.0
    %v2376 = vmax.f32 %v2142, 0.0
    %v2377 = vmax.f32 %v2144, 0.0
    %v2378 = vmax.f32 %v1569, 0.0
    %v2379 = vmax.f32 %v1571, 0.0
    %v2380 = vmax.f32 %v1762, 0.0
    %v2381 = vmax.f32 %v1764, 0.0
    %v2382 = vmax.f32 %v1955, 0.0
    %v2383 = vmax.f32 %v1957, 0.0
    %v2384 = vmax.f32 %v2148, 0.0
    %v2385 = vmax.f32 %v2150, 0.0
    %v2386 = vmax.f32 %v1573, 0.0
    %v2387 = vmax.f32 %v1575, 0.0
    %v2388 = vmax.f32 %v1766, 0.0
    %v2389 = vmax.f32 %v1768, 0.0
    %v2390 = vmax.f32 %v1959, 0.0
    %v2391 = vmax.f32 %v1961, 0.0
    %v2392 = vmax.f32 %v2152, 0.0
    %v2393 = vmax.f32 %v2154, 0.0
    %v2394 = vmax.f32 %v1579, 0.0
    %v2395 = vmax.f32 %v1581, 0.0
    %v2396 = vmax.f32 %v1772, 0.0
    %v2397 = vmax.f32 %v1774, 0.0
    %v2398 = vmax.f32 %v1965, 0.0
    %v2399 = vmax.f32 %v1967, 0.0
    %v2400 = vmax.f32 %v2158, 0.0
    %v2401 = vmax.f32 %v2160, 0.0
    %v2402 = vmax.f32 %v1583, 0.0
    %v2403 = vmax.f32 %v1585, 0.0
    %v2404 = vmax.f32 %v1776, 0.0
    %v2405 = vmax.f32 %v1778, 0.0
    %v2406 = vmax.f32 %v1969, 0.0
    %v2407 = vmax.f32 %v1971, 0.0
    %v2408 = vmax.f32 %v2162, 0.0
    %v2409 = vmax.f32 %v2164, 0.0
    %v2410 = vmax.f32 %v1589, 0.0
    %v2411 = vmax.f32 %v1591, 0.0
    %v2412 = vmax.f32 %v1782, 0.0
    %v2413 = vmax.f32 %v1784, 0.0
    %v2414 = vmax.f32 %v1975, 0.0
    %v2415 = vmax.f32 %v1977, 0.0
    %v2416 = vmax.f32 %v2168, 0.0
    %v2417 = vmax.f32 %v2170, 0.0
    %v2418 = vmax.f32 %v1593, 0.0
    %v2419 = vmax.f32 %v1595, 0.0
    %v2420 = vmax.f32 %v1786, 0.0
    %v2421 = vmax.f32 %v1788, 0.0
    %v2422 = vmax.f32 %v1979, 0.0
    %v2423 = vmax.f32 %v1981, 0.0
    %v2424 = vmax.f32 %v2172, 0.0
    %v2425 = vmax.f32 %v2174, 0.0
    %v2426 = vmax.f32 %v1599, 0.0
    %v2427 = vmax.f32 %v1601, 0.0
    %v2428 = vmax.f32 %v1792, 0.0
    %v2429 = vmax.f32 %v1794, 0.0
    %v2430 = vmax.f32 %v1985, 0.0
    %v2431 = vmax.f32 %v1987, 0.0
    %v2432 = vmax.f32 %v2178, 0.0
    %v2433 = vmax.f32 %v2180, 0.0
    %v2434 = vmax.f32 %v1603, 0.0
    %v2435 = vmax.f32 %v1605, 0.0
    %v2436 = vmax.f32 %v1796, 0.0
    %v2437 = vmax.f32 %v1798, 0.0
    %v2438 = vmax.f32 %v1989, 0.0
    %v2439 = vmax.f32 %v1991, 0.0
    %v2440 = vmax.f32 %v2182, 0.0
    %v2441 = vmax.f32 %v2184, 0.0
    %v2442 = vmax.f32 %v2186, %v2194
    %v2443 = vmax.f32 %v2442, %v2202
    %v2444 = vmax.f32 %v2443, %v2210
    %v2445 = vmax.f32 %v2444, %v2218
    %v2446 = vmax.f32 %v2445, %v2226
    %v2447 = vmax.f32 %v2446, %v2234
    %v2448 = vmax.f32 %v2447, %v2242
    %v2449 = vmax.f32 %v2448, %v2250
    %v2450 = vmax.f32 %v2449, %v2258
    %v2451 = vmax.f32 %v2450, %v2266
    %v2452 = vmax.f32 %v2451, %v2274
    %v2453 = vmax.f32 %v2452, %v2282
    %v2454 = vmax.f32 %v2453, %v2290
    %v2455 = vmax.f32 %v2454, %v2298
    %v2456 = vmax.f32 %v2455, %v2306
    %v2457 = vrot.slane %v2456, 4
    %v2458 = vmax.f32 %v2456, %v2457
    %v2459 = vrot.slane %v2458, 2
    %v2460 = vmax.f32 %v2458, %v2459
    %v2461 = vrot.slane %v2460, 1
    %v2462 = vmax.f32 %v2460, %v2461
    %v2463 = vmax.f32 %v2187, %v2195
    %v2464 = vmax.f32 %v2463, %v2203
    %v2465 = vmax.f32 %v2464, %v2211
    %v2466 = vmax.f32 %v2465, %v2219
    %v2467 = vmax.f32 %v2466, %v2227
    %v2468 = vmax.f32 %v2467, %v2235
    %v2469 = vmax.f32 %v2468, %v2243
    %v2470 = vmax.f32 %v2469, %v2251
    %v2471 = vmax.f32 %v2470, %v2259
    %v2472 = vmax.f32 %v2471, %v2267
    %v2473 = vmax.f32 %v2472, %v2275
    %v2474 = vmax.f32 %v2473, %v2283
    %v2475 = vmax.f32 %v2474, %v2291
    %v2476 = vmax.f32 %v2475, %v2299
    %v2477 = vmax.f32 %v2476, %v2307
    %v2478 = vrot.slane %v2477, 4
    %v2479 = vmax.f32 %v2477, %v2478
    %v2480 = vrot.slane %v2479, 2
    %v2481 = vmax.f32 %v2479, %v2480
    %v2482 = vrot.slane %v2481, 1
    %v2483 = vmax.f32 %v2481, %v2482
    %v2484 = vmax.f32 %v2188, %v2196
    %v2485 = vmax.f32 %v2484, %v2204
    %v2486 = vmax.f32 %v2485, %v2212
    %v2487 = vmax.f32 %v2486, %v2220
    %v2488 = vmax.f32 %v2487, %v2228
    %v2489 = vmax.f32 %v2488, %v2236
    %v2490 = vmax.f32 %v2489, %v2244
    %v2491 = vmax.f32 %v2490, %v2252
    %v2492 = vmax.f32 %v2491, %v2260
    %v2493 = vmax.f32 %v2492, %v2268
    %v2494 = vmax.f32 %v2493, %v2276
    %v2495 = vmax.f32 %v2494, %v2284
    %v2496 = vmax.f32 %v2495, %v2292
    %v2497 = vmax.f32 %v2496, %v2300
    %v2498 = vmax.f32 %v2497, %v2308
    %v2499 = vrot.slane %v2498, 4
    %v2500 = vmax.f32 %v2498, %v2499
    %v2501 = vrot.slane %v2500, 2
    %v2502 = vmax.f32 %v2500, %v2501
    %v2503 = vrot.slane %v2502, 1
    %v2504 = vmax.f32 %v2502, %v2503
    %v2505 = vmax.f32 %v2189, %v2197
    %v2506 = vmax.f32 %v2505, %v2205
    %v2507 = vmax.f32 %v2506, %v2213
    %v2508 = vmax.f32 %v2507, %v2221
    %v2509 = vmax.f32 %v2508, %v2229
    %v2510 = vmax.f32 %v2509, %v2237
    %v2511 = vmax.f32 %v2510, %v2245
    %v2512 = vmax.f32 %v2511, %v2253
    %v2513 = vmax.f32 %v2512, %v2261
    %v2514 = vmax.f32 %v2513, %v2269
    %v2515 = vmax.f32 %v2514, %v2277
    %v2516 = vmax.f32 %v2515, %v2285
    %v2517 = vmax.f32 %v2516, %v2293
    %v2518 = vmax.f32 %v2517, %v2301
    %v2519 = vmax.f32 %v2518, %v2309
    %v2520 = vrot.slane %v2519, 4
    %v2521 = vmax.f32 %v2519, %v2520
    %v2522 = vrot.slane %v2521, 2
    %v2523 = vmax.f32 %v2521, %v2522
    %v2524 = vrot.slane %v2523, 1
    %v2525 = vmax.f32 %v2523, %v2524
    %v2526 = vmax.f32 %v2190, %v2198
    %v2527 = vmax.f32 %v2526, %v2206
    %v2528 = vmax.f32 %v2527, %v2214
    %v2529 = vmax.f32 %v2528, %v2222
    %v2530 = vmax.f32 %v2529, %v2230
    %v2531 = vmax.f32 %v2530, %v2238
    %v2532 = vmax.f32 %v2531, %v2246
    %v2533 = vmax.f32 %v2532, %v2254
    %v2534 = vmax.f32 %v2533, %v2262
    %v2535 = vmax.f32 %v2534, %v2270
    %v2536 = vmax.f32 %v2535, %v2278
    %v2537 = vmax.f32 %v2536, %v2286
    %v2538 = vmax.f32 %v2537, %v2294
    %v2539 = vmax.f32 %v2538, %v2302
    %v2540 = vmax.f32 %v2539, %v2310
    %v2541 = vrot.slane %v2540, 4
    %v2542 = vmax.f32 %v2540, %v2541
    %v2543 = vrot.slane %v2542, 2
    %v2544 = vmax.f32 %v2542, %v2543
    %v2545 = vrot.slane %v2544, 1
    %v2546 = vmax.f32 %v2544, %v2545
    %v2547 = vmax.f32 %v2191, %v2199
    %v2548 = vmax.f32 %v2547, %v2207
    %v2549 = vmax.f32 %v2548, %v2215
    %v2550 = vmax.f32 %v2549, %v2223
    %v2551 = vmax.f32 %v2550, %v2231
    %v2552 = vmax.f32 %v2551, %v2239
    %v2553 = vmax.f32 %v2552, %v2247
    %v2554 = vmax.f32 %v2553, %v2255
    %v2555 = vmax.f32 %v2554, %v2263
    %v2556 = vmax.f32 %v2555, %v2271
    %v2557 = vmax.f32 %v2556, %v2279
    %v2558 = vmax.f32 %v2557, %v2287
    %v2559 = vmax.f32 %v2558, %v2295
    %v2560 = vmax.f32 %v2559, %v2303
    %v2561 = vmax.f32 %v2560, %v2311
    %v2562 = vrot.slane %v2561, 4
    %v2563 = vmax.f32 %v2561, %v2562
    %v2564 = vrot.slane %v2563, 2
    %v2565 = vmax.f32 %v2563, %v2564
    %v2566 = vrot.slane %v2565, 1
    %v2567 = vmax.f32 %v2565, %v2566
    %v2568 = vmax.f32 %v2192, %v2200
    %v2569 = vmax.f32 %v2568, %v2208
    %v2570 = vmax.f32 %v2569, %v2216
    %v2571 = vmax.f32 %v2570, %v2224
    %v2572 = vmax.f32 %v2571, %v2232
    %v2573 = vmax.f32 %v2572, %v2240
    %v2574 = vmax.f32 %v2573, %v2248
    %v2575 = vmax.f32 %v2574, %v2256
    %v2576 = vmax.f32 %v2575, %v2264
    %v2577 = vmax.f32 %v2576, %v2272
    %v2578 = vmax.f32 %v2577, %v2280
    %v2579 = vmax.f32 %v2578, %v2288
    %v2580 = vmax.f32 %v2579, %v2296
    %v2581 = vmax.f32 %v2580, %v2304
    %v2582 = vmax.f32 %v2581, %v2312
    %v2583 = vrot.slane %v2582, 4
    %v2584 = vmax.f32 %v2582, %v2583
    %v2585 = vrot.slane %v2584, 2
    %v2586 = vmax.f32 %v2584, %v2585
    %v2587 = vrot.slane %v2586, 1
    %v2588 = vmax.f32 %v2586, %v2587
    %v2589 = vmax.f32 %v2193, %v2201
    %v2590 = vmax.f32 %v2589, %v2209
    %v2591 = vmax.f32 %v2590, %v2217
    %v2592 = vmax.f32 %v2591, %v2225
    %v2593 = vmax.f32 %v2592, %v2233
    %v2594 = vmax.f32 %v2593, %v2241
    %v2595 = vmax.f32 %v2594, %v2249
    %v2596 = vmax.f32 %v2595, %v2257
    %v2597 = vmax.f32 %v2596, %v2265
    %v2598 = vmax.f32 %v2597, %v2273
    %v2599 = vmax.f32 %v2598, %v2281
    %v2600 = vmax.f32 %v2599, %v2289
    %v2601 = vmax.f32 %v2600, %v2297
    %v2602 = vmax.f32 %v2601, %v2305
    %v2603 = vmax.f32 %v2602, %v2313
    %v2604 = vrot.slane %v2603, 4
    %v2605 = vmax.f32 %v2603, %v2604
    %v2606 = vrot.slane %v2605, 2
    %v2607 = vmax.f32 %v2605, %v2606
    %v2608 = vrot.slane %v2607, 1
    %v2609 = vmax.f32 %v2607, %v2608
    %v2610 = vmax.f32 %v2314, %v2322
    %v2611 = vmax.f32 %v2610, %v2330
    %v2612 = vmax.f32 %v2611, %v2338
    %v2613 = vmax.f32 %v2612, %v2346
    %v2614 = vmax.f32 %v2613, %v2354
    %v2615 = vmax.f32 %v2614, %v2362
    %v2616 = vmax.f32 %v2615, %v2370
    %v2617 = vmax.f32 %v2616, %v2378
    %v2618 = vmax.f32 %v2617, %v2386
    %v2619 = vmax.f32 %v2618, %v2394
    %v2620 = vmax.f32 %v2619, %v2402
    %v2621 = vmax.f32 %v2620, %v2410
    %v2622 = vmax.f32 %v2621, %v2418
    %v2623 = vmax.f32 %v2622, %v2426
    %v2624 = vmax.f32 %v2623, %v2434
    %v2625 = vrot.slane %v2624, 4
    %v2626 = vmax.f32 %v2624, %v2625
    %v2627 = vrot.slane %v2626, 2
    %v2628 = vmax.f32 %v2626, %v2627
    %v2629 = vrot.slane %v2628, 1
    %v2630 = vmax.f32 %v2628, %v2629
    %v2631 = vmax.f32 %v2315, %v2323
    %v2632 = vmax.f32 %v2631, %v2331
    %v2633 = vmax.f32 %v2632, %v2339
    %v2634 = vmax.f32 %v2633, %v2347
    %v2635 = vmax.f32 %v2634, %v2355
    %v2636 = vmax.f32 %v2635, %v2363
    %v2637 = vmax.f32 %v2636, %v2371
    %v2638 = vmax.f32 %v2637, %v2379
    %v2639 = vmax.f32 %v2638, %v2387
    %v2640 = vmax.f32 %v2639, %v2395
    %v2641 = vmax.f32 %v2640, %v2403
    %v2642 = vmax.f32 %v2641, %v2411
    %v2643 = vmax.f32 %v2642, %v2419
    %v2644 = vmax.f32 %v2643, %v2427
    %v2645 = vmax.f32 %v2644, %v2435
    %v2646 = vrot.slane %v2645, 4
    %v2647 = vmax.f32 %v2645, %v2646
    %v2648 = vrot.slane %v2647, 2
    %v2649 = vmax.f32 %v2647, %v2648
    %v2650 = vrot.slane %v2649, 1
    %v2651 = vmax.f32 %v2649, %v2650
    %v2652 = vmax.f32 %v2316, %v2324
    %v2653 = vmax.f32 %v2652, %v2332
    %v2654 = vmax.f32 %v2653, %v2340
    %v2655 = vmax.f32 %v2654, %v2348
    %v2656 = vmax.f32 %v2655, %v2356
    %v2657 = vmax.f32 %v2656, %v2364
    %v2658 = vmax.f32 %v2657, %v2372
    %v2659 = vmax.f32 %v2658, %v2380
    %v2660 = vmax.f32 %v2659, %v2388
    %v2661 = vmax.f32 %v2660, %v2396
    %v2662 = vmax.f32 %v2661, %v2404
    %v2663 = vmax.f32 %v2662, %v2412
    %v2664 = vmax.f32 %v2663, %v2420
    %v2665 = vmax.f32 %v2664, %v2428
    %v2666 = vmax.f32 %v2665, %v2436
    %v2667 = vrot.slane %v2666, 4
    %v2668 = vmax.f32 %v2666, %v2667
    %v2669 = vrot.slane %v2668, 2
    %v2670 = vmax.f32 %v2668, %v2669
    %v2671 = vrot.slane %v2670, 1
    %v2672 = vmax.f32 %v2670, %v2671
    %v2673 = vmax.f32 %v2317, %v2325
    %v2674 = vmax.f32 %v2673, %v2333
    %v2675 = vmax.f32 %v2674, %v2341
    %v2676 = vmax.f32 %v2675, %v2349
    %v2677 = vmax.f32 %v2676, %v2357
    %v2678 = vmax.f32 %v2677, %v2365
    %v2679 = vmax.f32 %v2678, %v2373
    %v2680 = vmax.f32 %v2679, %v2381
    %v2681 = vmax.f32 %v2680, %v2389
    %v2682 = vmax.f32 %v2681, %v2397
    %v2683 = vmax.f32 %v2682, %v2405
    %v2684 = vmax.f32 %v2683, %v2413
    %v2685 = vmax.f32 %v2684, %v2421
    %v2686 = vmax.f32 %v2685, %v2429
    %v2687 = vmax.f32 %v2686, %v2437
    %v2688 = vrot.slane %v2687, 4
    %v2689 = vmax.f32 %v2687, %v2688
    %v2690 = vrot.slane %v2689, 2
    %v2691 = vmax.f32 %v2689, %v2690
    %v2692 = vrot.slane %v2691, 1
    %v2693 = vmax.f32 %v2691, %v2692
    %v2694 = vmax.f32 %v2318, %v2326
    %v2695 = vmax.f32 %v2694, %v2334
    %v2696 = vmax.f32 %v2695, %v2342
    %v2697 = vmax.f32 %v2696, %v2350
    %v2698 = vmax.f32 %v2697, %v2358
    %v2699 = vmax.f32 %v2698, %v2366
    %v2700 = vmax.f32 %v2699, %v2374
    %v2701 = vmax.f32 %v2700, %v2382
    %v2702 = vmax.f32 %v2701, %v2390
    %v2703 = vmax.f32 %v2702, %v2398
    %v2704 = vmax.f32 %v2703, %v2406
    %v2705 = vmax.f32 %v2704, %v2414
    %v2706 = vmax.f32 %v2705, %v2422
    %v2707 = vmax.f32 %v2706, %v2430
    %v2708 = vmax.f32 %v2707, %v2438
    %v2709 = vrot.slane %v2708, 4
    %v2710 = vmax.f32 %v2708, %v2709
    %v2711 = vrot.slane %v2710, 2
    %v2712 = vmax.f32 %v2710, %v2711
    %v2713 = vrot.slane %v2712, 1
    %v2714 = vmax.f32 %v2712, %v2713
    %v2715 = vmax.f32 %v2319, %v2327
    %v2716 = vmax.f32 %v2715, %v2335
    %v2717 = vmax.f32 %v2716, %v2343
    %v2718 = vmax.f32 %v2717, %v2351
    %v2719 = vmax.f32 %v2718, %v2359
    %v2720 = vmax.f32 %v2719, %v2367
    %v2721 = vmax.f32 %v2720, %v2375
    %v2722 = vmax.f32 %v2721, %v2383
    %v2723 = vmax.f32 %v2722, %v2391
    %v2724 = vmax.f32 %v2723, %v2399
    %v2725 = vmax.f32 %v2724, %v2407
    %v2726 = vmax.f32 %v2725, %v2415
    %v2727 = vmax.f32 %v2726, %v2423
    %v2728 = vmax.f32 %v2727, %v2431
    %v2729 = vmax.f32 %v2728, %v2439
    %v2730 = vrot.slane %v2729, 4
    %v2731 = vmax.f32 %v2729, %v2730
    %v2732 = vrot.slane %v2731, 2
    %v2733 = vmax.f32 %v2731, %v2732
    %v2734 = vrot.slane %v2733, 1
    %v2735 = vmax.f32 %v2733, %v2734
    %v2736 = vmax.f32 %v2320, %v2328
    %v2737 = vmax.f32 %v2736, %v2336
    %v2738 = vmax.f32 %v2737, %v2344
    %v2739 = vmax.f32 %v2738, %v2352
    %v2740 = vmax.f32 %v2739, %v2360
    %v2741 = vmax.f32 %v2740, %v2368
    %v2742 = vmax.f32 %v2741, %v2376
    %v2743 = vmax.f32 %v2742, %v2384
    %v2744 = vmax.f32 %v2743, %v2392
    %v2745 = vmax.f32 %v2744, %v2400
    %v2746 = vmax.f32 %v2745, %v2408
    %v2747 = vmax.f32 %v2746, %v2416
    %v2748 = vmax.f32 %v2747, %v2424
    %v2749 = vmax.f32 %v2748, %v2432
    %v2750 = vmax.f32 %v2749, %v2440
    %v2751 = vrot.slane %v2750, 4
    %v2752 = vmax.f32 %v2750, %v2751
    %v2753 = vrot.slane %v2752, 2
    %v2754 = vmax.f32 %v2752, %v2753
    %v2755 = vrot.slane %v2754, 1
    %v2756 = vmax.f32 %v2754, %v2755
    %v2757 = vmax.f32 %v2321, %v2329
    %v2758 = vmax.f32 %v2757, %v2337
    %v2759 = vmax.f32 %v2758, %v2345
    %v2760 = vmax.f32 %v2759, %v2353
    %v2761 = vmax.f32 %v2760, %v2361
    %v2762 = vmax.f32 %v2761, %v2369
    %v2763 = vmax.f32 %v2762, %v2377
    %v2764 = vmax.f32 %v2763, %v2385
    %v2765 = vmax.f32 %v2764, %v2393
    %v2766 = vmax.f32 %v2765, %v2401
    %v2767 = vmax.f32 %v2766, %v2409
    %v2768 = vmax.f32 %v2767, %v2417
    %v2769 = vmax.f32 %v2768, %v2425
    %v2770 = vmax.f32 %v2769, %v2433
    %v2771 = vmax.f32 %v2770, %v2441
    %v2772 = vrot.slane %v2771, 4
    %v2773 = vmax.f32 %v2771, %v2772
    %v2774 = vrot.slane %v2773, 2
    %v2775 = vmax.f32 %v2773, %v2774
    %v2776 = vrot.slane %v2775, 1
    %v2777 = vmax.f32 %v2775, %v2776
    %s2778 = smul.u32 4, 128
    %s2779 = smul.u32 %s2778, 4
    %s2780 = sshll.u32 %s2779, 4
    %2781 = dma.done [#allocation5], %s2780
    %v2782 = vpack.c.bf16 %v2462, %v2462
    %v2783 = vpack.c.bf16 %v2483, %v2483
    %v2784 = vpack.c.bf16 %v2504, %v2504
    %v2785 = vpack.c.bf16 %v2525, %v2525
    %v2786 = vpack.c.bf16 %v2546, %v2546
    %v2787 = vpack.c.bf16 %v2567, %v2567
    %v2788 = vpack.c.bf16 %v2588, %v2588
    %v2789 = vpack.c.bf16 %v2609, %v2609
    %v2790 = vpack.c.bf16 %v2630, %v2630
    %v2791 = vpack.c.bf16 %v2651, %v2651
    %v2792 = vpack.c.bf16 %v2672, %v2672
    %v2793 = vpack.c.bf16 %v2693, %v2693
    %v2794 = vpack.c.bf16 %v2714, %v2714
    %v2795 = vpack.c.bf16 %v2735, %v2735
    %v2796 = vpack.c.bf16 %v2756, %v2756
    %v2797 = vpack.c.bf16 %v2777, %v2777
    %v2798 = vld [vmem:[#allocation2] sm:$0xff]
    %v2799 = vld [vmem:[#allocation2 + $0x8] sm:$0xff]
    %v2800 = vld [vmem:[#allocation2 + $0x10] sm:$0xff]
    %v2801 = vld [vmem:[#allocation2 + $0x18] sm:$0xff]
    %v2802 = vld [vmem:[#allocation2 + $0x20] sm:$0xff]
    %v2803 = vld [vmem:[#allocation2 + $0x28] sm:$0xff]
    %v2804 = vld [vmem:[#allocation2 + $0x30] sm:$0xff]
    %v2805 = vld [vmem:[#allocation2 + $0x38] sm:$0xff]
    %v2806 = vld [vmem:[#allocation2 + $0x40] sm:$0xff]
    %v2807 = vld [vmem:[#allocation2 + $0x48] sm:$0xff]
    %v2808 = vld [vmem:[#allocation2 + $0x50] sm:$0xff]
    %v2809 = vld [vmem:[#allocation2 + $0x58] sm:$0xff]
    %v2810 = vld [vmem:[#allocation2 + $0x60] sm:$0xff]
    %v2811 = vld [vmem:[#allocation2 + $0x68] sm:$0xff]
    %v2812 = vld [vmem:[#allocation2 + $0x70] sm:$0xff]
    %v2813 = vld [vmem:[#allocation2 + $0x78] sm:$0xff]
    %v2814 = vld [vmem:[#allocation2 + $0x80] sm:$0xff]
    %v2815 = vld [vmem:[#allocation2 + $0x88] sm:$0xff]
    %v2816 = vld [vmem:[#allocation2 + $0x90] sm:$0xff]
    %v2817 = vld [vmem:[#allocation2 + $0x98] sm:$0xff]
    %v2818 = vld [vmem:[#allocation2 + $0xa0] sm:$0xff]
    %v2819 = vld [vmem:[#allocation2 + $0xa8] sm:$0xff]
    %v2820 = vld [vmem:[#allocation2 + $0xb0] sm:$0xff]
    %v2821 = vld [vmem:[#allocation2 + $0xb8] sm:$0xff]
    %v2822 = vld [vmem:[#allocation2 + $0xc0] sm:$0xff]
    %v2823 = vld [vmem:[#allocation2 + $0xc8] sm:$0xff]
    %v2824 = vld [vmem:[#allocation2 + $0xd0] sm:$0xff]
    %v2825 = vld [vmem:[#allocation2 + $0xd8] sm:$0xff]
    %v2826 = vld [vmem:[#allocation2 + $0xe0] sm:$0xff]
    %v2827 = vld [vmem:[#allocation2 + $0xe8] sm:$0xff]
    %v2828 = vld [vmem:[#allocation2 + $0xf0] sm:$0xff]
    %v2829 = vld [vmem:[#allocation2 + $0xf8] sm:$0xff]
    %v2830 = vld [vmem:[#allocation2 + $0x100] sm:$0xff]
    %v2831 = vld [vmem:[#allocation2 + $0x108] sm:$0xff]
    %v2832 = vld [vmem:[#allocation2 + $0x110] sm:$0xff]
    %v2833 = vld [vmem:[#allocation2 + $0x118] sm:$0xff]
    %v2834 = vld [vmem:[#allocation2 + $0x120] sm:$0xff]
    %v2835 = vld [vmem:[#allocation2 + $0x128] sm:$0xff]
    %v2836 = vld [vmem:[#allocation2 + $0x130] sm:$0xff]
    %v2837 = vld [vmem:[#allocation2 + $0x138] sm:$0xff]
    %v2838 = vld [vmem:[#allocation2 + $0x140] sm:$0xff]
    %v2839 = vld [vmem:[#allocation2 + $0x148] sm:$0xff]
    %v2840 = vld [vmem:[#allocation2 + $0x150] sm:$0xff]
    %v2841 = vld [vmem:[#allocation2 + $0x158] sm:$0xff]
    %v2842 = vld [vmem:[#allocation2 + $0x160] sm:$0xff]
    %v2843 = vld [vmem:[#allocation2 + $0x168] sm:$0xff]
    %v2844 = vld [vmem:[#allocation2 + $0x170] sm:$0xff]
    %v2845 = vld [vmem:[#allocation2 + $0x178] sm:$0xff]
    %v2846 = vld [vmem:[#allocation2 + $0x180] sm:$0xff]
    %v2847 = vld [vmem:[#allocation2 + $0x188] sm:$0xff]
    %v2848 = vld [vmem:[#allocation2 + $0x190] sm:$0xff]
    %v2849 = vld [vmem:[#allocation2 + $0x198] sm:$0xff]
    %v2850 = vld [vmem:[#allocation2 + $0x1a0] sm:$0xff]
    %v2851 = vld [vmem:[#allocation2 + $0x1a8] sm:$0xff]
    %v2852 = vld [vmem:[#allocation2 + $0x1b0] sm:$0xff]
    %v2853 = vld [vmem:[#allocation2 + $0x1b8] sm:$0xff]
    %v2854 = vld [vmem:[#allocation2 + $0x1c0] sm:$0xff]
    %v2855 = vld [vmem:[#allocation2 + $0x1c8] sm:$0xff]
    %v2856 = vld [vmem:[#allocation2 + $0x1d0] sm:$0xff]
    %v2857 = vld [vmem:[#allocation2 + $0x1d8] sm:$0xff]
    %v2858 = vld [vmem:[#allocation2 + $0x1e0] sm:$0xff]
    %v2859 = vld [vmem:[#allocation2 + $0x1e8] sm:$0xff]
    %v2860 = vld [vmem:[#allocation2 + $0x1f0] sm:$0xff]
    %v2861 = vld [vmem:[#allocation2 + $0x1f8] sm:$0xff]
    %v2862 = vld [vmem:[#allocation2 + $0x200] sm:$0xff]
    %v2863 = vld [vmem:[#allocation2 + $0x208] sm:$0xff]
    %v2864 = vld [vmem:[#allocation2 + $0x210] sm:$0xff]
    %v2865 = vld [vmem:[#allocation2 + $0x218] sm:$0xff]
    %v2866 = vld [vmem:[#allocation2 + $0x220] sm:$0xff]
    %v2867 = vld [vmem:[#allocation2 + $0x228] sm:$0xff]
    %v2868 = vld [vmem:[#allocation2 + $0x230] sm:$0xff]
    %v2869 = vld [vmem:[#allocation2 + $0x238] sm:$0xff]
    %v2870 = vld [vmem:[#allocation2 + $0x240] sm:$0xff]
    %v2871 = vld [vmem:[#allocation2 + $0x248] sm:$0xff]
    %v2872 = vld [vmem:[#allocation2 + $0x250] sm:$0xff]
    %v2873 = vld [vmem:[#allocation2 + $0x258] sm:$0xff]
    %v2874 = vld [vmem:[#allocation2 + $0x260] sm:$0xff]
    %v2875 = vld [vmem:[#allocation2 + $0x268] sm:$0xff]
    %v2876 = vld [vmem:[#allocation2 + $0x270] sm:$0xff]
    %v2877 = vld [vmem:[#allocation2 + $0x278] sm:$0xff]
    %v2878 = vld [vmem:[#allocation2 + $0x280] sm:$0xff]
    %v2879 = vld [vmem:[#allocation2 + $0x288] sm:$0xff]
    %v2880 = vld [vmem:[#allocation2 + $0x290] sm:$0xff]
    %v2881 = vld [vmem:[#allocation2 + $0x298] sm:$0xff]
    %v2882 = vld [vmem:[#allocation2 + $0x2a0] sm:$0xff]
    %v2883 = vld [vmem:[#allocation2 + $0x2a8] sm:$0xff]
    %v2884 = vld [vmem:[#allocation2 + $0x2b0] sm:$0xff]
    %v2885 = vld [vmem:[#allocation2 + $0x2b8] sm:$0xff]
    %v2886 = vld [vmem:[#allocation2 + $0x2c0] sm:$0xff]
    %v2887 = vld [vmem:[#allocation2 + $0x2c8] sm:$0xff]
    %v2888 = vld [vmem:[#allocation2 + $0x2d0] sm:$0xff]
    %v2889 = vld [vmem:[#allocation2 + $0x2d8] sm:$0xff]
    %v2890 = vld [vmem:[#allocation2 + $0x2e0] sm:$0xff]
    %v2891 = vld [vmem:[#allocation2 + $0x2e8] sm:$0xff]
    %v2892 = vld [vmem:[#allocation2 + $0x2f0] sm:$0xff]
    %v2893 = vld [vmem:[#allocation2 + $0x2f8] sm:$0xff]
    %v2894 = vld [vmem:[#allocation2 + $0x300] sm:$0xff]
    %v2895 = vld [vmem:[#allocation2 + $0x308] sm:$0xff]
    %v2896 = vld [vmem:[#allocation2 + $0x310] sm:$0xff]
    %v2897 = vld [vmem:[#allocation2 + $0x318] sm:$0xff]
    %v2898 = vld [vmem:[#allocation2 + $0x320] sm:$0xff]
    %v2899 = vld [vmem:[#allocation2 + $0x328] sm:$0xff]
    %v2900 = vld [vmem:[#allocation2 + $0x330] sm:$0xff]
    %v2901 = vld [vmem:[#allocation2 + $0x338] sm:$0xff]
    %v2902 = vld [vmem:[#allocation2 + $0x340] sm:$0xff]
    %v2903 = vld [vmem:[#allocation2 + $0x348] sm:$0xff]
    %v2904 = vld [vmem:[#allocation2 + $0x350] sm:$0xff]
    %v2905 = vld [vmem:[#allocation2 + $0x358] sm:$0xff]
    %v2906 = vld [vmem:[#allocation2 + $0x360] sm:$0xff]
    %v2907 = vld [vmem:[#allocation2 + $0x368] sm:$0xff]
    %v2908 = vld [vmem:[#allocation2 + $0x370] sm:$0xff]
    %v2909 = vld [vmem:[#allocation2 + $0x378] sm:$0xff]
    %v2910 = vld [vmem:[#allocation2 + $0x380] sm:$0xff]
    %v2911 = vld [vmem:[#allocation2 + $0x388] sm:$0xff]
    %v2912 = vld [vmem:[#allocation2 + $0x390] sm:$0xff]
    %v2913 = vld [vmem:[#allocation2 + $0x398] sm:$0xff]
    %v2914 = vld [vmem:[#allocation2 + $0x3a0] sm:$0xff]
    %v2915 = vld [vmem:[#allocation2 + $0x3a8] sm:$0xff]
    %v2916 = vld [vmem:[#allocation2 + $0x3b0] sm:$0xff]
    %v2917 = vld [vmem:[#allocation2 + $0x3b8] sm:$0xff]
    %v2918 = vld [vmem:[#allocation2 + $0x3c0] sm:$0xff]
    %v2919 = vld [vmem:[#allocation2 + $0x3c8] sm:$0xff]
    %v2920 = vld [vmem:[#allocation2 + $0x3d0] sm:$0xff]
    %v2921 = vld [vmem:[#allocation2 + $0x3d8] sm:$0xff]
    %v2922 = vld [vmem:[#allocation2 + $0x3e0] sm:$0xff]
    %v2923 = vld [vmem:[#allocation2 + $0x3e8] sm:$0xff]
    %v2924 = vld [vmem:[#allocation2 + $0x3f0] sm:$0xff]
    %v2925 = vld [vmem:[#allocation2 + $0x3f8] sm:$0xff]
    %v2926 = vld [vmem:[#allocation2 + $0x400] sm:$0xff]
    %v2927 = vld [vmem:[#allocation2 + $0x408] sm:$0xff]
    %v2928 = vld [vmem:[#allocation2 + $0x410] sm:$0xff]
    %v2929 = vld [vmem:[#allocation2 + $0x418] sm:$0xff]
    %v2930 = vld [vmem:[#allocation2 + $0x420] sm:$0xff]
    %v2931 = vld [vmem:[#allocation2 + $0x428] sm:$0xff]
    %v2932 = vld [vmem:[#allocation2 + $0x430] sm:$0xff]
    %v2933 = vld [vmem:[#allocation2 + $0x438] sm:$0xff]
    %v2934 = vld [vmem:[#allocation2 + $0x440] sm:$0xff]
    %v2935 = vld [vmem:[#allocation2 + $0x448] sm:$0xff]
    %v2936 = vld [vmem:[#allocation2 + $0x450] sm:$0xff]
    %v2937 = vld [vmem:[#allocation2 + $0x458] sm:$0xff]
    %v2938 = vld [vmem:[#allocation2 + $0x460] sm:$0xff]
    %v2939 = vld [vmem:[#allocation2 + $0x468] sm:$0xff]
    %v2940 = vld [vmem:[#allocation2 + $0x470] sm:$0xff]
    %v2941 = vld [vmem:[#allocation2 + $0x478] sm:$0xff]
    %v2942 = vld [vmem:[#allocation2 + $0x480] sm:$0xff]
    %v2943 = vld [vmem:[#allocation2 + $0x488] sm:$0xff]
    %v2944 = vld [vmem:[#allocation2 + $0x490] sm:$0xff]
    %v2945 = vld [vmem:[#allocation2 + $0x498] sm:$0xff]
    %v2946 = vld [vmem:[#allocation2 + $0x4a0] sm:$0xff]
    %v2947 = vld [vmem:[#allocation2 + $0x4a8] sm:$0xff]
    %v2948 = vld [vmem:[#allocation2 + $0x4b0] sm:$0xff]
    %v2949 = vld [vmem:[#allocation2 + $0x4b8] sm:$0xff]
    %v2950 = vld [vmem:[#allocation2 + $0x4c0] sm:$0xff]
    %v2951 = vld [vmem:[#allocation2 + $0x4c8] sm:$0xff]
    %v2952 = vld [vmem:[#allocation2 + $0x4d0] sm:$0xff]
    %v2953 = vld [vmem:[#allocation2 + $0x4d8] sm:$0xff]
    %v2954 = vld [vmem:[#allocation2 + $0x4e0] sm:$0xff]
    %v2955 = vld [vmem:[#allocation2 + $0x4e8] sm:$0xff]
    %v2956 = vld [vmem:[#allocation2 + $0x4f0] sm:$0xff]
    %v2957 = vld [vmem:[#allocation2 + $0x4f8] sm:$0xff]
    %v2958 = vld [vmem:[#allocation2 + $0x500] sm:$0xff]
    %v2959 = vld [vmem:[#allocation2 + $0x508] sm:$0xff]
    %v2960 = vld [vmem:[#allocation2 + $0x510] sm:$0xff]
    %v2961 = vld [vmem:[#allocation2 + $0x518] sm:$0xff]
    %v2962 = vld [vmem:[#allocation2 + $0x520] sm:$0xff]
    %v2963 = vld [vmem:[#allocation2 + $0x528] sm:$0xff]
    %v2964 = vld [vmem:[#allocation2 + $0x530] sm:$0xff]
    %v2965 = vld [vmem:[#allocation2 + $0x538] sm:$0xff]
    %v2966 = vld [vmem:[#allocation2 + $0x540] sm:$0xff]
    %v2967 = vld [vmem:[#allocation2 + $0x548] sm:$0xff]
    %v2968 = vld [vmem:[#allocation2 + $0x550] sm:$0xff]
    %v2969 = vld [vmem:[#allocation2 + $0x558] sm:$0xff]
    %v2970 = vld [vmem:[#allocation2 + $0x560] sm:$0xff]
    %v2971 = vld [vmem:[#allocation2 + $0x568] sm:$0xff]
    %v2972 = vld [vmem:[#allocation2 + $0x570] sm:$0xff]
    %v2973 = vld [vmem:[#allocation2 + $0x578] sm:$0xff]
    %v2974 = vld [vmem:[#allocation2 + $0x580] sm:$0xff]
    %v2975 = vld [vmem:[#allocation2 + $0x588] sm:$0xff]
    %v2976 = vld [vmem:[#allocation2 + $0x590] sm:$0xff]
    %v2977 = vld [vmem:[#allocation2 + $0x598] sm:$0xff]
    %v2978 = vld [vmem:[#allocation2 + $0x5a0] sm:$0xff]
    %v2979 = vld [vmem:[#allocation2 + $0x5a8] sm:$0xff]
    %v2980 = vld [vmem:[#allocation2 + $0x5b0] sm:$0xff]
    %v2981 = vld [vmem:[#allocation2 + $0x5b8] sm:$0xff]
    %v2982 = vld [vmem:[#allocation2 + $0x5c0] sm:$0xff]
    %v2983 = vld [vmem:[#allocation2 + $0x5c8] sm:$0xff]
    %v2984 = vld [vmem:[#allocation2 + $0x5d0] sm:$0xff]
    %v2985 = vld [vmem:[#allocation2 + $0x5d8] sm:$0xff]
    %v2986 = vld [vmem:[#allocation2 + $0x5e0] sm:$0xff]
    %v2987 = vld [vmem:[#allocation2 + $0x5e8] sm:$0xff]
    %v2988 = vld [vmem:[#allocation2 + $0x5f0] sm:$0xff]
    %v2989 = vld [vmem:[#allocation2 + $0x5f8] sm:$0xff]
    %v2990 = vld [vmem:[#allocation2 + $0x600] sm:$0xff]
    %v2991 = vld [vmem:[#allocation2 + $0x608] sm:$0xff]
    %v2992 = vld [vmem:[#allocation2 + $0x610] sm:$0xff]
    %v2993 = vld [vmem:[#allocation2 + $0x618] sm:$0xff]
    %v2994 = vld [vmem:[#allocation2 + $0x620] sm:$0xff]
    %v2995 = vld [vmem:[#allocation2 + $0x628] sm:$0xff]
    %v2996 = vld [vmem:[#allocation2 + $0x630] sm:$0xff]
    %v2997 = vld [vmem:[#allocation2 + $0x638] sm:$0xff]
    %v2998 = vld [vmem:[#allocation2 + $0x640] sm:$0xff]
    %v2999 = vld [vmem:[#allocation2 + $0x648] sm:$0xff]
    %v3000 = vld [vmem:[#allocation2 + $0x650] sm:$0xff]
    %v3001 = vld [vmem:[#allocation2 + $0x658] sm:$0xff]
    %v3002 = vld [vmem:[#allocation2 + $0x660] sm:$0xff]
    %v3003 = vld [vmem:[#allocation2 + $0x668] sm:$0xff]
    %v3004 = vld [vmem:[#allocation2 + $0x670] sm:$0xff]
    %v3005 = vld [vmem:[#allocation2 + $0x678] sm:$0xff]
    %v3006 = vld [vmem:[#allocation2 + $0x680] sm:$0xff]
    %v3007 = vld [vmem:[#allocation2 + $0x688] sm:$0xff]
    %v3008 = vld [vmem:[#allocation2 + $0x690] sm:$0xff]
    %v3009 = vld [vmem:[#allocation2 + $0x698] sm:$0xff]
    %v3010 = vld [vmem:[#allocation2 + $0x6a0] sm:$0xff]
    %v3011 = vld [vmem:[#allocation2 + $0x6a8] sm:$0xff]
    %v3012 = vld [vmem:[#allocation2 + $0x6b0] sm:$0xff]
    %v3013 = vld [vmem:[#allocation2 + $0x6b8] sm:$0xff]
    %v3014 = vld [vmem:[#allocation2 + $0x6c0] sm:$0xff]
    %v3015 = vld [vmem:[#allocation2 + $0x6c8] sm:$0xff]
    %v3016 = vld [vmem:[#allocation2 + $0x6d0] sm:$0xff]
    %v3017 = vld [vmem:[#allocation2 + $0x6d8] sm:$0xff]
    %v3018 = vld [vmem:[#allocation2 + $0x6e0] sm:$0xff]
    %v3019 = vld [vmem:[#allocation2 + $0x6e8] sm:$0xff]
    %v3020 = vld [vmem:[#allocation2 + $0x6f0] sm:$0xff]
    %v3021 = vld [vmem:[#allocation2 + $0x6f8] sm:$0xff]
    %v3022 = vld [vmem:[#allocation2 + $0x700] sm:$0xff]
    %v3023 = vld [vmem:[#allocation2 + $0x708] sm:$0xff]
    %v3024 = vld [vmem:[#allocation2 + $0x710] sm:$0xff]
    %v3025 = vld [vmem:[#allocation2 + $0x718] sm:$0xff]
    %v3026 = vld [vmem:[#allocation2 + $0x720] sm:$0xff]
    %v3027 = vld [vmem:[#allocation2 + $0x728] sm:$0xff]
    %v3028 = vld [vmem:[#allocation2 + $0x730] sm:$0xff]
    %v3029 = vld [vmem:[#allocation2 + $0x738] sm:$0xff]
    %v3030 = vld [vmem:[#allocation2 + $0x740] sm:$0xff]
    %v3031 = vld [vmem:[#allocation2 + $0x748] sm:$0xff]
    %v3032 = vld [vmem:[#allocation2 + $0x750] sm:$0xff]
    %v3033 = vld [vmem:[#allocation2 + $0x758] sm:$0xff]
    %v3034 = vld [vmem:[#allocation2 + $0x760] sm:$0xff]
    %v3035 = vld [vmem:[#allocation2 + $0x768] sm:$0xff]
    %v3036 = vld [vmem:[#allocation2 + $0x770] sm:$0xff]
    %v3037 = vld [vmem:[#allocation2 + $0x778] sm:$0xff]
    %v3038 = vld [vmem:[#allocation2 + $0x780] sm:$0xff]
    %v3039 = vld [vmem:[#allocation2 + $0x788] sm:$0xff]
    %v3040 = vld [vmem:[#allocation2 + $0x790] sm:$0xff]
    %v3041 = vld [vmem:[#allocation2 + $0x798] sm:$0xff]
    %v3042 = vld [vmem:[#allocation2 + $0x7a0] sm:$0xff]
    %v3043 = vld [vmem:[#allocation2 + $0x7a8] sm:$0xff]
    %v3044 = vld [vmem:[#allocation2 + $0x7b0] sm:$0xff]
    %v3045 = vld [vmem:[#allocation2 + $0x7b8] sm:$0xff]
    %v3046 = vld [vmem:[#allocation2 + $0x7c0] sm:$0xff]
    %v3047 = vld [vmem:[#allocation2 + $0x7c8] sm:$0xff]
    %v3048 = vld [vmem:[#allocation2 + $0x7d0] sm:$0xff]
    %v3049 = vld [vmem:[#allocation2 + $0x7d8] sm:$0xff]
    %v3050 = vld [vmem:[#allocation2 + $0x7e0] sm:$0xff]
    %v3051 = vld [vmem:[#allocation2 + $0x7e8] sm:$0xff]
    %v3052 = vld [vmem:[#allocation2 + $0x7f0] sm:$0xff]
    %v3053 = vld [vmem:[#allocation2 + $0x7f8] sm:$0xff]
    %s3054 = scalar_lea.vmem %s10, 3
    %v3055 = vld [vmem:[%s3054] ss:$8 sm:$0xf]
    %v3057 = vlaneseq
    %v3058 = vshrl.u32 %v3057, 7
    %v3059 = vsub.s32 0, %v3058
    %v3060 = vrot.slane %v3055, %v3059
    %v3061 = vlaneseq
    %v3062 = vshrl.u32 %v3061, 7
    %v3063 = vsub.s32 1, %v3062
    %v3064 = vrot.slane %v3055, %v3063
    %v3065 = vlaneseq
    %v3066 = vshrl.u32 %v3065, 7
    %v3067 = vsub.s32 2, %v3066
    %v3068 = vrot.slane %v3055, %v3067
    %v3069 = vlaneseq
    %v3070 = vshrl.u32 %v3069, 7
    %v3071 = vsub.s32 3, %v3070
    %v3072 = vrot.slane %v3055, %v3071
    %v3093 = vunpack.c.l.b16 %v2782
    %v3094 = vunpack.c.l.b16 %v2783
    %v3095 = vunpack.c.l.b16 %v2784
    %v3096 = vunpack.c.l.b16 %v2785
    %v3097 = vunpack.c.l.b16 %v2786
    %v3098 = vunpack.c.l.b16 %v2787
    %v3099 = vunpack.c.l.b16 %v2788
    %v3100 = vunpack.c.l.b16 %v2789
    %v3101 = vunpack.c.l.b16 %v2790
    %v3102 = vunpack.c.l.b16 %v2791
    %v3103 = vunpack.c.l.b16 %v2792
    %v3104 = vunpack.c.l.b16 %v2793
    %v3105 = vunpack.c.l.b16 %v2794
    %v3106 = vunpack.c.l.b16 %v2795
    %v3107 = vunpack.c.l.b16 %v2796
    %v3108 = vunpack.c.l.b16 %v2797
    %vm3109 = vcmask 1041409
    %v3110 = vsel %vm3109, %v3101, %v3093
    %v3111 = vsel %vm3109, %v3102, %v3094
    %v3112 = vsel %vm3109, %v3103, %v3095
    %v3113 = vsel %vm3109, %v3104, %v3096
    %v3114 = vsel %vm3109, %v3105, %v3097
    %v3115 = vsel %vm3109, %v3106, %v3098
    %v3116 = vsel %vm3109, %v3107, %v3099
    %v3117 = vsel %vm3109, %v3108, %v3100
    %v3118 = vpack.c.b16 %v3110, %v3110
    %v3119 = vpack.c.b16 %v3111, %v3111
    %v3120 = vpack.c.b16 %v3112, %v3112
    %v3121 = vpack.c.b16 %v3113, %v3113
    %v3122 = vpack.c.b16 %v3114, %v3114
    %v3123 = vpack.c.b16 %v3115, %v3115
    %v3124 = vpack.c.b16 %v3116, %v3116
    %v3125 = vpack.c.b16 %v3117, %v3117
    %3134 = vmatprep.subr.bf16.mxu0 %v2799
    %3135 = vmatpush1.bf16.msra.mxu0 %v2798
    %3136 = vmatprep.subr.bf16.mxu0 %v2803
    %3137 = vmatpush1.bf16.msra.mxu0 %v2802
    %3138 = vmatprep.subr.bf16.mxu0 %v2807
    %3139 = vmatpush1.bf16.msra.mxu0 %v2806
    %3140 = vmatprep.subr.bf16.mxu0 %v2811
    %3141 = vmatpush1.bf16.msra.mxu0 %v2810
    %3142 = vmatprep.subr.bf16.mxu0 %v2815
    %3143 = vmatpush1.bf16.msra.mxu0 %v2814
    %3144 = vmatprep.subr.bf16.mxu0 %v2819
    %3145 = vmatpush1.bf16.msra.mxu0 %v2818
    %3146 = vmatprep.subr.bf16.mxu0 %v2823
    %3147 = vmatpush1.bf16.msra.mxu0 %v2822
    %3148 = vmatprep.subr.bf16.mxu0 %v2827
    %3149 = vmatpush1.bf16.msra.mxu0 %v2826
    %3150 = vmatprep.subr.bf16.mxu0 %v2831
    %3151 = vmatpush1.bf16.msra.mxu0 %v2830
    %3152 = vmatprep.subr.bf16.mxu0 %v2835
    %3153 = vmatpush1.bf16.msra.mxu0 %v2834
    %3154 = vmatprep.subr.bf16.mxu0 %v2839
    %3155 = vmatpush1.bf16.msra.mxu0 %v2838
    %3156 = vmatprep.subr.bf16.mxu0 %v2843
    %3157 = vmatpush1.bf16.msra.mxu0 %v2842
    %3158 = vmatprep.subr.bf16.mxu0 %v2847
    %3159 = vmatpush1.bf16.msra.mxu0 %v2846
    %3160 = vmatprep.subr.bf16.mxu0 %v2851
    %3161 = vmatpush1.bf16.msra.mxu0 %v2850
    %3162 = vmatprep.subr.bf16.mxu0 %v2855
    %3163 = vmatpush1.bf16.msra.mxu0 %v2854
    %3164 = vmatprep.subr.bf16.mxu0 %v2859
    %3165 = vmatpush1.bf16.msra.mxu0 %v2858
    %3166 = vmatprep.mubr.bf16.mxu0 %v3119
    %3167 = vmatmul.mubr.bf16.gmra.mrb[0].mxu0 %v3118
    %v3168 = vpop.f32.mrb[0].mxu0
    %v3169 = vadd.f32 %v3060, %v3168
    %v3170 = vpop.f32.mrb[0].mxu0
    %v3171 = vadd.f32 %v3064, %v3170
    %v3172 = vpop.f32.mrb[0].mxu0
    %v3173 = vpop.f32.mrb[0].mxu0
    %3174 = vdwg.mxu0
    %3175 = vmatprep.subr.bf16.mxu0 %v2863
    %3176 = vmatpush1.bf16.msra.mxu0 %v2862
    %3177 = vmatprep.subr.bf16.mxu0 %v2867
    %3178 = vmatpush1.bf16.msra.mxu0 %v2866
    %3179 = vmatprep.subr.bf16.mxu0 %v2871
    %3180 = vmatpush1.bf16.msra.mxu0 %v2870
    %3181 = vmatprep.subr.bf16.mxu0 %v2875
    %3182 = vmatpush1.bf16.msra.mxu0 %v2874
    %3183 = vmatprep.subr.bf16.mxu0 %v2879
    %3184 = vmatpush1.bf16.msra.mxu0 %v2878
    %3185 = vmatprep.subr.bf16.mxu0 %v2883
    %3186 = vmatpush1.bf16.msra.mxu0 %v2882
    %3187 = vmatprep.subr.bf16.mxu0 %v2887
    %3188 = vmatpush1.bf16.msra.mxu0 %v2886
    %3189 = vmatprep.subr.bf16.mxu0 %v2891
    %3190 = vmatpush1.bf16.msra.mxu0 %v2890
    %3191 = vmatprep.subr.bf16.mxu0 %v2895
    %3192 = vmatpush1.bf16.msra.mxu0 %v2894
    %3193 = vmatprep.subr.bf16.mxu0 %v2899
    %3194 = vmatpush1.bf16.msra.mxu0 %v2898
    %3195 = vmatprep.subr.bf16.mxu0 %v2903
    %3196 = vmatpush1.bf16.msra.mxu0 %v2902
    %3197 = vmatprep.subr.bf16.mxu0 %v2907
    %3198 = vmatpush1.bf16.msra.mxu0 %v2906
    %3199 = vmatprep.subr.bf16.mxu0 %v2911
    %3200 = vmatpush1.bf16.msra.mxu0 %v2910
    %3201 = vmatprep.subr.bf16.mxu0 %v2915
    %3202 = vmatpush1.bf16.msra.mxu0 %v2914
    %3203 = vmatprep.subr.bf16.mxu0 %v2919
    %3204 = vmatpush1.bf16.msra.mxu0 %v2918
    %3205 = vmatprep.subr.bf16.mxu0 %v2923
    %3206 = vmatpush1.bf16.msra.mxu0 %v2922
    %3207 = vmatprep.mubr.bf16.mxu0 %v3121
    %3208 = vmatmul.mubr.bf16.gmra.mrb[0].mxu0 %v3120
    %v3209 = vpop.f32.mrb[0].mxu0
    %v3210 = vadd.f32 %v3169, %v3209
    %v3211 = vpop.f32.mrb[0].mxu0
    %v3212 = vadd.f32 %v3171, %v3211
    %v3213 = vpop.f32.mrb[0].mxu0
    %v3214 = vpop.f32.mrb[0].mxu0
    %3215 = vdwg.mxu0
    %3216 = vmatprep.subr.bf16.mxu0 %v2927
    %3217 = vmatpush1.bf16.msra.mxu0 %v2926
    %3218 = vmatprep.subr.bf16.mxu0 %v2931
    %3219 = vmatpush1.bf16.msra.mxu0 %v2930
    %3220 = vmatprep.subr.bf16.mxu0 %v2935
    %3221 = vmatpush1.bf16.msra.mxu0 %v2934
    %3222 = vmatprep.subr.bf16.mxu0 %v2939
    %3223 = vmatpush1.bf16.msra.mxu0 %v2938
    %3224 = vmatprep.subr.bf16.mxu0 %v2943
    %3225 = vmatpush1.bf16.msra.mxu0 %v2942
    %3226 = vmatprep.subr.bf16.mxu0 %v2947
    %3227 = vmatpush1.bf16.msra.mxu0 %v2946
    %3228 = vmatprep.subr.bf16.mxu0 %v2951
    %3229 = vmatpush1.bf16.msra.mxu0 %v2950
    %3230 = vmatprep.subr.bf16.mxu0 %v2955
    %3231 = vmatpush1.bf16.msra.mxu0 %v2954
    %3232 = vmatprep.subr.bf16.mxu0 %v2959
    %3233 = vmatpush1.bf16.msra.mxu0 %v2958
    %3234 = vmatprep.subr.bf16.mxu0 %v2963
    %3235 = vmatpush1.bf16.msra.mxu0 %v2962
    %3236 = vmatprep.subr.bf16.mxu0 %v2967
    %3237 = vmatpush1.bf16.msra.mxu0 %v2966
    %3238 = vmatprep.subr.bf16.mxu0 %v2971
    %3239 = vmatpush1.bf16.msra.mxu0 %v2970
    %3240 = vmatprep.subr.bf16.mxu0 %v2975
    %3241 = vmatpush1.bf16.msra.mxu0 %v2974
    %3242 = vmatprep.subr.bf16.mxu0 %v2979
    %3243 = vmatpush1.bf16.msra.mxu0 %v2978
    %3244 = vmatprep.subr.bf16.mxu0 %v2983
    %3245 = vmatpush1.bf16.msra.mxu0 %v2982
    %3246 = vmatprep.subr.bf16.mxu0 %v2987
    %3247 = vmatpush1.bf16.msra.mxu0 %v2986
    %3248 = vmatprep.mubr.bf16.mxu0 %v3123
    %3249 = vmatmul.mubr.bf16.gmra.mrb[0].mxu0 %v3122
    %v3250 = vpop.f32.mrb[0].mxu0
    %v3251 = vadd.f32 %v3210, %v3250
    %v3252 = vpop.f32.mrb[0].mxu0
    %v3253 = vadd.f32 %v3212, %v3252
    %v3254 = vpop.f32.mrb[0].mxu0
    %v3255 = vpop.f32.mrb[0].mxu0
    %3256 = vdwg.mxu0
    %3257 = vmatprep.subr.bf16.mxu0 %v2991
    %3258 = vmatpush1.bf16.msra.mxu0 %v2990
    %3259 = vmatprep.subr.bf16.mxu0 %v2995
    %3260 = vmatpush1.bf16.msra.mxu0 %v2994
    %3261 = vmatprep.subr.bf16.mxu0 %v2999
    %3262 = vmatpush1.bf16.msra.mxu0 %v2998
    %3263 = vmatprep.subr.bf16.mxu0 %v3003
    %3264 = vmatpush1.bf16.msra.mxu0 %v3002
    %3265 = vmatprep.subr.bf16.mxu0 %v3007
    %3266 = vmatpush1.bf16.msra.mxu0 %v3006
    %3267 = vmatprep.subr.bf16.mxu0 %v3011
    %3268 = vmatpush1.bf16.msra.mxu0 %v3010
    %3269 = vmatprep.subr.bf16.mxu0 %v3015
    %3270 = vmatpush1.bf16.msra.mxu0 %v3014
    %3271 = vmatprep.subr.bf16.mxu0 %v3019
    %3272 = vmatpush1.bf16.msra.mxu0 %v3018
    %3273 = vmatprep.subr.bf16.mxu0 %v3023
    %3274 = vmatpush1.bf16.msra.mxu0 %v3022
    %3275 = vmatprep.subr.bf16.mxu0 %v3027
    %3276 = vmatpush1.bf16.msra.mxu0 %v3026
    %3277 = vmatprep.subr.bf16.mxu0 %v3031
    %3278 = vmatpush1.bf16.msra.mxu0 %v3030
    %3279 = vmatprep.subr.bf16.mxu0 %v3035
    %3280 = vmatpush1.bf16.msra.mxu0 %v3034
    %3281 = vmatprep.subr.bf16.mxu0 %v3039
    %3282 = vmatpush1.bf16.msra.mxu0 %v3038
    %3283 = vmatprep.subr.bf16.mxu0 %v3043
    %3284 = vmatpush1.bf16.msra.mxu0 %v3042
    %3285 = vmatprep.subr.bf16.mxu0 %v3047
    %3286 = vmatpush1.bf16.msra.mxu0 %v3046
    %3287 = vmatprep.subr.bf16.mxu0 %v3051
    %3288 = vmatpush1.bf16.msra.mxu0 %v3050
    %3289 = vmatprep.mubr.bf16.mxu0 %v3125
    %3290 = vmatmul.mubr.bf16.gmra.mrb[0].mxu0 %v3124
    %v3291 = vpop.f32.mrb[0].mxu0
    %v3292 = vadd.f32 %v3251, %v3291
    %v3293 = vpop.f32.mrb[0].mxu0
    %v3294 = vadd.f32 %v3253, %v3293
    %v3295 = vpop.f32.mrb[0].mxu0
    %v3296 = vpop.f32.mrb[0].mxu0
    %3297 = vdwg.mxu0
    %3298 = vmatprep.subr.bf16.mxu0 %v2801
    %3299 = vmatpush1.bf16.msra.mxu0 %v2800
    %3300 = vmatprep.subr.bf16.mxu0 %v2805
    %3301 = vmatpush1.bf16.msra.mxu0 %v2804
    %3302 = vmatprep.subr.bf16.mxu0 %v2809
    %3303 = vmatpush1.bf16.msra.mxu0 %v2808
    %3304 = vmatprep.subr.bf16.mxu0 %v2813
    %3305 = vmatpush1.bf16.msra.mxu0 %v2812
    %3306 = vmatprep.subr.bf16.mxu0 %v2817
    %3307 = vmatpush1.bf16.msra.mxu0 %v2816
    %3308 = vmatprep.subr.bf16.mxu0 %v2821
    %3309 = vmatpush1.bf16.msra.mxu0 %v2820
    %3310 = vmatprep.subr.bf16.mxu0 %v2825
    %3311 = vmatpush1.bf16.msra.mxu0 %v2824
    %3312 = vmatprep.subr.bf16.mxu0 %v2829
    %3313 = vmatpush1.bf16.msra.mxu0 %v2828
    %3314 = vmatprep.subr.bf16.mxu0 %v2833
    %3315 = vmatpush1.bf16.msra.mxu0 %v2832
    %3316 = vmatprep.subr.bf16.mxu0 %v2837
    %3317 = vmatpush1.bf16.msra.mxu0 %v2836
    %3318 = vmatprep.subr.bf16.mxu0 %v2841
    %3319 = vmatpush1.bf16.msra.mxu0 %v2840
    %3320 = vmatprep.subr.bf16.mxu0 %v2845
    %3321 = vmatpush1.bf16.msra.mxu0 %v2844
    %3322 = vmatprep.subr.bf16.mxu0 %v2849
    %3323 = vmatpush1.bf16.msra.mxu0 %v2848
    %3324 = vmatprep.subr.bf16.mxu0 %v2853
    %3325 = vmatpush1.bf16.msra.mxu0 %v2852
    %3326 = vmatprep.subr.bf16.mxu0 %v2857
    %3327 = vmatpush1.bf16.msra.mxu0 %v2856
    %3328 = vmatprep.subr.bf16.mxu0 %v2861
    %3329 = vmatpush1.bf16.msra.mxu0 %v2860
    %3330 = vmatprep.mubr.bf16.mxu0 %v3119
    %3331 = vmatmul.mubr.bf16.gmra.mrb[0].mxu0 %v3118
    %v3332 = vpop.f32.mrb[0].mxu0
    %v3333 = vadd.f32 %v3068, %v3332
    %v3334 = vpop.f32.mrb[0].mxu0
    %v3335 = vadd.f32 %v3072, %v3334
    %v3336 = vpop.f32.mrb[0].mxu0
    %v3337 = vpop.f32.mrb[0].mxu0
    %3338 = vdwg.mxu0
    %3339 = vmatprep.subr.bf16.mxu0 %v2865
    %3340 = vmatpush1.bf16.msra.mxu0 %v2864
    %3341 = vmatprep.subr.bf16.mxu0 %v2869
    %3342 = vmatpush1.bf16.msra.mxu0 %v2868
    %3343 = vmatprep.subr.bf16.mxu0 %v2873
    %3344 = vmatpush1.bf16.msra.mxu0 %v2872
    %3345 = vmatprep.subr.bf16.mxu0 %v2877
    %3346 = vmatpush1.bf16.msra.mxu0 %v2876
    %3347 = vmatprep.subr.bf16.mxu0 %v2881
    %3348 = vmatpush1.bf16.msra.mxu0 %v2880
    %3349 = vmatprep.subr.bf16.mxu0 %v2885
    %3350 = vmatpush1.bf16.msra.mxu0 %v2884
    %3351 = vmatprep.subr.bf16.mxu0 %v2889
    %3352 = vmatpush1.bf16.msra.mxu0 %v2888
    %3353 = vmatprep.subr.bf16.mxu0 %v2893
    %3354 = vmatpush1.bf16.msra.mxu0 %v2892
    %3355 = vmatprep.subr.bf16.mxu0 %v2897
    %3356 = vmatpush1.bf16.msra.mxu0 %v2896
    %3357 = vmatprep.subr.bf16.mxu0 %v2901
    %3358 = vmatpush1.bf16.msra.mxu0 %v2900
    %3359 = vmatprep.subr.bf16.mxu0 %v2905
    %3360 = vmatpush1.bf16.msra.mxu0 %v2904
    %3361 = vmatprep.subr.bf16.mxu0 %v2909
    %3362 = vmatpush1.bf16.msra.mxu0 %v2908
    %3363 = vmatprep.subr.bf16.mxu0 %v2913
    %3364 = vmatpush1.bf16.msra.mxu0 %v2912
    %3365 = vmatprep.subr.bf16.mxu0 %v2917
    %3366 = vmatpush1.bf16.msra.mxu0 %v2916
    %3367 = vmatprep.subr.bf16.mxu0 %v2921
    %3368 = vmatpush1.bf16.msra.mxu0 %v2920
    %3369 = vmatprep.subr.bf16.mxu0 %v2925
    %3370 = vmatpush1.bf16.msra.mxu0 %v2924
    %3371 = vmatprep.mubr.bf16.mxu0 %v3121
    %3372 = vmatmul.mubr.bf16.gmra.mrb[0].mxu0 %v3120
    %v3373 = vpop.f32.mrb[0].mxu0
    %v3374 = vadd.f32 %v3333, %v3373
    %v3375 = vpop.f32.mrb[0].mxu0
    %v3376 = vadd.f32 %v3335, %v3375
    %v3377 = vpop.f32.mrb[0].mxu0
    %v3378 = vpop.f32.mrb[0].mxu0
    %3379 = vdwg.mxu0
    %3380 = vmatprep.subr.bf16.mxu0 %v2929
    %3381 = vmatpush1.bf16.msra.mxu0 %v2928
    %3382 = vmatprep.subr.bf16.mxu0 %v2933
    %3383 = vmatpush1.bf16.msra.mxu0 %v2932
    %3384 = vmatprep.subr.bf16.mxu0 %v2937
    %3385 = vmatpush1.bf16.msra.mxu0 %v2936
    %3386 = vmatprep.subr.bf16.mxu0 %v2941
    %3387 = vmatpush1.bf16.msra.mxu0 %v2940
    %3388 = vmatprep.subr.bf16.mxu0 %v2945
    %3389 = vmatpush1.bf16.msra.mxu0 %v2944
    %3390 = vmatprep.subr.bf16.mxu0 %v2949
    %3391 = vmatpush1.bf16.msra.mxu0 %v2948
    %3392 = vmatprep.subr.bf16.mxu0 %v2953
    %3393 = vmatpush1.bf16.msra.mxu0 %v2952
    %3394 = vmatprep.subr.bf16.mxu0 %v2957
    %3395 = vmatpush1.bf16.msra.mxu0 %v2956
    %3396 = vmatprep.subr.bf16.mxu0 %v2961
    %3397 = vmatpush1.bf16.msra.mxu0 %v2960
    %3398 = vmatprep.subr.bf16.mxu0 %v2965
    %3399 = vmatpush1.bf16.msra.mxu0 %v2964
    %3400 = vmatprep.subr.bf16.mxu0 %v2969
    %3401 = vmatpush1.bf16.msra.mxu0 %v2968
    %3402 = vmatprep.subr.bf16.mxu0 %v2973
    %3403 = vmatpush1.bf16.msra.mxu0 %v2972
    %3404 = vmatprep.subr.bf16.mxu0 %v2977
    %3405 = vmatpush1.bf16.msra.mxu0 %v2976
    %3406 = vmatprep.subr.bf16.mxu0 %v2981
    %3407 = vmatpush1.bf16.msra.mxu0 %v2980
    %3408 = vmatprep.subr.bf16.mxu0 %v2985
    %3409 = vmatpush1.bf16.msra.mxu0 %v2984
    %3410 = vmatprep.subr.bf16.mxu0 %v2989
    %3411 = vmatpush1.bf16.msra.mxu0 %v2988
    %3412 = vmatprep.mubr.bf16.mxu0 %v3123
    %3413 = vmatmul.mubr.bf16.gmra.mrb[0].mxu0 %v3122
    %v3414 = vpop.f32.mrb[0].mxu0
    %v3415 = vadd.f32 %v3374, %v3414
    %v3416 = vpop.f32.mrb[0].mxu0
    %v3417 = vadd.f32 %v3376, %v3416
    %v3418 = vpop.f32.mrb[0].mxu0
    %v3419 = vpop.f32.mrb[0].mxu0
    %3420 = vdwg.mxu0
    %3421 = vmatprep.subr.bf16.mxu0 %v2993
    %3422 = vmatpush1.bf16.msra.mxu0 %v2992
    %3423 = vmatprep.subr.bf16.mxu0 %v2997
    %3424 = vmatpush1.bf16.msra.mxu0 %v2996
    %3425 = vmatprep.subr.bf16.mxu0 %v3001
    %3426 = vmatpush1.bf16.msra.mxu0 %v3000
    %3427 = vmatprep.subr.bf16.mxu0 %v3005
    %3428 = vmatpush1.bf16.msra.mxu0 %v3004
    %3429 = vmatprep.subr.bf16.mxu0 %v3009
    %3430 = vmatpush1.bf16.msra.mxu0 %v3008
    %3431 = vmatprep.subr.bf16.mxu0 %v3013
    %3432 = vmatpush1.bf16.msra.mxu0 %v3012
    %3433 = vmatprep.subr.bf16.mxu0 %v3017
    %3434 = vmatpush1.bf16.msra.mxu0 %v3016
    %3435 = vmatprep.subr.bf16.mxu0 %v3021
    %3436 = vmatpush1.bf16.msra.mxu0 %v3020
    %3437 = vmatprep.subr.bf16.mxu0 %v3025
    %3438 = vmatpush1.bf16.msra.mxu0 %v3024
    %3439 = vmatprep.subr.bf16.mxu0 %v3029
    %3440 = vmatpush1.bf16.msra.mxu0 %v3028
    %3441 = vmatprep.subr.bf16.mxu0 %v3033
    %3442 = vmatpush1.bf16.msra.mxu0 %v3032
    %3443 = vmatprep.subr.bf16.mxu0 %v3037
    %3444 = vmatpush1.bf16.msra.mxu0 %v3036
    %3445 = vmatprep.subr.bf16.mxu0 %v3041
    %3446 = vmatpush1.bf16.msra.mxu0 %v3040
    %3447 = vmatprep.subr.bf16.mxu0 %v3045
    %3448 = vmatpush1.bf16.msra.mxu0 %v3044
    %3449 = vmatprep.subr.bf16.mxu0 %v3049
    %3450 = vmatpush1.bf16.msra.mxu0 %v3048
    %3451 = vmatprep.subr.bf16.mxu0 %v3053
    %3452 = vmatpush1.bf16.msra.mxu0 %v3052
    %3453 = vmatprep.mubr.bf16.mxu0 %v3125
    %3454 = vmatmul.mubr.bf16.gmra.mrb[0].mxu0 %v3124
    %v3455 = vpop.f32.mrb[0].mxu0
    %v3456 = vadd.f32 %v3415, %v3455
    %v3457 = vpop.f32.mrb[0].mxu0
    %v3458 = vadd.f32 %v3417, %v3457
    %v3459 = vpop.f32.mrb[0].mxu0
    %v3460 = vpop.f32.mrb[0].mxu0
    %3461 = vdwg.mxu0
    %v3462 = vmax.f32 %v3292, 0.0
    %v3463 = vmax.f32 %v3294, 0.0
    %v3464 = vmax.f32 %v3456, 0.0
    %v3465 = vmax.f32 %v3458, 0.0
    %s3466 = smul.u32 4, 64
    %s3467 = smul.u32 %s3466, 2
    %s3468 = sshll.u32 %s3467, 4
    %3469 = dma.done %s133, %s3468
    %v3470 = vpack.c.bf16 %v3462, %v3462
    %v3471 = vpack.c.bf16 %v3463, %v3463
    %v3472 = vpack.c.bf16 %v3464, %v3464
    %v3473 = vpack.c.bf16 %v3465, %v3465
    %v3474 = vld [vmem:[#allocation3] sm:$0xff]
    %v3475 = vld [vmem:[#allocation3 + $0x8] sm:$0xff]
    %v3476 = vld [vmem:[#allocation3 + $0x10] sm:$0xff]
    %v3477 = vld [vmem:[#allocation3 + $0x18] sm:$0xff]
    %v3478 = vld [vmem:[#allocation3 + $0x20] sm:$0xff]
    %v3479 = vld [vmem:[#allocation3 + $0x28] sm:$0xff]
    %v3480 = vld [vmem:[#allocation3 + $0x30] sm:$0xff]
    %v3481 = vld [vmem:[#allocation3 + $0x38] sm:$0xff]
    %v3482 = vld [vmem:[#allocation3 + $0x40] sm:$0xff]
    %v3483 = vld [vmem:[#allocation3 + $0x48] sm:$0xff]
    %v3484 = vld [vmem:[#allocation3 + $0x50] sm:$0xff]
    %v3485 = vld [vmem:[#allocation3 + $0x58] sm:$0xff]
    %v3486 = vld [vmem:[#allocation3 + $0x60] sm:$0xff]
    %v3487 = vld [vmem:[#allocation3 + $0x68] sm:$0xff]
    %v3488 = vld [vmem:[#allocation3 + $0x70] sm:$0xff]
    %v3489 = vld [vmem:[#allocation3 + $0x78] sm:$0xff]
    %v3490 = vld [vmem:[#allocation3 + $0x80] sm:$0xff]
    %v3491 = vld [vmem:[#allocation3 + $0x88] sm:$0xff]
    %v3492 = vld [vmem:[#allocation3 + $0x90] sm:$0xff]
    %v3493 = vld [vmem:[#allocation3 + $0x98] sm:$0xff]
    %v3494 = vld [vmem:[#allocation3 + $0xa0] sm:$0xff]
    %v3495 = vld [vmem:[#allocation3 + $0xa8] sm:$0xff]
    %v3496 = vld [vmem:[#allocation3 + $0xb0] sm:$0xff]
    %v3497 = vld [vmem:[#allocation3 + $0xb8] sm:$0xff]
    %v3498 = vld [vmem:[#allocation3 + $0xc0] sm:$0xff]
    %v3499 = vld [vmem:[#allocation3 + $0xc8] sm:$0xff]
    %v3500 = vld [vmem:[#allocation3 + $0xd0] sm:$0xff]
    %v3501 = vld [vmem:[#allocation3 + $0xd8] sm:$0xff]
    %v3502 = vld [vmem:[#allocation3 + $0xe0] sm:$0xff]
    %v3503 = vld [vmem:[#allocation3 + $0xe8] sm:$0xff]
    %v3504 = vld [vmem:[#allocation3 + $0xf0] sm:$0xff]
    %v3505 = vld [vmem:[#allocation3 + $0xf8] sm:$0xff]
    %v3506 = vld [vmem:[#allocation3 + $0x100] sm:$0xff]
    %v3507 = vld [vmem:[#allocation3 + $0x108] sm:$0xff]
    %v3508 = vld [vmem:[#allocation3 + $0x110] sm:$0xff]
    %v3509 = vld [vmem:[#allocation3 + $0x118] sm:$0xff]
    %v3510 = vld [vmem:[#allocation3 + $0x120] sm:$0xff]
    %v3511 = vld [vmem:[#allocation3 + $0x128] sm:$0xff]
    %v3512 = vld [vmem:[#allocation3 + $0x130] sm:$0xff]
    %v3513 = vld [vmem:[#allocation3 + $0x138] sm:$0xff]
    %v3514 = vld [vmem:[#allocation3 + $0x140] sm:$0xff]
    %v3515 = vld [vmem:[#allocation3 + $0x148] sm:$0xff]
    %v3516 = vld [vmem:[#allocation3 + $0x150] sm:$0xff]
    %v3517 = vld [vmem:[#allocation3 + $0x158] sm:$0xff]
    %v3518 = vld [vmem:[#allocation3 + $0x160] sm:$0xff]
    %v3519 = vld [vmem:[#allocation3 + $0x168] sm:$0xff]
    %v3520 = vld [vmem:[#allocation3 + $0x170] sm:$0xff]
    %v3521 = vld [vmem:[#allocation3 + $0x178] sm:$0xff]
    %v3522 = vld [vmem:[#allocation3 + $0x180] sm:$0xff]
    %v3523 = vld [vmem:[#allocation3 + $0x188] sm:$0xff]
    %v3524 = vld [vmem:[#allocation3 + $0x190] sm:$0xff]
    %v3525 = vld [vmem:[#allocation3 + $0x198] sm:$0xff]
    %v3526 = vld [vmem:[#allocation3 + $0x1a0] sm:$0xff]
    %v3527 = vld [vmem:[#allocation3 + $0x1a8] sm:$0xff]
    %v3528 = vld [vmem:[#allocation3 + $0x1b0] sm:$0xff]
    %v3529 = vld [vmem:[#allocation3 + $0x1b8] sm:$0xff]
    %v3530 = vld [vmem:[#allocation3 + $0x1c0] sm:$0xff]
    %v3531 = vld [vmem:[#allocation3 + $0x1c8] sm:$0xff]
    %v3532 = vld [vmem:[#allocation3 + $0x1d0] sm:$0xff]
    %v3533 = vld [vmem:[#allocation3 + $0x1d8] sm:$0xff]
    %v3534 = vld [vmem:[#allocation3 + $0x1e0] sm:$0xff]
    %v3535 = vld [vmem:[#allocation3 + $0x1e8] sm:$0xff]
    %v3536 = vld [vmem:[#allocation3 + $0x1f0] sm:$0xff]
    %v3537 = vld [vmem:[#allocation3 + $0x1f8] sm:$0xff]
    %s3538 = scalar_lea.vmem %s10, 4
    %v3539 = vld [vmem:[%s3538] ss:$8 sm:$0x3]
    %v3541 = vlaneseq
    %v3542 = vshrl.u32 %v3541, 7
    %v3543 = vsub.s32 0, %v3542
    %v3544 = vrot.slane %v3539, %v3543
    %v3545 = vlaneseq
    %v3546 = vshrl.u32 %v3545, 7
    %v3547 = vsub.s32 1, %v3546
    %v3548 = vrot.slane %v3539, %v3547
    %3551 = vmatprep.subr.bf16.mxu0 %v3475
    %3552 = vmatpush1.bf16.msra.mxu0 %v3474
    %3553 = vmatprep.subr.bf16.mxu0 %v3477
    %3554 = vmatpush1.bf16.msra.mxu0 %v3476
    %3555 = vmatprep.subr.bf16.mxu0 %v3479
    %3556 = vmatpush1.bf16.msra.mxu0 %v3478
    %3557 = vmatprep.subr.bf16.mxu0 %v3481
    %3558 = vmatpush1.bf16.msra.mxu0 %v3480
    %3559 = vmatprep.subr.bf16.mxu0 %v3483
    %3560 = vmatpush1.bf16.msra.mxu0 %v3482
    %3561 = vmatprep.subr.bf16.mxu0 %v3485
    %3562 = vmatpush1.bf16.msra.mxu0 %v3484
    %3563 = vmatprep.subr.bf16.mxu0 %v3487
    %3564 = vmatpush1.bf16.msra.mxu0 %v3486
    %3565 = vmatprep.subr.bf16.mxu0 %v3489
    %3566 = vmatpush1.bf16.msra.mxu0 %v3488
    %3567 = vmatprep.subr.bf16.mxu0 %v3491
    %3568 = vmatpush1.bf16.msra.mxu0 %v3490
    %3569 = vmatprep.subr.bf16.mxu0 %v3493
    %3570 = vmatpush1.bf16.msra.mxu0 %v3492
    %3571 = vmatprep.subr.bf16.mxu0 %v3495
    %3572 = vmatpush1.bf16.msra.mxu0 %v3494
    %3573 = vmatprep.subr.bf16.mxu0 %v3497
    %3574 = vmatpush1.bf16.msra.mxu0 %v3496
    %3575 = vmatprep.subr.bf16.mxu0 %v3499
    %3576 = vmatpush1.bf16.msra.mxu0 %v3498
    %3577 = vmatprep.subr.bf16.mxu0 %v3501
    %3578 = vmatpush1.bf16.msra.mxu0 %v3500
    %3579 = vmatprep.subr.bf16.mxu0 %v3503
    %3580 = vmatpush1.bf16.msra.mxu0 %v3502
    %3581 = vmatprep.subr.bf16.mxu0 %v3505
    %3582 = vmatpush1.bf16.msra.mxu0 %v3504
    %3583 = vmatprep.mubr.bf16.mxu0 %v3471
    %3584 = vmatmul.mubr.bf16.gmra.mrb[0].mxu0 %v3470
    %v3585 = vpop.f32.mrb[0].mxu0
    %v3586 = vadd.f32 %v3544, %v3585
    %v3587 = vpop.f32.mrb[0].mxu0
    %v3588 = vadd.f32 %v3548, %v3587
    %v3589 = vpop.f32.mrb[0].mxu0
    %v3590 = vpop.f32.mrb[0].mxu0
    %3591 = vdwg.mxu0
    %3592 = vmatprep.subr.bf16.mxu0 %v3507
    %3593 = vmatpush1.bf16.msra.mxu0 %v3506
    %3594 = vmatprep.subr.bf16.mxu0 %v3509
    %3595 = vmatpush1.bf16.msra.mxu0 %v3508
    %3596 = vmatprep.subr.bf16.mxu0 %v3511
    %3597 = vmatpush1.bf16.msra.mxu0 %v3510
    %3598 = vmatprep.subr.bf16.mxu0 %v3513
    %3599 = vmatpush1.bf16.msra.mxu0 %v3512
    %3600 = vmatprep.subr.bf16.mxu0 %v3515
    %3601 = vmatpush1.bf16.msra.mxu0 %v3514
    %3602 = vmatprep.subr.bf16.mxu0 %v3517
    %3603 = vmatpush1.bf16.msra.mxu0 %v3516
    %3604 = vmatprep.subr.bf16.mxu0 %v3519
    %3605 = vmatpush1.bf16.msra.mxu0 %v3518
    %3606 = vmatprep.subr.bf16.mxu0 %v3521
    %3607 = vmatpush1.bf16.msra.mxu0 %v3520
    %3608 = vmatprep.subr.bf16.mxu0 %v3523
    %3609 = vmatpush1.bf16.msra.mxu0 %v3522
    %3610 = vmatprep.subr.bf16.mxu0 %v3525
    %3611 = vmatpush1.bf16.msra.mxu0 %v3524
    %3612 = vmatprep.subr.bf16.mxu0 %v3527
    %3613 = vmatpush1.bf16.msra.mxu0 %v3526
    %3614 = vmatprep.subr.bf16.mxu0 %v3529
    %3615 = vmatpush1.bf16.msra.mxu0 %v3528
    %3616 = vmatprep.subr.bf16.mxu0 %v3531
    %3617 = vmatpush1.bf16.msra.mxu0 %v3530
    %3618 = vmatprep.subr.bf16.mxu0 %v3533
    %3619 = vmatpush1.bf16.msra.mxu0 %v3532
    %3620 = vmatprep.subr.bf16.mxu0 %v3535
    %3621 = vmatpush1.bf16.msra.mxu0 %v3534
    %3622 = vmatprep.subr.bf16.mxu0 %v3537
    %3623 = vmatpush1.bf16.msra.mxu0 %v3536
    %3624 = vmatprep.mubr.bf16.mxu0 %v3473
    %3625 = vmatmul.mubr.bf16.gmra.mrb[0].mxu0 %v3472
    %v3626 = vpop.f32.mrb[0].mxu0
    %v3627 = vadd.f32 %v3586, %v3626
    %v3628 = vpop.f32.mrb[0].mxu0
    %v3629 = vadd.f32 %v3588, %v3628
    %v3630 = vpop.f32.mrb[0].mxu0
    %v3631 = vpop.f32.mrb[0].mxu0
    %3632 = vdwg.mxu0
    %v3633 = vmax.f32 %v3627, 0.0
    %v3634 = vmax.f32 %v3629, 0.0
    %v3635 = vld [vmem:[%s5] sm:$0xff]
    %v3636 = vld [vmem:[%s5 + $0x8] sm:$0xff]
    %v3637 = vld [vmem:[%s5 + $0x10] sm:$0xff]
    %v3638 = vld [vmem:[%s5 + $0x18] sm:$0xff]
    %v3639 = vld [vmem:[%s5 + $0x20] sm:$0xff]
    %v3640 = vld [vmem:[%s5 + $0x28] sm:$0xff]
    %v3641 = vld [vmem:[%s5 + $0x30] sm:$0xff]
    %v3642 = vld [vmem:[%s5 + $0x38] sm:$0xff]
    %v3643 = vld [vmem:[%s5 + $0x40] sm:$0xff]
    %v3644 = vld [vmem:[%s5 + $0x48] sm:$0xff]
    %v3645 = vld [vmem:[%s5 + $0x50] sm:$0xff]
    %v3646 = vld [vmem:[%s5 + $0x58] sm:$0xff]
    %v3647 = vld [vmem:[%s5 + $0x60] sm:$0xff]
    %v3648 = vld [vmem:[%s5 + $0x68] sm:$0xff]
    %v3649 = vld [vmem:[%s5 + $0x70] sm:$0xff]
    %v3650 = vld [vmem:[%s5 + $0x78] sm:$0xff]
    %v3651 = vld [vmem:[%s5 + $0x80] sm:$0xff]
    %v3652 = vld [vmem:[%s5 + $0x88] sm:$0xff]
    %v3653 = vld [vmem:[%s5 + $0x90] sm:$0xff]
    %v3654 = vld [vmem:[%s5 + $0x98] sm:$0xff]
    %v3655 = vld [vmem:[%s5 + $0xa0] sm:$0xff]
    %v3656 = vld [vmem:[%s5 + $0xa8] sm:$0xff]
    %v3657 = vld [vmem:[%s5 + $0xb0] sm:$0xff]
    %v3658 = vld [vmem:[%s5 + $0xb8] sm:$0xff]
    %v3659 = vld [vmem:[%s5 + $0xc0] sm:$0xff]
    %v3660 = vld [vmem:[%s5 + $0xc8] sm:$0xff]
    %v3661 = vld [vmem:[%s5 + $0xd0] sm:$0xff]
    %v3662 = vld [vmem:[%s5 + $0xd8] sm:$0xff]
    %v3663 = vld [vmem:[%s5 + $0xe0] sm:$0xff]
    %v3664 = vld [vmem:[%s5 + $0xe8] sm:$0xff]
    %v3665 = vld [vmem:[%s5 + $0xf0] sm:$0xff]
    %v3666 = vld [vmem:[%s5 + $0xf8] sm:$0xff]
    %v3667 = vld [vmem:[%s10 + $0x5] ss:$0 sm:$0xff]
    %3668 = vmatprep.subr.mxu0 0.0
    %3669 = vmatpush1.msra.mxu0 %v3635
    %3670 = vmatprep.subr.mxu0 0.0
    %3671 = vmatpush1.msra.mxu0 %v3636
    %3672 = vmatprep.subr.mxu0 0.0
    %3673 = vmatpush1.msra.mxu0 %v3637
    %3674 = vmatprep.subr.mxu0 0.0
    %3675 = vmatpush1.msra.mxu0 %v3638
    %3676 = vmatprep.subr.mxu0 0.0
    %3677 = vmatpush1.msra.mxu0 %v3639
    %3678 = vmatprep.subr.mxu0 0.0
    %3679 = vmatpush1.msra.mxu0 %v3640
    %3680 = vmatprep.subr.mxu0 0.0
    %3681 = vmatpush1.msra.mxu0 %v3641
    %3682 = vmatprep.subr.mxu0 0.0
    %3683 = vmatpush1.msra.mxu0 %v3642
    %3684 = vmatprep.subr.mxu0 0.0
    %3685 = vmatpush1.msra.mxu0 %v3643
    %3686 = vmatprep.subr.mxu0 0.0
    %3687 = vmatpush1.msra.mxu0 %v3644
    %3688 = vmatprep.subr.mxu0 0.0
    %3689 = vmatpush1.msra.mxu0 %v3645
    %3690 = vmatprep.subr.mxu0 0.0
    %3691 = vmatpush1.msra.mxu0 %v3646
    %3692 = vmatprep.subr.mxu0 0.0
    %3693 = vmatpush1.msra.mxu0 %v3647
    %3694 = vmatprep.subr.mxu0 0.0
    %3695 = vmatpush1.msra.mxu0 %v3648
    %3696 = vmatprep.subr.mxu0 0.0
    %3697 = vmatpush1.msra.mxu0 %v3649
    %3698 = vmatprep.subr.mxu0 0.0
    %3699 = vmatpush1.msra.mxu0 %v3650
    %3700 = vmatprep.subr.mxu0 0.0
    %3701 = vmatpush1.msra.mxu0 %v3651
    %3702 = vmatprep.subr.mxu0 0.0
    %3703 = vmatpush1.msra.mxu0 %v3652
    %3704 = vmatprep.subr.mxu0 0.0
    %3705 = vmatpush1.msra.mxu0 %v3653
    %3706 = vmatprep.subr.mxu0 0.0
    %3707 = vmatpush1.msra.mxu0 %v3654
    %3708 = vmatprep.subr.mxu0 0.0
    %3709 = vmatpush1.msra.mxu0 %v3655
    %3710 = vmatprep.subr.mxu0 0.0
    %3711 = vmatpush1.msra.mxu0 %v3656
    %3712 = vmatprep.subr.mxu0 0.0
    %3713 = vmatpush1.msra.mxu0 %v3657
    %3714 = vmatprep.subr.mxu0 0.0
    %3715 = vmatpush1.msra.mxu0 %v3658
    %3716 = vmatprep.subr.mxu0 0.0
    %3717 = vmatpush1.msra.mxu0 %v3659
    %3718 = vmatprep.subr.mxu0 0.0
    %3719 = vmatpush1.msra.mxu0 %v3660
    %3720 = vmatprep.subr.mxu0 0.0
    %3721 = vmatpush1.msra.mxu0 %v3661
    %3722 = vmatprep.subr.mxu0 0.0
    %3723 = vmatpush1.msra.mxu0 %v3662
    %3724 = vmatprep.subr.mxu0 0.0
    %3725 = vmatpush1.msra.mxu0 %v3663
    %3726 = vmatprep.subr.mxu0 0.0
    %3727 = vmatpush1.msra.mxu0 %v3664
    %3728 = vmatprep.subr.mxu0 0.0
    %3729 = vmatpush1.msra.mxu0 %v3665
    %3730 = vmatprep.subr.mxu0 0.0
    %3731 = vmatpush1.msra.mxu0 %v3666
    %3732 = vmatprep.mubr.f32.mxu0 %v3634
    %3733 = vmatmul.mubr.f32.gmra.mrb[0].mxu0 %v3633
    %v3734 = vpop.f32.mrb[0].mxu0
    %v3735 = vadd.f32 %v3667, %v3734
    %v3736 = vpop.f32.mrb[0].mxu0
    %3737 = vdwg.mxu0
    %v3740 = vunpack.c.l.s4 1966171168
    %v3741 = vunpack.c.0.s8 %v3740
    %v3742 = vlaneseq
    %v3743 = vshrl.u32 %v3742, 7
    %v3744 = vsub.s32 %v3741, %v3743
    %v3745 = vrot.slane %v3735, %v3744
    %v3746 = vcombine.high %v3745, %v3745
    %v3748 = vunpack.c.l.s4 1966171168
    %v3749 = vunpack.c.0.s8 %v3748
    %v3750 = vlaneseq
    %v3751 = vshrl.u32 %v3750, 7
    %v3752 = vsub.s32 %v3749, %v3751
    %v3753 = vrot.slane %v3745, %v3752
    %v3755 = vunpack.c.l.s4 1966171168
    %v3756 = vunpack.c.0.s8 %v3755
    %v3757 = vlaneseq
    %v3758 = vshrl.u32 %v3757, 7
    %v3759 = vsub.s32 %v3756, %v3758
    %v3760 = vrot.slane %v3746, %v3759
    %3761 = vset.pattern.permute.xlu0 0
    %3762 = vperm.xlu0 %3761, %v342
    %v3763 = vpop.permute.xlu0 %3762
    %3765 = vset.pattern.permute.xlu0 0
    %3766 = vperm.xlu0 %3765, %v343
    %v3767 = vpop.permute.xlu0 %3766
    %3769 = vset.pattern.permute.xlu0 0
    %3770 = vperm.xlu0 %3769, %v344
    %v3771 = vpop.permute.xlu0 %3770
    %3773 = vset.pattern.permute.xlu0 0
    %3774 = vperm.xlu0 %3773, %v345
    %v3775 = vpop.permute.xlu0 %3774
    %3777 = vset.pattern.permute.xlu0 0
    %3778 = vperm.xlu0 %3777, %v346
    %v3779 = vpop.permute.xlu0 %3778
    %3781 = vset.pattern.permute.xlu0 0
    %3782 = vperm.xlu0 %3781, %v347
    %v3783 = vpop.permute.xlu0 %3782
    %3785 = vset.pattern.permute.xlu0 0
    %3786 = vperm.xlu0 %3785, %v348
    %v3787 = vpop.permute.xlu0 %3786
    %3789 = vset.pattern.permute.xlu0 0
    %3790 = vperm.xlu0 %3789, %v349
    %v3791 = vpop.permute.xlu0 %3790
    %3793 = vset.pattern.permute.xlu0 0
    %3794 = vperm.xlu0 %3793, %v350
    %v3795 = vpop.permute.xlu0 %3794
    %3797 = vset.pattern.permute.xlu0 0
    %3798 = vperm.xlu0 %3797, %v351
    %v3799 = vpop.permute.xlu0 %3798
    %3801 = vset.pattern.permute.xlu0 0
    %3802 = vperm.xlu0 %3801, %v352
    %v3803 = vpop.permute.xlu0 %3802
    %3805 = vset.pattern.permute.xlu0 0
    %3806 = vperm.xlu0 %3805, %v353
    %v3807 = vpop.permute.xlu0 %3806
    %3809 = vset.pattern.permute.xlu0 0
    %3810 = vperm.xlu0 %3809, %v354
    %v3811 = vpop.permute.xlu0 %3810
    %3813 = vset.pattern.permute.xlu0 0
    %3814 = vperm.xlu0 %3813, %v355
    %v3815 = vpop.permute.xlu0 %3814
    %3817 = vset.pattern.permute.xlu0 0
    %3818 = vperm.xlu0 %3817, %v356
    %v3819 = vpop.permute.xlu0 %3818
    %3821 = vset.pattern.permute.xlu0 0
    %3822 = vperm.xlu0 %3821, %v357
    %v3823 = vpop.permute.xlu0 %3822
    %3825 = vset.pattern.permute.xlu0 0
    %3826 = vperm.xlu0 %3825, %v374
    %v3827 = vpop.permute.xlu0 %3826
    %3829 = vset.pattern.permute.xlu0 0
    %3830 = vperm.xlu0 %3829, %v375
    %v3831 = vpop.permute.xlu0 %3830
    %3833 = vset.pattern.permute.xlu0 0
    %3834 = vperm.xlu0 %3833, %v376
    %v3835 = vpop.permute.xlu0 %3834
    %3837 = vset.pattern.permute.xlu0 0
    %3838 = vperm.xlu0 %3837, %v377
    %v3839 = vpop.permute.xlu0 %3838
    %3841 = vset.pattern.permute.xlu0 0
    %3842 = vperm.xlu0 %3841, %v378
    %v3843 = vpop.permute.xlu0 %3842
    %3845 = vset.pattern.permute.xlu0 0
    %3846 = vperm.xlu0 %3845, %v379
    %v3847 = vpop.permute.xlu0 %3846
    %3849 = vset.pattern.permute.xlu0 0
    %3850 = vperm.xlu0 %3849, %v380
    %v3851 = vpop.permute.xlu0 %3850
    %3853 = vset.pattern.permute.xlu0 0
    %3854 = vperm.xlu0 %3853, %v381
    %v3855 = vpop.permute.xlu0 %3854
    %3857 = vset.pattern.permute.xlu0 0
    %3858 = vperm.xlu0 %3857, %v382
    %v3859 = vpop.permute.xlu0 %3858
    %3861 = vset.pattern.permute.xlu0 0
    %3862 = vperm.xlu0 %3861, %v383
    %v3863 = vpop.permute.xlu0 %3862
    %3865 = vset.pattern.permute.xlu0 0
    %3866 = vperm.xlu0 %3865, %v384
    %v3867 = vpop.permute.xlu0 %3866
    %3869 = vset.pattern.permute.xlu0 0
    %3870 = vperm.xlu0 %3869, %v385
    %v3871 = vpop.permute.xlu0 %3870
    %3873 = vset.pattern.permute.xlu0 0
    %3874 = vperm.xlu0 %3873, %v386
    %v3875 = vpop.permute.xlu0 %3874
    %3877 = vset.pattern.permute.xlu0 0
    %3878 = vperm.xlu0 %3877, %v387
    %v3879 = vpop.permute.xlu0 %3878
    %3881 = vset.pattern.permute.xlu0 0
    %3882 = vperm.xlu0 %3881, %v388
    %v3883 = vpop.permute.xlu0 %3882
    %3885 = vset.pattern.permute.xlu0 0
    %3886 = vperm.xlu0 %3885, %v389
    %v3887 = vpop.permute.xlu0 %3886
    %v3889 = vlaneseq
    %v3890 = vshrl.u32 %v3889, 7
    %v3891 = vsub.s32 0, %v3890
    %v3892 = vrot.slane %v3753, %v3891
    %v3893 = vlaneseq
    %v3894 = vshrl.u32 %v3893, 7
    %v3895 = vsub.s32 0, %v3894
    %v3896 = vrot.slane %v3760, %v3895
    %v3899 = vmul.f32 %v3763, %v3892
    %v3900 = vmul.f32 %v3767, %v3892
    %v3901 = vmul.f32 %v3771, %v3892
    %v3902 = vmul.f32 %v3775, %v3892
    %v3903 = vmul.f32 %v3779, %v3892
    %v3904 = vmul.f32 %v3783, %v3892
    %v3905 = vmul.f32 %v3787, %v3892
    %v3906 = vmul.f32 %v3791, %v3892
    %v3907 = vmul.f32 %v3795, %v3892
    %v3908 = vmul.f32 %v3799, %v3892
    %v3909 = vmul.f32 %v3803, %v3892
    %v3910 = vmul.f32 %v3807, %v3892
    %v3911 = vmul.f32 %v3811, %v3892
    %v3912 = vmul.f32 %v3815, %v3892
    %v3913 = vmul.f32 %v3819, %v3892
    %v3914 = vmul.f32 %v3823, %v3892
    %v3915 = vmul.f32 %v3827, %v3896
    %v3916 = vmul.f32 %v3831, %v3896
    %v3917 = vmul.f32 %v3835, %v3896
    %v3918 = vmul.f32 %v3839, %v3896
    %v3919 = vmul.f32 %v3843, %v3896
    %v3920 = vmul.f32 %v3847, %v3896
    %v3921 = vmul.f32 %v3851, %v3896
    %v3922 = vmul.f32 %v3855, %v3896
    %v3923 = vmul.f32 %v3859, %v3896
    %v3924 = vmul.f32 %v3863, %v3896
    %v3925 = vmul.f32 %v3867, %v3896
    %v3926 = vmul.f32 %v3871, %v3896
    %v3927 = vmul.f32 %v3875, %v3896
    %v3928 = vmul.f32 %v3879, %v3896
    %v3929 = vmul.f32 %v3883, %v3896
    %v3930 = vmul.f32 %v3887, %v3896
    %3931 = vset.pattern.permute.xlu0 1
    %3932 = vperm.xlu0 %3931, %v342
    %v3933 = vpop.permute.xlu0 %3932
    %3935 = vset.pattern.permute.xlu0 1
    %3936 = vperm.xlu0 %3935, %v343
    %v3937 = vpop.permute.xlu0 %3936
    %3939 = vset.pattern.permute.xlu0 1
    %3940 = vperm.xlu0 %3939, %v344
    %v3941 = vpop.permute.xlu0 %3940
    %3943 = vset.pattern.permute.xlu0 1
    %3944 = vperm.xlu0 %3943, %v345
    %v3945 = vpop.permute.xlu0 %3944
    %3947 = vset.pattern.permute.xlu0 1
    %3948 = vperm.xlu0 %3947, %v346
    %v3949 = vpop.permute.xlu0 %3948
    %3951 = vset.pattern.permute.xlu0 1
    %3952 = vperm.xlu0 %3951, %v347
    %v3953 = vpop.permute.xlu0 %3952
    %3955 = vset.pattern.permute.xlu0 1
    %3956 = vperm.xlu0 %3955, %v348
    %v3957 = vpop.permute.xlu0 %3956
    %3959 = vset.pattern.permute.xlu0 1
    %3960 = vperm.xlu0 %3959, %v349
    %v3961 = vpop.permute.xlu0 %3960
    %3963 = vset.pattern.permute.xlu0 1
    %3964 = vperm.xlu0 %3963, %v350
    %v3965 = vpop.permute.xlu0 %3964
    %3967 = vset.pattern.permute.xlu0 1
    %3968 = vperm.xlu0 %3967, %v351
    %v3969 = vpop.permute.xlu0 %3968
    %3971 = vset.pattern.permute.xlu0 1
    %3972 = vperm.xlu0 %3971, %v352
    %v3973 = vpop.permute.xlu0 %3972
    %3975 = vset.pattern.permute.xlu0 1
    %3976 = vperm.xlu0 %3975, %v353
    %v3977 = vpop.permute.xlu0 %3976
    %3979 = vset.pattern.permute.xlu0 1
    %3980 = vperm.xlu0 %3979, %v354
    %v3981 = vpop.permute.xlu0 %3980
    %3983 = vset.pattern.permute.xlu0 1
    %3984 = vperm.xlu0 %3983, %v355
    %v3985 = vpop.permute.xlu0 %3984
    %3987 = vset.pattern.permute.xlu0 1
    %3988 = vperm.xlu0 %3987, %v356
    %v3989 = vpop.permute.xlu0 %3988
    %3991 = vset.pattern.permute.xlu0 1
    %3992 = vperm.xlu0 %3991, %v357
    %v3993 = vpop.permute.xlu0 %3992
    %3995 = vset.pattern.permute.xlu0 1
    %3996 = vperm.xlu0 %3995, %v374
    %v3997 = vpop.permute.xlu0 %3996
    %3999 = vset.pattern.permute.xlu0 1
    %4000 = vperm.xlu0 %3999, %v375
    %v4001 = vpop.permute.xlu0 %4000
    %4003 = vset.pattern.permute.xlu0 1
    %4004 = vperm.xlu0 %4003, %v376
    %v4005 = vpop.permute.xlu0 %4004
    %4007 = vset.pattern.permute.xlu0 1
    %4008 = vperm.xlu0 %4007, %v377
    %v4009 = vpop.permute.xlu0 %4008
    %4011 = vset.pattern.permute.xlu0 1
    %4012 = vperm.xlu0 %4011, %v378
    %v4013 = vpop.permute.xlu0 %4012
    %4015 = vset.pattern.permute.xlu0 1
    %4016 = vperm.xlu0 %4015, %v379
    %v4017 = vpop.permute.xlu0 %4016
    %4019 = vset.pattern.permute.xlu0 1
    %4020 = vperm.xlu0 %4019, %v380
    %v4021 = vpop.permute.xlu0 %4020
    %4023 = vset.pattern.permute.xlu0 1
    %4024 = vperm.xlu0 %4023, %v381
    %v4025 = vpop.permute.xlu0 %4024
    %4027 = vset.pattern.permute.xlu0 1
    %4028 = vperm.xlu0 %4027, %v382
    %v4029 = vpop.permute.xlu0 %4028
    %4031 = vset.pattern.permute.xlu0 1
    %4032 = vperm.xlu0 %4031, %v383
    %v4033 = vpop.permute.xlu0 %4032
    %4035 = vset.pattern.permute.xlu0 1
    %4036 = vperm.xlu0 %4035, %v384
    %v4037 = vpop.permute.xlu0 %4036
    %4039 = vset.pattern.permute.xlu0 1
    %4040 = vperm.xlu0 %4039, %v385
    %v4041 = vpop.permute.xlu0 %4040
    %4043 = vset.pattern.permute.xlu0 1
    %4044 = vperm.xlu0 %4043, %v386
    %v4045 = vpop.permute.xlu0 %4044
    %4047 = vset.pattern.permute.xlu0 1
    %4048 = vperm.xlu0 %4047, %v387
    %v4049 = vpop.permute.xlu0 %4048
    %4051 = vset.pattern.permute.xlu0 1
    %4052 = vperm.xlu0 %4051, %v388
    %v4053 = vpop.permute.xlu0 %4052
    %4055 = vset.pattern.permute.xlu0 1
    %4056 = vperm.xlu0 %4055, %v389
    %v4057 = vpop.permute.xlu0 %4056
    %v4059 = vmul.f32 %v3933, %v3892
    %v4060 = vmul.f32 %v3937, %v3892
    %v4061 = vmul.f32 %v3941, %v3892
    %v4062 = vmul.f32 %v3945, %v3892
    %v4063 = vmul.f32 %v3949, %v3892
    %v4064 = vmul.f32 %v3953, %v3892
    %v4065 = vmul.f32 %v3957, %v3892
    %v4066 = vmul.f32 %v3961, %v3892
    %v4067 = vmul.f32 %v3965, %v3892
    %v4068 = vmul.f32 %v3969, %v3892
    %v4069 = vmul.f32 %v3973, %v3892
    %v4070 = vmul.f32 %v3977, %v3892
    %v4071 = vmul.f32 %v3981, %v3892
    %v4072 = vmul.f32 %v3985, %v3892
    %v4073 = vmul.f32 %v3989, %v3892
    %v4074 = vmul.f32 %v3993, %v3892
    %v4075 = vmul.f32 %v3997, %v3896
    %v4076 = vmul.f32 %v4001, %v3896
    %v4077 = vmul.f32 %v4005, %v3896
    %v4078 = vmul.f32 %v4009, %v3896
    %v4079 = vmul.f32 %v4013, %v3896
    %v4080 = vmul.f32 %v4017, %v3896
    %v4081 = vmul.f32 %v4021, %v3896
    %v4082 = vmul.f32 %v4025, %v3896
    %v4083 = vmul.f32 %v4029, %v3896
    %v4084 = vmul.f32 %v4033, %v3896
    %v4085 = vmul.f32 %v4037, %v3896
    %v4086 = vmul.f32 %v4041, %v3896
    %v4087 = vmul.f32 %v4045, %v3896
    %v4088 = vmul.f32 %v4049, %v3896
    %v4089 = vmul.f32 %v4053, %v3896
    %v4090 = vmul.f32 %v4057, %v3896
    %4123 = vrot.lane.b32.xlu0 %v4059, 125
    %v4124 = vpop.permute.xlu0 %4123
    %4125 = vrot.lane.b32.xlu0 %v4060, 125
    %v4126 = vpop.permute.xlu0 %4125
    %4127 = vrot.lane.b32.xlu0 %v4061, 125
    %v4128 = vpop.permute.xlu0 %4127
    %4129 = vrot.lane.b32.xlu0 %v4062, 125
    %v4130 = vpop.permute.xlu0 %4129
    %4131 = vrot.lane.b32.xlu0 %v4063, 125
    %v4132 = vpop.permute.xlu0 %4131
    %4133 = vrot.lane.b32.xlu0 %v4064, 125
    %v4134 = vpop.permute.xlu0 %4133
    %4135 = vrot.lane.b32.xlu0 %v4065, 125
    %v4136 = vpop.permute.xlu0 %4135
    %4137 = vrot.lane.b32.xlu0 %v4066, 125
    %v4138 = vpop.permute.xlu0 %4137
    %4139 = vrot.lane.b32.xlu0 %v4067, 125
    %v4140 = vpop.permute.xlu0 %4139
    %4141 = vrot.lane.b32.xlu0 %v4068, 125
    %v4142 = vpop.permute.xlu0 %4141
    %4143 = vrot.lane.b32.xlu0 %v4069, 125
    %v4144 = vpop.permute.xlu0 %4143
    %4145 = vrot.lane.b32.xlu0 %v4070, 125
    %v4146 = vpop.permute.xlu0 %4145
    %4147 = vrot.lane.b32.xlu0 %v4071, 125
    %v4148 = vpop.permute.xlu0 %4147
    %4149 = vrot.lane.b32.xlu0 %v4072, 125
    %v4150 = vpop.permute.xlu0 %4149
    %4151 = vrot.lane.b32.xlu0 %v4073, 125
    %v4152 = vpop.permute.xlu0 %4151
    %4153 = vrot.lane.b32.xlu0 %v4074, 125
    %v4154 = vpop.permute.xlu0 %4153
    %4155 = vrot.lane.b32.xlu0 %v4075, 125
    %v4156 = vpop.permute.xlu0 %4155
    %4157 = vrot.lane.b32.xlu0 %v4076, 125
    %v4158 = vpop.permute.xlu0 %4157
    %4159 = vrot.lane.b32.xlu0 %v4077, 125
    %v4160 = vpop.permute.xlu0 %4159
    %4161 = vrot.lane.b32.xlu0 %v4078, 125
    %v4162 = vpop.permute.xlu0 %4161
    %4163 = vrot.lane.b32.xlu0 %v4079, 125
    %v4164 = vpop.permute.xlu0 %4163
    %4165 = vrot.lane.b32.xlu0 %v4080, 125
    %v4166 = vpop.permute.xlu0 %4165
    %4167 = vrot.lane.b32.xlu0 %v4081, 125
    %v4168 = vpop.permute.xlu0 %4167
    %4169 = vrot.lane.b32.xlu0 %v4082, 125
    %v4170 = vpop.permute.xlu0 %4169
    %4171 = vrot.lane.b32.xlu0 %v4083, 125
    %v4172 = vpop.permute.xlu0 %4171
    %4173 = vrot.lane.b32.xlu0 %v4084, 125
    %v4174 = vpop.permute.xlu0 %4173
    %4175 = vrot.lane.b32.xlu0 %v4085, 125
    %v4176 = vpop.permute.xlu0 %4175
    %4177 = vrot.lane.b32.xlu0 %v4086, 125
    %v4178 = vpop.permute.xlu0 %4177
    %4179 = vrot.lane.b32.xlu0 %v4087, 125
    %v4180 = vpop.permute.xlu0 %4179
    %4181 = vrot.lane.b32.xlu0 %v4088, 125
    %v4182 = vpop.permute.xlu0 %4181
    %4183 = vrot.lane.b32.xlu0 %v4089, 125
    %v4184 = vpop.permute.xlu0 %4183
    %4185 = vrot.lane.b32.xlu0 %v4090, 125
    %v4186 = vpop.permute.xlu0 %4185
    %v4219 = vadd.f32 %v3899, %v4124
    %v4220 = vadd.f32 %v3900, %v4126
    %v4221 = vadd.f32 %v3901, %v4128
    %v4222 = vadd.f32 %v3902, %v4130
    %v4223 = vadd.f32 %v3903, %v4132
    %v4224 = vadd.f32 %v3904, %v4134
    %v4225 = vadd.f32 %v3905, %v4136
    %v4226 = vadd.f32 %v3906, %v4138
    %v4227 = vadd.f32 %v3907, %v4140
    %v4228 = vadd.f32 %v3908, %v4142
    %v4229 = vadd.f32 %v3909, %v4144
    %v4230 = vadd.f32 %v3910, %v4146
    %v4231 = vadd.f32 %v3911, %v4148
    %v4232 = vadd.f32 %v3912, %v4150
    %v4233 = vadd.f32 %v3913, %v4152
    %v4234 = vadd.f32 %v3914, %v4154
    %v4235 = vadd.f32 %v3915, %v4156
    %v4236 = vadd.f32 %v3916, %v4158
    %v4237 = vadd.f32 %v3917, %v4160
    %v4238 = vadd.f32 %v3918, %v4162
    %v4239 = vadd.f32 %v3919, %v4164
    %v4240 = vadd.f32 %v3920, %v4166
    %v4241 = vadd.f32 %v3921, %v4168
    %v4242 = vadd.f32 %v3922, %v4170
    %v4243 = vadd.f32 %v3923, %v4172
    %v4244 = vadd.f32 %v3924, %v4174
    %v4245 = vadd.f32 %v3925, %v4176
    %v4246 = vadd.f32 %v3926, %v4178
    %v4247 = vadd.f32 %v3927, %v4180
    %v4248 = vadd.f32 %v3928, %v4182
    %v4249 = vadd.f32 %v3929, %v4184
    %v4250 = vadd.f32 %v3930, %v4186
    %4251 = vset.pattern.permute.xlu0 2
    %4252 = vperm.xlu0 %4251, %v342
    %v4253 = vpop.permute.xlu0 %4252
    %4255 = vset.pattern.permute.xlu0 2
    %4256 = vperm.xlu0 %4255, %v343
    %v4257 = vpop.permute.xlu0 %4256
    %4259 = vset.pattern.permute.xlu0 2
    %4260 = vperm.xlu0 %4259, %v344
    %v4261 = vpop.permute.xlu0 %4260
    %4263 = vset.pattern.permute.xlu0 2
    %4264 = vperm.xlu0 %4263, %v345
    %v4265 = vpop.permute.xlu0 %4264
    %4267 = vset.pattern.permute.xlu0 2
    %4268 = vperm.xlu0 %4267, %v346
    %v4269 = vpop.permute.xlu0 %4268
    %4271 = vset.pattern.permute.xlu0 2
    %4272 = vperm.xlu0 %4271, %v347
    %v4273 = vpop.permute.xlu0 %4272
    %4275 = vset.pattern.permute.xlu0 2
    %4276 = vperm.xlu0 %4275, %v348
    %v4277 = vpop.permute.xlu0 %4276
    %4279 = vset.pattern.permute.xlu0 2
    %4280 = vperm.xlu0 %4279, %v349
    %v4281 = vpop.permute.xlu0 %4280
    %4283 = vset.pattern.permute.xlu0 2
    %4284 = vperm.xlu0 %4283, %v350
    %v4285 = vpop.permute.xlu0 %4284
    %4287 = vset.pattern.permute.xlu0 2
    %4288 = vperm.xlu0 %4287, %v351
    %v4289 = vpop.permute.xlu0 %4288
    %4291 = vset.pattern.permute.xlu0 2
    %4292 = vperm.xlu0 %4291, %v352
    %v4293 = vpop.permute.xlu0 %4292
    %4295 = vset.pattern.permute.xlu0 2
    %4296 = vperm.xlu0 %4295, %v353
    %v4297 = vpop.permute.xlu0 %4296
    %4299 = vset.pattern.permute.xlu0 2
    %4300 = vperm.xlu0 %4299, %v354
    %v4301 = vpop.permute.xlu0 %4300
    %4303 = vset.pattern.permute.xlu0 2
    %4304 = vperm.xlu0 %4303, %v355
    %v4305 = vpop.permute.xlu0 %4304
    %4307 = vset.pattern.permute.xlu0 2
    %4308 = vperm.xlu0 %4307, %v356
    %v4309 = vpop.permute.xlu0 %4308
    %4311 = vset.pattern.permute.xlu0 2
    %4312 = vperm.xlu0 %4311, %v357
    %v4313 = vpop.permute.xlu0 %4312
    %4315 = vset.pattern.permute.xlu0 2
    %4316 = vperm.xlu0 %4315, %v374
    %v4317 = vpop.permute.xlu0 %4316
    %4319 = vset.pattern.permute.xlu0 2
    %4320 = vperm.xlu0 %4319, %v375
    %v4321 = vpop.permute.xlu0 %4320
    %4323 = vset.pattern.permute.xlu0 2
    %4324 = vperm.xlu0 %4323, %v376
    %v4325 = vpop.permute.xlu0 %4324
    %4327 = vset.pattern.permute.xlu0 2
    %4328 = vperm.xlu0 %4327, %v377
    %v4329 = vpop.permute.xlu0 %4328
    %4331 = vset.pattern.permute.xlu0 2
    %4332 = vperm.xlu0 %4331, %v378
    %v4333 = vpop.permute.xlu0 %4332
    %4335 = vset.pattern.permute.xlu0 2
    %4336 = vperm.xlu0 %4335, %v379
    %v4337 = vpop.permute.xlu0 %4336
    %4339 = vset.pattern.permute.xlu0 2
    %4340 = vperm.xlu0 %4339, %v380
    %v4341 = vpop.permute.xlu0 %4340
    %4343 = vset.pattern.permute.xlu0 2
    %4344 = vperm.xlu0 %4343, %v381
    %v4345 = vpop.permute.xlu0 %4344
    %4347 = vset.pattern.permute.xlu0 2
    %4348 = vperm.xlu0 %4347, %v382
    %v4349 = vpop.permute.xlu0 %4348
    %4351 = vset.pattern.permute.xlu0 2
    %4352 = vperm.xlu0 %4351, %v383
    %v4353 = vpop.permute.xlu0 %4352
    %4355 = vset.pattern.permute.xlu0 2
    %4356 = vperm.xlu0 %4355, %v384
    %v4357 = vpop.permute.xlu0 %4356
    %4359 = vset.pattern.permute.xlu0 2
    %4360 = vperm.xlu0 %4359, %v385
    %v4361 = vpop.permute.xlu0 %4360
    %4363 = vset.pattern.permute.xlu0 2
    %4364 = vperm.xlu0 %4363, %v386
    %v4365 = vpop.permute.xlu0 %4364
    %4367 = vset.pattern.permute.xlu0 2
    %4368 = vperm.xlu0 %4367, %v387
    %v4369 = vpop.permute.xlu0 %4368
    %4371 = vset.pattern.permute.xlu0 2
    %4372 = vperm.xlu0 %4371, %v388
    %v4373 = vpop.permute.xlu0 %4372
    %4375 = vset.pattern.permute.xlu0 2
    %4376 = vperm.xlu0 %4375, %v389
    %v4377 = vpop.permute.xlu0 %4376
    %v4379 = vmul.f32 %v4253, %v3892
    %v4380 = vmul.f32 %v4257, %v3892
    %v4381 = vmul.f32 %v4261, %v3892
    %v4382 = vmul.f32 %v4265, %v3892
    %v4383 = vmul.f32 %v4269, %v3892
    %v4384 = vmul.f32 %v4273, %v3892
    %v4385 = vmul.f32 %v4277, %v3892
    %v4386 = vmul.f32 %v4281, %v3892
    %v4387 = vmul.f32 %v4285, %v3892
    %v4388 = vmul.f32 %v4289, %v3892
    %v4389 = vmul.f32 %v4293, %v3892
    %v4390 = vmul.f32 %v4297, %v3892
    %v4391 = vmul.f32 %v4301, %v3892
    %v4392 = vmul.f32 %v4305, %v3892
    %v4393 = vmul.f32 %v4309, %v3892
    %v4394 = vmul.f32 %v4313, %v3892
    %v4395 = vmul.f32 %v4317, %v3896
    %v4396 = vmul.f32 %v4321, %v3896
    %v4397 = vmul.f32 %v4325, %v3896
    %v4398 = vmul.f32 %v4329, %v3896
    %v4399 = vmul.f32 %v4333, %v3896
    %v4400 = vmul.f32 %v4337, %v3896
    %v4401 = vmul.f32 %v4341, %v3896
    %v4402 = vmul.f32 %v4345, %v3896
    %v4403 = vmul.f32 %v4349, %v3896
    %v4404 = vmul.f32 %v4353, %v3896
    %v4405 = vmul.f32 %v4357, %v3896
    %v4406 = vmul.f32 %v4361, %v3896
    %v4407 = vmul.f32 %v4365, %v3896
    %v4408 = vmul.f32 %v4369, %v3896
    %v4409 = vmul.f32 %v4373, %v3896
    %v4410 = vmul.f32 %v4377, %v3896
    %4443 = vrot.lane.b32.xlu0 %v4379, 122
    %v4444 = vpop.permute.xlu0 %4443
    %4445 = vrot.lane.b32.xlu0 %v4380, 122
    %v4446 = vpop.permute.xlu0 %4445
    %4447 = vrot.lane.b32.xlu0 %v4381, 122
    %v4448 = vpop.permute.xlu0 %4447
    %4449 = vrot.lane.b32.xlu0 %v4382, 122
    %v4450 = vpop.permute.xlu0 %4449
    %4451 = vrot.lane.b32.xlu0 %v4383, 122
    %v4452 = vpop.permute.xlu0 %4451
    %4453 = vrot.lane.b32.xlu0 %v4384, 122
    %v4454 = vpop.permute.xlu0 %4453
    %4455 = vrot.lane.b32.xlu0 %v4385, 122
    %v4456 = vpop.permute.xlu0 %4455
    %4457 = vrot.lane.b32.xlu0 %v4386, 122
    %v4458 = vpop.permute.xlu0 %4457
    %4459 = vrot.lane.b32.xlu0 %v4387, 122
    %v4460 = vpop.permute.xlu0 %4459
    %4461 = vrot.lane.b32.xlu0 %v4388, 122
    %v4462 = vpop.permute.xlu0 %4461
    %4463 = vrot.lane.b32.xlu0 %v4389, 122
    %v4464 = vpop.permute.xlu0 %4463
    %4465 = vrot.lane.b32.xlu0 %v4390, 122
    %v4466 = vpop.permute.xlu0 %4465
    %4467 = vrot.lane.b32.xlu0 %v4391, 122
    %v4468 = vpop.permute.xlu0 %4467
    %4469 = vrot.lane.b32.xlu0 %v4392, 122
    %v4470 = vpop.permute.xlu0 %4469
    %4471 = vrot.lane.b32.xlu0 %v4393, 122
    %v4472 = vpop.permute.xlu0 %4471
    %4473 = vrot.lane.b32.xlu0 %v4394, 122
    %v4474 = vpop.permute.xlu0 %4473
    %4475 = vrot.lane.b32.xlu0 %v4395, 122
    %v4476 = vpop.permute.xlu0 %4475
    %4477 = vrot.lane.b32.xlu0 %v4396, 122
    %v4478 = vpop.permute.xlu0 %4477
    %4479 = vrot.lane.b32.xlu0 %v4397, 122
    %v4480 = vpop.permute.xlu0 %4479
    %4481 = vrot.lane.b32.xlu0 %v4398, 122
    %v4482 = vpop.permute.xlu0 %4481
    %4483 = vrot.lane.b32.xlu0 %v4399, 122
    %v4484 = vpop.permute.xlu0 %4483
    %4485 = vrot.lane.b32.xlu0 %v4400, 122
    %v4486 = vpop.permute.xlu0 %4485
    %4487 = vrot.lane.b32.xlu0 %v4401, 122
    %v4488 = vpop.permute.xlu0 %4487
    %4489 = vrot.lane.b32.xlu0 %v4402, 122
    %v4490 = vpop.permute.xlu0 %4489
    %4491 = vrot.lane.b32.xlu0 %v4403, 122
    %v4492 = vpop.permute.xlu0 %4491
    %4493 = vrot.lane.b32.xlu0 %v4404, 122
    %v4494 = vpop.permute.xlu0 %4493
    %4495 = vrot.lane.b32.xlu0 %v4405, 122
    %v4496 = vpop.permute.xlu0 %4495
    %4497 = vrot.lane.b32.xlu0 %v4406, 122
    %v4498 = vpop.permute.xlu0 %4497
    %4499 = vrot.lane.b32.xlu0 %v4407, 122
    %v4500 = vpop.permute.xlu0 %4499
    %4501 = vrot.lane.b32.xlu0 %v4408, 122
    %v4502 = vpop.permute.xlu0 %4501
    %4503 = vrot.lane.b32.xlu0 %v4409, 122
    %v4504 = vpop.permute.xlu0 %4503
    %4505 = vrot.lane.b32.xlu0 %v4410, 122
    %v4506 = vpop.permute.xlu0 %4505
    %v4539 = vadd.f32 %v4219, %v4444
    %v4540 = vadd.f32 %v4220, %v4446
    %v4541 = vadd.f32 %v4221, %v4448
    %v4542 = vadd.f32 %v4222, %v4450
    %v4543 = vadd.f32 %v4223, %v4452
    %v4544 = vadd.f32 %v4224, %v4454
    %v4545 = vadd.f32 %v4225, %v4456
    %v4546 = vadd.f32 %v4226, %v4458
    %v4547 = vadd.f32 %v4227, %v4460
    %v4548 = vadd.f32 %v4228, %v4462
    %v4549 = vadd.f32 %v4229, %v4464
    %v4550 = vadd.f32 %v4230, %v4466
    %v4551 = vadd.f32 %v4231, %v4468
    %v4552 = vadd.f32 %v4232, %v4470
    %v4553 = vadd.f32 %v4233, %v4472
    %v4554 = vadd.f32 %v4234, %v4474
    %v4555 = vadd.f32 %v4235, %v4476
    %v4556 = vadd.f32 %v4236, %v4478
    %v4557 = vadd.f32 %v4237, %v4480
    %v4558 = vadd.f32 %v4238, %v4482
    %v4559 = vadd.f32 %v4239, %v4484
    %v4560 = vadd.f32 %v4240, %v4486
    %v4561 = vadd.f32 %v4241, %v4488
    %v4562 = vadd.f32 %v4242, %v4490
    %v4563 = vadd.f32 %v4243, %v4492
    %v4564 = vadd.f32 %v4244, %v4494
    %v4565 = vadd.f32 %v4245, %v4496
    %v4566 = vadd.f32 %v4246, %v4498
    %v4567 = vadd.f32 %v4247, %v4500
    %v4568 = vadd.f32 %v4248, %v4502
    %v4569 = vadd.f32 %v4249, %v4504
    %v4570 = vadd.f32 %v4250, %v4506
    %v4571 = vld [vmem:[#allocation6] sm:$0x7]
    %v4572 = vld [vmem:[%s10 + $0x6] ss:$0 sm:$0xff]
    %v4574 = vsel %vm392, %v4539, 0
    %v4577 = vsel %vm392, %v4540, 0
    %v4580 = vsel %vm392, %v4541, 0
    %v4583 = vsel %vm392, %v4542, 0
    %v4586 = vsel %vm392, %v4543, 0
    %v4589 = vsel %vm392, %v4544, 0
    %v4592 = vsel %vm392, %v4545, 0
    %v4595 = vsel %vm392, %v4546, 0
    %v4598 = vsel %vm392, %v4547, 0
    %v4601 = vsel %vm392, %v4548, 0
    %v4604 = vsel %vm392, %v4549, 0
    %v4607 = vsel %vm392, %v4550, 0
    %v4610 = vsel %vm392, %v4551, 0
    %v4613 = vsel %vm392, %v4552, 0
    %v4616 = vsel %vm392, %v4553, 0
    %v4619 = vsel %vm392, %v4554, 0
    %v4622 = vsel %vm392, %v4555, 0
    %v4625 = vsel %vm392, %v4556, 0
    %v4628 = vsel %vm392, %v4557, 0
    %v4631 = vsel %vm392, %v4558, 0
    %v4634 = vsel %vm392, %v4559, 0
    %v4637 = vsel %vm392, %v4560, 0
    %v4640 = vsel %vm392, %v4561, 0
    %v4643 = vsel %vm392, %v4562, 0
    %v4646 = vsel %vm392, %v4563, 0
    %v4649 = vsel %vm392, %v4564, 0
    %v4652 = vsel %vm392, %v4565, 0
    %v4655 = vsel %vm392, %v4566, 0
    %v4658 = vsel %vm392, %v4567, 0
    %v4661 = vsel %vm392, %v4568, 0
    %v4664 = vsel %vm392, %v4569, 0
    %v4667 = vsel %vm392, %v4570, 0
    %v4670 = vsel %vm489, %v4571, 0
    %4672 = vmatprep.subr.mxu0 0.0
    %4673 = vmatpush1.msra.mxu0 %v4670
    %4674 = vmatprep.subr.mxu0 0.0
    %4675 = vmatpush1.msra.mxu0 0.0
    %4676 = vmatprep.subr.mxu0 0.0
    %4677 = vmatpush1.msra.mxu0 0.0
    %4678 = vmatprep.subr.mxu0 0.0
    %4679 = vmatpush1.msra.mxu0 0.0
    %4680 = vmatprep.subr.mxu0 0.0
    %4681 = vmatpush1.msra.mxu0 0.0
    %4682 = vmatprep.subr.mxu0 0.0
    %4683 = vmatpush1.msra.mxu0 0.0
    %4684 = vmatprep.subr.mxu0 0.0
    %4685 = vmatpush1.msra.mxu0 0.0
    %4686 = vmatprep.subr.mxu0 0.0
    %4687 = vmatpush1.msra.mxu0 0.0
    %4688 = vmatprep.subr.mxu0 0.0
    %4689 = vmatpush1.msra.mxu0 0.0
    %4690 = vmatprep.subr.mxu0 0.0
    %4691 = vmatpush1.msra.mxu0 0.0
    %4692 = vmatprep.subr.mxu0 0.0
    %4693 = vmatpush1.msra.mxu0 0.0
    %4694 = vmatprep.subr.mxu0 0.0
    %4695 = vmatpush1.msra.mxu0 0.0
    %4696 = vmatprep.subr.mxu0 0.0
    %4697 = vmatpush1.msra.mxu0 0.0
    %4698 = vmatprep.subr.mxu0 0.0
    %4699 = vmatpush1.msra.mxu0 0.0
    %4700 = vmatprep.subr.mxu0 0.0
    %4701 = vmatpush1.msra.mxu0 0.0
    %4702 = vmatprep.subr.mxu0 0.0
    %4703 = vmatpush1.msra.mxu0 0.0
    %4704 = vmatprep.subr.mxu0 0.0
    %4705 = vmatpush1.msra.mxu0 0.0
    %4706 = vmatprep.subr.mxu0 0.0
    %4707 = vmatpush1.msra.mxu0 0.0
    %4708 = vmatprep.subr.mxu0 0.0
    %4709 = vmatpush1.msra.mxu0 0.0
    %4710 = vmatprep.subr.mxu0 0.0
    %4711 = vmatpush1.msra.mxu0 0.0
    %4712 = vmatprep.subr.mxu0 0.0
    %4713 = vmatpush1.msra.mxu0 0.0
    %4714 = vmatprep.subr.mxu0 0.0
    %4715 = vmatpush1.msra.mxu0 0.0
    %4716 = vmatprep.subr.mxu0 0.0
    %4717 = vmatpush1.msra.mxu0 0.0
    %4718 = vmatprep.subr.mxu0 0.0
    %4719 = vmatpush1.msra.mxu0 0.0
    %4720 = vmatprep.subr.mxu0 0.0
    %4721 = vmatpush1.msra.mxu0 0.0
    %4722 = vmatprep.subr.mxu0 0.0
    %4723 = vmatpush1.msra.mxu0 0.0
    %4724 = vmatprep.subr.mxu0 0.0
    %4725 = vmatpush1.msra.mxu0 0.0
    %4726 = vmatprep.subr.mxu0 0.0
    %4727 = vmatpush1.msra.mxu0 0.0
    %4728 = vmatprep.subr.mxu0 0.0
    %4729 = vmatpush1.msra.mxu0 0.0
    %4730 = vmatprep.subr.mxu0 0.0
    %4731 = vmatpush1.msra.mxu0 0.0
    %4732 = vmatprep.subr.mxu0 0.0
    %4733 = vmatpush1.msra.mxu0 0.0
    %4734 = vmatprep.subr.mxu0 0.0
    %4735 = vmatpush1.msra.mxu0 0.0
    %4736 = vmatprep.mubr.f32.mxu0 0.0
    %4737 = vmatmul.mubr.f32.gmra.mrb[0].mxu0 %v4574
    %v4738 = vpop.f32.mrb[0].mxu0
    %v4739 = vadd.f32 %v4572, %v4738
    %v4740 = vpop.f32.mrb[0].mxu0
    %4741 = vmatprep.mubr.f32.mxu0 0.0
    %4742 = vmatmul.mubr.f32.gmra.mrb[0].mxu0 %v4577
    %v4743 = vpop.f32.mrb[0].mxu0
    %v4744 = vadd.f32 %v4572, %v4743
    %v4745 = vpop.f32.mrb[0].mxu0
    %4746 = vmatprep.mubr.f32.mxu0 0.0
    %4747 = vmatmul.mubr.f32.gmra.mrb[0].mxu0 %v4580
    %v4748 = vpop.f32.mrb[0].mxu0
    %v4749 = vadd.f32 %v4572, %v4748
    %v4750 = vpop.f32.mrb[0].mxu0
    %4751 = vmatprep.mubr.f32.mxu0 0.0
    %4752 = vmatmul.mubr.f32.gmra.mrb[0].mxu0 %v4583
    %v4753 = vpop.f32.mrb[0].mxu0
    %v4754 = vadd.f32 %v4572, %v4753
    %v4755 = vpop.f32.mrb[0].mxu0
    %4756 = vmatprep.mubr.f32.mxu0 0.0
    %4757 = vmatmul.mubr.f32.gmra.mrb[0].mxu0 %v4586
    %v4758 = vpop.f32.mrb[0].mxu0
    %v4759 = vadd.f32 %v4572, %v4758
    %v4760 = vpop.f32.mrb[0].mxu0
    %4761 = vmatprep.mubr.f32.mxu0 0.0
    %4762 = vmatmul.mubr.f32.gmra.mrb[0].mxu0 %v4589
    %v4763 = vpop.f32.mrb[0].mxu0
    %v4764 = vadd.f32 %v4572, %v4763
    %v4765 = vpop.f32.mrb[0].mxu0
    %4766 = vmatprep.mubr.f32.mxu0 0.0
    %4767 = vmatmul.mubr.f32.gmra.mrb[0].mxu0 %v4592
    %v4768 = vpop.f32.mrb[0].mxu0
    %v4769 = vadd.f32 %v4572, %v4768
    %v4770 = vpop.f32.mrb[0].mxu0
    %4771 = vmatprep.mubr.f32.mxu0 0.0
    %4772 = vmatmul.mubr.f32.gmra.mrb[0].mxu0 %v4595
    %v4773 = vpop.f32.mrb[0].mxu0
    %v4774 = vadd.f32 %v4572, %v4773
    %v4775 = vpop.f32.mrb[0].mxu0
    %4776 = vmatprep.mubr.f32.mxu0 0.0
    %4777 = vmatmul.mubr.f32.gmra.mrb[0].mxu0 %v4598
    %v4778 = vpop.f32.mrb[0].mxu0
    %v4779 = vadd.f32 %v4572, %v4778
    %v4780 = vpop.f32.mrb[0].mxu0
    %4781 = vmatprep.mubr.f32.mxu0 0.0
    %4782 = vmatmul.mubr.f32.gmra.mrb[0].mxu0 %v4601
    %v4783 = vpop.f32.mrb[0].mxu0
    %v4784 = vadd.f32 %v4572, %v4783
    %v4785 = vpop.f32.mrb[0].mxu0
    %4786 = vmatprep.mubr.f32.mxu0 0.0
    %4787 = vmatmul.mubr.f32.gmra.mrb[0].mxu0 %v4604
    %v4788 = vpop.f32.mrb[0].mxu0
    %v4789 = vadd.f32 %v4572, %v4788
    %v4790 = vpop.f32.mrb[0].mxu0
    %4791 = vmatprep.mubr.f32.mxu0 0.0
    %4792 = vmatmul.mubr.f32.gmra.mrb[0].mxu0 %v4607
    %v4793 = vpop.f32.mrb[0].mxu0
    %v4794 = vadd.f32 %v4572, %v4793
    %v4795 = vpop.f32.mrb[0].mxu0
    %4796 = vmatprep.mubr.f32.mxu0 0.0
    %4797 = vmatmul.mubr.f32.gmra.mrb[0].mxu0 %v4610
    %v4798 = vpop.f32.mrb[0].mxu0
    %v4799 = vadd.f32 %v4572, %v4798
    %v4800 = vpop.f32.mrb[0].mxu0
    %4801 = vmatprep.mubr.f32.mxu0 0.0
    %4802 = vmatmul.mubr.f32.gmra.mrb[0].mxu0 %v4613
    %v4803 = vpop.f32.mrb[0].mxu0
    %v4804 = vadd.f32 %v4572, %v4803
    %v4805 = vpop.f32.mrb[0].mxu0
    %4806 = vmatprep.mubr.f32.mxu0 0.0
    %4807 = vmatmul.mubr.f32.gmra.mrb[0].mxu0 %v4616
    %v4808 = vpop.f32.mrb[0].mxu0
    %v4809 = vadd.f32 %v4572, %v4808
    %v4810 = vpop.f32.mrb[0].mxu0
    %4811 = vmatprep.mubr.f32.mxu0 0.0
    %4812 = vmatmul.mubr.f32.gmra.mrb[0].mxu0 %v4619
    %v4813 = vpop.f32.mrb[0].mxu0
    %v4814 = vadd.f32 %v4572, %v4813
    %v4815 = vpop.f32.mrb[0].mxu0
    %4816 = vmatprep.mubr.f32.mxu0 0.0
    %4817 = vmatmul.mubr.f32.gmra.mrb[0].mxu0 %v4622
    %v4818 = vpop.f32.mrb[0].mxu0
    %v4819 = vadd.f32 %v4572, %v4818
    %v4820 = vpop.f32.mrb[0].mxu0
    %4821 = vmatprep.mubr.f32.mxu0 0.0
    %4822 = vmatmul.mubr.f32.gmra.mrb[0].mxu0 %v4625
    %v4823 = vpop.f32.mrb[0].mxu0
    %v4824 = vadd.f32 %v4572, %v4823
    %v4825 = vpop.f32.mrb[0].mxu0
    %4826 = vmatprep.mubr.f32.mxu0 0.0
    %4827 = vmatmul.mubr.f32.gmra.mrb[0].mxu0 %v4628
    %v4828 = vpop.f32.mrb[0].mxu0
    %v4829 = vadd.f32 %v4572, %v4828
    %v4830 = vpop.f32.mrb[0].mxu0
    %4831 = vmatprep.mubr.f32.mxu0 0.0
    %4832 = vmatmul.mubr.f32.gmra.mrb[0].mxu0 %v4631
    %v4833 = vpop.f32.mrb[0].mxu0
    %v4834 = vadd.f32 %v4572, %v4833
    %v4835 = vpop.f32.mrb[0].mxu0
    %4836 = vmatprep.mubr.f32.mxu0 0.0
    %4837 = vmatmul.mubr.f32.gmra.mrb[0].mxu0 %v4634
    %v4838 = vpop.f32.mrb[0].mxu0
    %v4839 = vadd.f32 %v4572, %v4838
    %v4840 = vpop.f32.mrb[0].mxu0
    %4841 = vmatprep.mubr.f32.mxu0 0.0
    %4842 = vmatmul.mubr.f32.gmra.mrb[0].mxu0 %v4637
    %v4843 = vpop.f32.mrb[0].mxu0
    %v4844 = vadd.f32 %v4572, %v4843
    %v4845 = vpop.f32.mrb[0].mxu0
    %4846 = vmatprep.mubr.f32.mxu0 0.0
    %4847 = vmatmul.mubr.f32.gmra.mrb[0].mxu0 %v4640
    %v4848 = vpop.f32.mrb[0].mxu0
    %v4849 = vadd.f32 %v4572, %v4848
    %v4850 = vpop.f32.mrb[0].mxu0
    %4851 = vmatprep.mubr.f32.mxu0 0.0
    %4852 = vmatmul.mubr.f32.gmra.mrb[0].mxu0 %v4643
    %v4853 = vpop.f32.mrb[0].mxu0
    %v4854 = vadd.f32 %v4572, %v4853
    %v4855 = vpop.f32.mrb[0].mxu0
    %4856 = vmatprep.mubr.f32.mxu0 0.0
    %4857 = vmatmul.mubr.f32.gmra.mrb[0].mxu0 %v4646
    %v4858 = vpop.f32.mrb[0].mxu0
    %v4859 = vadd.f32 %v4572, %v4858
    %v4860 = vpop.f32.mrb[0].mxu0
    %4861 = vmatprep.mubr.f32.mxu0 0.0
    %4862 = vmatmul.mubr.f32.gmra.mrb[0].mxu0 %v4649
    %v4863 = vpop.f32.mrb[0].mxu0
    %v4864 = vadd.f32 %v4572, %v4863
    %v4865 = vpop.f32.mrb[0].mxu0
    %4866 = vmatprep.mubr.f32.mxu0 0.0
    %4867 = vmatmul.mubr.f32.gmra.mrb[0].mxu0 %v4652
    %v4868 = vpop.f32.mrb[0].mxu0
    %v4869 = vadd.f32 %v4572, %v4868
    %v4870 = vpop.f32.mrb[0].mxu0
    %4871 = vmatprep.mubr.f32.mxu0 0.0
    %4872 = vmatmul.mubr.f32.gmra.mrb[0].mxu0 %v4655
    %v4873 = vpop.f32.mrb[0].mxu0
    %v4874 = vadd.f32 %v4572, %v4873
    %v4875 = vpop.f32.mrb[0].mxu0
    %4876 = vmatprep.mubr.f32.mxu0 0.0
    %4877 = vmatmul.mubr.f32.gmra.mrb[0].mxu0 %v4658
    %v4878 = vpop.f32.mrb[0].mxu0
    %v4879 = vadd.f32 %v4572, %v4878
    %v4880 = vpop.f32.mrb[0].mxu0
    %4881 = vmatprep.mubr.f32.mxu0 0.0
    %4882 = vmatmul.mubr.f32.gmra.mrb[0].mxu0 %v4661
    %v4883 = vpop.f32.mrb[0].mxu0
    %v4884 = vadd.f32 %v4572, %v4883
    %v4885 = vpop.f32.mrb[0].mxu0
    %4886 = vmatprep.mubr.f32.mxu0 0.0
    %4887 = vmatmul.mubr.f32.gmra.mrb[0].mxu0 %v4664
    %v4888 = vpop.f32.mrb[0].mxu0
    %v4889 = vadd.f32 %v4572, %v4888
    %v4890 = vpop.f32.mrb[0].mxu0
    %4891 = vmatprep.mubr.f32.mxu0 0.0
    %4892 = vmatmul.mubr.f32.gmra.mrb[0].mxu0 %v4667
    %v4893 = vpop.f32.mrb[0].mxu0
    %v4894 = vadd.f32 %v4572, %v4893
    %v4895 = vpop.f32.mrb[0].mxu0
    %4896 = vdwg.mxu0
    %v4897 = vmax.f32 %v4739, 0.0
    %v4898 = vmax.f32 %v4744, 0.0
    %v4899 = vmax.f32 %v4749, 0.0
    %v4900 = vmax.f32 %v4754, 0.0
    %v4901 = vmax.f32 %v4759, 0.0
    %v4902 = vmax.f32 %v4764, 0.0
    %v4903 = vmax.f32 %v4769, 0.0
    %v4904 = vmax.f32 %v4774, 0.0
    %v4905 = vmax.f32 %v4779, 0.0
    %v4906 = vmax.f32 %v4784, 0.0
    %v4907 = vmax.f32 %v4789, 0.0
    %v4908 = vmax.f32 %v4794, 0.0
    %v4909 = vmax.f32 %v4799, 0.0
    %v4910 = vmax.f32 %v4804, 0.0
    %v4911 = vmax.f32 %v4809, 0.0
    %v4912 = vmax.f32 %v4814, 0.0
    %v4913 = vmax.f32 %v4819, 0.0
    %v4914 = vmax.f32 %v4824, 0.0
    %v4915 = vmax.f32 %v4829, 0.0
    %v4916 = vmax.f32 %v4834, 0.0
    %v4917 = vmax.f32 %v4839, 0.0
    %v4918 = vmax.f32 %v4844, 0.0
    %v4919 = vmax.f32 %v4849, 0.0
    %v4920 = vmax.f32 %v4854, 0.0
    %v4921 = vmax.f32 %v4859, 0.0
    %v4922 = vmax.f32 %v4864, 0.0
    %v4923 = vmax.f32 %v4869, 0.0
    %v4924 = vmax.f32 %v4874, 0.0
    %v4925 = vmax.f32 %v4879, 0.0
    %v4926 = vmax.f32 %v4884, 0.0
    %v4927 = vmax.f32 %v4889, 0.0
    %v4928 = vmax.f32 %v4894, 0.0
    %v4929 = vpack.c.bf16 %v4898, %v4897
    %v4930 = vpack.c.bf16 %v4900, %v4899
    %v4931 = vpack.c.bf16 %v4902, %v4901
    %v4932 = vpack.c.bf16 %v4904, %v4903
    %v4933 = vpack.c.bf16 %v4906, %v4905
    %v4934 = vpack.c.bf16 %v4908, %v4907
    %v4935 = vpack.c.bf16 %v4910, %v4909
    %v4936 = vpack.c.bf16 %v4912, %v4911
    %v4937 = vpack.c.bf16 %v4914, %v4913
    %v4938 = vpack.c.bf16 %v4916, %v4915
    %v4939 = vpack.c.bf16 %v4918, %v4917
    %v4940 = vpack.c.bf16 %v4920, %v4919
    %v4941 = vpack.c.bf16 %v4922, %v4921
    %v4942 = vpack.c.bf16 %v4924, %v4923
    %v4943 = vpack.c.bf16 %v4926, %v4925
    %v4944 = vpack.c.bf16 %v4928, %v4927
    %v4945 = vld [vmem:[%s10 + $0x7] ss:$0 sm:$0xff]
    %v4954 = vunpack.c.l.b16 %v188
    %v4955 = vunpack.c.l.b16 %v189
    %v4956 = vunpack.c.l.b16 %v190
    %v4957 = vunpack.c.l.b16 %v191
    %v4958 = vunpack.c.l.b16 %v192
    %v4959 = vunpack.c.l.b16 %v193
    %v4960 = vunpack.c.l.b16 %v194
    %v4961 = vunpack.c.l.b16 %v195
    %v4962 = vpack.c.b16 %v4955, %v4954
    %v4963 = vpack.c.b16 %v4957, %v4956
    %v4964 = vpack.c.b16 %v4959, %v4958
    %v4965 = vpack.c.b16 %v4961, %v4960
    %v4971 = vsel %vm791, %v4929, 0
    %v4974 = vsel %vm791, %v4930, 0
    %v4977 = vsel %vm791, %v4931, 0
    %v4980 = vsel %vm791, %v4932, 0
    %v4983 = vsel %vm791, %v4933, 0
    %v4986 = vsel %vm791, %v4934, 0
    %v4989 = vsel %vm791, %v4935, 0
    %v4992 = vsel %vm791, %v4936, 0
    %v4995 = vsel %vm791, %v4937, 0
    %v4998 = vsel %vm791, %v4938, 0
    %v5001 = vsel %vm791, %v4939, 0
    %v5004 = vsel %vm791, %v4940, 0
    %v5007 = vsel %vm791, %v4941, 0
    %v5010 = vsel %vm791, %v4942, 0
    %v5013 = vsel %vm791, %v4943, 0
    %v5016 = vsel %vm791, %v4944, 0
    %5018 = vmatprep.subr.bf16.mxu0 0
    %5019 = vmatpush1.bf16.msra.mxu0 %v4962
    %5020 = vmatprep.subr.bf16.mxu0 0
    %5021 = vmatpush1.bf16.msra.mxu0 %v4963
    %5022 = vmatprep.subr.bf16.mxu0 0
    %5023 = vmatpush1.bf16.msra.mxu0 %v4964
    %5024 = vmatprep.subr.bf16.mxu0 0
    %5025 = vmatpush1.bf16.msra.mxu0 %v4965
    %5026 = vmatprep.subr.bf16.mxu0 0
    %5027 = vmatpush1.bf16.msra.mxu0 0
    %5028 = vmatprep.subr.bf16.mxu0 0
    %5029 = vmatpush1.bf16.msra.mxu0 0
    %5030 = vmatprep.subr.bf16.mxu0 0
    %5031 = vmatpush1.bf16.msra.mxu0 0
    %5032 = vmatprep.subr.bf16.mxu0 0
    %5033 = vmatpush1.bf16.msra.mxu0 0
    %5034 = vmatprep.subr.bf16.mxu0 0
    %5035 = vmatpush1.bf16.msra.mxu0 0
    %5036 = vmatprep.subr.bf16.mxu0 0
    %5037 = vmatpush1.bf16.msra.mxu0 0
    %5038 = vmatprep.subr.bf16.mxu0 0
    %5039 = vmatpush1.bf16.msra.mxu0 0
    %5040 = vmatprep.subr.bf16.mxu0 0
    %5041 = vmatpush1.bf16.msra.mxu0 0
    %5042 = vmatprep.subr.bf16.mxu0 0
    %5043 = vmatpush1.bf16.msra.mxu0 0
    %5044 = vmatprep.subr.bf16.mxu0 0
    %5045 = vmatpush1.bf16.msra.mxu0 0
    %5046 = vmatprep.subr.bf16.mxu0 0
    %5047 = vmatpush1.bf16.msra.mxu0 0
    %5048 = vmatprep.subr.bf16.mxu0 0
    %5049 = vmatpush1.bf16.msra.mxu0 0
    %5050 = vmatprep.mubr.bf16.mxu0 0
    %5051 = vmatmul.mubr.bf16.gmra.mrb[0].mxu0 %v4971
    %v5052 = vpop.f32.mrb[0].mxu0
    %v5053 = vadd.f32 %v4945, %v5052
    %v5054 = vpop.f32.mrb[0].mxu0
    %v5055 = vpop.f32.mrb[0].mxu0
    %v5056 = vadd.f32 %v4945, %v5055
    %v5057 = vpop.f32.mrb[0].mxu0
    %5058 = vmatprep.mubr.bf16.mxu0 0
    %5059 = vmatmul.mubr.bf16.gmra.mrb[0].mxu0 %v4974
    %v5060 = vpop.f32.mrb[0].mxu0
    %v5061 = vadd.f32 %v4945, %v5060
    %v5062 = vpop.f32.mrb[0].mxu0
    %v5063 = vpop.f32.mrb[0].mxu0
    %v5064 = vadd.f32 %v4945, %v5063
    %v5065 = vpop.f32.mrb[0].mxu0
    %5066 = vmatprep.mubr.bf16.mxu0 0
    %5067 = vmatmul.mubr.bf16.gmra.mrb[0].mxu0 %v4977
    %v5068 = vpop.f32.mrb[0].mxu0
    %v5069 = vadd.f32 %v4945, %v5068
    %v5070 = vpop.f32.mrb[0].mxu0
    %v5071 = vpop.f32.mrb[0].mxu0
    %v5072 = vadd.f32 %v4945, %v5071
    %v5073 = vpop.f32.mrb[0].mxu0
    %5074 = vmatprep.mubr.bf16.mxu0 0
    %5075 = vmatmul.mubr.bf16.gmra.mrb[0].mxu0 %v4980
    %v5076 = vpop.f32.mrb[0].mxu0
    %v5077 = vadd.f32 %v4945, %v5076
    %v5078 = vpop.f32.mrb[0].mxu0
    %v5079 = vpop.f32.mrb[0].mxu0
    %v5080 = vadd.f32 %v4945, %v5079
    %v5081 = vpop.f32.mrb[0].mxu0
    %5082 = vmatprep.mubr.bf16.mxu0 0
    %5083 = vmatmul.mubr.bf16.gmra.mrb[0].mxu0 %v4983
    %v5084 = vpop.f32.mrb[0].mxu0
    %v5085 = vadd.f32 %v4945, %v5084
    %v5086 = vpop.f32.mrb[0].mxu0
    %v5087 = vpop.f32.mrb[0].mxu0
    %v5088 = vadd.f32 %v4945, %v5087
    %v5089 = vpop.f32.mrb[0].mxu0
    %5090 = vmatprep.mubr.bf16.mxu0 0
    %5091 = vmatmul.mubr.bf16.gmra.mrb[0].mxu0 %v4986
    %v5092 = vpop.f32.mrb[0].mxu0
    %v5093 = vadd.f32 %v4945, %v5092
    %v5094 = vpop.f32.mrb[0].mxu0
    %v5095 = vpop.f32.mrb[0].mxu0
    %v5096 = vadd.f32 %v4945, %v5095
    %v5097 = vpop.f32.mrb[0].mxu0
    %5098 = vmatprep.mubr.bf16.mxu0 0
    %5099 = vmatmul.mubr.bf16.gmra.mrb[0].mxu0 %v4989
    %v5100 = vpop.f32.mrb[0].mxu0
    %v5101 = vadd.f32 %v4945, %v5100
    %v5102 = vpop.f32.mrb[0].mxu0
    %v5103 = vpop.f32.mrb[0].mxu0
    %v5104 = vadd.f32 %v4945, %v5103
    %v5105 = vpop.f32.mrb[0].mxu0
    %5106 = vmatprep.mubr.bf16.mxu0 0
    %5107 = vmatmul.mubr.bf16.gmra.mrb[0].mxu0 %v4992
    %v5108 = vpop.f32.mrb[0].mxu0
    %v5109 = vadd.f32 %v4945, %v5108
    %v5110 = vpop.f32.mrb[0].mxu0
    %v5111 = vpop.f32.mrb[0].mxu0
    %v5112 = vadd.f32 %v4945, %v5111
    %v5113 = vpop.f32.mrb[0].mxu0
    %5114 = vmatprep.mubr.bf16.mxu0 0
    %5115 = vmatmul.mubr.bf16.gmra.mrb[0].mxu0 %v4995
    %v5116 = vpop.f32.mrb[0].mxu0
    %v5117 = vadd.f32 %v4945, %v5116
    %v5118 = vpop.f32.mrb[0].mxu0
    %v5119 = vpop.f32.mrb[0].mxu0
    %v5120 = vadd.f32 %v4945, %v5119
    %v5121 = vpop.f32.mrb[0].mxu0
    %5122 = vmatprep.mubr.bf16.mxu0 0
    %5123 = vmatmul.mubr.bf16.gmra.mrb[0].mxu0 %v4998
    %v5124 = vpop.f32.mrb[0].mxu0
    %v5125 = vadd.f32 %v4945, %v5124
    %v5126 = vpop.f32.mrb[0].mxu0
    %v5127 = vpop.f32.mrb[0].mxu0
    %v5128 = vadd.f32 %v4945, %v5127
    %v5129 = vpop.f32.mrb[0].mxu0
    %5130 = vmatprep.mubr.bf16.mxu0 0
    %5131 = vmatmul.mubr.bf16.gmra.mrb[0].mxu0 %v5001
    %v5132 = vpop.f32.mrb[0].mxu0
    %v5133 = vadd.f32 %v4945, %v5132
    %v5134 = vpop.f32.mrb[0].mxu0
    %v5135 = vpop.f32.mrb[0].mxu0
    %v5136 = vadd.f32 %v4945, %v5135
    %v5137 = vpop.f32.mrb[0].mxu0
    %5138 = vmatprep.mubr.bf16.mxu0 0
    %5139 = vmatmul.mubr.bf16.gmra.mrb[0].mxu0 %v5004
    %v5140 = vpop.f32.mrb[0].mxu0
    %v5141 = vadd.f32 %v4945, %v5140
    %v5142 = vpop.f32.mrb[0].mxu0
    %v5143 = vpop.f32.mrb[0].mxu0
    %v5144 = vadd.f32 %v4945, %v5143
    %v5145 = vpop.f32.mrb[0].mxu0
    %5146 = vmatprep.mubr.bf16.mxu0 0
    %5147 = vmatmul.mubr.bf16.gmra.mrb[0].mxu0 %v5007
    %v5148 = vpop.f32.mrb[0].mxu0
    %v5149 = vadd.f32 %v4945, %v5148
    %v5150 = vpop.f32.mrb[0].mxu0
    %v5151 = vpop.f32.mrb[0].mxu0
    %v5152 = vadd.f32 %v4945, %v5151
    %v5153 = vpop.f32.mrb[0].mxu0
    %5154 = vmatprep.mubr.bf16.mxu0 0
    %5155 = vmatmul.mubr.bf16.gmra.mrb[0].mxu0 %v5010
    %v5156 = vpop.f32.mrb[0].mxu0
    %v5157 = vadd.f32 %v4945, %v5156
    %v5158 = vpop.f32.mrb[0].mxu0
    %v5159 = vpop.f32.mrb[0].mxu0
    %v5160 = vadd.f32 %v4945, %v5159
    %v5161 = vpop.f32.mrb[0].mxu0
    %5162 = vmatprep.mubr.bf16.mxu0 0
    %5163 = vmatmul.mubr.bf16.gmra.mrb[0].mxu0 %v5013
    %v5164 = vpop.f32.mrb[0].mxu0
    %v5165 = vadd.f32 %v4945, %v5164
    %v5166 = vpop.f32.mrb[0].mxu0
    %v5167 = vpop.f32.mrb[0].mxu0
    %v5168 = vadd.f32 %v4945, %v5167
    %v5169 = vpop.f32.mrb[0].mxu0
    %5170 = vmatprep.mubr.bf16.mxu0 0
    %5171 = vmatmul.mubr.bf16.gmra.mrb[0].mxu0 %v5016
    %v5172 = vpop.f32.mrb[0].mxu0
    %v5173 = vadd.f32 %v4945, %v5172
    %v5174 = vpop.f32.mrb[0].mxu0
    %v5175 = vpop.f32.mrb[0].mxu0
    %v5176 = vadd.f32 %v4945, %v5175
    %v5177 = vpop.f32.mrb[0].mxu0
    %5178 = vdwg.mxu0
    %v5179 = vmax.f32 %v5053, 0.0
    %v5180 = vmax.f32 %v5056, 0.0
    %v5181 = vmax.f32 %v5061, 0.0
    %v5182 = vmax.f32 %v5064, 0.0
    %v5183 = vmax.f32 %v5069, 0.0
    %v5184 = vmax.f32 %v5072, 0.0
    %v5185 = vmax.f32 %v5077, 0.0
    %v5186 = vmax.f32 %v5080, 0.0
    %v5187 = vmax.f32 %v5085, 0.0
    %v5188 = vmax.f32 %v5088, 0.0
    %v5189 = vmax.f32 %v5093, 0.0
    %v5190 = vmax.f32 %v5096, 0.0
    %v5191 = vmax.f32 %v5101, 0.0
    %v5192 = vmax.f32 %v5104, 0.0
    %v5193 = vmax.f32 %v5109, 0.0
    %v5194 = vmax.f32 %v5112, 0.0
    %v5195 = vmax.f32 %v5117, 0.0
    %v5196 = vmax.f32 %v5120, 0.0
    %v5197 = vmax.f32 %v5125, 0.0
    %v5198 = vmax.f32 %v5128, 0.0
    %v5199 = vmax.f32 %v5133, 0.0
    %v5200 = vmax.f32 %v5136, 0.0
    %v5201 = vmax.f32 %v5141, 0.0
    %v5202 = vmax.f32 %v5144, 0.0
    %v5203 = vmax.f32 %v5149, 0.0
    %v5204 = vmax.f32 %v5152, 0.0
    %v5205 = vmax.f32 %v5157, 0.0
    %v5206 = vmax.f32 %v5160, 0.0
    %v5207 = vmax.f32 %v5165, 0.0
    %v5208 = vmax.f32 %v5168, 0.0
    %v5209 = vmax.f32 %v5173, 0.0
    %v5210 = vmax.f32 %v5176, 0.0
    %v5211 = vpack.c.bf16 %v5180, %v5179
    %v5212 = vpack.c.bf16 %v5182, %v5181
    %v5213 = vpack.c.bf16 %v5184, %v5183
    %v5214 = vpack.c.bf16 %v5186, %v5185
    %v5215 = vpack.c.bf16 %v5188, %v5187
    %v5216 = vpack.c.bf16 %v5190, %v5189
    %v5217 = vpack.c.bf16 %v5192, %v5191
    %v5218 = vpack.c.bf16 %v5194, %v5193
    %v5219 = vpack.c.bf16 %v5196, %v5195
    %v5220 = vpack.c.bf16 %v5198, %v5197
    %v5221 = vpack.c.bf16 %v5200, %v5199
    %v5222 = vpack.c.bf16 %v5202, %v5201
    %v5223 = vpack.c.bf16 %v5204, %v5203
    %v5224 = vpack.c.bf16 %v5206, %v5205
    %v5225 = vpack.c.bf16 %v5208, %v5207
    %v5226 = vpack.c.bf16 %v5210, %v5209
    %s5227 = scalar_lea.vmem %s10, 64
    %v5228 = vld [vmem:[%s5227] ss:$8 sm:$0xf]
    %v5229 = vld [vmem:[%s5227] ss:$8 sm:$0xf0]
    %v5230 = vor.u32 %v5228, %v5229
    %v5232 = vlaneseq
    %v5233 = vshrl.u32 %v5232, 7
    %v5234 = vsub.s32 0, %v5233
    %v5235 = vrot.slane %v5230, %v5234
    %v5236 = vlaneseq
    %v5237 = vshrl.u32 %v5236, 7
    %v5238 = vsub.s32 1, %v5237
    %v5239 = vrot.slane %v5230, %v5238
    %v5240 = vlaneseq
    %v5241 = vshrl.u32 %v5240, 7
    %v5242 = vsub.s32 2, %v5241
    %v5243 = vrot.slane %v5230, %v5242
    %v5244 = vlaneseq
    %v5245 = vshrl.u32 %v5244, 7
    %v5246 = vsub.s32 3, %v5245
    %v5247 = vrot.slane %v5230, %v5246
    %v5248 = vlaneseq
    %v5249 = vshrl.u32 %v5248, 7
    %v5250 = vsub.s32 4, %v5249
    %v5251 = vrot.slane %v5230, %v5250
    %v5252 = vlaneseq
    %v5253 = vshrl.u32 %v5252, 7
    %v5254 = vsub.s32 5, %v5253
    %v5255 = vrot.slane %v5230, %v5254
    %v5256 = vlaneseq
    %v5257 = vshrl.u32 %v5256, 7
    %v5258 = vsub.s32 6, %v5257
    %v5259 = vrot.slane %v5230, %v5258
    %v5260 = vlaneseq
    %v5261 = vshrl.u32 %v5260, 7
    %v5262 = vsub.s32 7, %v5261
    %v5263 = vrot.slane %v5230, %v5262
    %v5336 = vunpack.c.l.b16 %v260
    %v5337 = vunpack.c.h.b16 %v260
    %v5338 = vunpack.c.l.b16 %v261
    %v5339 = vunpack.c.h.b16 %v261
    %v5340 = vunpack.c.l.b16 %v262
    %v5341 = vunpack.c.h.b16 %v262
    %v5342 = vunpack.c.l.b16 %v263
    %v5343 = vunpack.c.h.b16 %v263
    %v5344 = vunpack.c.l.b16 %v264
    %v5345 = vunpack.c.h.b16 %v264
    %v5346 = vunpack.c.l.b16 %v265
    %v5347 = vunpack.c.h.b16 %v265
    %v5348 = vunpack.c.l.b16 %v266
    %v5349 = vunpack.c.h.b16 %v266
    %v5350 = vunpack.c.l.b16 %v267
    %v5351 = vunpack.c.h.b16 %v267
    %v5352 = vunpack.c.l.b16 %v268
    %v5353 = vunpack.c.h.b16 %v268
    %v5354 = vunpack.c.l.b16 %v269
    %v5355 = vunpack.c.h.b16 %v269
    %v5356 = vunpack.c.l.b16 %v270
    %v5357 = vunpack.c.h.b16 %v270
    %v5358 = vunpack.c.l.b16 %v271
    %v5359 = vunpack.c.h.b16 %v271
    %v5360 = vunpack.c.l.b16 %v272
    %v5361 = vunpack.c.h.b16 %v272
    %v5362 = vunpack.c.l.b16 %v273
    %v5363 = vunpack.c.h.b16 %v273
    %v5364 = vunpack.c.l.b16 %v274
    %v5365 = vunpack.c.h.b16 %v274
    %v5366 = vunpack.c.l.b16 %v275
    %v5367 = vunpack.c.h.b16 %v275
    %v5368 = vunpack.c.l.b16 %v276
    %v5369 = vunpack.c.h.b16 %v276
    %v5370 = vunpack.c.l.b16 %v277
    %v5371 = vunpack.c.h.b16 %v277
    %v5372 = vunpack.c.l.b16 %v278
    %v5373 = vunpack.c.h.b16 %v278
    %v5374 = vunpack.c.l.b16 %v279
    %v5375 = vunpack.c.h.b16 %v279
    %v5376 = vunpack.c.l.b16 %v280
    %v5377 = vunpack.c.h.b16 %v280
    %v5378 = vunpack.c.l.b16 %v281
    %v5379 = vunpack.c.h.b16 %v281
    %v5380 = vunpack.c.l.b16 %v282
    %v5381 = vunpack.c.h.b16 %v282
    %v5382 = vunpack.c.l.b16 %v283
    %v5383 = vunpack.c.h.b16 %v283
    %v5384 = vunpack.c.l.b16 %v284
    %v5385 = vunpack.c.h.b16 %v284
    %v5386 = vunpack.c.l.b16 %v285
    %v5387 = vunpack.c.h.b16 %v285
    %v5388 = vunpack.c.l.b16 %v286
    %v5389 = vunpack.c.h.b16 %v286
    %v5390 = vunpack.c.l.b16 %v287
    %v5391 = vunpack.c.h.b16 %v287
    %v5392 = vunpack.c.l.b16 %v288
    %v5393 = vunpack.c.h.b16 %v288
    %v5394 = vunpack.c.l.b16 %v289
    %v5395 = vunpack.c.h.b16 %v289
    %v5396 = vunpack.c.l.b16 %v290
    %v5397 = vunpack.c.h.b16 %v290
    %v5398 = vunpack.c.l.b16 %v291
    %v5399 = vunpack.c.h.b16 %v291
    %v5400 = vunpack.c.l.b16 %v292
    %v5401 = vunpack.c.h.b16 %v292
    %v5402 = vunpack.c.l.b16 %v293
    %v5403 = vunpack.c.h.b16 %v293
    %v5404 = vunpack.c.l.b16 %v294
    %v5405 = vunpack.c.h.b16 %v294
    %v5406 = vunpack.c.l.b16 %v295
    %v5407 = vunpack.c.h.b16 %v295
    %v5408 = vunpack.c.l.b16 %v296
    %v5409 = vunpack.c.h.b16 %v296
    %v5410 = vunpack.c.l.b16 %v297
    %v5411 = vunpack.c.h.b16 %v297
    %v5412 = vunpack.c.l.b16 %v298
    %v5413 = vunpack.c.h.b16 %v298
    %v5414 = vunpack.c.l.b16 %v299
    %v5415 = vunpack.c.h.b16 %v299
    %v5416 = vunpack.c.l.b16 %v300
    %v5417 = vunpack.c.h.b16 %v300
    %v5418 = vunpack.c.l.b16 %v301
    %v5419 = vunpack.c.h.b16 %v301
    %v5420 = vunpack.c.l.b16 %v302
    %v5421 = vunpack.c.h.b16 %v302
    %v5422 = vunpack.c.l.b16 %v303
    %v5423 = vunpack.c.h.b16 %v303
    %v5424 = vunpack.c.l.b16 %v304
    %v5425 = vunpack.c.h.b16 %v304
    %v5426 = vunpack.c.l.b16 %v305
    %v5427 = vunpack.c.h.b16 %v305
    %v5428 = vunpack.c.l.b16 %v306
    %v5429 = vunpack.c.h.b16 %v306
    %v5430 = vunpack.c.l.b16 %v307
    %v5431 = vunpack.c.h.b16 %v307
    %v5432 = vunpack.c.l.b16 %v308
    %v5433 = vunpack.c.h.b16 %v308
    %v5434 = vunpack.c.l.b16 %v309
    %v5435 = vunpack.c.h.b16 %v309
    %v5436 = vunpack.c.l.b16 %v310
    %v5437 = vunpack.c.h.b16 %v310
    %v5438 = vunpack.c.l.b16 %v311
    %v5439 = vunpack.c.h.b16 %v311
    %v5440 = vunpack.c.l.b16 %v312
    %v5441 = vunpack.c.h.b16 %v312
    %v5442 = vunpack.c.l.b16 %v313
    %v5443 = vunpack.c.h.b16 %v313
    %v5444 = vunpack.c.l.b16 %v314
    %v5445 = vunpack.c.h.b16 %v314
    %v5446 = vunpack.c.l.b16 %v315
    %v5447 = vunpack.c.h.b16 %v315
    %v5448 = vunpack.c.l.b16 %v316
    %v5449 = vunpack.c.h.b16 %v316
    %v5450 = vunpack.c.l.b16 %v317
    %v5451 = vunpack.c.h.b16 %v317
    %v5452 = vunpack.c.l.b16 %v318
    %v5453 = vunpack.c.h.b16 %v318
    %v5454 = vunpack.c.l.b16 %v319
    %v5455 = vunpack.c.h.b16 %v319
    %v5456 = vunpack.c.l.b16 %v320
    %v5457 = vunpack.c.h.b16 %v320
    %v5458 = vunpack.c.l.b16 %v321
    %v5459 = vunpack.c.h.b16 %v321
    %v5460 = vunpack.c.l.b16 %v322
    %v5461 = vunpack.c.h.b16 %v322
    %v5462 = vunpack.c.l.b16 %v323
    %v5463 = vunpack.c.h.b16 %v323
    %v5464 = vpack.c.b16 %v5344, %v5336
    %v5465 = vpack.c.b16 %v5345, %v5337
    %v5466 = vpack.c.b16 %v5346, %v5338
    %v5467 = vpack.c.b16 %v5347, %v5339
    %v5468 = vpack.c.b16 %v5348, %v5340
    %v5469 = vpack.c.b16 %v5349, %v5341
    %v5470 = vpack.c.b16 %v5350, %v5342
    %v5471 = vpack.c.b16 %v5351, %v5343
    %v5472 = vpack.c.b16 %v5360, %v5352
    %v5473 = vpack.c.b16 %v5361, %v5353
    %v5474 = vpack.c.b16 %v5362, %v5354
    %v5475 = vpack.c.b16 %v5363, %v5355
    %v5476 = vpack.c.b16 %v5364, %v5356
    %v5477 = vpack.c.b16 %v5365, %v5357
    %v5478 = vpack.c.b16 %v5366, %v5358
    %v5479 = vpack.c.b16 %v5367, %v5359
    %v5480 = vpack.c.b16 %v5376, %v5368
    %v5481 = vpack.c.b16 %v5377, %v5369
    %v5482 = vpack.c.b16 %v5378, %v5370
    %v5483 = vpack.c.b16 %v5379, %v5371
    %v5484 = vpack.c.b16 %v5380, %v5372
    %v5485 = vpack.c.b16 %v5381, %v5373
    %v5486 = vpack.c.b16 %v5382, %v5374
    %v5487 = vpack.c.b16 %v5383, %v5375
    %v5488 = vpack.c.b16 %v5392, %v5384
    %v5489 = vpack.c.b16 %v5393, %v5385
    %v5490 = vpack.c.b16 %v5394, %v5386
    %v5491 = vpack.c.b16 %v5395, %v5387
    %v5492 = vpack.c.b16 %v5396, %v5388
    %v5493 = vpack.c.b16 %v5397, %v5389
    %v5494 = vpack.c.b16 %v5398, %v5390
    %v5495 = vpack.c.b16 %v5399, %v5391
    %v5496 = vpack.c.b16 %v5408, %v5400
    %v5497 = vpack.c.b16 %v5409, %v5401
    %v5498 = vpack.c.b16 %v5410, %v5402
    %v5499 = vpack.c.b16 %v5411, %v5403
    %v5500 = vpack.c.b16 %v5412, %v5404
    %v5501 = vpack.c.b16 %v5413, %v5405
    %v5502 = vpack.c.b16 %v5414, %v5406
    %v5503 = vpack.c.b16 %v5415, %v5407
    %v5504 = vpack.c.b16 %v5424, %v5416
    %v5505 = vpack.c.b16 %v5425, %v5417
    %v5506 = vpack.c.b16 %v5426, %v5418
    %v5507 = vpack.c.b16 %v5427, %v5419
    %v5508 = vpack.c.b16 %v5428, %v5420
    %v5509 = vpack.c.b16 %v5429, %v5421
    %v5510 = vpack.c.b16 %v5430, %v5422
    %v5511 = vpack.c.b16 %v5431, %v5423
    %v5512 = vpack.c.b16 %v5440, %v5432
    %v5513 = vpack.c.b16 %v5441, %v5433
    %v5514 = vpack.c.b16 %v5442, %v5434
    %v5515 = vpack.c.b16 %v5443, %v5435
    %v5516 = vpack.c.b16 %v5444, %v5436
    %v5517 = vpack.c.b16 %v5445, %v5437
    %v5518 = vpack.c.b16 %v5446, %v5438
    %v5519 = vpack.c.b16 %v5447, %v5439
    %v5520 = vpack.c.b16 %v5456, %v5448
    %v5521 = vpack.c.b16 %v5457, %v5449
    %v5522 = vpack.c.b16 %v5458, %v5450
    %v5523 = vpack.c.b16 %v5459, %v5451
    %v5524 = vpack.c.b16 %v5460, %v5452
    %v5525 = vpack.c.b16 %v5461, %v5453
    %v5526 = vpack.c.b16 %v5462, %v5454
    %v5527 = vpack.c.b16 %v5463, %v5455
    %5592 = vmatprep.subr.bf16.mxu0 %v5465
    %5593 = vmatpush1.bf16.msra.mxu0 %v5464
    %5594 = vmatprep.subr.bf16.mxu0 %v5473
    %5595 = vmatpush1.bf16.msra.mxu0 %v5472
    %5596 = vmatprep.subr.bf16.mxu0 %v5481
    %5597 = vmatpush1.bf16.msra.mxu0 %v5480
    %5598 = vmatprep.subr.bf16.mxu0 %v5489
    %5599 = vmatpush1.bf16.msra.mxu0 %v5488
    %5600 = vmatprep.subr.bf16.mxu0 %v5497
    %5601 = vmatpush1.bf16.msra.mxu0 %v5496
    %5602 = vmatprep.subr.bf16.mxu0 %v5505
    %5603 = vmatpush1.bf16.msra.mxu0 %v5504
    %5604 = vmatprep.subr.bf16.mxu0 %v5513
    %5605 = vmatpush1.bf16.msra.mxu0 %v5512
    %5606 = vmatprep.subr.bf16.mxu0 %v5521
    %5607 = vmatpush1.bf16.msra.mxu0 %v5520
    %5608 = vmatprep.subr.bf16.mxu0 0
    %5609 = vmatpush1.bf16.msra.mxu0 0
    %5610 = vmatprep.subr.bf16.mxu0 0
    %5611 = vmatpush1.bf16.msra.mxu0 0
    %5612 = vmatprep.subr.bf16.mxu0 0
    %5613 = vmatpush1.bf16.msra.mxu0 0
    %5614 = vmatprep.subr.bf16.mxu0 0
    %5615 = vmatpush1.bf16.msra.mxu0 0
    %5616 = vmatprep.subr.bf16.mxu0 0
    %5617 = vmatpush1.bf16.msra.mxu0 0
    %5618 = vmatprep.subr.bf16.mxu0 0
    %5619 = vmatpush1.bf16.msra.mxu0 0
    %5620 = vmatprep.subr.bf16.mxu0 0
    %5621 = vmatpush1.bf16.msra.mxu0 0
    %5622 = vmatprep.subr.bf16.mxu0 0
    %5623 = vmatpush1.bf16.msra.mxu0 0
    %5624 = vmatprep.mubr.bf16.mxu0 0
    %5625 = vmatmul.mubr.bf16.gmra.mrb[0].mxu0 %v5211
    %v5626 = vpop.f32.mrb[0].mxu0
    %v5627 = vadd.f32 %v5235, %v5626
    %v5628 = vpop.f32.mrb[0].mxu0
    %v5629 = vadd.f32 %v5239, %v5628
    %v5630 = vpop.f32.mrb[0].mxu0
    %v5631 = vadd.f32 %v5235, %v5630
    %v5632 = vpop.f32.mrb[0].mxu0
    %v5633 = vadd.f32 %v5239, %v5632
    %5634 = vmatprep.mubr.bf16.mxu0 0
    %5635 = vmatmul.mubr.bf16.gmra.mrb[0].mxu0 %v5212
    %v5636 = vpop.f32.mrb[0].mxu0
    %v5637 = vadd.f32 %v5235, %v5636
    %v5638 = vpop.f32.mrb[0].mxu0
    %v5639 = vadd.f32 %v5239, %v5638
    %v5640 = vpop.f32.mrb[0].mxu0
    %v5641 = vadd.f32 %v5235, %v5640
    %v5642 = vpop.f32.mrb[0].mxu0
    %v5643 = vadd.f32 %v5239, %v5642
    %5644 = vmatprep.mubr.bf16.mxu0 0
    %5645 = vmatmul.mubr.bf16.gmra.mrb[0].mxu0 %v5213
    %v5646 = vpop.f32.mrb[0].mxu0
    %v5647 = vadd.f32 %v5235, %v5646
    %v5648 = vpop.f32.mrb[0].mxu0
    %v5649 = vadd.f32 %v5239, %v5648
    %v5650 = vpop.f32.mrb[0].mxu0
    %v5651 = vadd.f32 %v5235, %v5650
    %v5652 = vpop.f32.mrb[0].mxu0
    %v5653 = vadd.f32 %v5239, %v5652
    %5654 = vmatprep.mubr.bf16.mxu0 0
    %5655 = vmatmul.mubr.bf16.gmra.mrb[0].mxu0 %v5214
    %v5656 = vpop.f32.mrb[0].mxu0
    %v5657 = vadd.f32 %v5235, %v5656
    %v5658 = vpop.f32.mrb[0].mxu0
    %v5659 = vadd.f32 %v5239, %v5658
    %v5660 = vpop.f32.mrb[0].mxu0
    %v5661 = vadd.f32 %v5235, %v5660
    %v5662 = vpop.f32.mrb[0].mxu0
    %v5663 = vadd.f32 %v5239, %v5662
    %5664 = vmatprep.mubr.bf16.mxu0 0
    %5665 = vmatmul.mubr.bf16.gmra.mrb[0].mxu0 %v5215
    %v5666 = vpop.f32.mrb[0].mxu0
    %v5667 = vadd.f32 %v5235, %v5666
    %v5668 = vpop.f32.mrb[0].mxu0
    %v5669 = vadd.f32 %v5239, %v5668
    %v5670 = vpop.f32.mrb[0].mxu0
    %v5671 = vadd.f32 %v5235, %v5670
    %v5672 = vpop.f32.mrb[0].mxu0
    %v5673 = vadd.f32 %v5239, %v5672
    %5674 = vmatprep.mubr.bf16.mxu0 0
    %5675 = vmatmul.mubr.bf16.gmra.mrb[0].mxu0 %v5216
    %v5676 = vpop.f32.mrb[0].mxu0
    %v5677 = vadd.f32 %v5235, %v5676
    %v5678 = vpop.f32.mrb[0].mxu0
    %v5679 = vadd.f32 %v5239, %v5678
    %v5680 = vpop.f32.mrb[0].mxu0
    %v5681 = vadd.f32 %v5235, %v5680
    %v5682 = vpop.f32.mrb[0].mxu0
    %v5683 = vadd.f32 %v5239, %v5682
    %5684 = vmatprep.mubr.bf16.mxu0 0
    %5685 = vmatmul.mubr.bf16.gmra.mrb[0].mxu0 %v5217
    %v5686 = vpop.f32.mrb[0].mxu0
    %v5687 = vadd.f32 %v5235, %v5686
    %v5688 = vpop.f32.mrb[0].mxu0
    %v5689 = vadd.f32 %v5239, %v5688
    %v5690 = vpop.f32.mrb[0].mxu0
    %v5691 = vadd.f32 %v5235, %v5690
    %v5692 = vpop.f32.mrb[0].mxu0
    %v5693 = vadd.f32 %v5239, %v5692
    %5694 = vmatprep.mubr.bf16.mxu0 0
    %5695 = vmatmul.mubr.bf16.gmra.mrb[0].mxu0 %v5218
    %v5696 = vpop.f32.mrb[0].mxu0
    %v5697 = vadd.f32 %v5235, %v5696
    %v5698 = vpop.f32.mrb[0].mxu0
    %v5699 = vadd.f32 %v5239, %v5698
    %v5700 = vpop.f32.mrb[0].mxu0
    %v5701 = vadd.f32 %v5235, %v5700
    %v5702 = vpop.f32.mrb[0].mxu0
    %v5703 = vadd.f32 %v5239, %v5702
    %5704 = vmatprep.mubr.bf16.mxu0 0
    %5705 = vmatmul.mubr.bf16.gmra.mrb[0].mxu0 %v5219
    %v5706 = vpop.f32.mrb[0].mxu0
    %v5707 = vadd.f32 %v5235, %v5706
    %v5708 = vpop.f32.mrb[0].mxu0
    %v5709 = vadd.f32 %v5239, %v5708
    %v5710 = vpop.f32.mrb[0].mxu0
    %v5711 = vadd.f32 %v5235, %v5710
    %v5712 = vpop.f32.mrb[0].mxu0
    %v5713 = vadd.f32 %v5239, %v5712
    %5714 = vmatprep.mubr.bf16.mxu0 0
    %5715 = vmatmul.mubr.bf16.gmra.mrb[0].mxu0 %v5220
    %v5716 = vpop.f32.mrb[0].mxu0
    %v5717 = vadd.f32 %v5235, %v5716
    %v5718 = vpop.f32.mrb[0].mxu0
    %v5719 = vadd.f32 %v5239, %v5718
    %v5720 = vpop.f32.mrb[0].mxu0
    %v5721 = vadd.f32 %v5235, %v5720
    %v5722 = vpop.f32.mrb[0].mxu0
    %v5723 = vadd.f32 %v5239, %v5722
    %5724 = vmatprep.mubr.bf16.mxu0 0
    %5725 = vmatmul.mubr.bf16.gmra.mrb[0].mxu0 %v5221
    %v5726 = vpop.f32.mrb[0].mxu0
    %v5727 = vadd.f32 %v5235, %v5726
    %v5728 = vpop.f32.mrb[0].mxu0
    %v5729 = vadd.f32 %v5239, %v5728
    %v5730 = vpop.f32.mrb[0].mxu0
    %v5731 = vadd.f32 %v5235, %v5730
    %v5732 = vpop.f32.mrb[0].mxu0
    %v5733 = vadd.f32 %v5239, %v5732
    %5734 = vmatprep.mubr.bf16.mxu0 0
    %5735 = vmatmul.mubr.bf16.gmra.mrb[0].mxu0 %v5222
    %v5736 = vpop.f32.mrb[0].mxu0
    %v5737 = vadd.f32 %v5235, %v5736
    %v5738 = vpop.f32.mrb[0].mxu0
    %v5739 = vadd.f32 %v5239, %v5738
    %v5740 = vpop.f32.mrb[0].mxu0
    %v5741 = vadd.f32 %v5235, %v5740
    %v5742 = vpop.f32.mrb[0].mxu0
    %v5743 = vadd.f32 %v5239, %v5742
    %5744 = vmatprep.mubr.bf16.mxu0 0
    %5745 = vmatmul.mubr.bf16.gmra.mrb[0].mxu0 %v5223
    %v5746 = vpop.f32.mrb[0].mxu0
    %v5747 = vadd.f32 %v5235, %v5746
    %v5748 = vpop.f32.mrb[0].mxu0
    %v5749 = vadd.f32 %v5239, %v5748
    %v5750 = vpop.f32.mrb[0].mxu0
    %v5751 = vadd.f32 %v5235, %v5750
    %v5752 = vpop.f32.mrb[0].mxu0
    %v5753 = vadd.f32 %v5239, %v5752
    %5754 = vmatprep.mubr.bf16.mxu0 0
    %5755 = vmatmul.mubr.bf16.gmra.mrb[0].mxu0 %v5224
    %v5756 = vpop.f32.mrb[0].mxu0
    %v5757 = vadd.f32 %v5235, %v5756
    %v5758 = vpop.f32.mrb[0].mxu0
    %v5759 = vadd.f32 %v5239, %v5758
    %v5760 = vpop.f32.mrb[0].mxu0
    %v5761 = vadd.f32 %v5235, %v5760
    %v5762 = vpop.f32.mrb[0].mxu0
    %v5763 = vadd.f32 %v5239, %v5762
    %5764 = vmatprep.mubr.bf16.mxu0 0
    %5765 = vmatmul.mubr.bf16.gmra.mrb[0].mxu0 %v5225
    %v5766 = vpop.f32.mrb[0].mxu0
    %v5767 = vadd.f32 %v5235, %v5766
    %v5768 = vpop.f32.mrb[0].mxu0
    %v5769 = vadd.f32 %v5239, %v5768
    %v5770 = vpop.f32.mrb[0].mxu0
    %v5771 = vadd.f32 %v5235, %v5770
    %v5772 = vpop.f32.mrb[0].mxu0
    %v5773 = vadd.f32 %v5239, %v5772
    %5774 = vmatprep.mubr.bf16.mxu0 0
    %5775 = vmatmul.mubr.bf16.gmra.mrb[0].mxu0 %v5226
    %v5776 = vpop.f32.mrb[0].mxu0
    %v5777 = vadd.f32 %v5235, %v5776
    %v5778 = vpop.f32.mrb[0].mxu0
    %v5779 = vadd.f32 %v5239, %v5778
    %v5780 = vpop.f32.mrb[0].mxu0
    %v5781 = vadd.f32 %v5235, %v5780
    %v5782 = vpop.f32.mrb[0].mxu0
    %v5783 = vadd.f32 %v5239, %v5782
    %5784 = vdwg.mxu0
    %5785 = vmatprep.subr.bf16.mxu0 %v5467
    %5786 = vmatpush1.bf16.msra.mxu0 %v5466
    %5787 = vmatprep.subr.bf16.mxu0 %v5475
    %5788 = vmatpush1.bf16.msra.mxu0 %v5474
    %5789 = vmatprep.subr.bf16.mxu0 %v5483
    %5790 = vmatpush1.bf16.msra.mxu0 %v5482
    %5791 = vmatprep.subr.bf16.mxu0 %v5491
    %5792 = vmatpush1.bf16.msra.mxu0 %v5490
    %5793 = vmatprep.subr.bf16.mxu0 %v5499
    %5794 = vmatpush1.bf16.msra.mxu0 %v5498
    %5795 = vmatprep.subr.bf16.mxu0 %v5507
    %5796 = vmatpush1.bf16.msra.mxu0 %v5506
    %5797 = vmatprep.subr.bf16.mxu0 %v5515
    %5798 = vmatpush1.bf16.msra.mxu0 %v5514
    %5799 = vmatprep.subr.bf16.mxu0 %v5523
    %5800 = vmatpush1.bf16.msra.mxu0 %v5522
    %5801 = vmatprep.subr.bf16.mxu0 0
    %5802 = vmatpush1.bf16.msra.mxu0 0
    %5803 = vmatprep.subr.bf16.mxu0 0
    %5804 = vmatpush1.bf16.msra.mxu0 0
    %5805 = vmatprep.subr.bf16.mxu0 0
    %5806 = vmatpush1.bf16.msra.mxu0 0
    %5807 = vmatprep.subr.bf16.mxu0 0
    %5808 = vmatpush1.bf16.msra.mxu0 0
    %5809 = vmatprep.subr.bf16.mxu0 0
    %5810 = vmatpush1.bf16.msra.mxu0 0
    %5811 = vmatprep.subr.bf16.mxu0 0
    %5812 = vmatpush1.bf16.msra.mxu0 0
    %5813 = vmatprep.subr.bf16.mxu0 0
    %5814 = vmatpush1.bf16.msra.mxu0 0
    %5815 = vmatprep.subr.bf16.mxu0 0
    %5816 = vmatpush1.bf16.msra.mxu0 0
    %5817 = vmatprep.mubr.bf16.mxu0 0
    %5818 = vmatmul.mubr.bf16.gmra.mrb[0].mxu0 %v5211
    %v5819 = vpop.f32.mrb[0].mxu0
    %v5820 = vadd.f32 %v5243, %v5819
    %v5821 = vpop.f32.mrb[0].mxu0
    %v5822 = vadd.f32 %v5247, %v5821
    %v5823 = vpop.f32.mrb[0].mxu0
    %v5824 = vadd.f32 %v5243, %v5823
    %v5825 = vpop.f32.mrb[0].mxu0
    %v5826 = vadd.f32 %v5247, %v5825
    %5827 = vmatprep.mubr.bf16.mxu0 0
    %5828 = vmatmul.mubr.bf16.gmra.mrb[0].mxu0 %v5212
    %v5829 = vpop.f32.mrb[0].mxu0
    %v5830 = vadd.f32 %v5243, %v5829
    %v5831 = vpop.f32.mrb[0].mxu0
    %v5832 = vadd.f32 %v5247, %v5831
    %v5833 = vpop.f32.mrb[0].mxu0
    %v5834 = vadd.f32 %v5243, %v5833
    %v5835 = vpop.f32.mrb[0].mxu0
    %v5836 = vadd.f32 %v5247, %v5835
    %5837 = vmatprep.mubr.bf16.mxu0 0
    %5838 = vmatmul.mubr.bf16.gmra.mrb[0].mxu0 %v5213
    %v5839 = vpop.f32.mrb[0].mxu0
    %v5840 = vadd.f32 %v5243, %v5839
    %v5841 = vpop.f32.mrb[0].mxu0
    %v5842 = vadd.f32 %v5247, %v5841
    %v5843 = vpop.f32.mrb[0].mxu0
    %v5844 = vadd.f32 %v5243, %v5843
    %v5845 = vpop.f32.mrb[0].mxu0
    %v5846 = vadd.f32 %v5247, %v5845
    %5847 = vmatprep.mubr.bf16.mxu0 0
    %5848 = vmatmul.mubr.bf16.gmra.mrb[0].mxu0 %v5214
    %v5849 = vpop.f32.mrb[0].mxu0
    %v5850 = vadd.f32 %v5243, %v5849
    %v5851 = vpop.f32.mrb[0].mxu0
    %v5852 = vadd.f32 %v5247, %v5851
    %v5853 = vpop.f32.mrb[0].mxu0
    %v5854 = vadd.f32 %v5243, %v5853
    %v5855 = vpop.f32.mrb[0].mxu0
    %v5856 = vadd.f32 %v5247, %v5855
    %5857 = vmatprep.mubr.bf16.mxu0 0
    %5858 = vmatmul.mubr.bf16.gmra.mrb[0].mxu0 %v5215
    %v5859 = vpop.f32.mrb[0].mxu0
    %v5860 = vadd.f32 %v5243, %v5859
    %v5861 = vpop.f32.mrb[0].mxu0
    %v5862 = vadd.f32 %v5247, %v5861
    %v5863 = vpop.f32.mrb[0].mxu0
    %v5864 = vadd.f32 %v5243, %v5863
    %v5865 = vpop.f32.mrb[0].mxu0
    %v5866 = vadd.f32 %v5247, %v5865
    %5867 = vmatprep.mubr.bf16.mxu0 0
    %5868 = vmatmul.mubr.bf16.gmra.mrb[0].mxu0 %v5216
    %v5869 = vpop.f32.mrb[0].mxu0
    %v5870 = vadd.f32 %v5243, %v5869
    %v5871 = vpop.f32.mrb[0].mxu0
    %v5872 = vadd.f32 %v5247, %v5871
    %v5873 = vpop.f32.mrb[0].mxu0
    %v5874 = vadd.f32 %v5243, %v5873
    %v5875 = vpop.f32.mrb[0].mxu0
    %v5876 = vadd.f32 %v5247, %v5875
    %5877 = vmatprep.mubr.bf16.mxu0 0
    %5878 = vmatmul.mubr.bf16.gmra.mrb[0].mxu0 %v5217
    %v5879 = vpop.f32.mrb[0].mxu0
    %v5880 = vadd.f32 %v5243, %v5879
    %v5881 = vpop.f32.mrb[0].mxu0
    %v5882 = vadd.f32 %v5247, %v5881
    %v5883 = vpop.f32.mrb[0].mxu0
    %v5884 = vadd.f32 %v5243, %v5883
    %v5885 = vpop.f32.mrb[0].mxu0
    %v5886 = vadd.f32 %v5247, %v5885
    %5887 = vmatprep.mubr.bf16.mxu0 0
    %5888 = vmatmul.mubr.bf16.gmra.mrb[0].mxu0 %v5218
    %v5889 = vpop.f32.mrb[0].mxu0
    %v5890 = vadd.f32 %v5243, %v5889
    %v5891 = vpop.f32.mrb[0].mxu0
    %v5892 = vadd.f32 %v5247, %v5891
    %v5893 = vpop.f32.mrb[0].mxu0
    %v5894 = vadd.f32 %v5243, %v5893
    %v5895 = vpop.f32.mrb[0].mxu0
    %v5896 = vadd.f32 %v5247, %v5895
    %5897 = vmatprep.mubr.bf16.mxu0 0
    %5898 = vmatmul.mubr.bf16.gmra.mrb[0].mxu0 %v5219
    %v5899 = vpop.f32.mrb[0].mxu0
    %v5900 = vadd.f32 %v5243, %v5899
    %v5901 = vpop.f32.mrb[0].mxu0
    %v5902 = vadd.f32 %v5247, %v5901
    %v5903 = vpop.f32.mrb[0].mxu0
    %v5904 = vadd.f32 %v5243, %v5903
    %v5905 = vpop.f32.mrb[0].mxu0
    %v5906 = vadd.f32 %v5247, %v5905
    %5907 = vmatprep.mubr.bf16.mxu0 0
    %5908 = vmatmul.mubr.bf16.gmra.mrb[0].mxu0 %v5220
    %v5909 = vpop.f32.mrb[0].mxu0
    %v5910 = vadd.f32 %v5243, %v5909
    %v5911 = vpop.f32.mrb[0].mxu0
    %v5912 = vadd.f32 %v5247, %v5911
    %v5913 = vpop.f32.mrb[0].mxu0
    %v5914 = vadd.f32 %v5243, %v5913
    %v5915 = vpop.f32.mrb[0].mxu0
    %v5916 = vadd.f32 %v5247, %v5915
    %5917 = vmatprep.mubr.bf16.mxu0 0
    %5918 = vmatmul.mubr.bf16.gmra.mrb[0].mxu0 %v5221
    %v5919 = vpop.f32.mrb[0].mxu0
    %v5920 = vadd.f32 %v5243, %v5919
    %v5921 = vpop.f32.mrb[0].mxu0
    %v5922 = vadd.f32 %v5247, %v5921
    %v5923 = vpop.f32.mrb[0].mxu0
    %v5924 = vadd.f32 %v5243, %v5923
    %v5925 = vpop.f32.mrb[0].mxu0
    %v5926 = vadd.f32 %v5247, %v5925
    %5927 = vmatprep.mubr.bf16.mxu0 0
    %5928 = vmatmul.mubr.bf16.gmra.mrb[0].mxu0 %v5222
    %v5929 = vpop.f32.mrb[0].mxu0
    %v5930 = vadd.f32 %v5243, %v5929
    %v5931 = vpop.f32.mrb[0].mxu0
    %v5932 = vadd.f32 %v5247, %v5931
    %v5933 = vpop.f32.mrb[0].mxu0
    %v5934 = vadd.f32 %v5243, %v5933
    %v5935 = vpop.f32.mrb[0].mxu0
    %v5936 = vadd.f32 %v5247, %v5935
    %5937 = vmatprep.mubr.bf16.mxu0 0
    %5938 = vmatmul.mubr.bf16.gmra.mrb[0].mxu0 %v5223
    %v5939 = vpop.f32.mrb[0].mxu0
    %v5940 = vadd.f32 %v5243, %v5939
    %v5941 = vpop.f32.mrb[0].mxu0
    %v5942 = vadd.f32 %v5247, %v5941
    %v5943 = vpop.f32.mrb[0].mxu0
    %v5944 = vadd.f32 %v5243, %v5943
    %v5945 = vpop.f32.mrb[0].mxu0
    %v5946 = vadd.f32 %v5247, %v5945
    %5947 = vmatprep.mubr.bf16.mxu0 0
    %5948 = vmatmul.mubr.bf16.gmra.mrb[0].mxu0 %v5224
    %v5949 = vpop.f32.mrb[0].mxu0
    %v5950 = vadd.f32 %v5243, %v5949
    %v5951 = vpop.f32.mrb[0].mxu0
    %v5952 = vadd.f32 %v5247, %v5951
    %v5953 = vpop.f32.mrb[0].mxu0
    %v5954 = vadd.f32 %v5243, %v5953
    %v5955 = vpop.f32.mrb[0].mxu0
    %v5956 = vadd.f32 %v5247, %v5955
    %5957 = vmatprep.mubr.bf16.mxu0 0
    %5958 = vmatmul.mubr.bf16.gmra.mrb[0].mxu0 %v5225
    %v5959 = vpop.f32.mrb[0].mxu0
    %v5960 = vadd.f32 %v5243, %v5959
    %v5961 = vpop.f32.mrb[0].mxu0
    %v5962 = vadd.f32 %v5247, %v5961
    %v5963 = vpop.f32.mrb[0].mxu0
    %v5964 = vadd.f32 %v5243, %v5963
    %v5965 = vpop.f32.mrb[0].mxu0
    %v5966 = vadd.f32 %v5247, %v5965
    %5967 = vmatprep.mubr.bf16.mxu0 0
    %5968 = vmatmul.mubr.bf16.gmra.mrb[0].mxu0 %v5226
    %v5969 = vpop.f32.mrb[0].mxu0
    %v5970 = vadd.f32 %v5243, %v5969
    %v5971 = vpop.f32.mrb[0].mxu0
    %v5972 = vadd.f32 %v5247, %v5971
    %v5973 = vpop.f32.mrb[0].mxu0
    %v5974 = vadd.f32 %v5243, %v5973
    %v5975 = vpop.f32.mrb[0].mxu0
    %v5976 = vadd.f32 %v5247, %v5975
    %5977 = vdwg.mxu0
    %5978 = vmatprep.subr.bf16.mxu0 %v5469
    %5979 = vmatpush1.bf16.msra.mxu0 %v5468
    %5980 = vmatprep.subr.bf16.mxu0 %v5477
    %5981 = vmatpush1.bf16.msra.mxu0 %v5476
    %5982 = vmatprep.subr.bf16.mxu0 %v5485
    %5983 = vmatpush1.bf16.msra.mxu0 %v5484
    %5984 = vmatprep.subr.bf16.mxu0 %v5493
    %5985 = vmatpush1.bf16.msra.mxu0 %v5492
    %5986 = vmatprep.subr.bf16.mxu0 %v5501
    %5987 = vmatpush1.bf16.msra.mxu0 %v5500
    %5988 = vmatprep.subr.bf16.mxu0 %v5509
    %5989 = vmatpush1.bf16.msra.mxu0 %v5508
    %5990 = vmatprep.subr.bf16.mxu0 %v5517
    %5991 = vmatpush1.bf16.msra.mxu0 %v5516
    %5992 = vmatprep.subr.bf16.mxu0 %v5525
    %5993 = vmatpush1.bf16.msra.mxu0 %v5524
    %5994 = vmatprep.subr.bf16.mxu0 0
    %5995 = vmatpush1.bf16.msra.mxu0 0
    %5996 = vmatprep.subr.bf16.mxu0 0
    %5997 = vmatpush1.bf16.msra.mxu0 0
    %5998 = vmatprep.subr.bf16.mxu0 0
    %5999 = vmatpush1.bf16.msra.mxu0 0
    %6000 = vmatprep.subr.bf16.mxu0 0
    %6001 = vmatpush1.bf16.msra.mxu0 0
    %6002 = vmatprep.subr.bf16.mxu0 0
    %6003 = vmatpush1.bf16.msra.mxu0 0
    %6004 = vmatprep.subr.bf16.mxu0 0
    %6005 = vmatpush1.bf16.msra.mxu0 0
    %6006 = vmatprep.subr.bf16.mxu0 0
    %6007 = vmatpush1.bf16.msra.mxu0 0
    %6008 = vmatprep.subr.bf16.mxu0 0
    %6009 = vmatpush1.bf16.msra.mxu0 0
    %6010 = vmatprep.mubr.bf16.mxu0 0
    %6011 = vmatmul.mubr.bf16.gmra.mrb[0].mxu0 %v5211
    %v6012 = vpop.f32.mrb[0].mxu0
    %v6013 = vadd.f32 %v5251, %v6012
    %v6014 = vpop.f32.mrb[0].mxu0
    %v6015 = vadd.f32 %v5255, %v6014
    %v6016 = vpop.f32.mrb[0].mxu0
    %v6017 = vadd.f32 %v5251, %v6016
    %v6018 = vpop.f32.mrb[0].mxu0
    %v6019 = vadd.f32 %v5255, %v6018
    %6020 = vmatprep.mubr.bf16.mxu0 0
    %6021 = vmatmul.mubr.bf16.gmra.mrb[0].mxu0 %v5212
    %v6022 = vpop.f32.mrb[0].mxu0
    %v6023 = vadd.f32 %v5251, %v6022
    %v6024 = vpop.f32.mrb[0].mxu0
    %v6025 = vadd.f32 %v5255, %v6024
    %v6026 = vpop.f32.mrb[0].mxu0
    %v6027 = vadd.f32 %v5251, %v6026
    %v6028 = vpop.f32.mrb[0].mxu0
    %v6029 = vadd.f32 %v5255, %v6028
    %6030 = vmatprep.mubr.bf16.mxu0 0
    %6031 = vmatmul.mubr.bf16.gmra.mrb[0].mxu0 %v5213
    %v6032 = vpop.f32.mrb[0].mxu0
    %v6033 = vadd.f32 %v5251, %v6032
    %v6034 = vpop.f32.mrb[0].mxu0
    %v6035 = vadd.f32 %v5255, %v6034
    %v6036 = vpop.f32.mrb[0].mxu0
    %v6037 = vadd.f32 %v5251, %v6036
    %v6038 = vpop.f32.mrb[0].mxu0
    %v6039 = vadd.f32 %v5255, %v6038
    %6040 = vmatprep.mubr.bf16.mxu0 0
    %6041 = vmatmul.mubr.bf16.gmra.mrb[0].mxu0 %v5214
    %v6042 = vpop.f32.mrb[0].mxu0
    %v6043 = vadd.f32 %v5251, %v6042
    %v6044 = vpop.f32.mrb[0].mxu0
    %v6045 = vadd.f32 %v5255, %v6044
    %v6046 = vpop.f32.mrb[0].mxu0
    %v6047 = vadd.f32 %v5251, %v6046
    %v6048 = vpop.f32.mrb[0].mxu0
    %v6049 = vadd.f32 %v5255, %v6048
    %6050 = vmatprep.mubr.bf16.mxu0 0
    %6051 = vmatmul.mubr.bf16.gmra.mrb[0].mxu0 %v5215
    %v6052 = vpop.f32.mrb[0].mxu0
    %v6053 = vadd.f32 %v5251, %v6052
    %v6054 = vpop.f32.mrb[0].mxu0
    %v6055 = vadd.f32 %v5255, %v6054
    %v6056 = vpop.f32.mrb[0].mxu0
    %v6057 = vadd.f32 %v5251, %v6056
    %v6058 = vpop.f32.mrb[0].mxu0
    %v6059 = vadd.f32 %v5255, %v6058
    %6060 = vmatprep.mubr.bf16.mxu0 0
    %6061 = vmatmul.mubr.bf16.gmra.mrb[0].mxu0 %v5216
    %v6062 = vpop.f32.mrb[0].mxu0
    %v6063 = vadd.f32 %v5251, %v6062
    %v6064 = vpop.f32.mrb[0].mxu0
    %v6065 = vadd.f32 %v5255, %v6064
    %v6066 = vpop.f32.mrb[0].mxu0
    %v6067 = vadd.f32 %v5251, %v6066
    %v6068 = vpop.f32.mrb[0].mxu0
    %v6069 = vadd.f32 %v5255, %v6068
    %6070 = vmatprep.mubr.bf16.mxu0 0
    %6071 = vmatmul.mubr.bf16.gmra.mrb[0].mxu0 %v5217
    %v6072 = vpop.f32.mrb[0].mxu0
    %v6073 = vadd.f32 %v5251, %v6072
    %v6074 = vpop.f32.mrb[0].mxu0
    %v6075 = vadd.f32 %v5255, %v6074
    %v6076 = vpop.f32.mrb[0].mxu0
    %v6077 = vadd.f32 %v5251, %v6076
    %v6078 = vpop.f32.mrb[0].mxu0
    %v6079 = vadd.f32 %v5255, %v6078
    %6080 = vmatprep.mubr.bf16.mxu0 0
    %6081 = vmatmul.mubr.bf16.gmra.mrb[0].mxu0 %v5218
    %v6082 = vpop.f32.mrb[0].mxu0
    %v6083 = vadd.f32 %v5251, %v6082
    %v6084 = vpop.f32.mrb[0].mxu0
    %v6085 = vadd.f32 %v5255, %v6084
    %v6086 = vpop.f32.mrb[0].mxu0
    %v6087 = vadd.f32 %v5251, %v6086
    %v6088 = vpop.f32.mrb[0].mxu0
    %v6089 = vadd.f32 %v5255, %v6088
    %6090 = vmatprep.mubr.bf16.mxu0 0
    %6091 = vmatmul.mubr.bf16.gmra.mrb[0].mxu0 %v5219
    %v6092 = vpop.f32.mrb[0].mxu0
    %v6093 = vadd.f32 %v5251, %v6092
    %v6094 = vpop.f32.mrb[0].mxu0
    %v6095 = vadd.f32 %v5255, %v6094
    %v6096 = vpop.f32.mrb[0].mxu0
    %v6097 = vadd.f32 %v5251, %v6096
    %v6098 = vpop.f32.mrb[0].mxu0
    %v6099 = vadd.f32 %v5255, %v6098
    %6100 = vmatprep.mubr.bf16.mxu0 0
    %6101 = vmatmul.mubr.bf16.gmra.mrb[0].mxu0 %v5220
    %v6102 = vpop.f32.mrb[0].mxu0
    %v6103 = vadd.f32 %v5251, %v6102
    %v6104 = vpop.f32.mrb[0].mxu0
    %v6105 = vadd.f32 %v5255, %v6104
    %v6106 = vpop.f32.mrb[0].mxu0
    %v6107 = vadd.f32 %v5251, %v6106
    %v6108 = vpop.f32.mrb[0].mxu0
    %v6109 = vadd.f32 %v5255, %v6108
    %6110 = vmatprep.mubr.bf16.mxu0 0
    %6111 = vmatmul.mubr.bf16.gmra.mrb[0].mxu0 %v5221
    %v6112 = vpop.f32.mrb[0].mxu0
    %v6113 = vadd.f32 %v5251, %v6112
    %v6114 = vpop.f32.mrb[0].mxu0
    %v6115 = vadd.f32 %v5255, %v6114
    %v6116 = vpop.f32.mrb[0].mxu0
    %v6117 = vadd.f32 %v5251, %v6116
    %v6118 = vpop.f32.mrb[0].mxu0
    %v6119 = vadd.f32 %v5255, %v6118
    %6120 = vmatprep.mubr.bf16.mxu0 0
    %6121 = vmatmul.mubr.bf16.gmra.mrb[0].mxu0 %v5222
    %v6122 = vpop.f32.mrb[0].mxu0
    %v6123 = vadd.f32 %v5251, %v6122
    %v6124 = vpop.f32.mrb[0].mxu0
    %v6125 = vadd.f32 %v5255, %v6124
    %v6126 = vpop.f32.mrb[0].mxu0
    %v6127 = vadd.f32 %v5251, %v6126
    %v6128 = vpop.f32.mrb[0].mxu0
    %v6129 = vadd.f32 %v5255, %v6128
    %6130 = vmatprep.mubr.bf16.mxu0 0
    %6131 = vmatmul.mubr.bf16.gmra.mrb[0].mxu0 %v5223
    %v6132 = vpop.f32.mrb[0].mxu0
    %v6133 = vadd.f32 %v5251, %v6132
    %v6134 = vpop.f32.mrb[0].mxu0
    %v6135 = vadd.f32 %v5255, %v6134
    %v6136 = vpop.f32.mrb[0].mxu0
    %v6137 = vadd.f32 %v5251, %v6136
    %v6138 = vpop.f32.mrb[0].mxu0
    %v6139 = vadd.f32 %v5255, %v6138
    %6140 = vmatprep.mubr.bf16.mxu0 0
    %6141 = vmatmul.mubr.bf16.gmra.mrb[0].mxu0 %v5224
    %v6142 = vpop.f32.mrb[0].mxu0
    %v6143 = vadd.f32 %v5251, %v6142
    %v6144 = vpop.f32.mrb[0].mxu0
    %v6145 = vadd.f32 %v5255, %v6144
    %v6146 = vpop.f32.mrb[0].mxu0
    %v6147 = vadd.f32 %v5251, %v6146
    %v6148 = vpop.f32.mrb[0].mxu0
    %v6149 = vadd.f32 %v5255, %v6148
    %6150 = vmatprep.mubr.bf16.mxu0 0
    %6151 = vmatmul.mubr.bf16.gmra.mrb[0].mxu0 %v5225
    %v6152 = vpop.f32.mrb[0].mxu0
    %v6153 = vadd.f32 %v5251, %v6152
    %v6154 = vpop.f32.mrb[0].mxu0
    %v6155 = vadd.f32 %v5255, %v6154
    %v6156 = vpop.f32.mrb[0].mxu0
    %v6157 = vadd.f32 %v5251, %v6156
    %v6158 = vpop.f32.mrb[0].mxu0
    %v6159 = vadd.f32 %v5255, %v6158
    %6160 = vmatprep.mubr.bf16.mxu0 0
    %6161 = vmatmul.mubr.bf16.gmra.mrb[0].mxu0 %v5226
    %v6162 = vpop.f32.mrb[0].mxu0
    %v6163 = vadd.f32 %v5251, %v6162
    %v6164 = vpop.f32.mrb[0].mxu0
    %v6165 = vadd.f32 %v5255, %v6164
    %v6166 = vpop.f32.mrb[0].mxu0
    %v6167 = vadd.f32 %v5251, %v6166
    %v6168 = vpop.f32.mrb[0].mxu0
    %v6169 = vadd.f32 %v5255, %v6168
    %6170 = vdwg.mxu0
    %6171 = vmatprep.subr.bf16.mxu0 %v5471
    %6172 = vmatpush1.bf16.msra.mxu0 %v5470
    %6173 = vmatprep.subr.bf16.mxu0 %v5479
    %6174 = vmatpush1.bf16.msra.mxu0 %v5478
    %6175 = vmatprep.subr.bf16.mxu0 %v5487
    %6176 = vmatpush1.bf16.msra.mxu0 %v5486
    %6177 = vmatprep.subr.bf16.mxu0 %v5495
    %6178 = vmatpush1.bf16.msra.mxu0 %v5494
    %6179 = vmatprep.subr.bf16.mxu0 %v5503
    %6180 = vmatpush1.bf16.msra.mxu0 %v5502
    %6181 = vmatprep.subr.bf16.mxu0 %v5511
    %6182 = vmatpush1.bf16.msra.mxu0 %v5510
    %6183 = vmatprep.subr.bf16.mxu0 %v5519
    %6184 = vmatpush1.bf16.msra.mxu0 %v5518
    %6185 = vmatprep.subr.bf16.mxu0 %v5527
    %6186 = vmatpush1.bf16.msra.mxu0 %v5526
    %6187 = vmatprep.subr.bf16.mxu0 0
    %6188 = vmatpush1.bf16.msra.mxu0 0
    %6189 = vmatprep.subr.bf16.mxu0 0
    %6190 = vmatpush1.bf16.msra.mxu0 0
    %6191 = vmatprep.subr.bf16.mxu0 0
    %6192 = vmatpush1.bf16.msra.mxu0 0
    %6193 = vmatprep.subr.bf16.mxu0 0
    %6194 = vmatpush1.bf16.msra.mxu0 0
    %6195 = vmatprep.subr.bf16.mxu0 0
    %6196 = vmatpush1.bf16.msra.mxu0 0
    %6197 = vmatprep.subr.bf16.mxu0 0
    %6198 = vmatpush1.bf16.msra.mxu0 0
    %6199 = vmatprep.subr.bf16.mxu0 0
    %6200 = vmatpush1.bf16.msra.mxu0 0
    %6201 = vmatprep.subr.bf16.mxu0 0
    %6202 = vmatpush1.bf16.msra.mxu0 0
    %6203 = vmatprep.mubr.bf16.mxu0 0
    %6204 = vmatmul.mubr.bf16.gmra.mrb[0].mxu0 %v5211
    %v6205 = vpop.f32.mrb[0].mxu0
    %v6206 = vadd.f32 %v5259, %v6205
    %v6207 = vpop.f32.mrb[0].mxu0
    %v6208 = vadd.f32 %v5263, %v6207
    %v6209 = vpop.f32.mrb[0].mxu0
    %v6210 = vadd.f32 %v5259, %v6209
    %v6211 = vpop.f32.mrb[0].mxu0
    %v6212 = vadd.f32 %v5263, %v6211
    %6213 = vmatprep.mubr.bf16.mxu0 0
    %6214 = vmatmul.mubr.bf16.gmra.mrb[0].mxu0 %v5212
    %v6215 = vpop.f32.mrb[0].mxu0
    %v6216 = vadd.f32 %v5259, %v6215
    %v6217 = vpop.f32.mrb[0].mxu0
    %v6218 = vadd.f32 %v5263, %v6217
    %v6219 = vpop.f32.mrb[0].mxu0
    %v6220 = vadd.f32 %v5259, %v6219
    %v6221 = vpop.f32.mrb[0].mxu0
    %v6222 = vadd.f32 %v5263, %v6221
    %6223 = vmatprep.mubr.bf16.mxu0 0
    %6224 = vmatmul.mubr.bf16.gmra.mrb[0].mxu0 %v5213
    %v6225 = vpop.f32.mrb[0].mxu0
    %v6226 = vadd.f32 %v5259, %v6225
    %v6227 = vpop.f32.mrb[0].mxu0
    %v6228 = vadd.f32 %v5263, %v6227
    %v6229 = vpop.f32.mrb[0].mxu0
    %v6230 = vadd.f32 %v5259, %v6229
    %v6231 = vpop.f32.mrb[0].mxu0
    %v6232 = vadd.f32 %v5263, %v6231
    %6233 = vmatprep.mubr.bf16.mxu0 0
    %6234 = vmatmul.mubr.bf16.gmra.mrb[0].mxu0 %v5214
    %v6235 = vpop.f32.mrb[0].mxu0
    %v6236 = vadd.f32 %v5259, %v6235
    %v6237 = vpop.f32.mrb[0].mxu0
    %v6238 = vadd.f32 %v5263, %v6237
    %v6239 = vpop.f32.mrb[0].mxu0
    %v6240 = vadd.f32 %v5259, %v6239
    %v6241 = vpop.f32.mrb[0].mxu0
    %v6242 = vadd.f32 %v5263, %v6241
    %6243 = vmatprep.mubr.bf16.mxu0 0
    %6244 = vmatmul.mubr.bf16.gmra.mrb[0].mxu0 %v5215
    %v6245 = vpop.f32.mrb[0].mxu0
    %v6246 = vadd.f32 %v5259, %v6245
    %v6247 = vpop.f32.mrb[0].mxu0
    %v6248 = vadd.f32 %v5263, %v6247
    %v6249 = vpop.f32.mrb[0].mxu0
    %v6250 = vadd.f32 %v5259, %v6249
    %v6251 = vpop.f32.mrb[0].mxu0
    %v6252 = vadd.f32 %v5263, %v6251
    %6253 = vmatprep.mubr.bf16.mxu0 0
    %6254 = vmatmul.mubr.bf16.gmra.mrb[0].mxu0 %v5216
    %v6255 = vpop.f32.mrb[0].mxu0
    %v6256 = vadd.f32 %v5259, %v6255
    %v6257 = vpop.f32.mrb[0].mxu0
    %v6258 = vadd.f32 %v5263, %v6257
    %v6259 = vpop.f32.mrb[0].mxu0
    %v6260 = vadd.f32 %v5259, %v6259
    %v6261 = vpop.f32.mrb[0].mxu0
    %v6262 = vadd.f32 %v5263, %v6261
    %6263 = vmatprep.mubr.bf16.mxu0 0
    %6264 = vmatmul.mubr.bf16.gmra.mrb[0].mxu0 %v5217
    %v6265 = vpop.f32.mrb[0].mxu0
    %v6266 = vadd.f32 %v5259, %v6265
    %v6267 = vpop.f32.mrb[0].mxu0
    %v6268 = vadd.f32 %v5263, %v6267
    %v6269 = vpop.f32.mrb[0].mxu0
    %v6270 = vadd.f32 %v5259, %v6269
    %v6271 = vpop.f32.mrb[0].mxu0
    %v6272 = vadd.f32 %v5263, %v6271
    %6273 = vmatprep.mubr.bf16.mxu0 0
    %6274 = vmatmul.mubr.bf16.gmra.mrb[0].mxu0 %v5218
    %v6275 = vpop.f32.mrb[0].mxu0
    %v6276 = vadd.f32 %v5259, %v6275
    %v6277 = vpop.f32.mrb[0].mxu0
    %v6278 = vadd.f32 %v5263, %v6277
    %v6279 = vpop.f32.mrb[0].mxu0
    %v6280 = vadd.f32 %v5259, %v6279
    %v6281 = vpop.f32.mrb[0].mxu0
    %v6282 = vadd.f32 %v5263, %v6281
    %6283 = vmatprep.mubr.bf16.mxu0 0
    %6284 = vmatmul.mubr.bf16.gmra.mrb[0].mxu0 %v5219
    %v6285 = vpop.f32.mrb[0].mxu0
    %v6286 = vadd.f32 %v5259, %v6285
    %v6287 = vpop.f32.mrb[0].mxu0
    %v6288 = vadd.f32 %v5263, %v6287
    %v6289 = vpop.f32.mrb[0].mxu0
    %v6290 = vadd.f32 %v5259, %v6289
    %v6291 = vpop.f32.mrb[0].mxu0
    %v6292 = vadd.f32 %v5263, %v6291
    %6293 = vmatprep.mubr.bf16.mxu0 0
    %6294 = vmatmul.mubr.bf16.gmra.mrb[0].mxu0 %v5220
    %v6295 = vpop.f32.mrb[0].mxu0
    %v6296 = vadd.f32 %v5259, %v6295
    %v6297 = vpop.f32.mrb[0].mxu0
    %v6298 = vadd.f32 %v5263, %v6297
    %v6299 = vpop.f32.mrb[0].mxu0
    %v6300 = vadd.f32 %v5259, %v6299
    %v6301 = vpop.f32.mrb[0].mxu0
    %v6302 = vadd.f32 %v5263, %v6301
    %6303 = vmatprep.mubr.bf16.mxu0 0
    %6304 = vmatmul.mubr.bf16.gmra.mrb[0].mxu0 %v5221
    %v6305 = vpop.f32.mrb[0].mxu0
    %v6306 = vadd.f32 %v5259, %v6305
    %v6307 = vpop.f32.mrb[0].mxu0
    %v6308 = vadd.f32 %v5263, %v6307
    %v6309 = vpop.f32.mrb[0].mxu0
    %v6310 = vadd.f32 %v5259, %v6309
    %v6311 = vpop.f32.mrb[0].mxu0
    %v6312 = vadd.f32 %v5263, %v6311
    %6313 = vmatprep.mubr.bf16.mxu0 0
    %6314 = vmatmul.mubr.bf16.gmra.mrb[0].mxu0 %v5222
    %v6315 = vpop.f32.mrb[0].mxu0
    %v6316 = vadd.f32 %v5259, %v6315
    %v6317 = vpop.f32.mrb[0].mxu0
    %v6318 = vadd.f32 %v5263, %v6317
    %v6319 = vpop.f32.mrb[0].mxu0
    %v6320 = vadd.f32 %v5259, %v6319
    %v6321 = vpop.f32.mrb[0].mxu0
    %v6322 = vadd.f32 %v5263, %v6321
    %6323 = vmatprep.mubr.bf16.mxu0 0
    %6324 = vmatmul.mubr.bf16.gmra.mrb[0].mxu0 %v5223
    %v6325 = vpop.f32.mrb[0].mxu0
    %v6326 = vadd.f32 %v5259, %v6325
    %v6327 = vpop.f32.mrb[0].mxu0
    %v6328 = vadd.f32 %v5263, %v6327
    %v6329 = vpop.f32.mrb[0].mxu0
    %v6330 = vadd.f32 %v5259, %v6329
    %v6331 = vpop.f32.mrb[0].mxu0
    %v6332 = vadd.f32 %v5263, %v6331
    %6333 = vmatprep.mubr.bf16.mxu0 0
    %6334 = vmatmul.mubr.bf16.gmra.mrb[0].mxu0 %v5224
    %v6335 = vpop.f32.mrb[0].mxu0
    %v6336 = vadd.f32 %v5259, %v6335
    %v6337 = vpop.f32.mrb[0].mxu0
    %v6338 = vadd.f32 %v5263, %v6337
    %v6339 = vpop.f32.mrb[0].mxu0
    %v6340 = vadd.f32 %v5259, %v6339
    %v6341 = vpop.f32.mrb[0].mxu0
    %v6342 = vadd.f32 %v5263, %v6341
    %6343 = vmatprep.mubr.bf16.mxu0 0
    %6344 = vmatmul.mubr.bf16.gmra.mrb[0].mxu0 %v5225
    %v6345 = vpop.f32.mrb[0].mxu0
    %v6346 = vadd.f32 %v5259, %v6345
    %v6347 = vpop.f32.mrb[0].mxu0
    %v6348 = vadd.f32 %v5263, %v6347
    %v6349 = vpop.f32.mrb[0].mxu0
    %v6350 = vadd.f32 %v5259, %v6349
    %v6351 = vpop.f32.mrb[0].mxu0
    %v6352 = vadd.f32 %v5263, %v6351
    %6353 = vmatprep.mubr.bf16.mxu0 0
    %6354 = vmatmul.mubr.bf16.gmra.mrb[0].mxu0 %v5226
    %v6355 = vpop.f32.mrb[0].mxu0
    %v6356 = vadd.f32 %v5259, %v6355
    %v6357 = vpop.f32.mrb[0].mxu0
    %v6358 = vadd.f32 %v5263, %v6357
    %v6359 = vpop.f32.mrb[0].mxu0
    %v6360 = vadd.f32 %v5259, %v6359
    %v6361 = vpop.f32.mrb[0].mxu0
    %v6362 = vadd.f32 %v5263, %v6361
    %6363 = vdwg.mxu0
    %v6364 = vmax.f32 %v5627, %v5631
    %v6365 = vmax.f32 %v6364, %v5637
    %v6366 = vmax.f32 %v6365, %v5641
    %v6367 = vmax.f32 %v6366, %v5647
    %v6368 = vmax.f32 %v6367, %v5651
    %v6369 = vmax.f32 %v6368, %v5657
    %v6370 = vmax.f32 %v6369, %v5661
    %v6371 = vmax.f32 %v6370, %v5667
    %v6372 = vmax.f32 %v6371, %v5671
    %v6373 = vmax.f32 %v6372, %v5677
    %v6374 = vmax.f32 %v6373, %v5681
    %v6375 = vmax.f32 %v6374, %v5687
    %v6376 = vmax.f32 %v6375, %v5691
    %v6377 = vmax.f32 %v6376, %v5697
    %v6378 = vmax.f32 %v6377, %v5701
    %v6379 = vrot.slane %v6378, 4
    %v6380 = vmax.f32 %v6378, %v6379
    %v6381 = vrot.slane %v6380, 2
    %v6382 = vmax.f32 %v6380, %v6381
    %v6383 = vrot.slane %v6382, 1
    %v6384 = vmax.f32 %v6382, %v6383
    %v6385 = vmax.f32 %v5629, %v5633
    %v6386 = vmax.f32 %v6385, %v5639
    %v6387 = vmax.f32 %v6386, %v5643
    %v6388 = vmax.f32 %v6387, %v5649
    %v6389 = vmax.f32 %v6388, %v5653
    %v6390 = vmax.f32 %v6389, %v5659
    %v6391 = vmax.f32 %v6390, %v5663
    %v6392 = vmax.f32 %v6391, %v5669
    %v6393 = vmax.f32 %v6392, %v5673
    %v6394 = vmax.f32 %v6393, %v5679
    %v6395 = vmax.f32 %v6394, %v5683
    %v6396 = vmax.f32 %v6395, %v5689
    %v6397 = vmax.f32 %v6396, %v5693
    %v6398 = vmax.f32 %v6397, %v5699
    %v6399 = vmax.f32 %v6398, %v5703
    %v6400 = vrot.slane %v6399, 4
    %v6401 = vmax.f32 %v6399, %v6400
    %v6402 = vrot.slane %v6401, 2
    %v6403 = vmax.f32 %v6401, %v6402
    %v6404 = vrot.slane %v6403, 1
    %v6405 = vmax.f32 %v6403, %v6404
    %v6406 = vmax.f32 %v5820, %v5824
    %v6407 = vmax.f32 %v6406, %v5830
    %v6408 = vmax.f32 %v6407, %v5834
    %v6409 = vmax.f32 %v6408, %v5840
    %v6410 = vmax.f32 %v6409, %v5844
    %v6411 = vmax.f32 %v6410, %v5850
    %v6412 = vmax.f32 %v6411, %v5854
    %v6413 = vmax.f32 %v6412, %v5860
    %v6414 = vmax.f32 %v6413, %v5864
    %v6415 = vmax.f32 %v6414, %v5870
    %v6416 = vmax.f32 %v6415, %v5874
    %v6417 = vmax.f32 %v6416, %v5880
    %v6418 = vmax.f32 %v6417, %v5884
    %v6419 = vmax.f32 %v6418, %v5890
    %v6420 = vmax.f32 %v6419, %v5894
    %v6421 = vrot.slane %v6420, 4
    %v6422 = vmax.f32 %v6420, %v6421
    %v6423 = vrot.slane %v6422, 2
    %v6424 = vmax.f32 %v6422, %v6423
    %v6425 = vrot.slane %v6424, 1
    %v6426 = vmax.f32 %v6424, %v6425
    %v6427 = vmax.f32 %v5822, %v5826
    %v6428 = vmax.f32 %v6427, %v5832
    %v6429 = vmax.f32 %v6428, %v5836
    %v6430 = vmax.f32 %v6429, %v5842
    %v6431 = vmax.f32 %v6430, %v5846
    %v6432 = vmax.f32 %v6431, %v5852
    %v6433 = vmax.f32 %v6432, %v5856
    %v6434 = vmax.f32 %v6433, %v5862
    %v6435 = vmax.f32 %v6434, %v5866
    %v6436 = vmax.f32 %v6435, %v5872
    %v6437 = vmax.f32 %v6436, %v5876
    %v6438 = vmax.f32 %v6437, %v5882
    %v6439 = vmax.f32 %v6438, %v5886
    %v6440 = vmax.f32 %v6439, %v5892
    %v6441 = vmax.f32 %v6440, %v5896
    %v6442 = vrot.slane %v6441, 4
    %v6443 = vmax.f32 %v6441, %v6442
    %v6444 = vrot.slane %v6443, 2
    %v6445 = vmax.f32 %v6443, %v6444
    %v6446 = vrot.slane %v6445, 1
    %v6447 = vmax.f32 %v6445, %v6446
    %v6448 = vmax.f32 %v6013, %v6017
    %v6449 = vmax.f32 %v6448, %v6023
    %v6450 = vmax.f32 %v6449, %v6027
    %v6451 = vmax.f32 %v6450, %v6033
    %v6452 = vmax.f32 %v6451, %v6037
    %v6453 = vmax.f32 %v6452, %v6043
    %v6454 = vmax.f32 %v6453, %v6047
    %v6455 = vmax.f32 %v6454, %v6053
    %v6456 = vmax.f32 %v6455, %v6057
    %v6457 = vmax.f32 %v6456, %v6063
    %v6458 = vmax.f32 %v6457, %v6067
    %v6459 = vmax.f32 %v6458, %v6073
    %v6460 = vmax.f32 %v6459, %v6077
    %v6461 = vmax.f32 %v6460, %v6083
    %v6462 = vmax.f32 %v6461, %v6087
    %v6463 = vrot.slane %v6462, 4
    %v6464 = vmax.f32 %v6462, %v6463
    %v6465 = vrot.slane %v6464, 2
    %v6466 = vmax.f32 %v6464, %v6465
    %v6467 = vrot.slane %v6466, 1
    %v6468 = vmax.f32 %v6466, %v6467
    %v6469 = vmax.f32 %v6015, %v6019
    %v6470 = vmax.f32 %v6469, %v6025
    %v6471 = vmax.f32 %v6470, %v6029
    %v6472 = vmax.f32 %v6471, %v6035
    %v6473 = vmax.f32 %v6472, %v6039
    %v6474 = vmax.f32 %v6473, %v6045
    %v6475 = vmax.f32 %v6474, %v6049
    %v6476 = vmax.f32 %v6475, %v6055
    %v6477 = vmax.f32 %v6476, %v6059
    %v6478 = vmax.f32 %v6477, %v6065
    %v6479 = vmax.f32 %v6478, %v6069
    %v6480 = vmax.f32 %v6479, %v6075
    %v6481 = vmax.f32 %v6480, %v6079
    %v6482 = vmax.f32 %v6481, %v6085
    %v6483 = vmax.f32 %v6482, %v6089
    %v6484 = vrot.slane %v6483, 4
    %v6485 = vmax.f32 %v6483, %v6484
    %v6486 = vrot.slane %v6485, 2
    %v6487 = vmax.f32 %v6485, %v6486
    %v6488 = vrot.slane %v6487, 1
    %v6489 = vmax.f32 %v6487, %v6488
    %v6490 = vmax.f32 %v6206, %v6210
    %v6491 = vmax.f32 %v6490, %v6216
    %v6492 = vmax.f32 %v6491, %v6220
    %v6493 = vmax.f32 %v6492, %v6226
    %v6494 = vmax.f32 %v6493, %v6230
    %v6495 = vmax.f32 %v6494, %v6236
    %v6496 = vmax.f32 %v6495, %v6240
    %v6497 = vmax.f32 %v6496, %v6246
    %v6498 = vmax.f32 %v6497, %v6250
    %v6499 = vmax.f32 %v6498, %v6256
    %v6500 = vmax.f32 %v6499, %v6260
    %v6501 = vmax.f32 %v6500, %v6266
    %v6502 = vmax.f32 %v6501, %v6270
    %v6503 = vmax.f32 %v6502, %v6276
    %v6504 = vmax.f32 %v6503, %v6280
    %v6505 = vrot.slane %v6504, 4
    %v6506 = vmax.f32 %v6504, %v6505
    %v6507 = vrot.slane %v6506, 2
    %v6508 = vmax.f32 %v6506, %v6507
    %v6509 = vrot.slane %v6508, 1
    %v6510 = vmax.f32 %v6508, %v6509
    %v6511 = vmax.f32 %v6208, %v6212
    %v6512 = vmax.f32 %v6511, %v6218
    %v6513 = vmax.f32 %v6512, %v6222
    %v6514 = vmax.f32 %v6513, %v6228
    %v6515 = vmax.f32 %v6514, %v6232
    %v6516 = vmax.f32 %v6515, %v6238
    %v6517 = vmax.f32 %v6516, %v6242
    %v6518 = vmax.f32 %v6517, %v6248
    %v6519 = vmax.f32 %v6518, %v6252
    %v6520 = vmax.f32 %v6519, %v6258
    %v6521 = vmax.f32 %v6520, %v6262
    %v6522 = vmax.f32 %v6521, %v6268
    %v6523 = vmax.f32 %v6522, %v6272
    %v6524 = vmax.f32 %v6523, %v6278
    %v6525 = vmax.f32 %v6524, %v6282
    %v6526 = vrot.slane %v6525, 4
    %v6527 = vmax.f32 %v6525, %v6526
    %v6528 = vrot.slane %v6527, 2
    %v6529 = vmax.f32 %v6527, %v6528
    %v6530 = vrot.slane %v6529, 1
    %v6531 = vmax.f32 %v6529, %v6530
    %v6532 = vmax.f32 %v5707, %v5711
    %v6533 = vmax.f32 %v6532, %v5717
    %v6534 = vmax.f32 %v6533, %v5721
    %v6535 = vmax.f32 %v6534, %v5727
    %v6536 = vmax.f32 %v6535, %v5731
    %v6537 = vmax.f32 %v6536, %v5737
    %v6538 = vmax.f32 %v6537, %v5741
    %v6539 = vmax.f32 %v6538, %v5747
    %v6540 = vmax.f32 %v6539, %v5751
    %v6541 = vmax.f32 %v6540, %v5757
    %v6542 = vmax.f32 %v6541, %v5761
    %v6543 = vmax.f32 %v6542, %v5767
    %v6544 = vmax.f32 %v6543, %v5771
    %v6545 = vmax.f32 %v6544, %v5777
    %v6546 = vmax.f32 %v6545, %v5781
    %v6547 = vrot.slane %v6546, 4
    %v6548 = vmax.f32 %v6546, %v6547
    %v6549 = vrot.slane %v6548, 2
    %v6550 = vmax.f32 %v6548, %v6549
    %v6551 = vrot.slane %v6550, 1
    %v6552 = vmax.f32 %v6550, %v6551
    %v6553 = vmax.f32 %v5709, %v5713
    %v6554 = vmax.f32 %v6553, %v5719
    %v6555 = vmax.f32 %v6554, %v5723
    %v6556 = vmax.f32 %v6555, %v5729
    %v6557 = vmax.f32 %v6556, %v5733
    %v6558 = vmax.f32 %v6557, %v5739
    %v6559 = vmax.f32 %v6558, %v5743
    %v6560 = vmax.f32 %v6559, %v5749
    %v6561 = vmax.f32 %v6560, %v5753
    %v6562 = vmax.f32 %v6561, %v5759
    %v6563 = vmax.f32 %v6562, %v5763
    %v6564 = vmax.f32 %v6563, %v5769
    %v6565 = vmax.f32 %v6564, %v5773
    %v6566 = vmax.f32 %v6565, %v5779
    %v6567 = vmax.f32 %v6566, %v5783
    %v6568 = vrot.slane %v6567, 4
    %v6569 = vmax.f32 %v6567, %v6568
    %v6570 = vrot.slane %v6569, 2
    %v6571 = vmax.f32 %v6569, %v6570
    %v6572 = vrot.slane %v6571, 1
    %v6573 = vmax.f32 %v6571, %v6572
    %v6574 = vmax.f32 %v5900, %v5904
    %v6575 = vmax.f32 %v6574, %v5910
    %v6576 = vmax.f32 %v6575, %v5914
    %v6577 = vmax.f32 %v6576, %v5920
    %v6578 = vmax.f32 %v6577, %v5924
    %v6579 = vmax.f32 %v6578, %v5930
    %v6580 = vmax.f32 %v6579, %v5934
    %v6581 = vmax.f32 %v6580, %v5940
    %v6582 = vmax.f32 %v6581, %v5944
    %v6583 = vmax.f32 %v6582, %v5950
    %v6584 = vmax.f32 %v6583, %v5954
    %v6585 = vmax.f32 %v6584, %v5960
    %v6586 = vmax.f32 %v6585, %v5964
    %v6587 = vmax.f32 %v6586, %v5970
    %v6588 = vmax.f32 %v6587, %v5974
    %v6589 = vrot.slane %v6588, 4
    %v6590 = vmax.f32 %v6588, %v6589
    %v6591 = vrot.slane %v6590, 2
    %v6592 = vmax.f32 %v6590, %v6591
    %v6593 = vrot.slane %v6592, 1
    %v6594 = vmax.f32 %v6592, %v6593
    %v6595 = vmax.f32 %v5902, %v5906
    %v6596 = vmax.f32 %v6595, %v5912
    %v6597 = vmax.f32 %v6596, %v5916
    %v6598 = vmax.f32 %v6597, %v5922
    %v6599 = vmax.f32 %v6598, %v5926
    %v6600 = vmax.f32 %v6599, %v5932
    %v6601 = vmax.f32 %v6600, %v5936
    %v6602 = vmax.f32 %v6601, %v5942
    %v6603 = vmax.f32 %v6602, %v5946
    %v6604 = vmax.f32 %v6603, %v5952
    %v6605 = vmax.f32 %v6604, %v5956
    %v6606 = vmax.f32 %v6605, %v5962
    %v6607 = vmax.f32 %v6606, %v5966
    %v6608 = vmax.f32 %v6607, %v5972
    %v6609 = vmax.f32 %v6608, %v5976
    %v6610 = vrot.slane %v6609, 4
    %v6611 = vmax.f32 %v6609, %v6610
    %v6612 = vrot.slane %v6611, 2
    %v6613 = vmax.f32 %v6611, %v6612
    %v6614 = vrot.slane %v6613, 1
    %v6615 = vmax.f32 %v6613, %v6614
    %v6616 = vmax.f32 %v6093, %v6097
    %v6617 = vmax.f32 %v6616, %v6103
    %v6618 = vmax.f32 %v6617, %v6107
    %v6619 = vmax.f32 %v6618, %v6113
    %v6620 = vmax.f32 %v6619, %v6117
    %v6621 = vmax.f32 %v6620, %v6123
    %v6622 = vmax.f32 %v6621, %v6127
    %v6623 = vmax.f32 %v6622, %v6133
    %v6624 = vmax.f32 %v6623, %v6137
    %v6625 = vmax.f32 %v6624, %v6143
    %v6626 = vmax.f32 %v6625, %v6147
    %v6627 = vmax.f32 %v6626, %v6153
    %v6628 = vmax.f32 %v6627, %v6157
    %v6629 = vmax.f32 %v6628, %v6163
    %v6630 = vmax.f32 %v6629, %v6167
    %v6631 = vrot.slane %v6630, 4
    %v6632 = vmax.f32 %v6630, %v6631
    %v6633 = vrot.slane %v6632, 2
    %v6634 = vmax.f32 %v6632, %v6633
    %v6635 = vrot.slane %v6634, 1
    %v6636 = vmax.f32 %v6634, %v6635
    %v6637 = vmax.f32 %v6095, %v6099
    %v6638 = vmax.f32 %v6637, %v6105
    %v6639 = vmax.f32 %v6638, %v6109
    %v6640 = vmax.f32 %v6639, %v6115
    %v6641 = vmax.f32 %v6640, %v6119
    %v6642 = vmax.f32 %v6641, %v6125
    %v6643 = vmax.f32 %v6642, %v6129
    %v6644 = vmax.f32 %v6643, %v6135
    %v6645 = vmax.f32 %v6644, %v6139
    %v6646 = vmax.f32 %v6645, %v6145
    %v6647 = vmax.f32 %v6646, %v6149
    %v6648 = vmax.f32 %v6647, %v6155
    %v6649 = vmax.f32 %v6648, %v6159
    %v6650 = vmax.f32 %v6649, %v6165
    %v6651 = vmax.f32 %v6650, %v6169
    %v6652 = vrot.slane %v6651, 4
    %v6653 = vmax.f32 %v6651, %v6652
    %v6654 = vrot.slane %v6653, 2
    %v6655 = vmax.f32 %v6653, %v6654
    %v6656 = vrot.slane %v6655, 1
    %v6657 = vmax.f32 %v6655, %v6656
    %v6658 = vmax.f32 %v6286, %v6290
    %v6659 = vmax.f32 %v6658, %v6296
    %v6660 = vmax.f32 %v6659, %v6300
    %v6661 = vmax.f32 %v6660, %v6306
    %v6662 = vmax.f32 %v6661, %v6310
    %v6663 = vmax.f32 %v6662, %v6316
    %v6664 = vmax.f32 %v6663, %v6320
    %v6665 = vmax.f32 %v6664, %v6326
    %v6666 = vmax.f32 %v6665, %v6330
    %v6667 = vmax.f32 %v6666, %v6336
    %v6668 = vmax.f32 %v6667, %v6340
    %v6669 = vmax.f32 %v6668, %v6346
    %v6670 = vmax.f32 %v6669, %v6350
    %v6671 = vmax.f32 %v6670, %v6356
    %v6672 = vmax.f32 %v6671, %v6360
    %v6673 = vrot.slane %v6672, 4
    %v6674 = vmax.f32 %v6672, %v6673
    %v6675 = vrot.slane %v6674, 2
    %v6676 = vmax.f32 %v6674, %v6675
    %v6677 = vrot.slane %v6676, 1
    %v6678 = vmax.f32 %v6676, %v6677
    %v6679 = vmax.f32 %v6288, %v6292
    %v6680 = vmax.f32 %v6679, %v6298
    %v6681 = vmax.f32 %v6680, %v6302
    %v6682 = vmax.f32 %v6681, %v6308
    %v6683 = vmax.f32 %v6682, %v6312
    %v6684 = vmax.f32 %v6683, %v6318
    %v6685 = vmax.f32 %v6684, %v6322
    %v6686 = vmax.f32 %v6685, %v6328
    %v6687 = vmax.f32 %v6686, %v6332
    %v6688 = vmax.f32 %v6687, %v6338
    %v6689 = vmax.f32 %v6688, %v6342
    %v6690 = vmax.f32 %v6689, %v6348
    %v6691 = vmax.f32 %v6690, %v6352
    %v6692 = vmax.f32 %v6691, %v6358
    %v6693 = vmax.f32 %v6692, %v6362
    %v6694 = vrot.slane %v6693, 4
    %v6695 = vmax.f32 %v6693, %v6694
    %v6696 = vrot.slane %v6695, 2
    %v6697 = vmax.f32 %v6695, %v6696
    %v6698 = vrot.slane %v6697, 1
    %v6699 = vmax.f32 %v6697, %v6698
    %s6700 = smul.u32 %s2778, 1
    %s6701 = sshll.u32 %s6700, 4
    %6702 = dma.done %s168, %s6701
    %v6703 = vpack.c.bf16 %v6384, %v6384
    %v6704 = vpack.c.bf16 %v6405, %v6405
    %v6705 = vpack.c.bf16 %v6426, %v6426
    %v6706 = vpack.c.bf16 %v6447, %v6447
    %v6707 = vpack.c.bf16 %v6468, %v6468
    %v6708 = vpack.c.bf16 %v6489, %v6489
    %v6709 = vpack.c.bf16 %v6510, %v6510
    %v6710 = vpack.c.bf16 %v6531, %v6531
    %v6711 = vpack.c.bf16 %v6552, %v6552
    %v6712 = vpack.c.bf16 %v6573, %v6573
    %v6713 = vpack.c.bf16 %v6594, %v6594
    %v6714 = vpack.c.bf16 %v6615, %v6615
    %v6715 = vpack.c.bf16 %v6636, %v6636
    %v6716 = vpack.c.bf16 %v6657, %v6657
    %v6717 = vpack.c.bf16 %v6678, %v6678
    %v6718 = vpack.c.bf16 %v6699, %v6699
    %v6719 = vld [vmem:[#allocation4] sm:$0xff]
    %v6720 = vld [vmem:[#allocation4 + $0x8] sm:$0xff]
    %v6721 = vld [vmem:[#allocation4 + $0x10] sm:$0xff]
    %v6722 = vld [vmem:[#allocation4 + $0x18] sm:$0xff]
    %v6723 = vld [vmem:[#allocation4 + $0x20] sm:$0xff]
    %v6724 = vld [vmem:[#allocation4 + $0x28] sm:$0xff]
    %v6725 = vld [vmem:[#allocation4 + $0x30] sm:$0xff]
    %v6726 = vld [vmem:[#allocation4 + $0x38] sm:$0xff]
    %v6727 = vld [vmem:[#allocation4 + $0x40] sm:$0xff]
    %v6728 = vld [vmem:[#allocation4 + $0x48] sm:$0xff]
    %v6729 = vld [vmem:[#allocation4 + $0x50] sm:$0xff]
    %v6730 = vld [vmem:[#allocation4 + $0x58] sm:$0xff]
    %v6731 = vld [vmem:[#allocation4 + $0x60] sm:$0xff]
    %v6732 = vld [vmem:[#allocation4 + $0x68] sm:$0xff]
    %v6733 = vld [vmem:[#allocation4 + $0x70] sm:$0xff]
    %v6734 = vld [vmem:[#allocation4 + $0x78] sm:$0xff]
    %v6735 = vld [vmem:[#allocation4 + $0x80] sm:$0xff]
    %v6736 = vld [vmem:[#allocation4 + $0x88] sm:$0xff]
    %v6737 = vld [vmem:[#allocation4 + $0x90] sm:$0xff]
    %v6738 = vld [vmem:[#allocation4 + $0x98] sm:$0xff]
    %v6739 = vld [vmem:[#allocation4 + $0xa0] sm:$0xff]
    %v6740 = vld [vmem:[#allocation4 + $0xa8] sm:$0xff]
    %v6741 = vld [vmem:[#allocation4 + $0xb0] sm:$0xff]
    %v6742 = vld [vmem:[#allocation4 + $0xb8] sm:$0xff]
    %v6743 = vld [vmem:[#allocation4 + $0xc0] sm:$0xff]
    %v6744 = vld [vmem:[#allocation4 + $0xc8] sm:$0xff]
    %v6745 = vld [vmem:[#allocation4 + $0xd0] sm:$0xff]
    %v6746 = vld [vmem:[#allocation4 + $0xd8] sm:$0xff]
    %v6747 = vld [vmem:[#allocation4 + $0xe0] sm:$0xff]
    %v6748 = vld [vmem:[#allocation4 + $0xe8] sm:$0xff]
    %v6749 = vld [vmem:[#allocation4 + $0xf0] sm:$0xff]
    %v6750 = vld [vmem:[#allocation4 + $0xf8] sm:$0xff]
    %v6751 = vld [vmem:[#allocation4 + $0x100] sm:$0xff]
    %v6752 = vld [vmem:[#allocation4 + $0x108] sm:$0xff]
    %v6753 = vld [vmem:[#allocation4 + $0x110] sm:$0xff]
    %v6754 = vld [vmem:[#allocation4 + $0x118] sm:$0xff]
    %v6755 = vld [vmem:[#allocation4 + $0x120] sm:$0xff]
    %v6756 = vld [vmem:[#allocation4 + $0x128] sm:$0xff]
    %v6757 = vld [vmem:[#allocation4 + $0x130] sm:$0xff]
    %v6758 = vld [vmem:[#allocation4 + $0x138] sm:$0xff]
    %v6759 = vld [vmem:[#allocation4 + $0x140] sm:$0xff]
    %v6760 = vld [vmem:[#allocation4 + $0x148] sm:$0xff]
    %v6761 = vld [vmem:[#allocation4 + $0x150] sm:$0xff]
    %v6762 = vld [vmem:[#allocation4 + $0x158] sm:$0xff]
    %v6763 = vld [vmem:[#allocation4 + $0x160] sm:$0xff]
    %v6764 = vld [vmem:[#allocation4 + $0x168] sm:$0xff]
    %v6765 = vld [vmem:[#allocation4 + $0x170] sm:$0xff]
    %v6766 = vld [vmem:[#allocation4 + $0x178] sm:$0xff]
    %v6767 = vld [vmem:[#allocation4 + $0x180] sm:$0xff]
    %v6768 = vld [vmem:[#allocation4 + $0x188] sm:$0xff]
    %v6769 = vld [vmem:[#allocation4 + $0x190] sm:$0xff]
    %v6770 = vld [vmem:[#allocation4 + $0x198] sm:$0xff]
    %v6771 = vld [vmem:[#allocation4 + $0x1a0] sm:$0xff]
    %v6772 = vld [vmem:[#allocation4 + $0x1a8] sm:$0xff]
    %v6773 = vld [vmem:[#allocation4 + $0x1b0] sm:$0xff]
    %v6774 = vld [vmem:[#allocation4 + $0x1b8] sm:$0xff]
    %v6775 = vld [vmem:[#allocation4 + $0x1c0] sm:$0xff]
    %v6776 = vld [vmem:[#allocation4 + $0x1c8] sm:$0xff]
    %v6777 = vld [vmem:[#allocation4 + $0x1d0] sm:$0xff]
    %v6778 = vld [vmem:[#allocation4 + $0x1d8] sm:$0xff]
    %v6779 = vld [vmem:[#allocation4 + $0x1e0] sm:$0xff]
    %v6780 = vld [vmem:[#allocation4 + $0x1e8] sm:$0xff]
    %v6781 = vld [vmem:[#allocation4 + $0x1f0] sm:$0xff]
    %v6782 = vld [vmem:[#allocation4 + $0x1f8] sm:$0xff]
    %v6783 = vld [vmem:[%s10 + $0x41] ss:$0 sm:$0xff]
    %v6800 = vunpack.c.l.b16 %v6703
    %v6801 = vunpack.c.l.b16 %v6704
    %v6802 = vunpack.c.l.b16 %v6705
    %v6803 = vunpack.c.l.b16 %v6706
    %v6804 = vunpack.c.l.b16 %v6707
    %v6805 = vunpack.c.l.b16 %v6708
    %v6806 = vunpack.c.l.b16 %v6709
    %v6807 = vunpack.c.l.b16 %v6710
    %v6808 = vunpack.c.l.b16 %v6711
    %v6809 = vunpack.c.l.b16 %v6712
    %v6810 = vunpack.c.l.b16 %v6713
    %v6811 = vunpack.c.l.b16 %v6714
    %v6812 = vunpack.c.l.b16 %v6715
    %v6813 = vunpack.c.l.b16 %v6716
    %v6814 = vunpack.c.l.b16 %v6717
    %v6815 = vunpack.c.l.b16 %v6718
    %v6816 = vsel %vm3109, %v6808, %v6800
    %v6817 = vsel %vm3109, %v6809, %v6801
    %v6818 = vsel %vm3109, %v6810, %v6802
    %v6819 = vsel %vm3109, %v6811, %v6803
    %v6820 = vsel %vm3109, %v6812, %v6804
    %v6821 = vsel %vm3109, %v6813, %v6805
    %v6822 = vsel %vm3109, %v6814, %v6806
    %v6823 = vsel %vm3109, %v6815, %v6807
    %v6824 = vpack.c.b16 %v6816, %v6816
    %v6825 = vpack.c.b16 %v6817, %v6817
    %v6826 = vpack.c.b16 %v6818, %v6818
    %v6827 = vpack.c.b16 %v6819, %v6819
    %v6828 = vpack.c.b16 %v6820, %v6820
    %v6829 = vpack.c.b16 %v6821, %v6821
    %v6830 = vpack.c.b16 %v6822, %v6822
    %v6831 = vpack.c.b16 %v6823, %v6823
    %6840 = vmatprep.subr.bf16.mxu0 0
    %6841 = vmatpush1.bf16.msra.mxu0 %v6719
    %6842 = vmatprep.subr.bf16.mxu0 0
    %6843 = vmatpush1.bf16.msra.mxu0 %v6720
    %6844 = vmatprep.subr.bf16.mxu0 0
    %6845 = vmatpush1.bf16.msra.mxu0 %v6721
    %6846 = vmatprep.subr.bf16.mxu0 0
    %6847 = vmatpush1.bf16.msra.mxu0 %v6722
    %6848 = vmatprep.subr.bf16.mxu0 0
    %6849 = vmatpush1.bf16.msra.mxu0 %v6723
    %6850 = vmatprep.subr.bf16.mxu0 0
    %6851 = vmatpush1.bf16.msra.mxu0 %v6724
    %6852 = vmatprep.subr.bf16.mxu0 0
    %6853 = vmatpush1.bf16.msra.mxu0 %v6725
    %6854 = vmatprep.subr.bf16.mxu0 0
    %6855 = vmatpush1.bf16.msra.mxu0 %v6726
    %6856 = vmatprep.subr.bf16.mxu0 0
    %6857 = vmatpush1.bf16.msra.mxu0 %v6727
    %6858 = vmatprep.subr.bf16.mxu0 0
    %6859 = vmatpush1.bf16.msra.mxu0 %v6728
    %6860 = vmatprep.subr.bf16.mxu0 0
    %6861 = vmatpush1.bf16.msra.mxu0 %v6729
    %6862 = vmatprep.subr.bf16.mxu0 0
    %6863 = vmatpush1.bf16.msra.mxu0 %v6730
    %6864 = vmatprep.subr.bf16.mxu0 0
    %6865 = vmatpush1.bf16.msra.mxu0 %v6731
    %6866 = vmatprep.subr.bf16.mxu0 0
    %6867 = vmatpush1.bf16.msra.mxu0 %v6732
    %6868 = vmatprep.subr.bf16.mxu0 0
    %6869 = vmatpush1.bf16.msra.mxu0 %v6733
    %6870 = vmatprep.subr.bf16.mxu0 0
    %6871 = vmatpush1.bf16.msra.mxu0 %v6734
    %6872 = vmatprep.mubr.bf16.mxu0 %v6825
    %6873 = vmatmul.mubr.bf16.gmra.mrb[0].mxu0 %v6824
    %v6874 = vpop.f32.mrb[0].mxu0
    %v6875 = vadd.f32 %v6783, %v6874
    %v6876 = vpop.f32.mrb[0].mxu0
    %v6877 = vpop.f32.mrb[0].mxu0
    %v6878 = vpop.f32.mrb[0].mxu0
    %6879 = vdwg.mxu0
    %6880 = vmatprep.subr.bf16.mxu0 0
    %6881 = vmatpush1.bf16.msra.mxu0 %v6735
    %6882 = vmatprep.subr.bf16.mxu0 0
    %6883 = vmatpush1.bf16.msra.mxu0 %v6736
    %6884 = vmatprep.subr.bf16.mxu0 0
    %6885 = vmatpush1.bf16.msra.mxu0 %v6737
    %6886 = vmatprep.subr.bf16.mxu0 0
    %6887 = vmatpush1.bf16.msra.mxu0 %v6738
    %6888 = vmatprep.subr.bf16.mxu0 0
    %6889 = vmatpush1.bf16.msra.mxu0 %v6739
    %6890 = vmatprep.subr.bf16.mxu0 0
    %6891 = vmatpush1.bf16.msra.mxu0 %v6740
    %6892 = vmatprep.subr.bf16.mxu0 0
    %6893 = vmatpush1.bf16.msra.mxu0 %v6741
    %6894 = vmatprep.subr.bf16.mxu0 0
    %6895 = vmatpush1.bf16.msra.mxu0 %v6742
    %6896 = vmatprep.subr.bf16.mxu0 0
    %6897 = vmatpush1.bf16.msra.mxu0 %v6743
    %6898 = vmatprep.subr.bf16.mxu0 0
    %6899 = vmatpush1.bf16.msra.mxu0 %v6744
    %6900 = vmatprep.subr.bf16.mxu0 0
    %6901 = vmatpush1.bf16.msra.mxu0 %v6745
    %6902 = vmatprep.subr.bf16.mxu0 0
    %6903 = vmatpush1.bf16.msra.mxu0 %v6746
    %6904 = vmatprep.subr.bf16.mxu0 0
    %6905 = vmatpush1.bf16.msra.mxu0 %v6747
    %6906 = vmatprep.subr.bf16.mxu0 0
    %6907 = vmatpush1.bf16.msra.mxu0 %v6748
    %6908 = vmatprep.subr.bf16.mxu0 0
    %6909 = vmatpush1.bf16.msra.mxu0 %v6749
    %6910 = vmatprep.subr.bf16.mxu0 0
    %6911 = vmatpush1.bf16.msra.mxu0 %v6750
    %6912 = vmatprep.mubr.bf16.mxu0 %v6827
    %6913 = vmatmul.mubr.bf16.gmra.mrb[0].mxu0 %v6826
    %v6914 = vpop.f32.mrb[0].mxu0
    %v6915 = vadd.f32 %v6875, %v6914
    %v6916 = vpop.f32.mrb[0].mxu0
    %v6917 = vpop.f32.mrb[0].mxu0
    %v6918 = vpop.f32.mrb[0].mxu0
    %6919 = vdwg.mxu0
    %6920 = vmatprep.subr.bf16.mxu0 0
    %6921 = vmatpush1.bf16.msra.mxu0 %v6751
    %6922 = vmatprep.subr.bf16.mxu0 0
    %6923 = vmatpush1.bf16.msra.mxu0 %v6752
    %6924 = vmatprep.subr.bf16.mxu0 0
    %6925 = vmatpush1.bf16.msra.mxu0 %v6753
    %6926 = vmatprep.subr.bf16.mxu0 0
    %6927 = vmatpush1.bf16.msra.mxu0 %v6754
    %6928 = vmatprep.subr.bf16.mxu0 0
    %6929 = vmatpush1.bf16.msra.mxu0 %v6755
    %6930 = vmatprep.subr.bf16.mxu0 0
    %6931 = vmatpush1.bf16.msra.mxu0 %v6756
    %6932 = vmatprep.subr.bf16.mxu0 0
    %6933 = vmatpush1.bf16.msra.mxu0 %v6757
    %6934 = vmatprep.subr.bf16.mxu0 0
    %6935 = vmatpush1.bf16.msra.mxu0 %v6758
    %6936 = vmatprep.subr.bf16.mxu0 0
    %6937 = vmatpush1.bf16.msra.mxu0 %v6759
    %6938 = vmatprep.subr.bf16.mxu0 0
    %6939 = vmatpush1.bf16.msra.mxu0 %v6760
    %6940 = vmatprep.subr.bf16.mxu0 0
    %6941 = vmatpush1.bf16.msra.mxu0 %v6761
    %6942 = vmatprep.subr.bf16.mxu0 0
    %6943 = vmatpush1.bf16.msra.mxu0 %v6762
    %6944 = vmatprep.subr.bf16.mxu0 0
    %6945 = vmatpush1.bf16.msra.mxu0 %v6763
    %6946 = vmatprep.subr.bf16.mxu0 0
    %6947 = vmatpush1.bf16.msra.mxu0 %v6764
    %6948 = vmatprep.subr.bf16.mxu0 0
    %6949 = vmatpush1.bf16.msra.mxu0 %v6765
    %6950 = vmatprep.subr.bf16.mxu0 0
    %6951 = vmatpush1.bf16.msra.mxu0 %v6766
    %6952 = vmatprep.mubr.bf16.mxu0 %v6829
    %6953 = vmatmul.mubr.bf16.gmra.mrb[0].mxu0 %v6828
    %v6954 = vpop.f32.mrb[0].mxu0
    %v6955 = vadd.f32 %v6915, %v6954
    %v6956 = vpop.f32.mrb[0].mxu0
    %v6957 = vpop.f32.mrb[0].mxu0
    %v6958 = vpop.f32.mrb[0].mxu0
    %6959 = vdwg.mxu0
    %6960 = vmatprep.subr.bf16.mxu0 0
    %6961 = vmatpush1.bf16.msra.mxu0 %v6767
    %6962 = vmatprep.subr.bf16.mxu0 0
    %6963 = vmatpush1.bf16.msra.mxu0 %v6768
    %6964 = vmatprep.subr.bf16.mxu0 0
    %6965 = vmatpush1.bf16.msra.mxu0 %v6769
    %6966 = vmatprep.subr.bf16.mxu0 0
    %6967 = vmatpush1.bf16.msra.mxu0 %v6770
    %6968 = vmatprep.subr.bf16.mxu0 0
    %6969 = vmatpush1.bf16.msra.mxu0 %v6771
    %6970 = vmatprep.subr.bf16.mxu0 0
    %6971 = vmatpush1.bf16.msra.mxu0 %v6772
    %6972 = vmatprep.subr.bf16.mxu0 0
    %6973 = vmatpush1.bf16.msra.mxu0 %v6773
    %6974 = vmatprep.subr.bf16.mxu0 0
    %6975 = vmatpush1.bf16.msra.mxu0 %v6774
    %6976 = vmatprep.subr.bf16.mxu0 0
    %6977 = vmatpush1.bf16.msra.mxu0 %v6775
    %6978 = vmatprep.subr.bf16.mxu0 0
    %6979 = vmatpush1.bf16.msra.mxu0 %v6776
    %6980 = vmatprep.subr.bf16.mxu0 0
    %6981 = vmatpush1.bf16.msra.mxu0 %v6777
    %6982 = vmatprep.subr.bf16.mxu0 0
    %6983 = vmatpush1.bf16.msra.mxu0 %v6778
    %6984 = vmatprep.subr.bf16.mxu0 0
    %6985 = vmatpush1.bf16.msra.mxu0 %v6779
    %6986 = vmatprep.subr.bf16.mxu0 0
    %6987 = vmatpush1.bf16.msra.mxu0 %v6780
    %6988 = vmatprep.subr.bf16.mxu0 0
    %6989 = vmatpush1.bf16.msra.mxu0 %v6781
    %6990 = vmatprep.subr.bf16.mxu0 0
    %6991 = vmatpush1.bf16.msra.mxu0 %v6782
    %6992 = vmatprep.mubr.bf16.mxu0 %v6831
    %6993 = vmatmul.mubr.bf16.gmra.mrb[0].mxu0 %v6830
    %v6994 = vpop.f32.mrb[0].mxu0
    %v6995 = vadd.f32 %v6955, %v6994
    %v6996 = vpop.f32.mrb[0].mxu0
    %v6997 = vpop.f32.mrb[0].mxu0
    %v6998 = vpop.f32.mrb[0].mxu0
    %6999 = vdwg.mxu0
    %v7000 = vld [vmem:[#allocation10] sm:$0xf]
    %v7001 = vld [vmem:[#allocation10 + $0x4] sm:$0xf]
    %v7002 = vld [vmem:[#allocation10 + $0x8] sm:$0xf]
    %v7003 = vld [vmem:[#allocation10 + $0xc] sm:$0xf]
    %v7004 = vld [vmem:[#allocation10 + $0x10] sm:$0xf]
    %v7005 = vld [vmem:[#allocation10 + $0x14] sm:$0xf]
    %v7006 = vld [vmem:[#allocation10 + $0x18] sm:$0xf]
    %v7007 = vld [vmem:[#allocation10 + $0x1c] sm:$0xf]
    %v7016 = vunpack.c.l.b16 %v7000
    %v7017 = vunpack.c.l.b16 %v7001
    %v7018 = vunpack.c.l.b16 %v7002
    %v7019 = vunpack.c.l.b16 %v7003
    %v7020 = vunpack.c.l.b16 %v7004
    %v7021 = vunpack.c.l.b16 %v7005
    %v7022 = vunpack.c.l.b16 %v7006
    %v7023 = vunpack.c.l.b16 %v7007
    %v7024 = vpack.c.b16 %v7017, %v7016
    %v7025 = vpack.c.b16 %v7019, %v7018
    %v7026 = vpack.c.b16 %v7021, %v7020
    %v7027 = vpack.c.b16 %v7023, %v7022
    %7032 = vmatprep.subr.bf16.mxu0 0
    %7033 = vmatpush1.bf16.msra.mxu0 %v7024
    %7034 = vmatprep.subr.bf16.mxu0 0
    %7035 = vmatpush1.bf16.msra.mxu0 %v7025
    %7036 = vmatprep.subr.bf16.mxu0 0
    %7037 = vmatpush1.bf16.msra.mxu0 %v7026
    %7038 = vmatprep.subr.bf16.mxu0 0
    %7039 = vmatpush1.bf16.msra.mxu0 %v7027
    %7040 = vmatprep.subr.bf16.mxu0 0
    %7041 = vmatpush1.bf16.msra.mxu0 0
    %7042 = vmatprep.subr.bf16.mxu0 0
    %7043 = vmatpush1.bf16.msra.mxu0 0
    %7044 = vmatprep.subr.bf16.mxu0 0
    %7045 = vmatpush1.bf16.msra.mxu0 0
    %7046 = vmatprep.subr.bf16.mxu0 0
    %7047 = vmatpush1.bf16.msra.mxu0 0
    %7048 = vmatprep.subr.bf16.mxu0 0
    %7049 = vmatpush1.bf16.msra.mxu0 0
    %7050 = vmatprep.subr.bf16.mxu0 0
    %7051 = vmatpush1.bf16.msra.mxu0 0
    %7052 = vmatprep.subr.bf16.mxu0 0
    %7053 = vmatpush1.bf16.msra.mxu0 0
    %7054 = vmatprep.subr.bf16.mxu0 0
    %7055 = vmatpush1.bf16.msra.mxu0 0
    %7056 = vmatprep.subr.bf16.mxu0 0
    %7057 = vmatpush1.bf16.msra.mxu0 0
    %7058 = vmatprep.subr.bf16.mxu0 0
    %7059 = vmatpush1.bf16.msra.mxu0 0
    %7060 = vmatprep.subr.bf16.mxu0 0
    %7061 = vmatpush1.bf16.msra.mxu0 0
    %7062 = vmatprep.subr.bf16.mxu0 0
    %7063 = vmatpush1.bf16.msra.mxu0 0
    %7064 = vmatprep.mubr.bf16.mxu0 0
    %7065 = vmatmul.mubr.bf16.gmra.mrb[0].mxu0 %v4971
    %v7066 = vpop.f32.mrb[0].mxu0
    %v7067 = vadd.f32 0.0, %v7066
    %v7068 = vpop.f32.mrb[0].mxu0
    %v7069 = vpop.f32.mrb[0].mxu0
    %v7070 = vadd.f32 0.0, %v7069
    %v7071 = vpop.f32.mrb[0].mxu0
    %7072 = vmatprep.mubr.bf16.mxu0 0
    %7073 = vmatmul.mubr.bf16.gmra.mrb[0].mxu0 %v4974
    %v7074 = vpop.f32.mrb[0].mxu0
    %v7075 = vadd.f32 0.0, %v7074
    %v7076 = vpop.f32.mrb[0].mxu0
    %v7077 = vpop.f32.mrb[0].mxu0
    %v7078 = vadd.f32 0.0, %v7077
    %v7079 = vpop.f32.mrb[0].mxu0
    %7080 = vmatprep.mubr.bf16.mxu0 0
    %7081 = vmatmul.mubr.bf16.gmra.mrb[0].mxu0 %v4977
    %v7082 = vpop.f32.mrb[0].mxu0
    %v7083 = vadd.f32 0.0, %v7082
    %v7084 = vpop.f32.mrb[0].mxu0
    %v7085 = vpop.f32.mrb[0].mxu0
    %v7086 = vadd.f32 0.0, %v7085
    %v7087 = vpop.f32.mrb[0].mxu0
    %7088 = vmatprep.mubr.bf16.mxu0 0
    %7089 = vmatmul.mubr.bf16.gmra.mrb[0].mxu0 %v4980
    %v7090 = vpop.f32.mrb[0].mxu0
    %v7091 = vadd.f32 0.0, %v7090
    %v7092 = vpop.f32.mrb[0].mxu0
    %v7093 = vpop.f32.mrb[0].mxu0
    %v7094 = vadd.f32 0.0, %v7093
    %v7095 = vpop.f32.mrb[0].mxu0
    %7096 = vmatprep.mubr.bf16.mxu0 0
    %7097 = vmatmul.mubr.bf16.gmra.mrb[0].mxu0 %v4983
    %v7098 = vpop.f32.mrb[0].mxu0
    %v7099 = vadd.f32 0.0, %v7098
    %v7100 = vpop.f32.mrb[0].mxu0
    %v7101 = vpop.f32.mrb[0].mxu0
    %v7102 = vadd.f32 0.0, %v7101
    %v7103 = vpop.f32.mrb[0].mxu0
    %7104 = vmatprep.mubr.bf16.mxu0 0
    %7105 = vmatmul.mubr.bf16.gmra.mrb[0].mxu0 %v4986
    %v7106 = vpop.f32.mrb[0].mxu0
    %v7107 = vadd.f32 0.0, %v7106
    %v7108 = vpop.f32.mrb[0].mxu0
    %v7109 = vpop.f32.mrb[0].mxu0
    %v7110 = vadd.f32 0.0, %v7109
    %v7111 = vpop.f32.mrb[0].mxu0
    %7112 = vmatprep.mubr.bf16.mxu0 0
    %7113 = vmatmul.mubr.bf16.gmra.mrb[0].mxu0 %v4989
    %v7114 = vpop.f32.mrb[0].mxu0
    %v7115 = vadd.f32 0.0, %v7114
    %v7116 = vpop.f32.mrb[0].mxu0
    %v7117 = vpop.f32.mrb[0].mxu0
    %v7118 = vadd.f32 0.0, %v7117
    %v7119 = vpop.f32.mrb[0].mxu0
    %7120 = vmatprep.mubr.bf16.mxu0 0
    %7121 = vmatmul.mubr.bf16.gmra.mrb[0].mxu0 %v4992
    %v7122 = vpop.f32.mrb[0].mxu0
    %v7123 = vadd.f32 0.0, %v7122
    %v7124 = vpop.f32.mrb[0].mxu0
    %v7125 = vpop.f32.mrb[0].mxu0
    %v7126 = vadd.f32 0.0, %v7125
    %v7127 = vpop.f32.mrb[0].mxu0
    %7128 = vmatprep.mubr.bf16.mxu0 0
    %7129 = vmatmul.mubr.bf16.gmra.mrb[0].mxu0 %v4995
    %v7130 = vpop.f32.mrb[0].mxu0
    %v7131 = vadd.f32 0.0, %v7130
    %v7132 = vpop.f32.mrb[0].mxu0
    %v7133 = vpop.f32.mrb[0].mxu0
    %v7134 = vadd.f32 0.0, %v7133
    %v7135 = vpop.f32.mrb[0].mxu0
    %7136 = vmatprep.mubr.bf16.mxu0 0
    %7137 = vmatmul.mubr.bf16.gmra.mrb[0].mxu0 %v4998
    %v7138 = vpop.f32.mrb[0].mxu0
    %v7139 = vadd.f32 0.0, %v7138
    %v7140 = vpop.f32.mrb[0].mxu0
    %v7141 = vpop.f32.mrb[0].mxu0
    %v7142 = vadd.f32 0.0, %v7141
    %v7143 = vpop.f32.mrb[0].mxu0
    %7144 = vmatprep.mubr.bf16.mxu0 0
    %7145 = vmatmul.mubr.bf16.gmra.mrb[0].mxu0 %v5001
    %v7146 = vpop.f32.mrb[0].mxu0
    %v7147 = vadd.f32 0.0, %v7146
    %v7148 = vpop.f32.mrb[0].mxu0
    %v7149 = vpop.f32.mrb[0].mxu0
    %v7150 = vadd.f32 0.0, %v7149
    %v7151 = vpop.f32.mrb[0].mxu0
    %7152 = vmatprep.mubr.bf16.mxu0 0
    %7153 = vmatmul.mubr.bf16.gmra.mrb[0].mxu0 %v5004
    %v7154 = vpop.f32.mrb[0].mxu0
    %v7155 = vadd.f32 0.0, %v7154
    %v7156 = vpop.f32.mrb[0].mxu0
    %v7157 = vpop.f32.mrb[0].mxu0
    %v7158 = vadd.f32 0.0, %v7157
    %v7159 = vpop.f32.mrb[0].mxu0
    %7160 = vmatprep.mubr.bf16.mxu0 0
    %7161 = vmatmul.mubr.bf16.gmra.mrb[0].mxu0 %v5007
    %v7162 = vpop.f32.mrb[0].mxu0
    %v7163 = vadd.f32 0.0, %v7162
    %v7164 = vpop.f32.mrb[0].mxu0
    %v7165 = vpop.f32.mrb[0].mxu0
    %v7166 = vadd.f32 0.0, %v7165
    %v7167 = vpop.f32.mrb[0].mxu0
    %7168 = vmatprep.mubr.bf16.mxu0 0
    %7169 = vmatmul.mubr.bf16.gmra.mrb[0].mxu0 %v5010
    %v7170 = vpop.f32.mrb[0].mxu0
    %v7171 = vadd.f32 0.0, %v7170
    %v7172 = vpop.f32.mrb[0].mxu0
    %v7173 = vpop.f32.mrb[0].mxu0
    %v7174 = vadd.f32 0.0, %v7173
    %v7175 = vpop.f32.mrb[0].mxu0
    %7176 = vmatprep.mubr.bf16.mxu0 0
    %7177 = vmatmul.mubr.bf16.gmra.mrb[0].mxu0 %v5013
    %v7178 = vpop.f32.mrb[0].mxu0
    %v7179 = vadd.f32 0.0, %v7178
    %v7180 = vpop.f32.mrb[0].mxu0
    %v7181 = vpop.f32.mrb[0].mxu0
    %v7182 = vadd.f32 0.0, %v7181
    %v7183 = vpop.f32.mrb[0].mxu0
    %7184 = vmatprep.mubr.bf16.mxu0 0
    %7185 = vmatmul.mubr.bf16.gmra.mrb[0].mxu0 %v5016
    %v7186 = vpop.f32.mrb[0].mxu0
    %v7187 = vadd.f32 0.0, %v7186
    %v7188 = vpop.f32.mrb[0].mxu0
    %v7189 = vpop.f32.mrb[0].mxu0
    %v7190 = vadd.f32 0.0, %v7189
    %v7191 = vpop.f32.mrb[0].mxu0
    %7192 = vdwg.mxu0
    %v7195 = vunpack.c.l.s4 1966171168
    %v7196 = vunpack.c.0.s8 %v7195
    %v7197 = vlaneseq
    %v7198 = vshrl.u32 %v7197, 7
    %v7199 = vsub.s32 %v7196, %v7198
    %v7200 = vrot.slane %v6995, %v7199
    %v7201 = vcombine.high %v7200, %v7200
    %v7203 = vunpack.c.l.s4 1966171168
    %v7204 = vunpack.c.0.s8 %v7203
    %v7205 = vlaneseq
    %v7206 = vshrl.u32 %v7205, 7
    %v7207 = vsub.s32 %v7204, %v7206
    %v7208 = vrot.slane %v7200, %v7207
    %v7210 = vunpack.c.l.s4 1966171168
    %v7211 = vunpack.c.0.s8 %v7210
    %v7212 = vlaneseq
    %v7213 = vshrl.u32 %v7212, 7
    %v7214 = vsub.s32 %v7211, %v7213
    %v7215 = vrot.slane %v7201, %v7214
    %v7216 = vlaneseq
    %v7217 = vshrl.u32 %v7216, 7
    %v7218 = vsub.s32 0, %v7217
    %v7219 = vrot.slane %v7208, %v7218
    %v7220 = vlaneseq
    %v7221 = vshrl.u32 %v7220, 7
    %v7222 = vsub.s32 0, %v7221
    %v7223 = vrot.slane %v7215, %v7222
    %v7226 = vadd.f32 %v7067, %v7219
    %v7227 = vadd.f32 %v7070, %v7219
    %v7228 = vadd.f32 %v7075, %v7219
    %v7229 = vadd.f32 %v7078, %v7219
    %v7230 = vadd.f32 %v7083, %v7219
    %v7231 = vadd.f32 %v7086, %v7219
    %v7232 = vadd.f32 %v7091, %v7219
    %v7233 = vadd.f32 %v7094, %v7219
    %v7234 = vadd.f32 %v7099, %v7219
    %v7235 = vadd.f32 %v7102, %v7219
    %v7236 = vadd.f32 %v7107, %v7219
    %v7237 = vadd.f32 %v7110, %v7219
    %v7238 = vadd.f32 %v7115, %v7219
    %v7239 = vadd.f32 %v7118, %v7219
    %v7240 = vadd.f32 %v7123, %v7219
    %v7241 = vadd.f32 %v7126, %v7219
    %v7242 = vadd.f32 %v7131, %v7223
    %v7243 = vadd.f32 %v7134, %v7223
    %v7244 = vadd.f32 %v7139, %v7223
    %v7245 = vadd.f32 %v7142, %v7223
    %v7246 = vadd.f32 %v7147, %v7223
    %v7247 = vadd.f32 %v7150, %v7223
    %v7248 = vadd.f32 %v7155, %v7223
    %v7249 = vadd.f32 %v7158, %v7223
    %v7250 = vadd.f32 %v7163, %v7223
    %v7251 = vadd.f32 %v7166, %v7223
    %v7252 = vadd.f32 %v7171, %v7223
    %v7253 = vadd.f32 %v7174, %v7223
    %v7254 = vadd.f32 %v7179, %v7223
    %v7255 = vadd.f32 %v7182, %v7223
    %v7256 = vadd.f32 %v7187, %v7223
    %v7257 = vadd.f32 %v7190, %v7223
    %v7258 = vmax.f32 %v7226, 0.0
    %v7259 = vmax.f32 %v7227, 0.0
    %v7260 = vmax.f32 %v7228, 0.0
    %v7261 = vmax.f32 %v7229, 0.0
    %v7262 = vmax.f32 %v7230, 0.0
    %v7263 = vmax.f32 %v7231, 0.0
    %v7264 = vmax.f32 %v7232, 0.0
    %v7265 = vmax.f32 %v7233, 0.0
    %v7266 = vmax.f32 %v7234, 0.0
    %v7267 = vmax.f32 %v7235, 0.0
    %v7268 = vmax.f32 %v7236, 0.0
    %v7269 = vmax.f32 %v7237, 0.0
    %v7270 = vmax.f32 %v7238, 0.0
    %v7271 = vmax.f32 %v7239, 0.0
    %v7272 = vmax.f32 %v7240, 0.0
    %v7273 = vmax.f32 %v7241, 0.0
    %v7274 = vmax.f32 %v7242, 0.0
    %v7275 = vmax.f32 %v7243, 0.0
    %v7276 = vmax.f32 %v7244, 0.0
    %v7277 = vmax.f32 %v7245, 0.0
    %v7278 = vmax.f32 %v7246, 0.0
    %v7279 = vmax.f32 %v7247, 0.0
    %v7280 = vmax.f32 %v7248, 0.0
    %v7281 = vmax.f32 %v7249, 0.0
    %v7282 = vmax.f32 %v7250, 0.0
    %v7283 = vmax.f32 %v7251, 0.0
    %v7284 = vmax.f32 %v7252, 0.0
    %v7285 = vmax.f32 %v7253, 0.0
    %v7286 = vmax.f32 %v7254, 0.0
    %v7287 = vmax.f32 %v7255, 0.0
    %v7288 = vmax.f32 %v7256, 0.0
    %v7289 = vmax.f32 %v7257, 0.0
    %v7290 = vpack.c.bf16 %v7259, %v7258
    %v7291 = vpack.c.bf16 %v7261, %v7260
    %v7292 = vpack.c.bf16 %v7263, %v7262
    %v7293 = vpack.c.bf16 %v7265, %v7264
    %v7294 = vpack.c.bf16 %v7267, %v7266
    %v7295 = vpack.c.bf16 %v7269, %v7268
    %v7296 = vpack.c.bf16 %v7271, %v7270
    %v7297 = vpack.c.bf16 %v7273, %v7272
    %v7298 = vpack.c.bf16 %v7275, %v7274
    %v7299 = vpack.c.bf16 %v7277, %v7276
    %v7300 = vpack.c.bf16 %v7279, %v7278
    %v7301 = vpack.c.bf16 %v7281, %v7280
    %v7302 = vpack.c.bf16 %v7283, %v7282
    %v7303 = vpack.c.bf16 %v7285, %v7284
    %v7304 = vpack.c.bf16 %v7287, %v7286
    %v7305 = vpack.c.bf16 %v7289, %v7288
    %v7306 = vld [vmem:[%s7] sm:$0xf]
    %v7307 = vld [vmem:[%s7 + $0x4] sm:$0xf]
    %v7308 = vld [vmem:[%s7 + $0x8] sm:$0xf]
    %v7309 = vld [vmem:[%s7 + $0xc] sm:$0xf]
    %v7310 = vld [vmem:[%s7 + $0x10] sm:$0xf]
    %v7311 = vld [vmem:[%s7 + $0x14] sm:$0xf]
    %v7312 = vld [vmem:[%s7 + $0x18] sm:$0xf]
    %v7313 = vld [vmem:[%s7 + $0x1c] sm:$0xf]
    %v7314 = vld [vmem:[%s7 + $0x20] sm:$0xf]
    %v7315 = vld [vmem:[%s7 + $0x24] sm:$0xf]
    %v7316 = vld [vmem:[%s7 + $0x28] sm:$0xf]
    %v7317 = vld [vmem:[%s7 + $0x2c] sm:$0xf]
    %v7318 = vld [vmem:[%s7 + $0x30] sm:$0xf]
    %v7319 = vld [vmem:[%s7 + $0x34] sm:$0xf]
    %v7320 = vld [vmem:[%s7 + $0x38] sm:$0xf]
    %v7321 = vld [vmem:[%s7 + $0x3c] sm:$0xf]
    %v7322 = vld [vmem:[%s10 + $0x42] ss:$0 sm:$0xff]
    %v7339 = vunpack.c.l.b16 %v7306
    %v7340 = vunpack.c.l.b16 %v7307
    %v7341 = vunpack.c.l.b16 %v7308
    %v7342 = vunpack.c.l.b16 %v7309
    %v7343 = vunpack.c.l.b16 %v7310
    %v7344 = vunpack.c.l.b16 %v7311
    %v7345 = vunpack.c.l.b16 %v7312
    %v7346 = vunpack.c.l.b16 %v7313
    %v7347 = vunpack.c.l.b16 %v7314
    %v7348 = vunpack.c.l.b16 %v7315
    %v7349 = vunpack.c.l.b16 %v7316
    %v7350 = vunpack.c.l.b16 %v7317
    %v7351 = vunpack.c.l.b16 %v7318
    %v7352 = vunpack.c.l.b16 %v7319
    %v7353 = vunpack.c.l.b16 %v7320
    %v7354 = vunpack.c.l.b16 %v7321
    %v7355 = vpack.c.b16 %v7340, %v7339
    %v7356 = vpack.c.b16 %v7342, %v7341
    %v7357 = vpack.c.b16 %v7344, %v7343
    %v7358 = vpack.c.b16 %v7346, %v7345
    %v7359 = vpack.c.b16 %v7348, %v7347
    %v7360 = vpack.c.b16 %v7350, %v7349
    %v7361 = vpack.c.b16 %v7352, %v7351
    %v7362 = vpack.c.b16 %v7354, %v7353
    %7371 = vmatprep.subr.bf16.mxu0 0
    %7372 = vmatpush1.bf16.msra.mxu0 %v7355
    %7373 = vmatprep.subr.bf16.mxu0 0
    %7374 = vmatpush1.bf16.msra.mxu0 %v7356
    %7375 = vmatprep.subr.bf16.mxu0 0
    %7376 = vmatpush1.bf16.msra.mxu0 %v7357
    %7377 = vmatprep.subr.bf16.mxu0 0
    %7378 = vmatpush1.bf16.msra.mxu0 %v7358
    %7379 = vmatprep.subr.bf16.mxu0 0
    %7380 = vmatpush1.bf16.msra.mxu0 %v7359
    %7381 = vmatprep.subr.bf16.mxu0 0
    %7382 = vmatpush1.bf16.msra.mxu0 %v7360
    %7383 = vmatprep.subr.bf16.mxu0 0
    %7384 = vmatpush1.bf16.msra.mxu0 %v7361
    %7385 = vmatprep.subr.bf16.mxu0 0
    %7386 = vmatpush1.bf16.msra.mxu0 %v7362
    %7387 = vmatprep.subr.bf16.mxu0 0
    %7388 = vmatpush1.bf16.msra.mxu0 0
    %7389 = vmatprep.subr.bf16.mxu0 0
    %7390 = vmatpush1.bf16.msra.mxu0 0
    %7391 = vmatprep.subr.bf16.mxu0 0
    %7392 = vmatpush1.bf16.msra.mxu0 0
    %7393 = vmatprep.subr.bf16.mxu0 0
    %7394 = vmatpush1.bf16.msra.mxu0 0
    %7395 = vmatprep.subr.bf16.mxu0 0
    %7396 = vmatpush1.bf16.msra.mxu0 0
    %7397 = vmatprep.subr.bf16.mxu0 0
    %7398 = vmatpush1.bf16.msra.mxu0 0
    %7399 = vmatprep.subr.bf16.mxu0 0
    %7400 = vmatpush1.bf16.msra.mxu0 0
    %7401 = vmatprep.subr.bf16.mxu0 0
    %7402 = vmatpush1.bf16.msra.mxu0 0
    %7403 = vmatprep.mubr.bf16.mxu0 0
    %7404 = vmatmul.mubr.bf16.gmra.mrb[0].mxu0 %v7290
    %v7405 = vpop.f32.mrb[0].mxu0
    %v7406 = vadd.f32 %v7322, %v7405
    %v7407 = vpop.f32.mrb[0].mxu0
    %v7408 = vpop.f32.mrb[0].mxu0
    %v7409 = vadd.f32 %v7322, %v7408
    %v7410 = vpop.f32.mrb[0].mxu0
    %7411 = vmatprep.mubr.bf16.mxu0 0
    %7412 = vmatmul.mubr.bf16.gmra.mrb[0].mxu0 %v7291
    %v7413 = vpop.f32.mrb[0].mxu0
    %v7414 = vadd.f32 %v7322, %v7413
    %v7415 = vpop.f32.mrb[0].mxu0
    %v7416 = vpop.f32.mrb[0].mxu0
    %v7417 = vadd.f32 %v7322, %v7416
    %v7418 = vpop.f32.mrb[0].mxu0
    %7419 = vmatprep.mubr.bf16.mxu0 0
    %7420 = vmatmul.mubr.bf16.gmra.mrb[0].mxu0 %v7292
    %v7421 = vpop.f32.mrb[0].mxu0
    %v7422 = vadd.f32 %v7322, %v7421
    %v7423 = vpop.f32.mrb[0].mxu0
    %v7424 = vpop.f32.mrb[0].mxu0
    %v7425 = vadd.f32 %v7322, %v7424
    %v7426 = vpop.f32.mrb[0].mxu0
    %7427 = vmatprep.mubr.bf16.mxu0 0
    %7428 = vmatmul.mubr.bf16.gmra.mrb[0].mxu0 %v7293
    %v7429 = vpop.f32.mrb[0].mxu0
    %v7430 = vadd.f32 %v7322, %v7429
    %v7431 = vpop.f32.mrb[0].mxu0
    %v7432 = vpop.f32.mrb[0].mxu0
    %v7433 = vadd.f32 %v7322, %v7432
    %v7434 = vpop.f32.mrb[0].mxu0
    %7435 = vmatprep.mubr.bf16.mxu0 0
    %7436 = vmatmul.mubr.bf16.gmra.mrb[0].mxu0 %v7294
    %v7437 = vpop.f32.mrb[0].mxu0
    %v7438 = vadd.f32 %v7322, %v7437
    %v7439 = vpop.f32.mrb[0].mxu0
    %v7440 = vpop.f32.mrb[0].mxu0
    %v7441 = vadd.f32 %v7322, %v7440
    %v7442 = vpop.f32.mrb[0].mxu0
    %7443 = vmatprep.mubr.bf16.mxu0 0
    %7444 = vmatmul.mubr.bf16.gmra.mrb[0].mxu0 %v7295
    %v7445 = vpop.f32.mrb[0].mxu0
    %v7446 = vadd.f32 %v7322, %v7445
    %v7447 = vpop.f32.mrb[0].mxu0
    %v7448 = vpop.f32.mrb[0].mxu0
    %v7449 = vadd.f32 %v7322, %v7448
    %v7450 = vpop.f32.mrb[0].mxu0
    %7451 = vmatprep.mubr.bf16.mxu0 0
    %7452 = vmatmul.mubr.bf16.gmra.mrb[0].mxu0 %v7296
    %v7453 = vpop.f32.mrb[0].mxu0
    %v7454 = vadd.f32 %v7322, %v7453
    %v7455 = vpop.f32.mrb[0].mxu0
    %v7456 = vpop.f32.mrb[0].mxu0
    %v7457 = vadd.f32 %v7322, %v7456
    %v7458 = vpop.f32.mrb[0].mxu0
    %7459 = vmatprep.mubr.bf16.mxu0 0
    %7460 = vmatmul.mubr.bf16.gmra.mrb[0].mxu0 %v7297
    %v7461 = vpop.f32.mrb[0].mxu0
    %v7462 = vadd.f32 %v7322, %v7461
    %v7463 = vpop.f32.mrb[0].mxu0
    %v7464 = vpop.f32.mrb[0].mxu0
    %v7465 = vadd.f32 %v7322, %v7464
    %v7466 = vpop.f32.mrb[0].mxu0
    %7467 = vmatprep.mubr.bf16.mxu0 0
    %7468 = vmatmul.mubr.bf16.gmra.mrb[0].mxu0 %v7298
    %v7469 = vpop.f32.mrb[0].mxu0
    %v7470 = vadd.f32 %v7322, %v7469
    %v7471 = vpop.f32.mrb[0].mxu0
    %v7472 = vpop.f32.mrb[0].mxu0
    %v7473 = vadd.f32 %v7322, %v7472
    %v7474 = vpop.f32.mrb[0].mxu0
    %7475 = vmatprep.mubr.bf16.mxu0 0
    %7476 = vmatmul.mubr.bf16.gmra.mrb[0].mxu0 %v7299
    %v7477 = vpop.f32.mrb[0].mxu0
    %v7478 = vadd.f32 %v7322, %v7477
    %v7479 = vpop.f32.mrb[0].mxu0
    %v7480 = vpop.f32.mrb[0].mxu0
    %v7481 = vadd.f32 %v7322, %v7480
    %v7482 = vpop.f32.mrb[0].mxu0
    %7483 = vmatprep.mubr.bf16.mxu0 0
    %7484 = vmatmul.mubr.bf16.gmra.mrb[0].mxu0 %v7300
    %v7485 = vpop.f32.mrb[0].mxu0
    %v7486 = vadd.f32 %v7322, %v7485
    %v7487 = vpop.f32.mrb[0].mxu0
    %v7488 = vpop.f32.mrb[0].mxu0
    %v7489 = vadd.f32 %v7322, %v7488
    %v7490 = vpop.f32.mrb[0].mxu0
    %7491 = vmatprep.mubr.bf16.mxu0 0
    %7492 = vmatmul.mubr.bf16.gmra.mrb[0].mxu0 %v7301
    %v7493 = vpop.f32.mrb[0].mxu0
    %v7494 = vadd.f32 %v7322, %v7493
    %v7495 = vpop.f32.mrb[0].mxu0
    %v7496 = vpop.f32.mrb[0].mxu0
    %v7497 = vadd.f32 %v7322, %v7496
    %v7498 = vpop.f32.mrb[0].mxu0
    %7499 = vmatprep.mubr.bf16.mxu0 0
    %7500 = vmatmul.mubr.bf16.gmra.mrb[0].mxu0 %v7302
    %v7501 = vpop.f32.mrb[0].mxu0
    %v7502 = vadd.f32 %v7322, %v7501
    %v7503 = vpop.f32.mrb[0].mxu0
    %v7504 = vpop.f32.mrb[0].mxu0
    %v7505 = vadd.f32 %v7322, %v7504
    %v7506 = vpop.f32.mrb[0].mxu0
    %7507 = vmatprep.mubr.bf16.mxu0 0
    %7508 = vmatmul.mubr.bf16.gmra.mrb[0].mxu0 %v7303
    %v7509 = vpop.f32.mrb[0].mxu0
    %v7510 = vadd.f32 %v7322, %v7509
    %v7511 = vpop.f32.mrb[0].mxu0
    %v7512 = vpop.f32.mrb[0].mxu0
    %v7513 = vadd.f32 %v7322, %v7512
    %v7514 = vpop.f32.mrb[0].mxu0
    %7515 = vmatprep.mubr.bf16.mxu0 0
    %7516 = vmatmul.mubr.bf16.gmra.mrb[0].mxu0 %v7304
    %v7517 = vpop.f32.mrb[0].mxu0
    %v7518 = vadd.f32 %v7322, %v7517
    %v7519 = vpop.f32.mrb[0].mxu0
    %v7520 = vpop.f32.mrb[0].mxu0
    %v7521 = vadd.f32 %v7322, %v7520
    %v7522 = vpop.f32.mrb[0].mxu0
    %7523 = vmatprep.mubr.bf16.mxu0 0
    %7524 = vmatmul.mubr.bf16.gmra.mrb[0].mxu0 %v7305
    %v7525 = vpop.f32.mrb[0].mxu0
    %v7526 = vadd.f32 %v7322, %v7525
    %v7527 = vpop.f32.mrb[0].mxu0
    %v7528 = vpop.f32.mrb[0].mxu0
    %v7529 = vadd.f32 %v7322, %v7528
    %v7530 = vpop.f32.mrb[0].mxu0
    %7531 = vdwg.mxu0
    %v7532 = vmax.f32 %v7406, 0.0
    %v7533 = vmax.f32 %v7409, 0.0
    %v7534 = vmax.f32 %v7414, 0.0
    %v7535 = vmax.f32 %v7417, 0.0
    %v7536 = vmax.f32 %v7422, 0.0
    %v7537 = vmax.f32 %v7425, 0.0
    %v7538 = vmax.f32 %v7430, 0.0
    %v7539 = vmax.f32 %v7433, 0.0
    %v7540 = vmax.f32 %v7438, 0.0
    %v7541 = vmax.f32 %v7441, 0.0
    %v7542 = vmax.f32 %v7446, 0.0
    %v7543 = vmax.f32 %v7449, 0.0
    %v7544 = vmax.f32 %v7454, 0.0
    %v7545 = vmax.f32 %v7457, 0.0
    %v7546 = vmax.f32 %v7462, 0.0
    %v7547 = vmax.f32 %v7465, 0.0
    %v7548 = vmax.f32 %v7470, 0.0
    %v7549 = vmax.f32 %v7473, 0.0
    %v7550 = vmax.f32 %v7478, 0.0
    %v7551 = vmax.f32 %v7481, 0.0
    %v7552 = vmax.f32 %v7486, 0.0
    %v7553 = vmax.f32 %v7489, 0.0
    %v7554 = vmax.f32 %v7494, 0.0
    %v7555 = vmax.f32 %v7497, 0.0
    %v7556 = vmax.f32 %v7502, 0.0
    %v7557 = vmax.f32 %v7505, 0.0
    %v7558 = vmax.f32 %v7510, 0.0
    %v7559 = vmax.f32 %v7513, 0.0
    %v7560 = vmax.f32 %v7518, 0.0
    %v7561 = vmax.f32 %v7521, 0.0
    %v7562 = vmax.f32 %v7526, 0.0
    %v7563 = vmax.f32 %v7529, 0.0
    %v7564 = vpack.c.bf16 %v7533, %v7532
    %v7565 = vpack.c.bf16 %v7535, %v7534
    %v7566 = vpack.c.bf16 %v7537, %v7536
    %v7567 = vpack.c.bf16 %v7539, %v7538
    %v7568 = vpack.c.bf16 %v7541, %v7540
    %v7569 = vpack.c.bf16 %v7543, %v7542
    %v7570 = vpack.c.bf16 %v7545, %v7544
    %v7571 = vpack.c.bf16 %v7547, %v7546
    %v7572 = vpack.c.bf16 %v7549, %v7548
    %v7573 = vpack.c.bf16 %v7551, %v7550
    %v7574 = vpack.c.bf16 %v7553, %v7552
    %v7575 = vpack.c.bf16 %v7555, %v7554
    %v7576 = vpack.c.bf16 %v7557, %v7556
    %v7577 = vpack.c.bf16 %v7559, %v7558
    %v7578 = vpack.c.bf16 %v7561, %v7560
    %v7579 = vpack.c.bf16 %v7563, %v7562
    %v7580 = vld [vmem:[%s8] sm:$0xf]
    %v7581 = vld [vmem:[%s8 + $0x4] sm:$0xf]
    %v7582 = vld [vmem:[%s8 + $0x8] sm:$0xf]
    %v7583 = vld [vmem:[%s8 + $0xc] sm:$0xf]
    %v7584 = vld [vmem:[%s8 + $0x10] sm:$0xf]
    %v7585 = vld [vmem:[%s8 + $0x14] sm:$0xf]
    %v7586 = vld [vmem:[%s8 + $0x18] sm:$0xf]
    %v7587 = vld [vmem:[%s8 + $0x1c] sm:$0xf]
    %v7588 = vld [vmem:[%s8 + $0x20] sm:$0xf]
    %v7589 = vld [vmem:[%s8 + $0x24] sm:$0xf]
    %v7590 = vld [vmem:[%s8 + $0x28] sm:$0xf]
    %v7591 = vld [vmem:[%s8 + $0x2c] sm:$0xf]
    %v7592 = vld [vmem:[%s8 + $0x30] sm:$0xf]
    %v7593 = vld [vmem:[%s8 + $0x34] sm:$0xf]
    %v7594 = vld [vmem:[%s8 + $0x38] sm:$0xf]
    %v7595 = vld [vmem:[%s8 + $0x3c] sm:$0xf]
    %v7596 = vld [vmem:[%s10 + $0x43] ss:$0 sm:$0xff]
    %v7613 = vunpack.c.l.b16 %v7580
    %v7614 = vunpack.c.l.b16 %v7581
    %v7615 = vunpack.c.l.b16 %v7582
    %v7616 = vunpack.c.l.b16 %v7583
    %v7617 = vunpack.c.l.b16 %v7584
    %v7618 = vunpack.c.l.b16 %v7585
    %v7619 = vunpack.c.l.b16 %v7586
    %v7620 = vunpack.c.l.b16 %v7587
    %v7621 = vunpack.c.l.b16 %v7588
    %v7622 = vunpack.c.l.b16 %v7589
    %v7623 = vunpack.c.l.b16 %v7590
    %v7624 = vunpack.c.l.b16 %v7591
    %v7625 = vunpack.c.l.b16 %v7592
    %v7626 = vunpack.c.l.b16 %v7593
    %v7627 = vunpack.c.l.b16 %v7594
    %v7628 = vunpack.c.l.b16 %v7595
    %v7629 = vpack.c.b16 %v7614, %v7613
    %v7630 = vpack.c.b16 %v7616, %v7615
    %v7631 = vpack.c.b16 %v7618, %v7617
    %v7632 = vpack.c.b16 %v7620, %v7619
    %v7633 = vpack.c.b16 %v7622, %v7621
    %v7634 = vpack.c.b16 %v7624, %v7623
    %v7635 = vpack.c.b16 %v7626, %v7625
    %v7636 = vpack.c.b16 %v7628, %v7627
    %7645 = vmatprep.subr.bf16.mxu0 0
    %7646 = vmatpush1.bf16.msra.mxu0 %v7629
    %7647 = vmatprep.subr.bf16.mxu0 0
    %7648 = vmatpush1.bf16.msra.mxu0 %v7630
    %7649 = vmatprep.subr.bf16.mxu0 0
    %7650 = vmatpush1.bf16.msra.mxu0 %v7631
    %7651 = vmatprep.subr.bf16.mxu0 0
    %7652 = vmatpush1.bf16.msra.mxu0 %v7632
    %7653 = vmatprep.subr.bf16.mxu0 0
    %7654 = vmatpush1.bf16.msra.mxu0 %v7633
    %7655 = vmatprep.subr.bf16.mxu0 0
    %7656 = vmatpush1.bf16.msra.mxu0 %v7634
    %7657 = vmatprep.subr.bf16.mxu0 0
    %7658 = vmatpush1.bf16.msra.mxu0 %v7635
    %7659 = vmatprep.subr.bf16.mxu0 0
    %7660 = vmatpush1.bf16.msra.mxu0 %v7636
    %7661 = vmatprep.subr.bf16.mxu0 0
    %7662 = vmatpush1.bf16.msra.mxu0 0
    %7663 = vmatprep.subr.bf16.mxu0 0
    %7664 = vmatpush1.bf16.msra.mxu0 0
    %7665 = vmatprep.subr.bf16.mxu0 0
    %7666 = vmatpush1.bf16.msra.mxu0 0
    %7667 = vmatprep.subr.bf16.mxu0 0
    %7668 = vmatpush1.bf16.msra.mxu0 0
    %7669 = vmatprep.subr.bf16.mxu0 0
    %7670 = vmatpush1.bf16.msra.mxu0 0
    %7671 = vmatprep.subr.bf16.mxu0 0
    %7672 = vmatpush1.bf16.msra.mxu0 0
    %7673 = vmatprep.subr.bf16.mxu0 0
    %7674 = vmatpush1.bf16.msra.mxu0 0
    %7675 = vmatprep.subr.bf16.mxu0 0
    %7676 = vmatpush1.bf16.msra.mxu0 0
    %7677 = vmatprep.mubr.bf16.mxu0 0
    %7678 = vmatmul.mubr.bf16.gmra.mrb[0].mxu0 %v7564
    %v7679 = vpop.f32.mrb[0].mxu0
    %v7680 = vadd.f32 %v7596, %v7679
    %v7681 = vpop.f32.mrb[0].mxu0
    %v7682 = vpop.f32.mrb[0].mxu0
    %v7683 = vadd.f32 %v7596, %v7682
    %v7684 = vpop.f32.mrb[0].mxu0
    %7685 = vmatprep.mubr.bf16.mxu0 0
    %7686 = vmatmul.mubr.bf16.gmra.mrb[0].mxu0 %v7565
    %v7687 = vpop.f32.mrb[0].mxu0
    %v7688 = vadd.f32 %v7596, %v7687
    %v7689 = vpop.f32.mrb[0].mxu0
    %v7690 = vpop.f32.mrb[0].mxu0
    %v7691 = vadd.f32 %v7596, %v7690
    %v7692 = vpop.f32.mrb[0].mxu0
    %7693 = vmatprep.mubr.bf16.mxu0 0
    %7694 = vmatmul.mubr.bf16.gmra.mrb[0].mxu0 %v7566
    %v7695 = vpop.f32.mrb[0].mxu0
    %v7696 = vadd.f32 %v7596, %v7695
    %v7697 = vpop.f32.mrb[0].mxu0
    %v7698 = vpop.f32.mrb[0].mxu0
    %v7699 = vadd.f32 %v7596, %v7698
    %v7700 = vpop.f32.mrb[0].mxu0
    %7701 = vmatprep.mubr.bf16.mxu0 0
    %7702 = vmatmul.mubr.bf16.gmra.mrb[0].mxu0 %v7567
    %v7703 = vpop.f32.mrb[0].mxu0
    %v7704 = vadd.f32 %v7596, %v7703
    %v7705 = vpop.f32.mrb[0].mxu0
    %v7706 = vpop.f32.mrb[0].mxu0
    %v7707 = vadd.f32 %v7596, %v7706
    %v7708 = vpop.f32.mrb[0].mxu0
    %7709 = vmatprep.mubr.bf16.mxu0 0
    %7710 = vmatmul.mubr.bf16.gmra.mrb[0].mxu0 %v7568
    %v7711 = vpop.f32.mrb[0].mxu0
    %v7712 = vadd.f32 %v7596, %v7711
    %v7713 = vpop.f32.mrb[0].mxu0
    %v7714 = vpop.f32.mrb[0].mxu0
    %v7715 = vadd.f32 %v7596, %v7714
    %v7716 = vpop.f32.mrb[0].mxu0
    %7717 = vmatprep.mubr.bf16.mxu0 0
    %7718 = vmatmul.mubr.bf16.gmra.mrb[0].mxu0 %v7569
    %v7719 = vpop.f32.mrb[0].mxu0
    %v7720 = vadd.f32 %v7596, %v7719
    %v7721 = vpop.f32.mrb[0].mxu0
    %v7722 = vpop.f32.mrb[0].mxu0
    %v7723 = vadd.f32 %v7596, %v7722
    %v7724 = vpop.f32.mrb[0].mxu0
    %7725 = vmatprep.mubr.bf16.mxu0 0
    %7726 = vmatmul.mubr.bf16.gmra.mrb[0].mxu0 %v7570
    %v7727 = vpop.f32.mrb[0].mxu0
    %v7728 = vadd.f32 %v7596, %v7727
    %v7729 = vpop.f32.mrb[0].mxu0
    %v7730 = vpop.f32.mrb[0].mxu0
    %v7731 = vadd.f32 %v7596, %v7730
    %v7732 = vpop.f32.mrb[0].mxu0
    %7733 = vmatprep.mubr.bf16.mxu0 0
    %7734 = vmatmul.mubr.bf16.gmra.mrb[0].mxu0 %v7571
    %v7735 = vpop.f32.mrb[0].mxu0
    %v7736 = vadd.f32 %v7596, %v7735
    %v7737 = vpop.f32.mrb[0].mxu0
    %v7738 = vpop.f32.mrb[0].mxu0
    %v7739 = vadd.f32 %v7596, %v7738
    %v7740 = vpop.f32.mrb[0].mxu0
    %7741 = vmatprep.mubr.bf16.mxu0 0
    %7742 = vmatmul.mubr.bf16.gmra.mrb[0].mxu0 %v7572
    %v7743 = vpop.f32.mrb[0].mxu0
    %v7744 = vadd.f32 %v7596, %v7743
    %v7745 = vpop.f32.mrb[0].mxu0
    %v7746 = vpop.f32.mrb[0].mxu0
    %v7747 = vadd.f32 %v7596, %v7746
    %v7748 = vpop.f32.mrb[0].mxu0
    %7749 = vmatprep.mubr.bf16.mxu0 0
    %7750 = vmatmul.mubr.bf16.gmra.mrb[0].mxu0 %v7573
    %v7751 = vpop.f32.mrb[0].mxu0
    %v7752 = vadd.f32 %v7596, %v7751
    %v7753 = vpop.f32.mrb[0].mxu0
    %v7754 = vpop.f32.mrb[0].mxu0
    %v7755 = vadd.f32 %v7596, %v7754
    %v7756 = vpop.f32.mrb[0].mxu0
    %7757 = vmatprep.mubr.bf16.mxu0 0
    %7758 = vmatmul.mubr.bf16.gmra.mrb[0].mxu0 %v7574
    %v7759 = vpop.f32.mrb[0].mxu0
    %v7760 = vadd.f32 %v7596, %v7759
    %v7761 = vpop.f32.mrb[0].mxu0
    %v7762 = vpop.f32.mrb[0].mxu0
    %v7763 = vadd.f32 %v7596, %v7762
    %v7764 = vpop.f32.mrb[0].mxu0
    %7765 = vmatprep.mubr.bf16.mxu0 0
    %7766 = vmatmul.mubr.bf16.gmra.mrb[0].mxu0 %v7575
    %v7767 = vpop.f32.mrb[0].mxu0
    %v7768 = vadd.f32 %v7596, %v7767
    %v7769 = vpop.f32.mrb[0].mxu0
    %v7770 = vpop.f32.mrb[0].mxu0
    %v7771 = vadd.f32 %v7596, %v7770
    %v7772 = vpop.f32.mrb[0].mxu0
    %7773 = vmatprep.mubr.bf16.mxu0 0
    %7774 = vmatmul.mubr.bf16.gmra.mrb[0].mxu0 %v7576
    %v7775 = vpop.f32.mrb[0].mxu0
    %v7776 = vadd.f32 %v7596, %v7775
    %v7777 = vpop.f32.mrb[0].mxu0
    %v7778 = vpop.f32.mrb[0].mxu0
    %v7779 = vadd.f32 %v7596, %v7778
    %v7780 = vpop.f32.mrb[0].mxu0
    %7781 = vmatprep.mubr.bf16.mxu0 0
    %7782 = vmatmul.mubr.bf16.gmra.mrb[0].mxu0 %v7577
    %v7783 = vpop.f32.mrb[0].mxu0
    %v7784 = vadd.f32 %v7596, %v7783
    %v7785 = vpop.f32.mrb[0].mxu0
    %v7786 = vpop.f32.mrb[0].mxu0
    %v7787 = vadd.f32 %v7596, %v7786
    %v7788 = vpop.f32.mrb[0].mxu0
    %7789 = vmatprep.mubr.bf16.mxu0 0
    %7790 = vmatmul.mubr.bf16.gmra.mrb[0].mxu0 %v7578
    %v7791 = vpop.f32.mrb[0].mxu0
    %v7792 = vadd.f32 %v7596, %v7791
    %v7793 = vpop.f32.mrb[0].mxu0
    %v7794 = vpop.f32.mrb[0].mxu0
    %v7795 = vadd.f32 %v7596, %v7794
    %v7796 = vpop.f32.mrb[0].mxu0
    %7797 = vmatprep.mubr.bf16.mxu0 0
    %7798 = vmatmul.mubr.bf16.gmra.mrb[0].mxu0 %v7579
    %v7799 = vpop.f32.mrb[0].mxu0
    %v7800 = vadd.f32 %v7596, %v7799
    %v7801 = vpop.f32.mrb[0].mxu0
    %v7802 = vpop.f32.mrb[0].mxu0
    %v7803 = vadd.f32 %v7596, %v7802
    %v7804 = vpop.f32.mrb[0].mxu0
    %7805 = vdwg.mxu0
    %v7806 = vmax.f32 %v7680, 0.0
    %v7807 = vmax.f32 %v7683, 0.0
    %v7808 = vmax.f32 %v7688, 0.0
    %v7809 = vmax.f32 %v7691, 0.0
    %v7810 = vmax.f32 %v7696, 0.0
    %v7811 = vmax.f32 %v7699, 0.0
    %v7812 = vmax.f32 %v7704, 0.0
    %v7813 = vmax.f32 %v7707, 0.0
    %v7814 = vmax.f32 %v7712, 0.0
    %v7815 = vmax.f32 %v7715, 0.0
    %v7816 = vmax.f32 %v7720, 0.0
    %v7817 = vmax.f32 %v7723, 0.0
    %v7818 = vmax.f32 %v7728, 0.0
    %v7819 = vmax.f32 %v7731, 0.0
    %v7820 = vmax.f32 %v7736, 0.0
    %v7821 = vmax.f32 %v7739, 0.0
    %v7822 = vmax.f32 %v7744, 0.0
    %v7823 = vmax.f32 %v7747, 0.0
    %v7824 = vmax.f32 %v7752, 0.0
    %v7825 = vmax.f32 %v7755, 0.0
    %v7826 = vmax.f32 %v7760, 0.0
    %v7827 = vmax.f32 %v7763, 0.0
    %v7828 = vmax.f32 %v7768, 0.0
    %v7829 = vmax.f32 %v7771, 0.0
    %v7830 = vmax.f32 %v7776, 0.0
    %v7831 = vmax.f32 %v7779, 0.0
    %v7832 = vmax.f32 %v7784, 0.0
    %v7833 = vmax.f32 %v7787, 0.0
    %v7834 = vmax.f32 %v7792, 0.0
    %v7835 = vmax.f32 %v7795, 0.0
    %v7836 = vmax.f32 %v7800, 0.0
    %v7837 = vmax.f32 %v7803, 0.0
    %v7838 = vpack.c.bf16 %v7807, %v7806
    %v7839 = vpack.c.bf16 %v7809, %v7808
    %v7840 = vpack.c.bf16 %v7811, %v7810
    %v7841 = vpack.c.bf16 %v7813, %v7812
    %v7842 = vpack.c.bf16 %v7815, %v7814
    %v7843 = vpack.c.bf16 %v7817, %v7816
    %v7844 = vpack.c.bf16 %v7819, %v7818
    %v7845 = vpack.c.bf16 %v7821, %v7820
    %v7846 = vpack.c.bf16 %v7823, %v7822
    %v7847 = vpack.c.bf16 %v7825, %v7824
    %v7848 = vpack.c.bf16 %v7827, %v7826
    %v7849 = vpack.c.bf16 %v7829, %v7828
    %v7850 = vpack.c.bf16 %v7831, %v7830
    %v7851 = vpack.c.bf16 %v7833, %v7832
    %v7852 = vpack.c.bf16 %v7835, %v7834
    %v7853 = vpack.c.bf16 %v7837, %v7836
    %v7854 = vld [vmem:[#allocation11] sm:$0xf]
    %v7855 = vld [vmem:[#allocation11 + $0x4] sm:$0xf]
    %v7856 = vld [vmem:[#allocation11 + $0x8] sm:$0xf]
    %v7857 = vld [vmem:[#allocation11 + $0xc] sm:$0xf]
    %v7858 = vld [vmem:[#allocation11 + $0x10] sm:$0xf]
    %v7859 = vld [vmem:[#allocation11 + $0x14] sm:$0xf]
    %v7860 = vld [vmem:[#allocation11 + $0x18] sm:$0xf]
    %v7861 = vld [vmem:[#allocation11 + $0x1c] sm:$0xf]
    %v7862 = vld [vmem:[#allocation11 + $0x20] sm:$0xf]
    %v7863 = vld [vmem:[#allocation11 + $0x24] sm:$0xf]
    %v7864 = vld [vmem:[#allocation11 + $0x28] sm:$0xf]
    %v7865 = vld [vmem:[#allocation11 + $0x2c] sm:$0xf]
    %v7866 = vld [vmem:[#allocation11 + $0x30] sm:$0xf]
    %v7867 = vld [vmem:[#allocation11 + $0x34] sm:$0xf]
    %v7868 = vld [vmem:[#allocation11 + $0x38] sm:$0xf]
    %v7869 = vld [vmem:[#allocation11 + $0x3c] sm:$0xf]
    %v7870 = vld [vmem:[%s10 + $0x44] ss:$0 sm:$0xff]
    %v7887 = vunpack.c.l.b16 %v7854
    %v7888 = vunpack.c.l.b16 %v7855
    %v7889 = vunpack.c.l.b16 %v7856
    %v7890 = vunpack.c.l.b16 %v7857
    %v7891 = vunpack.c.l.b16 %v7858
    %v7892 = vunpack.c.l.b16 %v7859
    %v7893 = vunpack.c.l.b16 %v7860
    %v7894 = vunpack.c.l.b16 %v7861
    %v7895 = vunpack.c.l.b16 %v7862
    %v7896 = vunpack.c.l.b16 %v7863
    %v7897 = vunpack.c.l.b16 %v7864
    %v7898 = vunpack.c.l.b16 %v7865
    %v7899 = vunpack.c.l.b16 %v7866
    %v7900 = vunpack.c.l.b16 %v7867
    %v7901 = vunpack.c.l.b16 %v7868
    %v7902 = vunpack.c.l.b16 %v7869
    %v7903 = vpack.c.b16 %v7888, %v7887
    %v7904 = vpack.c.b16 %v7890, %v7889
    %v7905 = vpack.c.b16 %v7892, %v7891
    %v7906 = vpack.c.b16 %v7894, %v7893
    %v7907 = vpack.c.b16 %v7896, %v7895
    %v7908 = vpack.c.b16 %v7898, %v7897
    %v7909 = vpack.c.b16 %v7900, %v7899
    %v7910 = vpack.c.b16 %v7902, %v7901
    %7919 = vmatprep.subr.bf16.mxu0 0
    %7920 = vmatpush1.bf16.msra.mxu0 %v7903
    %7921 = vmatprep.subr.bf16.mxu0 0
    %7922 = vmatpush1.bf16.msra.mxu0 %v7904
    %7923 = vmatprep.subr.bf16.mxu0 0
    %7924 = vmatpush1.bf16.msra.mxu0 %v7905
    %7925 = vmatprep.subr.bf16.mxu0 0
    %7926 = vmatpush1.bf16.msra.mxu0 %v7906
    %7927 = vmatprep.subr.bf16.mxu0 0
    %7928 = vmatpush1.bf16.msra.mxu0 %v7907
    %7929 = vmatprep.subr.bf16.mxu0 0
    %7930 = vmatpush1.bf16.msra.mxu0 %v7908
    %7931 = vmatprep.subr.bf16.mxu0 0
    %7932 = vmatpush1.bf16.msra.mxu0 %v7909
    %7933 = vmatprep.subr.bf16.mxu0 0
    %7934 = vmatpush1.bf16.msra.mxu0 %v7910
    %7935 = vmatprep.subr.bf16.mxu0 0
    %7936 = vmatpush1.bf16.msra.mxu0 0
    %7937 = vmatprep.subr.bf16.mxu0 0
    %7938 = vmatpush1.bf16.msra.mxu0 0
    %7939 = vmatprep.subr.bf16.mxu0 0
    %7940 = vmatpush1.bf16.msra.mxu0 0
    %7941 = vmatprep.subr.bf16.mxu0 0
    %7942 = vmatpush1.bf16.msra.mxu0 0
    %7943 = vmatprep.subr.bf16.mxu0 0
    %7944 = vmatpush1.bf16.msra.mxu0 0
    %7945 = vmatprep.subr.bf16.mxu0 0
    %7946 = vmatpush1.bf16.msra.mxu0 0
    %7947 = vmatprep.subr.bf16.mxu0 0
    %7948 = vmatpush1.bf16.msra.mxu0 0
    %7949 = vmatprep.subr.bf16.mxu0 0
    %7950 = vmatpush1.bf16.msra.mxu0 0
    %7951 = vmatprep.mubr.bf16.mxu0 0
    %7952 = vmatmul.mubr.bf16.gmra.mrb[0].mxu0 %v7838
    %v7953 = vpop.f32.mrb[0].mxu0
    %v7954 = vadd.f32 %v7870, %v7953
    %v7955 = vpop.f32.mrb[0].mxu0
    %v7956 = vpop.f32.mrb[0].mxu0
    %v7957 = vadd.f32 %v7870, %v7956
    %v7958 = vpop.f32.mrb[0].mxu0
    %7959 = vmatprep.mubr.bf16.mxu0 0
    %7960 = vmatmul.mubr.bf16.gmra.mrb[0].mxu0 %v7839
    %v7961 = vpop.f32.mrb[0].mxu0
    %v7962 = vadd.f32 %v7870, %v7961
    %v7963 = vpop.f32.mrb[0].mxu0
    %v7964 = vpop.f32.mrb[0].mxu0
    %v7965 = vadd.f32 %v7870, %v7964
    %v7966 = vpop.f32.mrb[0].mxu0
    %7967 = vmatprep.mubr.bf16.mxu0 0
    %7968 = vmatmul.mubr.bf16.gmra.mrb[0].mxu0 %v7840
    %v7969 = vpop.f32.mrb[0].mxu0
    %v7970 = vadd.f32 %v7870, %v7969
    %v7971 = vpop.f32.mrb[0].mxu0
    %v7972 = vpop.f32.mrb[0].mxu0
    %v7973 = vadd.f32 %v7870, %v7972
    %v7974 = vpop.f32.mrb[0].mxu0
    %7975 = vmatprep.mubr.bf16.mxu0 0
    %7976 = vmatmul.mubr.bf16.gmra.mrb[0].mxu0 %v7841
    %v7977 = vpop.f32.mrb[0].mxu0
    %v7978 = vadd.f32 %v7870, %v7977
    %v7979 = vpop.f32.mrb[0].mxu0
    %v7980 = vpop.f32.mrb[0].mxu0
    %v7981 = vadd.f32 %v7870, %v7980
    %v7982 = vpop.f32.mrb[0].mxu0
    %7983 = vmatprep.mubr.bf16.mxu0 0
    %7984 = vmatmul.mubr.bf16.gmra.mrb[0].mxu0 %v7842
    %v7985 = vpop.f32.mrb[0].mxu0
    %v7986 = vadd.f32 %v7870, %v7985
    %v7987 = vpop.f32.mrb[0].mxu0
    %v7988 = vpop.f32.mrb[0].mxu0
    %v7989 = vadd.f32 %v7870, %v7988
    %v7990 = vpop.f32.mrb[0].mxu0
    %7991 = vmatprep.mubr.bf16.mxu0 0
    %7992 = vmatmul.mubr.bf16.gmra.mrb[0].mxu0 %v7843
    %v7993 = vpop.f32.mrb[0].mxu0
    %v7994 = vadd.f32 %v7870, %v7993
    %v7995 = vpop.f32.mrb[0].mxu0
    %v7996 = vpop.f32.mrb[0].mxu0
    %v7997 = vadd.f32 %v7870, %v7996
    %v7998 = vpop.f32.mrb[0].mxu0
    %7999 = vmatprep.mubr.bf16.mxu0 0
    %8000 = vmatmul.mubr.bf16.gmra.mrb[0].mxu0 %v7844
    %v8001 = vpop.f32.mrb[0].mxu0
    %v8002 = vadd.f32 %v7870, %v8001
    %v8003 = vpop.f32.mrb[0].mxu0
    %v8004 = vpop.f32.mrb[0].mxu0
    %v8005 = vadd.f32 %v7870, %v8004
    %v8006 = vpop.f32.mrb[0].mxu0
    %8007 = vmatprep.mubr.bf16.mxu0 0
    %8008 = vmatmul.mubr.bf16.gmra.mrb[0].mxu0 %v7845
    %v8009 = vpop.f32.mrb[0].mxu0
    %v8010 = vadd.f32 %v7870, %v8009
    %v8011 = vpop.f32.mrb[0].mxu0
    %v8012 = vpop.f32.mrb[0].mxu0
    %v8013 = vadd.f32 %v7870, %v8012
    %v8014 = vpop.f32.mrb[0].mxu0
    %8015 = vmatprep.mubr.bf16.mxu0 0
    %8016 = vmatmul.mubr.bf16.gmra.mrb[0].mxu0 %v7846
    %v8017 = vpop.f32.mrb[0].mxu0
    %v8018 = vadd.f32 %v7870, %v8017
    %v8019 = vpop.f32.mrb[0].mxu0
    %v8020 = vpop.f32.mrb[0].mxu0
    %v8021 = vadd.f32 %v7870, %v8020
    %v8022 = vpop.f32.mrb[0].mxu0
    %8023 = vmatprep.mubr.bf16.mxu0 0
    %8024 = vmatmul.mubr.bf16.gmra.mrb[0].mxu0 %v7847
    %v8025 = vpop.f32.mrb[0].mxu0
    %v8026 = vadd.f32 %v7870, %v8025
    %v8027 = vpop.f32.mrb[0].mxu0
    %v8028 = vpop.f32.mrb[0].mxu0
    %v8029 = vadd.f32 %v7870, %v8028
    %v8030 = vpop.f32.mrb[0].mxu0
    %8031 = vmatprep.mubr.bf16.mxu0 0
    %8032 = vmatmul.mubr.bf16.gmra.mrb[0].mxu0 %v7848
    %v8033 = vpop.f32.mrb[0].mxu0
    %v8034 = vadd.f32 %v7870, %v8033
    %v8035 = vpop.f32.mrb[0].mxu0
    %v8036 = vpop.f32.mrb[0].mxu0
    %v8037 = vadd.f32 %v7870, %v8036
    %v8038 = vpop.f32.mrb[0].mxu0
    %8039 = vmatprep.mubr.bf16.mxu0 0
    %8040 = vmatmul.mubr.bf16.gmra.mrb[0].mxu0 %v7849
    %v8041 = vpop.f32.mrb[0].mxu0
    %v8042 = vadd.f32 %v7870, %v8041
    %v8043 = vpop.f32.mrb[0].mxu0
    %v8044 = vpop.f32.mrb[0].mxu0
    %v8045 = vadd.f32 %v7870, %v8044
    %v8046 = vpop.f32.mrb[0].mxu0
    %8047 = vmatprep.mubr.bf16.mxu0 0
    %8048 = vmatmul.mubr.bf16.gmra.mrb[0].mxu0 %v7850
    %v8049 = vpop.f32.mrb[0].mxu0
    %v8050 = vadd.f32 %v7870, %v8049
    %v8051 = vpop.f32.mrb[0].mxu0
    %v8052 = vpop.f32.mrb[0].mxu0
    %v8053 = vadd.f32 %v7870, %v8052
    %v8054 = vpop.f32.mrb[0].mxu0
    %8055 = vmatprep.mubr.bf16.mxu0 0
    %8056 = vmatmul.mubr.bf16.gmra.mrb[0].mxu0 %v7851
    %v8057 = vpop.f32.mrb[0].mxu0
    %v8058 = vadd.f32 %v7870, %v8057
    %v8059 = vpop.f32.mrb[0].mxu0
    %v8060 = vpop.f32.mrb[0].mxu0
    %v8061 = vadd.f32 %v7870, %v8060
    %v8062 = vpop.f32.mrb[0].mxu0
    %8063 = vmatprep.mubr.bf16.mxu0 0
    %8064 = vmatmul.mubr.bf16.gmra.mrb[0].mxu0 %v7852
    %v8065 = vpop.f32.mrb[0].mxu0
    %v8066 = vadd.f32 %v7870, %v8065
    %v8067 = vpop.f32.mrb[0].mxu0
    %v8068 = vpop.f32.mrb[0].mxu0
    %v8069 = vadd.f32 %v7870, %v8068
    %v8070 = vpop.f32.mrb[0].mxu0
    %8071 = vmatprep.mubr.bf16.mxu0 0
    %8072 = vmatmul.mubr.bf16.gmra.mrb[0].mxu0 %v7853
    %v8073 = vpop.f32.mrb[0].mxu0
    %v8074 = vadd.f32 %v7870, %v8073
    %v8075 = vpop.f32.mrb[0].mxu0
    %v8076 = vpop.f32.mrb[0].mxu0
    %v8077 = vadd.f32 %v7870, %v8076
    %v8078 = vpop.f32.mrb[0].mxu0
    %8079 = vdwg.mxu0
    %8080 = vxpose.xlu0.b32.start [1/16] %v7954, 128
    %8081 = vxpose.xlu0.b32.cont [2/16] %v7957, 128
    %8082 = vxpose.xlu0.b32.cont [3/16] %v7962, 128
    %8083 = vxpose.xlu0.b32.cont [4/16] %v7965, 128
    %8084 = vxpose.xlu0.b32.cont [5/16] %v7970, 128
    %8085 = vxpose.xlu0.b32.cont [6/16] %v7973, 128
    %8086 = vxpose.xlu0.b32.cont [7/16] %v7978, 128
    %8087 = vxpose.xlu0.b32.cont [8/16] %v7981, 128
    %8088 = vxpose.xlu0.b32.cont [9/16] %v7986, 128
    %8089 = vxpose.xlu0.b32.cont [10/16] %v7989, 128
    %8090 = vxpose.xlu0.b32.cont [11/16] %v7994, 128
    %8091 = vxpose.xlu0.b32.cont [12/16] %v7997, 128
    %8092 = vxpose.xlu0.b32.cont [13/16] %v8002, 128
    %8093 = vxpose.xlu0.b32.cont [14/16] %v8005, 128
    %8094 = vxpose.xlu0.b32.cont [15/16] %v8010, 128
    %8095 = vxpose.xlu0.b32.end [16/16] %v8013, 128
    %v8096 = vpop.trf.xlu0
    %v8097 = vpop.trf.xlu0
    %v8098 = vpop.trf.xlu0
    %v8099 = vpop.trf.xlu0
    %v8100 = vpop.trf.xlu0
    %v8101 = vpop.trf.xlu0
    %v8102 = vpop.trf.xlu0
    %v8103 = vpop.trf.xlu0
    %v8104 = vpop.trf.xlu0
    %v8105 = vpop.trf.xlu0
    %v8106 = vpop.trf.xlu0
    %v8107 = vpop.trf.xlu0
    %v8108 = vpop.trf.xlu0
    %v8109 = vpop.trf.xlu0
    %v8110 = vpop.trf.xlu0
    %v8111 = vpop.trf.xlu0
    %8112 = vxpose.xlu0.b32.start [1/16] %v8018, 128
    %8113 = vxpose.xlu0.b32.cont [2/16] %v8021, 128
    %8114 = vxpose.xlu0.b32.cont [3/16] %v8026, 128
    %8115 = vxpose.xlu0.b32.cont [4/16] %v8029, 128
    %8116 = vxpose.xlu0.b32.cont [5/16] %v8034, 128
    %8117 = vxpose.xlu0.b32.cont [6/16] %v8037, 128
    %8118 = vxpose.xlu0.b32.cont [7/16] %v8042, 128
    %8119 = vxpose.xlu0.b32.cont [8/16] %v8045, 128
    %8120 = vxpose.xlu0.b32.cont [9/16] %v8050, 128
    %8121 = vxpose.xlu0.b32.cont [10/16] %v8053, 128
    %8122 = vxpose.xlu0.b32.cont [11/16] %v8058, 128
    %8123 = vxpose.xlu0.b32.cont [12/16] %v8061, 128
    %8124 = vxpose.xlu0.b32.cont [13/16] %v8066, 128
    %8125 = vxpose.xlu0.b32.cont [14/16] %v8069, 128
    %8126 = vxpose.xlu0.b32.cont [15/16] %v8074, 128
    %8127 = vxpose.xlu0.b32.end [16/16] %v8077, 128
    %v8128 = vpop.trf.xlu0
    %v8129 = vpop.trf.xlu0
    %v8130 = vpop.trf.xlu0
    %v8131 = vpop.trf.xlu0
    %v8132 = vpop.trf.xlu0
    %v8133 = vpop.trf.xlu0
    %v8134 = vpop.trf.xlu0
    %v8135 = vpop.trf.xlu0
    %v8136 = vpop.trf.xlu0
    %v8137 = vpop.trf.xlu0
    %v8138 = vpop.trf.xlu0
    %v8139 = vpop.trf.xlu0
    %v8140 = vpop.trf.xlu0
    %v8141 = vpop.trf.xlu0
    %v8142 = vpop.trf.xlu0
    %v8143 = vpop.trf.xlu0
    %8144 = vst [vmem:[%s14] sm:$0x3f] %v8096
    %8145 = vst [vmem:[%s14 + $0x8] sm:$0x3f] %v8128
    %8146 = vxpose.xlu0.b32.start [1/16] %v7532, 128
    %8147 = vxpose.xlu0.b32.cont [2/16] %v7533, 128
    %8148 = vxpose.xlu0.b32.cont [3/16] %v7534, 128
    %8149 = vxpose.xlu0.b32.cont [4/16] %v7535, 128
    %8150 = vxpose.xlu0.b32.cont [5/16] %v7536, 128
    %8151 = vxpose.xlu0.b32.cont [6/16] %v7537, 128
    %8152 = vxpose.xlu0.b32.cont [7/16] %v7538, 128
    %8153 = vxpose.xlu0.b32.cont [8/16] %v7539, 128
    %8154 = vxpose.xlu0.b32.cont [9/16] %v7540, 128
    %8155 = vxpose.xlu0.b32.cont [10/16] %v7541, 128
    %8156 = vxpose.xlu0.b32.cont [11/16] %v7542, 128
    %8157 = vxpose.xlu0.b32.cont [12/16] %v7543, 128
    %8158 = vxpose.xlu0.b32.cont [13/16] %v7544, 128
    %8159 = vxpose.xlu0.b32.cont [14/16] %v7545, 128
    %8160 = vxpose.xlu0.b32.cont [15/16] %v7546, 128
    %8161 = vxpose.xlu0.b32.end [16/16] %v7547, 128
    %v8162 = vpop.trf.xlu0
    %v8163 = vpop.trf.xlu0
    %v8164 = vpop.trf.xlu0
    %v8165 = vpop.trf.xlu0
    %v8166 = vpop.trf.xlu0
    %v8167 = vpop.trf.xlu0
    %v8168 = vpop.trf.xlu0
    %v8169 = vpop.trf.xlu0
    %v8170 = vpop.trf.xlu0
    %v8171 = vpop.trf.xlu0
    %v8172 = vpop.trf.xlu0
    %v8173 = vpop.trf.xlu0
    %v8174 = vpop.trf.xlu0
    %v8175 = vpop.trf.xlu0
    %v8176 = vpop.trf.xlu0
    %v8177 = vpop.trf.xlu0
    %8178 = vxpose.xlu0.b32.start [1/16] %v7548, 128
    %8179 = vxpose.xlu0.b32.cont [2/16] %v7549, 128
    %8180 = vxpose.xlu0.b32.cont [3/16] %v7550, 128
    %8181 = vxpose.xlu0.b32.cont [4/16] %v7551, 128
    %8182 = vxpose.xlu0.b32.cont [5/16] %v7552, 128
    %8183 = vxpose.xlu0.b32.cont [6/16] %v7553, 128
    %8184 = vxpose.xlu0.b32.cont [7/16] %v7554, 128
    %8185 = vxpose.xlu0.b32.cont [8/16] %v7555, 128
    %8186 = vxpose.xlu0.b32.cont [9/16] %v7556, 128
    %8187 = vxpose.xlu0.b32.cont [10/16] %v7557, 128
    %8188 = vxpose.xlu0.b32.cont [11/16] %v7558, 128
    %8189 = vxpose.xlu0.b32.cont [12/16] %v7559, 128
    %8190 = vxpose.xlu0.b32.cont [13/16] %v7560, 128
    %8191 = vxpose.xlu0.b32.cont [14/16] %v7561, 128
    %8192 = vxpose.xlu0.b32.cont [15/16] %v7562, 128
    %8193 = vxpose.xlu0.b32.end [16/16] %v7563, 128
    %v8194 = vpop.trf.xlu0
    %v8195 = vpop.trf.xlu0
    %v8196 = vpop.trf.xlu0
    %v8197 = vpop.trf.xlu0
    %v8198 = vpop.trf.xlu0
    %v8199 = vpop.trf.xlu0
    %v8200 = vpop.trf.xlu0
    %v8201 = vpop.trf.xlu0
    %v8202 = vpop.trf.xlu0
    %v8203 = vpop.trf.xlu0
    %v8204 = vpop.trf.xlu0
    %v8205 = vpop.trf.xlu0
    %v8206 = vpop.trf.xlu0
    %v8207 = vpop.trf.xlu0
    %v8208 = vpop.trf.xlu0
    %v8209 = vpop.trf.xlu0
    %8210 = vst [vmem:[%s15] sm:$0xff] %v8162
    %8211 = vst [vmem:[%s15 + $0x8] sm:$0x3] %v8163
    %8212 = vst [vmem:[%s15 + $0x10] sm:$0xff] %v8194
    %8213 = vst [vmem:[%s15 + $0x18] sm:$0x3] %v8195
    %8214 = vxpose.xlu0.b32.start [1/16] %v7806, 128
    %8215 = vxpose.xlu0.b32.cont [2/16] %v7807, 128
    %8216 = vxpose.xlu0.b32.cont [3/16] %v7808, 128
    %8217 = vxpose.xlu0.b32.cont [4/16] %v7809, 128
    %8218 = vxpose.xlu0.b32.cont [5/16] %v7810, 128
    %8219 = vxpose.xlu0.b32.cont [6/16] %v7811, 128
    %8220 = vxpose.xlu0.b32.cont [7/16] %v7812, 128
    %8221 = vxpose.xlu0.b32.cont [8/16] %v7813, 128
    %8222 = vxpose.xlu0.b32.cont [9/16] %v7814, 128
    %8223 = vxpose.xlu0.b32.cont [10/16] %v7815, 128
    %8224 = vxpose.xlu0.b32.cont [11/16] %v7816, 128
    %8225 = vxpose.xlu0.b32.cont [12/16] %v7817, 128
    %8226 = vxpose.xlu0.b32.cont [13/16] %v7818, 128
    %8227 = vxpose.xlu0.b32.cont [14/16] %v7819, 128
    %8228 = vxpose.xlu0.b32.cont [15/16] %v7820, 128
    %8229 = vxpose.xlu0.b32.end [16/16] %v7821, 128
    %v8230 = vpop.trf.xlu0
    %v8231 = vpop.trf.xlu0
    %v8232 = vpop.trf.xlu0
    %v8233 = vpop.trf.xlu0
    %v8234 = vpop.trf.xlu0
    %v8235 = vpop.trf.xlu0
    %v8236 = vpop.trf.xlu0
    %v8237 = vpop.trf.xlu0
    %v8238 = vpop.trf.xlu0
    %v8239 = vpop.trf.xlu0
    %v8240 = vpop.trf.xlu0
    %v8241 = vpop.trf.xlu0
    %v8242 = vpop.trf.xlu0
    %v8243 = vpop.trf.xlu0
    %v8244 = vpop.trf.xlu0
    %v8245 = vpop.trf.xlu0
    %8246 = vxpose.xlu0.b32.start [1/16] %v7822, 128
    %8247 = vxpose.xlu0.b32.cont [2/16] %v7823, 128
    %8248 = vxpose.xlu0.b32.cont [3/16] %v7824, 128
    %8249 = vxpose.xlu0.b32.cont [4/16] %v7825, 128
    %8250 = vxpose.xlu0.b32.cont [5/16] %v7826, 128
    %8251 = vxpose.xlu0.b32.cont [6/16] %v7827, 128
    %8252 = vxpose.xlu0.b32.cont [7/16] %v7828, 128
    %8253 = vxpose.xlu0.b32.cont [8/16] %v7829, 128
    %8254 = vxpose.xlu0.b32.cont [9/16] %v7830, 128
    %8255 = vxpose.xlu0.b32.cont [10/16] %v7831, 128
    %8256 = vxpose.xlu0.b32.cont [11/16] %v7832, 128
    %8257 = vxpose.xlu0.b32.cont [12/16] %v7833, 128
    %8258 = vxpose.xlu0.b32.cont [13/16] %v7834, 128
    %8259 = vxpose.xlu0.b32.cont [14/16] %v7835, 128
    %8260 = vxpose.xlu0.b32.cont [15/16] %v7836, 128
    %8261 = vxpose.xlu0.b32.end [16/16] %v7837, 128
    %v8262 = vpop.trf.xlu0
    %v8263 = vpop.trf.xlu0
    %v8264 = vpop.trf.xlu0
    %v8265 = vpop.trf.xlu0
    %v8266 = vpop.trf.xlu0
    %v8267 = vpop.trf.xlu0
    %v8268 = vpop.trf.xlu0
    %v8269 = vpop.trf.xlu0
    %v8270 = vpop.trf.xlu0
    %v8271 = vpop.trf.xlu0
    %v8272 = vpop.trf.xlu0
    %v8273 = vpop.trf.xlu0
    %v8274 = vpop.trf.xlu0
    %v8275 = vpop.trf.xlu0
    %v8276 = vpop.trf.xlu0
    %v8277 = vpop.trf.xlu0
    %8278 = vst [vmem:[%s16] sm:$0xff] %v8230
    %8279 = vst [vmem:[%s16 + $0x8] sm:$0xff] %v8262
    // Predicated region
    $region66: #{pointnet_densefusion_forward.1} parent=1 // pred_check
      _
    $region67: #{pointnet_densefusion_forward.1} parent=1 // pred_check_branch
      %8281 = sbr.rel (0) target = $region69
    $region68: #{pointnet_densefusion_forward.1} parent=1 // pred_region
      _
    $region69: #{pointnet_densefusion_forward.1} parent=1 // pred_fallthru
      _
    // Predicated region
    $region70: #{pointnet_densefusion_forward.1} parent=1 // pred_check
      _
    $region71: #{pointnet_densefusion_forward.1} parent=1 // pred_check_branch
      %8283 = sbr.rel (0) target = $region73
    $region72: #{pointnet_densefusion_forward.1} parent=1 // pred_region
      _
    $region73: #{pointnet_densefusion_forward.1} parent=1 // pred_fallthru
      _
    // Predicated region
    $region74: #{pointnet_densefusion_forward.1} parent=1 // pred_check
      _
    $region75: #{pointnet_densefusion_forward.1} parent=1 // pred_check_branch
      %8285 = sbr.rel (0) target = $region77
    $region76: #{pointnet_densefusion_forward.1} parent=1 // pred_region
      _
    $region77: #{pointnet_densefusion_forward.1} parent=1 // pred_fallthru
      _
    // Predicated region
    $region78: #{pointnet_densefusion_forward.1} parent=1 // pred_check
      _
    $region79: #{pointnet_densefusion_forward.1} parent=1 // pred_check_branch
      %8287 = sbr.rel (0) target = $region81
    $region80: #{pointnet_densefusion_forward.1} parent=1 // pred_region
      _
    $region81: #{pointnet_densefusion_forward.1} parent=1 // pred_fallthru
      _
    // Predicated region
    $region82: #{pointnet_densefusion_forward.1} parent=1 // pred_check
      _
    $region83: #{pointnet_densefusion_forward.1} parent=1 // pred_check_branch
      %8289 = sbr.rel (0) target = $region85
    $region84: #{pointnet_densefusion_forward.1} parent=1 // pred_region
      _
    $region85: #{pointnet_densefusion_forward.1} parent=1 // pred_fallthru
      _
    // Predicated region
    $region86: #{pointnet_densefusion_forward.1} parent=1 // pred_check
      _
    $region87: #{pointnet_densefusion_forward.1} parent=1 // pred_check_branch
      %8291 = sbr.rel (0) target = $region89
    $region88: #{pointnet_densefusion_forward.1} parent=1 // pred_region
      _
    $region89: #{pointnet_densefusion_forward.1} parent=1 // pred_fallthru
      _
    %8292 = vsyncpa [#allocation7], 1
    %8293 = vsyncpa [#allocation9], 1
    %8294 = vsyncpa [#allocation12], 1
  %8295 = vsyncmov [#allocation5]
  %s8296 = vpop.sfrf %8295
  %p8297 = scmp.eq.s32.totalorder %s8296, 0
  %p8298 = pneg %p8297
  %8300 = shalt.err (%p8298)
  %s8301 = scalar_lea.sflag [#allocation5], 1
  %8302 = vsyncmov %s8301
  %s8303 = vpop.sfrf %8302
  %p8304 = scmp.eq.s32.totalorder %s8303, 0
  %p8305 = pneg %p8304
  %8307 = shalt.err (%p8305)
  %s8308 = scalar_lea.sflag [#allocation5], 2
  %8309 = vsyncmov %s8308
  %s8310 = vpop.sfrf %8309
  %p8311 = scmp.eq.s32.totalorder %s8310, 0
  %p8312 = pneg %p8311
  %8314 = shalt.err (%p8312)

</llo_original>
